<compile_context>
chip_gen: v6e
topology: v6e:2x2x1
jax: 0.10.0
libtpu: 0.0.40
codegen_flags: <defaults>
</compile_context>

<pallas_src>
import math
import numpy as np
import jax
import jax.numpy as jnp
from jax import lax
from jax.experimental import pallas as pl
from jax.experimental.pallas import tpu as pltpu

# ---- module defaults (AugmentMelSTFT.__init__) ------------------------------
N_MELS = 128
SR = 32000
WIN_LENGTH = 800
HOPSIZE = 320
N_FFT = 1024
FMIN = 0.0
FMIN_AUG_RANGE = 1
FMAX_AUG_RANGE = 1000
FMAX = SR // 2 - FMAX_AUG_RANGE // 2          # 15500 (fmax=None branch)

# kaldi get_mel_banks only produces n_fft//2 = 512 columns; the torch code then
# appends one EXPLICIT zero column (bin 512 / Nyquist), so that bin contributes
# nothing to the mel projection regardless of fmin/fmax -> dropping it and
# keeping N_FREQ = 512 is exact (and tile friendly).
N_FREQ = N_FFT // 2

_BLK = 64                                      # gcd(HOPSIZE, N_FFT)
_HOP_BLKS = HOPSIZE // _BLK                    # 5
_FFT_BLKS = N_FFT // _BLK                      # 16
assert _HOP_BLKS * _BLK == HOPSIZE and _FFT_BLKS * _BLK == N_FFT


def _round_up(a, b):
    return -(-a // b) * b


# ---- parameter construction (deterministic, in-script) ----------------------
def _mel_scale(f):
    return 1127.0 * np.log(1.0 + np.asarray(f, dtype=np.float64) / 700.0)


def kaldi_mel_banks(num_bins, window_length_padded, sample_freq, low_freq, high_freq):
    """Re-implementation of torchaudio.compliance.kaldi.get_mel_banks
    (vtln_warp_factor == 1.0, so no VTLN warping)."""
    num_fft_bins = window_length_padded // 2
    nyquist = 0.5 * sample_freq
    if high_freq <= 0.0:
        high_freq += nyquist
    fft_bin_width = sample_freq / window_length_padded

    mel_low = _mel_scale(low_freq)
    mel_high = _mel_scale(high_freq)
    mel_delta = (mel_high - mel_low) / (num_bins + 1)

    bin_idx = np.arange(num_bins, dtype=np.float64)[:, None]
    left_mel = mel_low + bin_idx * mel_delta
    center_mel = left_mel + mel_delta
    right_mel = center_mel + mel_delta

    mel_f = _mel_scale(fft_bin_width * np.arange(num_fft_bins))[None, :]
    up_slope = (mel_f - left_mel) / (center_mel - left_mel)
    down_slope = (right_mel - mel_f) / (right_mel - center_mel)
    bins = np.maximum(0.0, np.minimum(up_slope, down_slope))
    return bins.astype(np.float32)                    # (num_bins, num_fft_bins)


def make_params():
    # hann window, periodic=False, zero-centered into the n_fft frame (torch.stft)
    n = np.arange(WIN_LENGTH, dtype=np.float64)
    win = 0.5 - 0.5 * np.cos(2.0 * np.pi * n / (WIN_LENGTH - 1))
    lpad = (N_FFT - WIN_LENGTH) // 2
    win_p = np.pad(win, (lpad, N_FFT - WIN_LENGTH - lpad))

    # window folded into real/imag DFT matrices (sign of imag irrelevant: squared)
    k = np.arange(N_FREQ, dtype=np.float64)
    t = np.arange(N_FFT, dtype=np.float64)
    ang = 2.0 * np.pi * np.outer(t, k) / N_FFT
    w_re = win_p[:, None] * np.cos(ang)                         # (N_FFT, N_FREQ)
    w_im = win_p[:, None] * np.sin(ang)                         # (N_FFT, N_FREQ)
    w_cat = np.concatenate([w_re, w_im], axis=1)                # (N_FFT, 2*N_FREQ)

    # TODO(synk): randint-based fmin/fmax augmentation replaced by deterministic
    # no-augmentation draws (randint(1)==0, and midpoint draw for fmax).
    fmin = FMIN + 0
    fmax = FMAX + FMAX_AUG_RANGE // 2 - FMAX_AUG_RANGE // 2     # == FMAX
    mel = kaldi_mel_banks(N_MELS, N_FFT, SR, fmin, fmax)        # (N_MELS, N_FREQ)
    # Guard the "dropped Nyquist column" invariant: the kernel only carries
    # N_FREQ = n_fft//2 bins, which is exact because the torch reference pads
    # that extra column with zeros.  A config change here must not slip through.
    assert mel.shape == (N_MELS, N_FREQ), mel.shape
    mel_t = np.ascontiguousarray(mel.T)                         # (N_FREQ, N_MELS)

    # bf16 weights -> native MXU rate; f32 accumulation happens in-kernel.
    return (jnp.asarray(w_cat, dtype=jnp.bfloat16),
            jnp.asarray(mel_t, dtype=jnp.bfloat16))


# ---- Pallas kernel: windowed DFT power spectrum -> mel -> log/scale ---------
def _mel_kernel(frames_ref, w_ref, melt_ref, out_ref):
    fr = frames_ref[...]                                        # (TF, N_FFT) bf16
    # one MXU matmul against [W_re | W_im]; f32 accumulate
    yri = jnp.dot(fr, w_ref[...], preferred_element_type=jnp.float32)  # (TF, 2*N_FREQ)
    power = yri[:, :N_FREQ] ** 2 + yri[:, N_FREQ:] ** 2         # (TF, N_FREQ) f32
    # Note: bf16 power for the mel matmul gives ~1e-3 abs error in the final
    # log-mel; switch to an f32 dot here if a tighter tolerance is ever needed
    # (it is only ~6% of the FLOPs).
    mel = jnp.dot(power.astype(jnp.bfloat16), melt_ref[...],
                  preferred_element_type=jnp.float32)           # (TF, N_MELS) f32
    logmel = (jnp.log(mel + 1e-5) + 4.5) * 0.2                  # (TF, N_MELS)
    # in-kernel transpose (XLU, hidden under the MXU) -> lane-dense (128, TF) store
    out_ref[...] = logmel.T


def _extract_frames(y, n_frames):
    """Overlapping frames without a TPU gather.

    gcd(HOPSIZE, N_FFT) = 64, so frame f is exactly 64-sample blocks
    [5f, 5f+16) of the padded waveform -> 16 strided slices + concat.
    `n_frames` may exceed the number of real frames; the waveform (small) is
    zero-padded so the frames tensor comes out already row-padded.
    """
    B = y.shape[0]
    n_blocks = (n_frames - 1) * _HOP_BLKS + _FFT_BLKS
    need = n_blocks * _BLK
    if y.shape[1] < need:
        y = jnp.pad(y, ((0, 0), (0, need - y.shape[1])))
    y64 = y[:, :need].reshape(B, n_blocks, _BLK)
    cols = [
        lax.slice_in_dim(y64, j, j + (n_frames - 1) * _HOP_BLKS + 1,
                         stride=_HOP_BLKS, axis=1)              # (B, NF, 64)
        for j in range(_FFT_BLKS)
    ]
    frames = jnp.concatenate(cols, axis=-1)                     # (B, NF, N_FFT)
    return frames.reshape(B * n_frames, N_FFT)


def _const_weight_spec(shape):
    """Resident weight: constant index_map (one DMA); single-buffered to avoid
    allocating a second, never-used VMEM copy."""
    idx = lambda i: (0, 0)
    try:
        return pl.BlockSpec(shape, idx, pipeline_mode=pl.Buffered(1))
    except (AttributeError, TypeError):     # older jax: fall back to default buffering
        return pl.BlockSpec(shape, idx)


def augment_mel_stft(x, w_cat, mel_t, *, tile_frames=1024):
    """x: (B, T) waveform -> (B, N_MELS, n_frames), matching the torch module."""
    x = x.astype(jnp.float32)
    B = x.shape[0]

    # pre-emphasis: conv1d with kernel [-0.97, 1] (valid) -> length T-1 (f32)
    y = x[:, 1:] - 0.97 * x[:, :-1]
    L = y.shape[1]

    # torch.stft center=True: reflect-pad by n_fft//2 on each side
    y = jnp.pad(y, ((0, 0), (N_FFT // 2, N_FFT // 2)), mode="reflect")
    # frames/weights feed the MXU in bf16 anyway; cast the (small) waveform once
    # so framing writes bf16 directly (halves wrapper framing traffic).
    y = y.astype(jnp.bfloat16)

    n_frames = 1 + L // HOPSIZE
    rows = B * n_frames

    # Large tiles amortize the ~0.35us per-grid-step overhead and the resident
    # 1024x1024 RHS re-push, but clamp so there are always >= 2 grid steps
    # (keeps both v7x TensorCores busy on short inputs; harmless on v5e/v6e).
    tf = int(min(tile_frames, max(256, _round_up(-(-rows // 2), 256))))

    # Fold the row padding into extraction: pad the per-batch frame count so
    # B * n_frames_p is an exact multiple of the tile size.
    n_frames_p = _round_up(n_frames, tf // math.gcd(B, tf))
    rows_p = B * n_frames_p
    n_tiles = rows_p // tf

    frames = _extract_frames(y, n_frames_p)                     # (rows_p, N_FFT) bf16

    cost = pl.CostEstimate(
        flops=2 * rows_p * N_FFT * (2 * N_FREQ) + 2 * rows_p * N_FREQ * N_MELS,
        transcendentals=rows_p * N_MELS,
        bytes_accessed=(rows_p * N_FFT * 2                              # frames (bf16)
                        + (N_FFT * 2 * N_FREQ + N_FREQ * N_MELS) * 2    # weights (bf16)
                        + N_MELS * rows_p * 4))                         # output (f32)

    out = pl.pallas_call(
        _mel_kernel,
        out_shape=jax.ShapeDtypeStruct((N_MELS, rows_p), jnp.float32),
        grid_spec=pltpu.PrefetchScalarGridSpec(
            num_scalar_prefetch=0,
            grid=(n_tiles,),
            in_specs=[
                pl.BlockSpec((tf, N_FFT), lambda i: (i, 0)),
                _const_weight_spec((N_FFT, 2 * N_FREQ)),
                _const_weight_spec((N_FREQ, N_MELS)),
            ],
            out_specs=pl.BlockSpec((N_MELS, tf), lambda i: (0, i)),
        ),
        compiler_params=pltpu.CompilerParams(
            dimension_semantics=("parallel",),
            # ~16-18 MiB working set at tf=1024; fits v5e/v6e/v7x.  Re-derive
            # before raising tile_frames past 1024 (v7x: 64 MiB physical VMEM).
            vmem_limit_bytes=32 * 1024 * 1024,
        ),
        cost_estimate=cost,
    )(frames, w_cat, mel_t)

    # (N_MELS, rows_p) -> (B, N_MELS, n_frames): leading-axis permute + trailing
    # slice only; the minor-dim transpose already happened inside the kernel.
    out = out.reshape(N_MELS, B, n_frames_p).transpose(1, 0, 2)
    return out[:, :, :n_frames]


if __name__ == "__main__":
    key = jax.random.PRNGKey(0)
    B = 2
    # 48001 samples -> 48000 after pre-emphasis -> 151 frames per batch item
    # (302 frame rows: exercises the multi-tile grid, the >=2-tile clamp and the
    #  folded-in row padding)
    T = HOPSIZE * 150 + 1
    x = jax.random.normal(key, (B, T), dtype=jnp.float32)

    w_cat, mel_t = make_params()
    fwd = jax.jit(augment_mel_stft)
    out = jax.block_until_ready(fwd(x, w_cat, mel_t))

    n_frames = 1 + (T - 1) // HOPSIZE
    assert out.shape == (B, N_MELS, n_frames), out.shape
    assert bool(jnp.all(jnp.isfinite(out)))
    print("KERNEL_OK")
</pallas_src>

<mosaic_0001>
module attributes {stable_mosaic.version = 11 : i64} {
  func.func @_mel_kernel(%arg0: i32, %arg1: memref<256x1024xbf16, #tpu.memory_space<vmem>>, %arg2: memref<1024x1024xbf16, #tpu.memory_space<vmem>>, %arg3: memref<512x128xbf16, #tpu.memory_space<vmem>>, %arg4: memref<128x256xf32, #tpu.memory_space<vmem>>) attributes {dimension_semantics = [#tpu.dimension_semantics<parallel>], iteration_bounds = array<i64: 2>, scalar_prefetch = 0 : i64, scratch_operands = 0 : i64, tpu.core_type = #tpu.core_type<tc>, window_params = [{transform_indices = @transform_0, window_bounds = array<i64: 256, 1024>}, {pipeline_mode = #tpu.pipeline_mode<synchronous>, transform_indices = @transform_1, window_bounds = array<i64: 1024, 1024>}, {pipeline_mode = #tpu.pipeline_mode<synchronous>, transform_indices = @transform_2, window_bounds = array<i64: 512, 128>}, {transform_indices = @transform_3, window_bounds = array<i64: 128, 256>}]} {
    %c0 = arith.constant 0 : index
    %c0_0 = arith.constant 0 : index
    %0 = vector.load %arg1[%c0, %c0_0] : memref<256x1024xbf16, #tpu.memory_space<vmem>>, vector<256x1024xbf16>
    %c0_1 = arith.constant 0 : index
    %c0_2 = arith.constant 0 : index
    %1 = vector.load %arg2[%c0_1, %c0_2] : memref<1024x1024xbf16, #tpu.memory_space<vmem>>, vector<1024x1024xbf16>
    %cst = arith.constant dense<0.000000e+00> : vector<256x1024xf32>
    %2 = tpu.matmul %0, %1, %cst {dimension_numbers = #tpu.dot_dimension_numbers<[1], [0], [0], [1], [0, 0, 1, 1], [], []>} : vector<256x1024xbf16>, vector<1024x1024xbf16>, vector<256x1024xf32> -> vector<256x1024xf32>
    %3 = vector.extract_strided_slice %2 {offsets = [0, 0], sizes = [256, 512], strides = [1, 1]} : vector<256x1024xf32> to vector<256x512xf32>
    %4 = arith.mulf %3, %3 : vector<256x512xf32>
    %5 = vector.extract_strided_slice %2 {offsets = [0, 512], sizes = [256, 512], strides = [1, 1]} : vector<256x1024xf32> to vector<256x512xf32>
    %6 = arith.mulf %5, %5 : vector<256x512xf32>
    %7 = arith.addf %4, %6 : vector<256x512xf32>
    %8 = arith.truncf %7 : vector<256x512xf32> to vector<256x512xbf16>
    %c0_3 = arith.constant 0 : index
    %c0_4 = arith.constant 0 : index
    %9 = vector.load %arg3[%c0_3, %c0_4] : memref<512x128xbf16, #tpu.memory_space<vmem>>, vector<512x128xbf16>
    %cst_5 = arith.constant dense<0.000000e+00> : vector<256x128xf32>
    %10 = tpu.matmul %8, %9, %cst_5 {dimension_numbers = #tpu.dot_dimension_numbers<[1], [0], [0], [1], [0, 0, 1, 1], [], []>} : vector<256x512xbf16>, vector<512x128xbf16>, vector<256x128xf32> -> vector<256x128xf32>
    %cst_6 = arith.constant 9.99999974E-6 : f32
    %11 = vector.broadcast %cst_6 : f32 to vector<256x128xf32>
    %12 = arith.addf %10, %11 : vector<256x128xf32>
    %13 = math.log %12 : vector<256x128xf32>
    %cst_7 = arith.constant 4.500000e+00 : f32
    %14 = vector.broadcast %cst_7 : f32 to vector<256x128xf32>
    %15 = arith.addf %13, %14 : vector<256x128xf32>
    %cst_8 = arith.constant 2.000000e-01 : f32
    %16 = vector.broadcast %cst_8 : f32 to vector<256x128xf32>
    %17 = arith.mulf %15, %16 : vector<256x128xf32>
    %18 = tpu.transpose %17, [1, 0] : vector<256x128xf32> -> vector<128x256xf32>
    %c0_9 = arith.constant 0 : index
    %c0_10 = arith.constant 0 : index
    %19 = vector.load %arg4[%c0_9, %c0_10] : memref<128x256xf32, #tpu.memory_space<vmem>>, vector<128x256xf32>
    tpu.vector_store %arg4[%c0_9, %c0_10], %18 {strides = array<i32>} : memref<128x256xf32, #tpu.memory_space<vmem>>, vector<128x256xf32>,
    return
  }
  func.func @transform_0(%arg0: i32) -> (i32, i32) {
    %c0_i32 = arith.constant 0 : i32
    %c0_i32_0 = arith.constant 0 : i32
    return %arg0, %c0_i32 : i32, i32
  }
  func.func @transform_1(%arg0: i32) -> (i32, i32) {
    %c0_i32 = arith.constant 0 : i32
    %c0_i32_0 = arith.constant 0 : i32
    %c0_i32_1 = arith.constant 0 : i32
    return %c0_i32, %c0_i32_0 : i32, i32
  }
  func.func @transform_2(%arg0: i32) -> (i32, i32) {
    %c0_i32 = arith.constant 0 : i32
    %c0_i32_0 = arith.constant 0 : i32
    %c0_i32_1 = arith.constant 0 : i32
    return %c0_i32, %c0_i32_0 : i32, i32
  }
  func.func @transform_3(%arg0: i32) -> (i32, i32) {
    %c0_i32 = arith.constant 0 : i32
    %c0_i32_0 = arith.constant 0 : i32
    return %c0_i32, %arg0 : i32, i32
  }
}

</mosaic_0001>

<llo_original>
// kernel: augment_mel_stft.1
$region0: #{augment_mel_stft.1}
  #allocation0 [shape = 'u32[]', space=smem, size = 0x4, offset = 0x4, fixed_abs, tag = 'smem constant byte address 0x4 - core index']
  #allocation1 [shape = 'u32[144,128]{1,0:T(1,128)}', space=vmem, size = 0x12000, scoped, tag = 'internal scratch']
  %s0 = inlined_call_operand.vmem [shape: bf16[512,1024], index: 0, kind: input, shape index: {}]
  %s1 = inlined_call_operand.vmem [shape: bf16[1024,1024], index: 1, kind: input, shape index: {}]
  %s2 = inlined_call_operand.vmem [shape: bf16[512,128], index: 2, kind: input, shape index: {}]
  %s3 = inlined_call_operand.vmem [shape: f32[128,512], index: 3, kind: output, shape index: {}]
  %s4 = sld [smem:[#allocation0]]
  $region64: #{augment_mel_stft.1} parent=0
    _
  %s6 = ssub.s32 1, %s4
  %s7 = scalar_select 0, %s6, %s4
  $region1: #{augment_mel_stft.1} parent=0
    #allocation2 [shape = 'u8[262144]{0}', space=vmem, size = 0x40000, scoped, tag = 'output window, operand 0']
    loop: start=0, step=1, limit=4
    $region2: #{augment_mel_stft.1} parent=1 // loop_pre_header
      _
    $region3: #{augment_mel_stft.1} parent=1 // loop_header
      %s9 = sphi 0, %s13
      %p10 = scmp.ge.s32.totalorder %s9, 4
      %s19 = sphi 0, %s21
      %s22 = sphi 0, %s19
      %s23 = sphi 0, %s22
      %s39 = sphi 0, %s23
      %s43 = sphi 0, %s43
      %s45 = sphi 0, %s43
      %s46 = sphi 0, %s45
      %s60 = sphi 0, %s46
      %s64 = sphi 0, %s64
      %s66 = sphi 0, %s64
      %s67 = sphi 0, %s66
      %s81 = sphi 0, %s67
      %s87 = sphi 0, %s89
      %s90 = sphi 0, %s87
      %s91 = sphi 0, %s90
      %s107 = sphi 0, %s91
    $region4: #{augment_mel_stft.1} parent=1 // loop_header_branch
      %12 = sbr.rel (%p10) target = $region8
    $region5: #{augment_mel_stft.1} parent=1 // loop_body
      %s14 = ssub.s32 %s9, 1
      %s15 = ssub.s32 %s9, 2
      %s16 = sadd.s32 %s9, 1
      %s17 = ssub.s32 %s9, %s16
      %p18 = scmp.eq.s32.totalorder %s17, 0
      %s20 = sadd.s32 %s19, 1
      %s21 = scalar_select %p18, %s19, %s20
      %p24 = pneg %p18
      %p25 = scmp.eq.s32.totalorder %s9, 1
      %p26 = por %p24, %p25
      %p27 = scmp.ne.s32.totalorder %s19, %s22
      %p28 = scmp.eq.s32.totalorder %s9, 0
      %p29 = por %p27, %p28
      %p30 = scmp.ne.s32.totalorder %s19, %s22
      %p31 = scmp.eq.s32.totalorder %s14, 1
      %p32 = por %p30, %p31
      %p33 = scmp.ne.s32.totalorder %s22, %s23
      %p34 = scmp.eq.s32.totalorder %s14, 0
      %p35 = por %p33, %p34
      %p36 = scmp.ne.s32.totalorder %s22, %s23
      %p37 = scmp.eq.s32.totalorder %s15, 1
      %p38 = por %p36, %p37
      %p40 = scmp.ne.s32.totalorder %s23, %s39
      %p41 = scmp.eq.s32.totalorder %s15, 0
      %p42 = por %p40, %p41
      %s44 = sadd.s32 %s43, 1
      %p47 = scmp.eq.s32.totalorder %s9, 1
      %p48 = scmp.ne.s32.totalorder %s43, %s45
      %p49 = scmp.eq.s32.totalorder %s9, 0
      %p50 = por %p48, %p49
      %p51 = scmp.ne.s32.totalorder %s43, %s45
      %p52 = scmp.eq.s32.totalorder %s14, 1
      %p53 = por %p51, %p52
      %p54 = scmp.ne.s32.totalorder %s45, %s46
      %p55 = scmp.eq.s32.totalorder %s14, 0
      %p56 = por %p54, %p55
      %p57 = scmp.ne.s32.totalorder %s45, %s46
      %p58 = scmp.eq.s32.totalorder %s15, 1
      %p59 = por %p57, %p58
      %p61 = scmp.ne.s32.totalorder %s46, %s60
      %p62 = scmp.eq.s32.totalorder %s15, 0
      %p63 = por %p61, %p62
      %s65 = sadd.s32 %s64, 1
      %p68 = scmp.eq.s32.totalorder %s9, 1
      %p69 = scmp.ne.s32.totalorder %s64, %s66
      %p70 = scmp.eq.s32.totalorder %s9, 0
      %p71 = por %p69, %p70
      %p72 = scmp.ne.s32.totalorder %s64, %s66
      %p73 = scmp.eq.s32.totalorder %s14, 1
      %p74 = por %p72, %p73
      %p75 = scmp.ne.s32.totalorder %s66, %s67
      %p76 = scmp.eq.s32.totalorder %s14, 0
      %p77 = por %p75, %p76
      %p78 = scmp.ne.s32.totalorder %s66, %s67
      %p79 = scmp.eq.s32.totalorder %s15, 1
      %p80 = por %p78, %p79
      %p82 = scmp.ne.s32.totalorder %s67, %s81
      %p83 = scmp.eq.s32.totalorder %s15, 0
      %p84 = por %p82, %p83
      %s85 = ssub.s32 %s9, %s16
      %p86 = scmp.eq.s32.totalorder %s85, 0
      %s88 = sadd.s32 %s87, 1
      %s89 = scalar_select %p86, %s87, %s88
      %p92 = pneg %p86
      %p93 = scmp.eq.s32.totalorder %s9, 1
      %p94 = por %p92, %p93
      %p95 = scmp.ne.s32.totalorder %s87, %s90
      %p96 = scmp.eq.s32.totalorder %s9, 0
      %p97 = por %p95, %p96
      %p98 = scmp.ne.s32.totalorder %s87, %s90
      %p99 = scmp.eq.s32.totalorder %s14, 1
      %p100 = por %p98, %p99
      %p101 = scmp.ne.s32.totalorder %s90, %s91
      %p102 = scmp.eq.s32.totalorder %s14, 0
      %p103 = por %p101, %p102
      %p104 = scmp.ne.s32.totalorder %s90, %s91
      %p105 = scmp.eq.s32.totalorder %s15, 1
      %p106 = por %p104, %p105
      %p108 = scmp.ne.s32.totalorder %s91, %s107
      %p109 = scmp.eq.s32.totalorder %s15, 0
      %p110 = por %p108, %p109
      %p111 = scmp.le.s32.totalorder 1, %s9
      %p112 = scmp.lt.s32.totalorder %s9, 3
      %p113 = pnand %p111, %p112
      %p114 = pneg %p113
      // Predicated region
      $region9: #{augment_mel_stft.1} parent=5 // pred_check
        _
      $region10: #{augment_mel_stft.1} parent=5 // pred_check_branch
        %116 = sbr.rel (%p113) target = $region12
      $region11: #{augment_mel_stft.1} parent=5 // pred_region
        %s117 = ssub.s32 %s9, 1
        // Predicated region
        $region13: #{augment_mel_stft.1} parent=11 // pred_check
          %p118 = pneg %p56
        $region14: #{augment_mel_stft.1} parent=11 // pred_check_branch
          %120 = sbr.rel (%p118) target = $region16
        $region15: #{augment_mel_stft.1} parent=11 // pred_region
          _
        $region16: #{augment_mel_stft.1} parent=11 // pred_fallthru
          _
        // Predicated region
        $region17: #{augment_mel_stft.1} parent=11 // pred_check
          %p121 = pneg %p77
        $region18: #{augment_mel_stft.1} parent=11 // pred_check_branch
          %123 = sbr.rel (%p121) target = $region20
        $region19: #{augment_mel_stft.1} parent=11 // pred_region
          _
        $region20: #{augment_mel_stft.1} parent=11 // pred_fallthru
          _
      $region12: #{augment_mel_stft.1} parent=5 // pred_fallthru
        _
      %p124 = scmp.lt.s32.totalorder %s9, 2
      // Predicated region
      $region21: #{augment_mel_stft.1} parent=5 // pred_check
        %p125 = pneg %p124
      $region22: #{augment_mel_stft.1} parent=5 // pred_check_branch
        %127 = sbr.rel (%p125) target = $region24
      $region23: #{augment_mel_stft.1} parent=5 // pred_region
        // Predicated region
        $region25: #{augment_mel_stft.1} parent=23 // pred_check
          %p128 = pneg %p29
        $region26: #{augment_mel_stft.1} parent=23 // pred_check_branch
          %130 = sbr.rel (%p128) target = $region28
        $region27: #{augment_mel_stft.1} parent=23 // pred_region
          %s131 = smul.u32 32, %s9
          %p132 = scmp.lt.s32.totalorder %s131, 63
          %s133 = scalar_select %p132, %s131, 63
          %s134 = smul.addr %s133, 8
          %s135 = smul.addr %s134, 4
          %s136 = scalar_lea.vmem %s0, %s135
          %s137 = smul.u32 32, %s9
        $region28: #{augment_mel_stft.1} parent=23 // pred_fallthru
          _
      $region24: #{augment_mel_stft.1} parent=5 // pred_fallthru
        _
      %p138 = scmp.le.s32.totalorder 1, %s9
      %p139 = scmp.lt.s32.totalorder %s9, 3
      %p140 = pnand %p138, %p139
      %p141 = pneg %p140
      // Predicated region
      $region29: #{augment_mel_stft.1} parent=5 // pred_check
        _
      $region30: #{augment_mel_stft.1} parent=5 // pred_check_branch
        %143 = sbr.rel (%p140) target = $region32
      $region31: #{augment_mel_stft.1} parent=5 // pred_region
        %s144 = ssub.s32 %s9, 1
        %s145 = smul.u32 32, %s14
        %p146 = scmp.lt.s32.totalorder %s145, 63
        %s147 = scalar_select %p146, %s145, 63
        %s148 = smul.addr %s147, 8
        %s149 = smul.addr %s148, 4
        %s150 = scalar_lea.vmem %s0, %s149
        %p151 = pneg %p35
        %p152 = pneg %p32
        %p153 = pneg %p56
        %p154 = pneg %p53
        %p155 = pneg %p77
        %p156 = pneg %p74
        %p157 = pneg %p103
        %p158 = pneg %p100
        %s159 = sand.u32 %s90, 1
        %s160 = sand.u32 %s90, 1
        %s161 = smul.addr %s160, 256
        %s162 = scalar_lea.vmem [#allocation2], %s161
        %s163 = smul.u32 32, %s14
        %p164 = scmp.lt.s32.totalorder %s163, 63
        %s165 = scalar_select %p164, %s163, 63
        %s166 = smul.addr %s165, 8
        %s167 = smul.addr %s166, 4
        %s168 = scalar_lea.vmem %s0, %s167
        %s169 = smul.u32 32, %s14
        %s170 = smul.u32 2, %s14
        %v172 = vld [vmem:[%s168] sm:$0xff]
        %v173 = vld [vmem:[%s168 + $0x8] sm:$0xff]
        %v174 = vld [vmem:[%s168 + $0x10] sm:$0xff]
        %v175 = vld [vmem:[%s168 + $0x18] sm:$0xff]
        %v176 = vld [vmem:[%s168 + $0x20] sm:$0xff]
        %v177 = vld [vmem:[%s168 + $0x28] sm:$0xff]
        %v178 = vld [vmem:[%s168 + $0x30] sm:$0xff]
        %v179 = vld [vmem:[%s168 + $0x38] sm:$0xff]
        %v180 = vld [vmem:[%s168 + $0x40] sm:$0xff]
        %v181 = vld [vmem:[%s168 + $0x48] sm:$0xff]
        %v182 = vld [vmem:[%s168 + $0x50] sm:$0xff]
        %v183 = vld [vmem:[%s168 + $0x58] sm:$0xff]
        %v184 = vld [vmem:[%s168 + $0x60] sm:$0xff]
        %v185 = vld [vmem:[%s168 + $0x68] sm:$0xff]
        %v186 = vld [vmem:[%s168 + $0x70] sm:$0xff]
        %v187 = vld [vmem:[%s168 + $0x78] sm:$0xff]
        %v188 = vld [vmem:[%s168 + $0x80] sm:$0xff]
        %v189 = vld [vmem:[%s168 + $0x88] sm:$0xff]
        %v190 = vld [vmem:[%s168 + $0x90] sm:$0xff]
        %v191 = vld [vmem:[%s168 + $0x98] sm:$0xff]
        %v192 = vld [vmem:[%s168 + $0xa0] sm:$0xff]
        %v193 = vld [vmem:[%s168 + $0xa8] sm:$0xff]
        %v194 = vld [vmem:[%s168 + $0xb0] sm:$0xff]
        %v195 = vld [vmem:[%s168 + $0xb8] sm:$0xff]
        %v196 = vld [vmem:[%s168 + $0xc0] sm:$0xff]
        %v197 = vld [vmem:[%s168 + $0xc8] sm:$0xff]
        %v198 = vld [vmem:[%s168 + $0xd0] sm:$0xff]
        %v199 = vld [vmem:[%s168 + $0xd8] sm:$0xff]
        %v200 = vld [vmem:[%s168 + $0xe0] sm:$0xff]
        %v201 = vld [vmem:[%s168 + $0xe8] sm:$0xff]
        %v202 = vld [vmem:[%s168 + $0xf0] sm:$0xff]
        %v203 = vld [vmem:[%s168 + $0xf8] sm:$0xff]
        %v204 = vld [vmem:[%s168 + $0x100] sm:$0xff]
        %v205 = vld [vmem:[%s168 + $0x108] sm:$0xff]
        %v206 = vld [vmem:[%s168 + $0x110] sm:$0xff]
        %v207 = vld [vmem:[%s168 + $0x118] sm:$0xff]
        %v208 = vld [vmem:[%s168 + $0x120] sm:$0xff]
        %v209 = vld [vmem:[%s168 + $0x128] sm:$0xff]
        %v210 = vld [vmem:[%s168 + $0x130] sm:$0xff]
        %v211 = vld [vmem:[%s168 + $0x138] sm:$0xff]
        %v212 = vld [vmem:[%s168 + $0x140] sm:$0xff]
        %v213 = vld [vmem:[%s168 + $0x148] sm:$0xff]
        %v214 = vld [vmem:[%s168 + $0x150] sm:$0xff]
        %v215 = vld [vmem:[%s168 + $0x158] sm:$0xff]
        %v216 = vld [vmem:[%s168 + $0x160] sm:$0xff]
        %v217 = vld [vmem:[%s168 + $0x168] sm:$0xff]
        %v218 = vld [vmem:[%s168 + $0x170] sm:$0xff]
        %v219 = vld [vmem:[%s168 + $0x178] sm:$0xff]
        %v220 = vld [vmem:[%s168 + $0x180] sm:$0xff]
        %v221 = vld [vmem:[%s168 + $0x188] sm:$0xff]
        %v222 = vld [vmem:[%s168 + $0x190] sm:$0xff]
        %v223 = vld [vmem:[%s168 + $0x198] sm:$0xff]
        %v224 = vld [vmem:[%s168 + $0x1a0] sm:$0xff]
        %v225 = vld [vmem:[%s168 + $0x1a8] sm:$0xff]
        %v226 = vld [vmem:[%s168 + $0x1b0] sm:$0xff]
        %v227 = vld [vmem:[%s168 + $0x1b8] sm:$0xff]
        %v228 = vld [vmem:[%s168 + $0x1c0] sm:$0xff]
        %v229 = vld [vmem:[%s168 + $0x1c8] sm:$0xff]
        %v230 = vld [vmem:[%s168 + $0x1d0] sm:$0xff]
        %v231 = vld [vmem:[%s168 + $0x1d8] sm:$0xff]
        %v232 = vld [vmem:[%s168 + $0x1e0] sm:$0xff]
        %v233 = vld [vmem:[%s168 + $0x1e8] sm:$0xff]
        %v234 = vld [vmem:[%s168 + $0x1f0] sm:$0xff]
        %v235 = vld [vmem:[%s168 + $0x1f8] sm:$0xff]
        %v236 = vld [vmem:[%s168 + $0x200] sm:$0xff]
        %v237 = vld [vmem:[%s168 + $0x208] sm:$0xff]
        %v238 = vld [vmem:[%s168 + $0x210] sm:$0xff]
        %v239 = vld [vmem:[%s168 + $0x218] sm:$0xff]
        %v240 = vld [vmem:[%s168 + $0x220] sm:$0xff]
        %v241 = vld [vmem:[%s168 + $0x228] sm:$0xff]
        %v242 = vld [vmem:[%s168 + $0x230] sm:$0xff]
        %v243 = vld [vmem:[%s168 + $0x238] sm:$0xff]
        %v244 = vld [vmem:[%s168 + $0x240] sm:$0xff]
        %v245 = vld [vmem:[%s168 + $0x248] sm:$0xff]
        %v246 = vld [vmem:[%s168 + $0x250] sm:$0xff]
        %v247 = vld [vmem:[%s168 + $0x258] sm:$0xff]
        %v248 = vld [vmem:[%s168 + $0x260] sm:$0xff]
        %v249 = vld [vmem:[%s168 + $0x268] sm:$0xff]
        %v250 = vld [vmem:[%s168 + $0x270] sm:$0xff]
        %v251 = vld [vmem:[%s168 + $0x278] sm:$0xff]
        %v252 = vld [vmem:[%s168 + $0x280] sm:$0xff]
        %v253 = vld [vmem:[%s168 + $0x288] sm:$0xff]
        %v254 = vld [vmem:[%s168 + $0x290] sm:$0xff]
        %v255 = vld [vmem:[%s168 + $0x298] sm:$0xff]
        %v256 = vld [vmem:[%s168 + $0x2a0] sm:$0xff]
        %v257 = vld [vmem:[%s168 + $0x2a8] sm:$0xff]
        %v258 = vld [vmem:[%s168 + $0x2b0] sm:$0xff]
        %v259 = vld [vmem:[%s168 + $0x2b8] sm:$0xff]
        %v260 = vld [vmem:[%s168 + $0x2c0] sm:$0xff]
        %v261 = vld [vmem:[%s168 + $0x2c8] sm:$0xff]
        %v262 = vld [vmem:[%s168 + $0x2d0] sm:$0xff]
        %v263 = vld [vmem:[%s168 + $0x2d8] sm:$0xff]
        %v264 = vld [vmem:[%s168 + $0x2e0] sm:$0xff]
        %v265 = vld [vmem:[%s168 + $0x2e8] sm:$0xff]
        %v266 = vld [vmem:[%s168 + $0x2f0] sm:$0xff]
        %v267 = vld [vmem:[%s168 + $0x2f8] sm:$0xff]
        %v268 = vld [vmem:[%s168 + $0x300] sm:$0xff]
        %v269 = vld [vmem:[%s168 + $0x308] sm:$0xff]
        %v270 = vld [vmem:[%s168 + $0x310] sm:$0xff]
        %v271 = vld [vmem:[%s168 + $0x318] sm:$0xff]
        %v272 = vld [vmem:[%s168 + $0x320] sm:$0xff]
        %v273 = vld [vmem:[%s168 + $0x328] sm:$0xff]
        %v274 = vld [vmem:[%s168 + $0x330] sm:$0xff]
        %v275 = vld [vmem:[%s168 + $0x338] sm:$0xff]
        %v276 = vld [vmem:[%s168 + $0x340] sm:$0xff]
        %v277 = vld [vmem:[%s168 + $0x348] sm:$0xff]
        %v278 = vld [vmem:[%s168 + $0x350] sm:$0xff]
        %v279 = vld [vmem:[%s168 + $0x358] sm:$0xff]
        %v280 = vld [vmem:[%s168 + $0x360] sm:$0xff]
        %v281 = vld [vmem:[%s168 + $0x368] sm:$0xff]
        %v282 = vld [vmem:[%s168 + $0x370] sm:$0xff]
        %v283 = vld [vmem:[%s168 + $0x378] sm:$0xff]
        %v284 = vld [vmem:[%s168 + $0x380] sm:$0xff]
        %v285 = vld [vmem:[%s168 + $0x388] sm:$0xff]
        %v286 = vld [vmem:[%s168 + $0x390] sm:$0xff]
        %v287 = vld [vmem:[%s168 + $0x398] sm:$0xff]
        %v288 = vld [vmem:[%s168 + $0x3a0] sm:$0xff]
        %v289 = vld [vmem:[%s168 + $0x3a8] sm:$0xff]
        %v290 = vld [vmem:[%s168 + $0x3b0] sm:$0xff]
        %v291 = vld [vmem:[%s168 + $0x3b8] sm:$0xff]
        %v292 = vld [vmem:[%s168 + $0x3c0] sm:$0xff]
        %v293 = vld [vmem:[%s168 + $0x3c8] sm:$0xff]
        %v294 = vld [vmem:[%s168 + $0x3d0] sm:$0xff]
        %v295 = vld [vmem:[%s168 + $0x3d8] sm:$0xff]
        %v296 = vld [vmem:[%s168 + $0x3e0] sm:$0xff]
        %v297 = vld [vmem:[%s168 + $0x3e8] sm:$0xff]
        %v298 = vld [vmem:[%s168 + $0x3f0] sm:$0xff]
        %v299 = vld [vmem:[%s168 + $0x3f8] sm:$0xff]
        %v300 = vld [vmem:[%s1] sm:$0xff]
        %v301 = vld [vmem:[%s1 + $0x8] sm:$0xff]
        %v302 = vld [vmem:[%s1 + $0x10] sm:$0xff]
        %v303 = vld [vmem:[%s1 + $0x18] sm:$0xff]
        %v304 = vld [vmem:[%s1 + $0x20] sm:$0xff]
        %v305 = vld [vmem:[%s1 + $0x28] sm:$0xff]
        %v306 = vld [vmem:[%s1 + $0x30] sm:$0xff]
        %v307 = vld [vmem:[%s1 + $0x38] sm:$0xff]
        %v308 = vld [vmem:[%s1 + $0x40] sm:$0xff]
        %v309 = vld [vmem:[%s1 + $0x48] sm:$0xff]
        %v310 = vld [vmem:[%s1 + $0x50] sm:$0xff]
        %v311 = vld [vmem:[%s1 + $0x58] sm:$0xff]
        %v312 = vld [vmem:[%s1 + $0x60] sm:$0xff]
        %v313 = vld [vmem:[%s1 + $0x68] sm:$0xff]
        %v314 = vld [vmem:[%s1 + $0x70] sm:$0xff]
        %v315 = vld [vmem:[%s1 + $0x78] sm:$0xff]
        %v316 = vld [vmem:[%s1 + $0x80] sm:$0xff]
        %v317 = vld [vmem:[%s1 + $0x88] sm:$0xff]
        %v318 = vld [vmem:[%s1 + $0x90] sm:$0xff]
        %v319 = vld [vmem:[%s1 + $0x98] sm:$0xff]
        %v320 = vld [vmem:[%s1 + $0xa0] sm:$0xff]
        %v321 = vld [vmem:[%s1 + $0xa8] sm:$0xff]
        %v322 = vld [vmem:[%s1 + $0xb0] sm:$0xff]
        %v323 = vld [vmem:[%s1 + $0xb8] sm:$0xff]
        %v324 = vld [vmem:[%s1 + $0xc0] sm:$0xff]
        %v325 = vld [vmem:[%s1 + $0xc8] sm:$0xff]
        %v326 = vld [vmem:[%s1 + $0xd0] sm:$0xff]
        %v327 = vld [vmem:[%s1 + $0xd8] sm:$0xff]
        %v328 = vld [vmem:[%s1 + $0xe0] sm:$0xff]
        %v329 = vld [vmem:[%s1 + $0xe8] sm:$0xff]
        %v330 = vld [vmem:[%s1 + $0xf0] sm:$0xff]
        %v331 = vld [vmem:[%s1 + $0xf8] sm:$0xff]
        %v332 = vld [vmem:[%s1 + $0x100] sm:$0xff]
        %v333 = vld [vmem:[%s1 + $0x108] sm:$0xff]
        %v334 = vld [vmem:[%s1 + $0x110] sm:$0xff]
        %v335 = vld [vmem:[%s1 + $0x118] sm:$0xff]
        %v336 = vld [vmem:[%s1 + $0x120] sm:$0xff]
        %v337 = vld [vmem:[%s1 + $0x128] sm:$0xff]
        %v338 = vld [vmem:[%s1 + $0x130] sm:$0xff]
        %v339 = vld [vmem:[%s1 + $0x138] sm:$0xff]
        %v340 = vld [vmem:[%s1 + $0x140] sm:$0xff]
        %v341 = vld [vmem:[%s1 + $0x148] sm:$0xff]
        %v342 = vld [vmem:[%s1 + $0x150] sm:$0xff]
        %v343 = vld [vmem:[%s1 + $0x158] sm:$0xff]
        %v344 = vld [vmem:[%s1 + $0x160] sm:$0xff]
        %v345 = vld [vmem:[%s1 + $0x168] sm:$0xff]
        %v346 = vld [vmem:[%s1 + $0x170] sm:$0xff]
        %v347 = vld [vmem:[%s1 + $0x178] sm:$0xff]
        %v348 = vld [vmem:[%s1 + $0x180] sm:$0xff]
        %v349 = vld [vmem:[%s1 + $0x188] sm:$0xff]
        %v350 = vld [vmem:[%s1 + $0x190] sm:$0xff]
        %v351 = vld [vmem:[%s1 + $0x198] sm:$0xff]
        %v352 = vld [vmem:[%s1 + $0x1a0] sm:$0xff]
        %v353 = vld [vmem:[%s1 + $0x1a8] sm:$0xff]
        %v354 = vld [vmem:[%s1 + $0x1b0] sm:$0xff]
        %v355 = vld [vmem:[%s1 + $0x1b8] sm:$0xff]
        %v356 = vld [vmem:[%s1 + $0x1c0] sm:$0xff]
        %v357 = vld [vmem:[%s1 + $0x1c8] sm:$0xff]
        %v358 = vld [vmem:[%s1 + $0x1d0] sm:$0xff]
        %v359 = vld [vmem:[%s1 + $0x1d8] sm:$0xff]
        %v360 = vld [vmem:[%s1 + $0x1e0] sm:$0xff]
        %v361 = vld [vmem:[%s1 + $0x1e8] sm:$0xff]
        %v362 = vld [vmem:[%s1 + $0x1f0] sm:$0xff]
        %v363 = vld [vmem:[%s1 + $0x1f8] sm:$0xff]
        %v364 = vld [vmem:[%s1 + $0x200] sm:$0xff]
        %v365 = vld [vmem:[%s1 + $0x208] sm:$0xff]
        %v366 = vld [vmem:[%s1 + $0x210] sm:$0xff]
        %v367 = vld [vmem:[%s1 + $0x218] sm:$0xff]
        %v368 = vld [vmem:[%s1 + $0x220] sm:$0xff]
        %v369 = vld [vmem:[%s1 + $0x228] sm:$0xff]
        %v370 = vld [vmem:[%s1 + $0x230] sm:$0xff]
        %v371 = vld [vmem:[%s1 + $0x238] sm:$0xff]
        %v372 = vld [vmem:[%s1 + $0x240] sm:$0xff]
        %v373 = vld [vmem:[%s1 + $0x248] sm:$0xff]
        %v374 = vld [vmem:[%s1 + $0x250] sm:$0xff]
        %v375 = vld [vmem:[%s1 + $0x258] sm:$0xff]
        %v376 = vld [vmem:[%s1 + $0x260] sm:$0xff]
        %v377 = vld [vmem:[%s1 + $0x268] sm:$0xff]
        %v378 = vld [vmem:[%s1 + $0x270] sm:$0xff]
        %v379 = vld [vmem:[%s1 + $0x278] sm:$0xff]
        %v380 = vld [vmem:[%s1 + $0x280] sm:$0xff]
        %v381 = vld [vmem:[%s1 + $0x288] sm:$0xff]
        %v382 = vld [vmem:[%s1 + $0x290] sm:$0xff]
        %v383 = vld [vmem:[%s1 + $0x298] sm:$0xff]
        %v384 = vld [vmem:[%s1 + $0x2a0] sm:$0xff]
        %v385 = vld [vmem:[%s1 + $0x2a8] sm:$0xff]
        %v386 = vld [vmem:[%s1 + $0x2b0] sm:$0xff]
        %v387 = vld [vmem:[%s1 + $0x2b8] sm:$0xff]
        %v388 = vld [vmem:[%s1 + $0x2c0] sm:$0xff]
        %v389 = vld [vmem:[%s1 + $0x2c8] sm:$0xff]
        %v390 = vld [vmem:[%s1 + $0x2d0] sm:$0xff]
        %v391 = vld [vmem:[%s1 + $0x2d8] sm:$0xff]
        %v392 = vld [vmem:[%s1 + $0x2e0] sm:$0xff]
        %v393 = vld [vmem:[%s1 + $0x2e8] sm:$0xff]
        %v394 = vld [vmem:[%s1 + $0x2f0] sm:$0xff]
        %v395 = vld [vmem:[%s1 + $0x2f8] sm:$0xff]
        %v396 = vld [vmem:[%s1 + $0x300] sm:$0xff]
        %v397 = vld [vmem:[%s1 + $0x308] sm:$0xff]
        %v398 = vld [vmem:[%s1 + $0x310] sm:$0xff]
        %v399 = vld [vmem:[%s1 + $0x318] sm:$0xff]
        %v400 = vld [vmem:[%s1 + $0x320] sm:$0xff]
        %v401 = vld [vmem:[%s1 + $0x328] sm:$0xff]
        %v402 = vld [vmem:[%s1 + $0x330] sm:$0xff]
        %v403 = vld [vmem:[%s1 + $0x338] sm:$0xff]
        %v404 = vld [vmem:[%s1 + $0x340] sm:$0xff]
        %v405 = vld [vmem:[%s1 + $0x348] sm:$0xff]
        %v406 = vld [vmem:[%s1 + $0x350] sm:$0xff]
        %v407 = vld [vmem:[%s1 + $0x358] sm:$0xff]
        %v408 = vld [vmem:[%s1 + $0x360] sm:$0xff]
        %v409 = vld [vmem:[%s1 + $0x368] sm:$0xff]
        %v410 = vld [vmem:[%s1 + $0x370] sm:$0xff]
        %v411 = vld [vmem:[%s1 + $0x378] sm:$0xff]
        %v412 = vld [vmem:[%s1 + $0x380] sm:$0xff]
        %v413 = vld [vmem:[%s1 + $0x388] sm:$0xff]
        %v414 = vld [vmem:[%s1 + $0x390] sm:$0xff]
        %v415 = vld [vmem:[%s1 + $0x398] sm:$0xff]
        %v416 = vld [vmem:[%s1 + $0x3a0] sm:$0xff]
        %v417 = vld [vmem:[%s1 + $0x3a8] sm:$0xff]
        %v418 = vld [vmem:[%s1 + $0x3b0] sm:$0xff]
        %v419 = vld [vmem:[%s1 + $0x3b8] sm:$0xff]
        %v420 = vld [vmem:[%s1 + $0x3c0] sm:$0xff]
        %v421 = vld [vmem:[%s1 + $0x3c8] sm:$0xff]
        %v422 = vld [vmem:[%s1 + $0x3d0] sm:$0xff]
        %v423 = vld [vmem:[%s1 + $0x3d8] sm:$0xff]
        %v424 = vld [vmem:[%s1 + $0x3e0] sm:$0xff]
        %v425 = vld [vmem:[%s1 + $0x3e8] sm:$0xff]
        %v426 = vld [vmem:[%s1 + $0x3f0] sm:$0xff]
        %v427 = vld [vmem:[%s1 + $0x3f8] sm:$0xff]
        %v428 = vld [vmem:[%s1 + $0x400] sm:$0xff]
        %v429 = vld [vmem:[%s1 + $0x408] sm:$0xff]
        %v430 = vld [vmem:[%s1 + $0x410] sm:$0xff]
        %v431 = vld [vmem:[%s1 + $0x418] sm:$0xff]
        %v432 = vld [vmem:[%s1 + $0x420] sm:$0xff]
        %v433 = vld [vmem:[%s1 + $0x428] sm:$0xff]
        %v434 = vld [vmem:[%s1 + $0x430] sm:$0xff]
        %v435 = vld [vmem:[%s1 + $0x438] sm:$0xff]
        %v436 = vld [vmem:[%s1 + $0x440] sm:$0xff]
        %v437 = vld [vmem:[%s1 + $0x448] sm:$0xff]
        %v438 = vld [vmem:[%s1 + $0x450] sm:$0xff]
        %v439 = vld [vmem:[%s1 + $0x458] sm:$0xff]
        %v440 = vld [vmem:[%s1 + $0x460] sm:$0xff]
        %v441 = vld [vmem:[%s1 + $0x468] sm:$0xff]
        %v442 = vld [vmem:[%s1 + $0x470] sm:$0xff]
        %v443 = vld [vmem:[%s1 + $0x478] sm:$0xff]
        %v444 = vld [vmem:[%s1 + $0x480] sm:$0xff]
        %v445 = vld [vmem:[%s1 + $0x488] sm:$0xff]
        %v446 = vld [vmem:[%s1 + $0x490] sm:$0xff]
        %v447 = vld [vmem:[%s1 + $0x498] sm:$0xff]
        %v448 = vld [vmem:[%s1 + $0x4a0] sm:$0xff]
        %v449 = vld [vmem:[%s1 + $0x4a8] sm:$0xff]
        %v450 = vld [vmem:[%s1 + $0x4b0] sm:$0xff]
        %v451 = vld [vmem:[%s1 + $0x4b8] sm:$0xff]
        %v452 = vld [vmem:[%s1 + $0x4c0] sm:$0xff]
        %v453 = vld [vmem:[%s1 + $0x4c8] sm:$0xff]
        %v454 = vld [vmem:[%s1 + $0x4d0] sm:$0xff]
        %v455 = vld [vmem:[%s1 + $0x4d8] sm:$0xff]
        %v456 = vld [vmem:[%s1 + $0x4e0] sm:$0xff]
        %v457 = vld [vmem:[%s1 + $0x4e8] sm:$0xff]
        %v458 = vld [vmem:[%s1 + $0x4f0] sm:$0xff]
        %v459 = vld [vmem:[%s1 + $0x4f8] sm:$0xff]
        %v460 = vld [vmem:[%s1 + $0x500] sm:$0xff]
        %v461 = vld [vmem:[%s1 + $0x508] sm:$0xff]
        %v462 = vld [vmem:[%s1 + $0x510] sm:$0xff]
        %v463 = vld [vmem:[%s1 + $0x518] sm:$0xff]
        %v464 = vld [vmem:[%s1 + $0x520] sm:$0xff]
        %v465 = vld [vmem:[%s1 + $0x528] sm:$0xff]
        %v466 = vld [vmem:[%s1 + $0x530] sm:$0xff]
        %v467 = vld [vmem:[%s1 + $0x538] sm:$0xff]
        %v468 = vld [vmem:[%s1 + $0x540] sm:$0xff]
        %v469 = vld [vmem:[%s1 + $0x548] sm:$0xff]
        %v470 = vld [vmem:[%s1 + $0x550] sm:$0xff]
        %v471 = vld [vmem:[%s1 + $0x558] sm:$0xff]
        %v472 = vld [vmem:[%s1 + $0x560] sm:$0xff]
        %v473 = vld [vmem:[%s1 + $0x568] sm:$0xff]
        %v474 = vld [vmem:[%s1 + $0x570] sm:$0xff]
        %v475 = vld [vmem:[%s1 + $0x578] sm:$0xff]
        %v476 = vld [vmem:[%s1 + $0x580] sm:$0xff]
        %v477 = vld [vmem:[%s1 + $0x588] sm:$0xff]
        %v478 = vld [vmem:[%s1 + $0x590] sm:$0xff]
        %v479 = vld [vmem:[%s1 + $0x598] sm:$0xff]
        %v480 = vld [vmem:[%s1 + $0x5a0] sm:$0xff]
        %v481 = vld [vmem:[%s1 + $0x5a8] sm:$0xff]
        %v482 = vld [vmem:[%s1 + $0x5b0] sm:$0xff]
        %v483 = vld [vmem:[%s1 + $0x5b8] sm:$0xff]
        %v484 = vld [vmem:[%s1 + $0x5c0] sm:$0xff]
        %v485 = vld [vmem:[%s1 + $0x5c8] sm:$0xff]
        %v486 = vld [vmem:[%s1 + $0x5d0] sm:$0xff]
        %v487 = vld [vmem:[%s1 + $0x5d8] sm:$0xff]
        %v488 = vld [vmem:[%s1 + $0x5e0] sm:$0xff]
        %v489 = vld [vmem:[%s1 + $0x5e8] sm:$0xff]
        %v490 = vld [vmem:[%s1 + $0x5f0] sm:$0xff]
        %v491 = vld [vmem:[%s1 + $0x5f8] sm:$0xff]
        %v492 = vld [vmem:[%s1 + $0x600] sm:$0xff]
        %v493 = vld [vmem:[%s1 + $0x608] sm:$0xff]
        %v494 = vld [vmem:[%s1 + $0x610] sm:$0xff]
        %v495 = vld [vmem:[%s1 + $0x618] sm:$0xff]
        %v496 = vld [vmem:[%s1 + $0x620] sm:$0xff]
        %v497 = vld [vmem:[%s1 + $0x628] sm:$0xff]
        %v498 = vld [vmem:[%s1 + $0x630] sm:$0xff]
        %v499 = vld [vmem:[%s1 + $0x638] sm:$0xff]
        %v500 = vld [vmem:[%s1 + $0x640] sm:$0xff]
        %v501 = vld [vmem:[%s1 + $0x648] sm:$0xff]
        %v502 = vld [vmem:[%s1 + $0x650] sm:$0xff]
        %v503 = vld [vmem:[%s1 + $0x658] sm:$0xff]
        %v504 = vld [vmem:[%s1 + $0x660] sm:$0xff]
        %v505 = vld [vmem:[%s1 + $0x668] sm:$0xff]
        %v506 = vld [vmem:[%s1 + $0x670] sm:$0xff]
        %v507 = vld [vmem:[%s1 + $0x678] sm:$0xff]
        %v508 = vld [vmem:[%s1 + $0x680] sm:$0xff]
        %v509 = vld [vmem:[%s1 + $0x688] sm:$0xff]
        %v510 = vld [vmem:[%s1 + $0x690] sm:$0xff]
        %v511 = vld [vmem:[%s1 + $0x698] sm:$0xff]
        %v512 = vld [vmem:[%s1 + $0x6a0] sm:$0xff]
        %v513 = vld [vmem:[%s1 + $0x6a8] sm:$0xff]
        %v514 = vld [vmem:[%s1 + $0x6b0] sm:$0xff]
        %v515 = vld [vmem:[%s1 + $0x6b8] sm:$0xff]
        %v516 = vld [vmem:[%s1 + $0x6c0] sm:$0xff]
        %v517 = vld [vmem:[%s1 + $0x6c8] sm:$0xff]
        %v518 = vld [vmem:[%s1 + $0x6d0] sm:$0xff]
        %v519 = vld [vmem:[%s1 + $0x6d8] sm:$0xff]
        %v520 = vld [vmem:[%s1 + $0x6e0] sm:$0xff]
        %v521 = vld [vmem:[%s1 + $0x6e8] sm:$0xff]
        %v522 = vld [vmem:[%s1 + $0x6f0] sm:$0xff]
        %v523 = vld [vmem:[%s1 + $0x6f8] sm:$0xff]
        %v524 = vld [vmem:[%s1 + $0x700] sm:$0xff]
        %v525 = vld [vmem:[%s1 + $0x708] sm:$0xff]
        %v526 = vld [vmem:[%s1 + $0x710] sm:$0xff]
        %v527 = vld [vmem:[%s1 + $0x718] sm:$0xff]
        %v528 = vld [vmem:[%s1 + $0x720] sm:$0xff]
        %v529 = vld [vmem:[%s1 + $0x728] sm:$0xff]
        %v530 = vld [vmem:[%s1 + $0x730] sm:$0xff]
        %v531 = vld [vmem:[%s1 + $0x738] sm:$0xff]
        %v532 = vld [vmem:[%s1 + $0x740] sm:$0xff]
        %v533 = vld [vmem:[%s1 + $0x748] sm:$0xff]
        %v534 = vld [vmem:[%s1 + $0x750] sm:$0xff]
        %v535 = vld [vmem:[%s1 + $0x758] sm:$0xff]
        %v536 = vld [vmem:[%s1 + $0x760] sm:$0xff]
        %v537 = vld [vmem:[%s1 + $0x768] sm:$0xff]
        %v538 = vld [vmem:[%s1 + $0x770] sm:$0xff]
        %v539 = vld [vmem:[%s1 + $0x778] sm:$0xff]
        %v540 = vld [vmem:[%s1 + $0x780] sm:$0xff]
        %v541 = vld [vmem:[%s1 + $0x788] sm:$0xff]
        %v542 = vld [vmem:[%s1 + $0x790] sm:$0xff]
        %v543 = vld [vmem:[%s1 + $0x798] sm:$0xff]
        %v544 = vld [vmem:[%s1 + $0x7a0] sm:$0xff]
        %v545 = vld [vmem:[%s1 + $0x7a8] sm:$0xff]
        %v546 = vld [vmem:[%s1 + $0x7b0] sm:$0xff]
        %v547 = vld [vmem:[%s1 + $0x7b8] sm:$0xff]
        %v548 = vld [vmem:[%s1 + $0x7c0] sm:$0xff]
        %v549 = vld [vmem:[%s1 + $0x7c8] sm:$0xff]
        %v550 = vld [vmem:[%s1 + $0x7d0] sm:$0xff]
        %v551 = vld [vmem:[%s1 + $0x7d8] sm:$0xff]
        %v552 = vld [vmem:[%s1 + $0x7e0] sm:$0xff]
        %v553 = vld [vmem:[%s1 + $0x7e8] sm:$0xff]
        %v554 = vld [vmem:[%s1 + $0x7f0] sm:$0xff]
        %v555 = vld [vmem:[%s1 + $0x7f8] sm:$0xff]
        %v556 = vld [vmem:[%s1 + $0x800] sm:$0xff]
        %v557 = vld [vmem:[%s1 + $0x808] sm:$0xff]
        %v558 = vld [vmem:[%s1 + $0x810] sm:$0xff]
        %v559 = vld [vmem:[%s1 + $0x818] sm:$0xff]
        %v560 = vld [vmem:[%s1 + $0x820] sm:$0xff]
        %v561 = vld [vmem:[%s1 + $0x828] sm:$0xff]
        %v562 = vld [vmem:[%s1 + $0x830] sm:$0xff]
        %v563 = vld [vmem:[%s1 + $0x838] sm:$0xff]
        %v564 = vld [vmem:[%s1 + $0x840] sm:$0xff]
        %v565 = vld [vmem:[%s1 + $0x848] sm:$0xff]
        %v566 = vld [vmem:[%s1 + $0x850] sm:$0xff]
        %v567 = vld [vmem:[%s1 + $0x858] sm:$0xff]
        %v568 = vld [vmem:[%s1 + $0x860] sm:$0xff]
        %v569 = vld [vmem:[%s1 + $0x868] sm:$0xff]
        %v570 = vld [vmem:[%s1 + $0x870] sm:$0xff]
        %v571 = vld [vmem:[%s1 + $0x878] sm:$0xff]
        %v572 = vld [vmem:[%s1 + $0x880] sm:$0xff]
        %v573 = vld [vmem:[%s1 + $0x888] sm:$0xff]
        %v574 = vld [vmem:[%s1 + $0x890] sm:$0xff]
        %v575 = vld [vmem:[%s1 + $0x898] sm:$0xff]
        %v576 = vld [vmem:[%s1 + $0x8a0] sm:$0xff]
        %v577 = vld [vmem:[%s1 + $0x8a8] sm:$0xff]
        %v578 = vld [vmem:[%s1 + $0x8b0] sm:$0xff]
        %v579 = vld [vmem:[%s1 + $0x8b8] sm:$0xff]
        %v580 = vld [vmem:[%s1 + $0x8c0] sm:$0xff]
        %v581 = vld [vmem:[%s1 + $0x8c8] sm:$0xff]
        %v582 = vld [vmem:[%s1 + $0x8d0] sm:$0xff]
        %v583 = vld [vmem:[%s1 + $0x8d8] sm:$0xff]
        %v584 = vld [vmem:[%s1 + $0x8e0] sm:$0xff]
        %v585 = vld [vmem:[%s1 + $0x8e8] sm:$0xff]
        %v586 = vld [vmem:[%s1 + $0x8f0] sm:$0xff]
        %v587 = vld [vmem:[%s1 + $0x8f8] sm:$0xff]
        %v588 = vld [vmem:[%s1 + $0x900] sm:$0xff]
        %v589 = vld [vmem:[%s1 + $0x908] sm:$0xff]
        %v590 = vld [vmem:[%s1 + $0x910] sm:$0xff]
        %v591 = vld [vmem:[%s1 + $0x918] sm:$0xff]
        %v592 = vld [vmem:[%s1 + $0x920] sm:$0xff]
        %v593 = vld [vmem:[%s1 + $0x928] sm:$0xff]
        %v594 = vld [vmem:[%s1 + $0x930] sm:$0xff]
        %v595 = vld [vmem:[%s1 + $0x938] sm:$0xff]
        %v596 = vld [vmem:[%s1 + $0x940] sm:$0xff]
        %v597 = vld [vmem:[%s1 + $0x948] sm:$0xff]
        %v598 = vld [vmem:[%s1 + $0x950] sm:$0xff]
        %v599 = vld [vmem:[%s1 + $0x958] sm:$0xff]
        %v600 = vld [vmem:[%s1 + $0x960] sm:$0xff]
        %v601 = vld [vmem:[%s1 + $0x968] sm:$0xff]
        %v602 = vld [vmem:[%s1 + $0x970] sm:$0xff]
        %v603 = vld [vmem:[%s1 + $0x978] sm:$0xff]
        %v604 = vld [vmem:[%s1 + $0x980] sm:$0xff]
        %v605 = vld [vmem:[%s1 + $0x988] sm:$0xff]
        %v606 = vld [vmem:[%s1 + $0x990] sm:$0xff]
        %v607 = vld [vmem:[%s1 + $0x998] sm:$0xff]
        %v608 = vld [vmem:[%s1 + $0x9a0] sm:$0xff]
        %v609 = vld [vmem:[%s1 + $0x9a8] sm:$0xff]
        %v610 = vld [vmem:[%s1 + $0x9b0] sm:$0xff]
        %v611 = vld [vmem:[%s1 + $0x9b8] sm:$0xff]
        %v612 = vld [vmem:[%s1 + $0x9c0] sm:$0xff]
        %v613 = vld [vmem:[%s1 + $0x9c8] sm:$0xff]
        %v614 = vld [vmem:[%s1 + $0x9d0] sm:$0xff]
        %v615 = vld [vmem:[%s1 + $0x9d8] sm:$0xff]
        %v616 = vld [vmem:[%s1 + $0x9e0] sm:$0xff]
        %v617 = vld [vmem:[%s1 + $0x9e8] sm:$0xff]
        %v618 = vld [vmem:[%s1 + $0x9f0] sm:$0xff]
        %v619 = vld [vmem:[%s1 + $0x9f8] sm:$0xff]
        %v620 = vld [vmem:[%s1 + $0xa00] sm:$0xff]
        %v621 = vld [vmem:[%s1 + $0xa08] sm:$0xff]
        %v622 = vld [vmem:[%s1 + $0xa10] sm:$0xff]
        %v623 = vld [vmem:[%s1 + $0xa18] sm:$0xff]
        %v624 = vld [vmem:[%s1 + $0xa20] sm:$0xff]
        %v625 = vld [vmem:[%s1 + $0xa28] sm:$0xff]
        %v626 = vld [vmem:[%s1 + $0xa30] sm:$0xff]
        %v627 = vld [vmem:[%s1 + $0xa38] sm:$0xff]
        %v628 = vld [vmem:[%s1 + $0xa40] sm:$0xff]
        %v629 = vld [vmem:[%s1 + $0xa48] sm:$0xff]
        %v630 = vld [vmem:[%s1 + $0xa50] sm:$0xff]
        %v631 = vld [vmem:[%s1 + $0xa58] sm:$0xff]
        %v632 = vld [vmem:[%s1 + $0xa60] sm:$0xff]
        %v633 = vld [vmem:[%s1 + $0xa68] sm:$0xff]
        %v634 = vld [vmem:[%s1 + $0xa70] sm:$0xff]
        %v635 = vld [vmem:[%s1 + $0xa78] sm:$0xff]
        %v636 = vld [vmem:[%s1 + $0xa80] sm:$0xff]
        %v637 = vld [vmem:[%s1 + $0xa88] sm:$0xff]
        %v638 = vld [vmem:[%s1 + $0xa90] sm:$0xff]
        %v639 = vld [vmem:[%s1 + $0xa98] sm:$0xff]
        %v640 = vld [vmem:[%s1 + $0xaa0] sm:$0xff]
        %v641 = vld [vmem:[%s1 + $0xaa8] sm:$0xff]
        %v642 = vld [vmem:[%s1 + $0xab0] sm:$0xff]
        %v643 = vld [vmem:[%s1 + $0xab8] sm:$0xff]
        %v644 = vld [vmem:[%s1 + $0xac0] sm:$0xff]
        %v645 = vld [vmem:[%s1 + $0xac8] sm:$0xff]
        %v646 = vld [vmem:[%s1 + $0xad0] sm:$0xff]
        %v647 = vld [vmem:[%s1 + $0xad8] sm:$0xff]
        %v648 = vld [vmem:[%s1 + $0xae0] sm:$0xff]
        %v649 = vld [vmem:[%s1 + $0xae8] sm:$0xff]
        %v650 = vld [vmem:[%s1 + $0xaf0] sm:$0xff]
        %v651 = vld [vmem:[%s1 + $0xaf8] sm:$0xff]
        %v652 = vld [vmem:[%s1 + $0xb00] sm:$0xff]
        %v653 = vld [vmem:[%s1 + $0xb08] sm:$0xff]
        %v654 = vld [vmem:[%s1 + $0xb10] sm:$0xff]
        %v655 = vld [vmem:[%s1 + $0xb18] sm:$0xff]
        %v656 = vld [vmem:[%s1 + $0xb20] sm:$0xff]
        %v657 = vld [vmem:[%s1 + $0xb28] sm:$0xff]
        %v658 = vld [vmem:[%s1 + $0xb30] sm:$0xff]
        %v659 = vld [vmem:[%s1 + $0xb38] sm:$0xff]
        %v660 = vld [vmem:[%s1 + $0xb40] sm:$0xff]
        %v661 = vld [vmem:[%s1 + $0xb48] sm:$0xff]
        %v662 = vld [vmem:[%s1 + $0xb50] sm:$0xff]
        %v663 = vld [vmem:[%s1 + $0xb58] sm:$0xff]
        %v664 = vld [vmem:[%s1 + $0xb60] sm:$0xff]
        %v665 = vld [vmem:[%s1 + $0xb68] sm:$0xff]
        %v666 = vld [vmem:[%s1 + $0xb70] sm:$0xff]
        %v667 = vld [vmem:[%s1 + $0xb78] sm:$0xff]
        %v668 = vld [vmem:[%s1 + $0xb80] sm:$0xff]
        %v669 = vld [vmem:[%s1 + $0xb88] sm:$0xff]
        %v670 = vld [vmem:[%s1 + $0xb90] sm:$0xff]
        %v671 = vld [vmem:[%s1 + $0xb98] sm:$0xff]
        %v672 = vld [vmem:[%s1 + $0xba0] sm:$0xff]
        %v673 = vld [vmem:[%s1 + $0xba8] sm:$0xff]
        %v674 = vld [vmem:[%s1 + $0xbb0] sm:$0xff]
        %v675 = vld [vmem:[%s1 + $0xbb8] sm:$0xff]
        %v676 = vld [vmem:[%s1 + $0xbc0] sm:$0xff]
        %v677 = vld [vmem:[%s1 + $0xbc8] sm:$0xff]
        %v678 = vld [vmem:[%s1 + $0xbd0] sm:$0xff]
        %v679 = vld [vmem:[%s1 + $0xbd8] sm:$0xff]
        %v680 = vld [vmem:[%s1 + $0xbe0] sm:$0xff]
        %v681 = vld [vmem:[%s1 + $0xbe8] sm:$0xff]
        %v682 = vld [vmem:[%s1 + $0xbf0] sm:$0xff]
        %v683 = vld [vmem:[%s1 + $0xbf8] sm:$0xff]
        %v684 = vld [vmem:[%s1 + $0xc00] sm:$0xff]
        %v685 = vld [vmem:[%s1 + $0xc08] sm:$0xff]
        %v686 = vld [vmem:[%s1 + $0xc10] sm:$0xff]
        %v687 = vld [vmem:[%s1 + $0xc18] sm:$0xff]
        %v688 = vld [vmem:[%s1 + $0xc20] sm:$0xff]
        %v689 = vld [vmem:[%s1 + $0xc28] sm:$0xff]
        %v690 = vld [vmem:[%s1 + $0xc30] sm:$0xff]
        %v691 = vld [vmem:[%s1 + $0xc38] sm:$0xff]
        %v692 = vld [vmem:[%s1 + $0xc40] sm:$0xff]
        %v693 = vld [vmem:[%s1 + $0xc48] sm:$0xff]
        %v694 = vld [vmem:[%s1 + $0xc50] sm:$0xff]
        %v695 = vld [vmem:[%s1 + $0xc58] sm:$0xff]
        %v696 = vld [vmem:[%s1 + $0xc60] sm:$0xff]
        %v697 = vld [vmem:[%s1 + $0xc68] sm:$0xff]
        %v698 = vld [vmem:[%s1 + $0xc70] sm:$0xff]
        %v699 = vld [vmem:[%s1 + $0xc78] sm:$0xff]
        %v700 = vld [vmem:[%s1 + $0xc80] sm:$0xff]
        %v701 = vld [vmem:[%s1 + $0xc88] sm:$0xff]
        %v702 = vld [vmem:[%s1 + $0xc90] sm:$0xff]
        %v703 = vld [vmem:[%s1 + $0xc98] sm:$0xff]
        %v704 = vld [vmem:[%s1 + $0xca0] sm:$0xff]
        %v705 = vld [vmem:[%s1 + $0xca8] sm:$0xff]
        %v706 = vld [vmem:[%s1 + $0xcb0] sm:$0xff]
        %v707 = vld [vmem:[%s1 + $0xcb8] sm:$0xff]
        %v708 = vld [vmem:[%s1 + $0xcc0] sm:$0xff]
        %v709 = vld [vmem:[%s1 + $0xcc8] sm:$0xff]
        %v710 = vld [vmem:[%s1 + $0xcd0] sm:$0xff]
        %v711 = vld [vmem:[%s1 + $0xcd8] sm:$0xff]
        %v712 = vld [vmem:[%s1 + $0xce0] sm:$0xff]
        %v713 = vld [vmem:[%s1 + $0xce8] sm:$0xff]
        %v714 = vld [vmem:[%s1 + $0xcf0] sm:$0xff]
        %v715 = vld [vmem:[%s1 + $0xcf8] sm:$0xff]
        %v716 = vld [vmem:[%s1 + $0xd00] sm:$0xff]
        %v717 = vld [vmem:[%s1 + $0xd08] sm:$0xff]
        %v718 = vld [vmem:[%s1 + $0xd10] sm:$0xff]
        %v719 = vld [vmem:[%s1 + $0xd18] sm:$0xff]
        %v720 = vld [vmem:[%s1 + $0xd20] sm:$0xff]
        %v721 = vld [vmem:[%s1 + $0xd28] sm:$0xff]
        %v722 = vld [vmem:[%s1 + $0xd30] sm:$0xff]
        %v723 = vld [vmem:[%s1 + $0xd38] sm:$0xff]
        %v724 = vld [vmem:[%s1 + $0xd40] sm:$0xff]
        %v725 = vld [vmem:[%s1 + $0xd48] sm:$0xff]
        %v726 = vld [vmem:[%s1 + $0xd50] sm:$0xff]
        %v727 = vld [vmem:[%s1 + $0xd58] sm:$0xff]
        %v728 = vld [vmem:[%s1 + $0xd60] sm:$0xff]
        %v729 = vld [vmem:[%s1 + $0xd68] sm:$0xff]
        %v730 = vld [vmem:[%s1 + $0xd70] sm:$0xff]
        %v731 = vld [vmem:[%s1 + $0xd78] sm:$0xff]
        %v732 = vld [vmem:[%s1 + $0xd80] sm:$0xff]
        %v733 = vld [vmem:[%s1 + $0xd88] sm:$0xff]
        %v734 = vld [vmem:[%s1 + $0xd90] sm:$0xff]
        %v735 = vld [vmem:[%s1 + $0xd98] sm:$0xff]
        %v736 = vld [vmem:[%s1 + $0xda0] sm:$0xff]
        %v737 = vld [vmem:[%s1 + $0xda8] sm:$0xff]
        %v738 = vld [vmem:[%s1 + $0xdb0] sm:$0xff]
        %v739 = vld [vmem:[%s1 + $0xdb8] sm:$0xff]
        %v740 = vld [vmem:[%s1 + $0xdc0] sm:$0xff]
        %v741 = vld [vmem:[%s1 + $0xdc8] sm:$0xff]
        %v742 = vld [vmem:[%s1 + $0xdd0] sm:$0xff]
        %v743 = vld [vmem:[%s1 + $0xdd8] sm:$0xff]
        %v744 = vld [vmem:[%s1 + $0xde0] sm:$0xff]
        %v745 = vld [vmem:[%s1 + $0xde8] sm:$0xff]
        %v746 = vld [vmem:[%s1 + $0xdf0] sm:$0xff]
        %v747 = vld [vmem:[%s1 + $0xdf8] sm:$0xff]
        %v748 = vld [vmem:[%s1 + $0xe00] sm:$0xff]
        %v749 = vld [vmem:[%s1 + $0xe08] sm:$0xff]
        %v750 = vld [vmem:[%s1 + $0xe10] sm:$0xff]
        %v751 = vld [vmem:[%s1 + $0xe18] sm:$0xff]
        %v752 = vld [vmem:[%s1 + $0xe20] sm:$0xff]
        %v753 = vld [vmem:[%s1 + $0xe28] sm:$0xff]
        %v754 = vld [vmem:[%s1 + $0xe30] sm:$0xff]
        %v755 = vld [vmem:[%s1 + $0xe38] sm:$0xff]
        %v756 = vld [vmem:[%s1 + $0xe40] sm:$0xff]
        %v757 = vld [vmem:[%s1 + $0xe48] sm:$0xff]
        %v758 = vld [vmem:[%s1 + $0xe50] sm:$0xff]
        %v759 = vld [vmem:[%s1 + $0xe58] sm:$0xff]
        %v760 = vld [vmem:[%s1 + $0xe60] sm:$0xff]
        %v761 = vld [vmem:[%s1 + $0xe68] sm:$0xff]
        %v762 = vld [vmem:[%s1 + $0xe70] sm:$0xff]
        %v763 = vld [vmem:[%s1 + $0xe78] sm:$0xff]
        %v764 = vld [vmem:[%s1 + $0xe80] sm:$0xff]
        %v765 = vld [vmem:[%s1 + $0xe88] sm:$0xff]
        %v766 = vld [vmem:[%s1 + $0xe90] sm:$0xff]
        %v767 = vld [vmem:[%s1 + $0xe98] sm:$0xff]
        %v768 = vld [vmem:[%s1 + $0xea0] sm:$0xff]
        %v769 = vld [vmem:[%s1 + $0xea8] sm:$0xff]
        %v770 = vld [vmem:[%s1 + $0xeb0] sm:$0xff]
        %v771 = vld [vmem:[%s1 + $0xeb8] sm:$0xff]
        %v772 = vld [vmem:[%s1 + $0xec0] sm:$0xff]
        %v773 = vld [vmem:[%s1 + $0xec8] sm:$0xff]
        %v774 = vld [vmem:[%s1 + $0xed0] sm:$0xff]
        %v775 = vld [vmem:[%s1 + $0xed8] sm:$0xff]
        %v776 = vld [vmem:[%s1 + $0xee0] sm:$0xff]
        %v777 = vld [vmem:[%s1 + $0xee8] sm:$0xff]
        %v778 = vld [vmem:[%s1 + $0xef0] sm:$0xff]
        %v779 = vld [vmem:[%s1 + $0xef8] sm:$0xff]
        %v780 = vld [vmem:[%s1 + $0xf00] sm:$0xff]
        %v781 = vld [vmem:[%s1 + $0xf08] sm:$0xff]
        %v782 = vld [vmem:[%s1 + $0xf10] sm:$0xff]
        %v783 = vld [vmem:[%s1 + $0xf18] sm:$0xff]
        %v784 = vld [vmem:[%s1 + $0xf20] sm:$0xff]
        %v785 = vld [vmem:[%s1 + $0xf28] sm:$0xff]
        %v786 = vld [vmem:[%s1 + $0xf30] sm:$0xff]
        %v787 = vld [vmem:[%s1 + $0xf38] sm:$0xff]
        %v788 = vld [vmem:[%s1 + $0xf40] sm:$0xff]
        %v789 = vld [vmem:[%s1 + $0xf48] sm:$0xff]
        %v790 = vld [vmem:[%s1 + $0xf50] sm:$0xff]
        %v791 = vld [vmem:[%s1 + $0xf58] sm:$0xff]
        %v792 = vld [vmem:[%s1 + $0xf60] sm:$0xff]
        %v793 = vld [vmem:[%s1 + $0xf68] sm:$0xff]
        %v794 = vld [vmem:[%s1 + $0xf70] sm:$0xff]
        %v795 = vld [vmem:[%s1 + $0xf78] sm:$0xff]
        %v796 = vld [vmem:[%s1 + $0xf80] sm:$0xff]
        %v797 = vld [vmem:[%s1 + $0xf88] sm:$0xff]
        %v798 = vld [vmem:[%s1 + $0xf90] sm:$0xff]
        %v799 = vld [vmem:[%s1 + $0xf98] sm:$0xff]
        %v800 = vld [vmem:[%s1 + $0xfa0] sm:$0xff]
        %v801 = vld [vmem:[%s1 + $0xfa8] sm:$0xff]
        %v802 = vld [vmem:[%s1 + $0xfb0] sm:$0xff]
        %v803 = vld [vmem:[%s1 + $0xfb8] sm:$0xff]
        %v804 = vld [vmem:[%s1 + $0xfc0] sm:$0xff]
        %v805 = vld [vmem:[%s1 + $0xfc8] sm:$0xff]
        %v806 = vld [vmem:[%s1 + $0xfd0] sm:$0xff]
        %v807 = vld [vmem:[%s1 + $0xfd8] sm:$0xff]
        %v808 = vld [vmem:[%s1 + $0xfe0] sm:$0xff]
        %v809 = vld [vmem:[%s1 + $0xfe8] sm:$0xff]
        %v810 = vld [vmem:[%s1 + $0xff0] sm:$0xff]
        %v811 = vld [vmem:[%s1 + $0xff8] sm:$0xff]
        %v940 = vunpack.c.l.b16 %v172
        %v941 = vunpack.c.h.b16 %v172
        %v942 = vunpack.c.l.b16 %v173
        %v943 = vunpack.c.h.b16 %v173
        %v944 = vunpack.c.l.b16 %v174
        %v945 = vunpack.c.h.b16 %v174
        %v946 = vunpack.c.l.b16 %v175
        %v947 = vunpack.c.h.b16 %v175
        %v948 = vunpack.c.l.b16 %v176
        %v949 = vunpack.c.h.b16 %v176
        %v950 = vunpack.c.l.b16 %v177
        %v951 = vunpack.c.h.b16 %v177
        %v952 = vunpack.c.l.b16 %v178
        %v953 = vunpack.c.h.b16 %v178
        %v954 = vunpack.c.l.b16 %v179
        %v955 = vunpack.c.h.b16 %v179
        %v956 = vunpack.c.l.b16 %v180
        %v957 = vunpack.c.h.b16 %v180
        %v958 = vunpack.c.l.b16 %v181
        %v959 = vunpack.c.h.b16 %v181
        %v960 = vunpack.c.l.b16 %v182
        %v961 = vunpack.c.h.b16 %v182
        %v962 = vunpack.c.l.b16 %v183
        %v963 = vunpack.c.h.b16 %v183
        %v964 = vunpack.c.l.b16 %v184
        %v965 = vunpack.c.h.b16 %v184
        %v966 = vunpack.c.l.b16 %v185
        %v967 = vunpack.c.h.b16 %v185
        %v968 = vunpack.c.l.b16 %v186
        %v969 = vunpack.c.h.b16 %v186
        %v970 = vunpack.c.l.b16 %v187
        %v971 = vunpack.c.h.b16 %v187
        %v972 = vunpack.c.l.b16 %v188
        %v973 = vunpack.c.h.b16 %v188
        %v974 = vunpack.c.l.b16 %v189
        %v975 = vunpack.c.h.b16 %v189
        %v976 = vunpack.c.l.b16 %v190
        %v977 = vunpack.c.h.b16 %v190
        %v978 = vunpack.c.l.b16 %v191
        %v979 = vunpack.c.h.b16 %v191
        %v980 = vunpack.c.l.b16 %v192
        %v981 = vunpack.c.h.b16 %v192
        %v982 = vunpack.c.l.b16 %v193
        %v983 = vunpack.c.h.b16 %v193
        %v984 = vunpack.c.l.b16 %v194
        %v985 = vunpack.c.h.b16 %v194
        %v986 = vunpack.c.l.b16 %v195
        %v987 = vunpack.c.h.b16 %v195
        %v988 = vunpack.c.l.b16 %v196
        %v989 = vunpack.c.h.b16 %v196
        %v990 = vunpack.c.l.b16 %v197
        %v991 = vunpack.c.h.b16 %v197
        %v992 = vunpack.c.l.b16 %v198
        %v993 = vunpack.c.h.b16 %v198
        %v994 = vunpack.c.l.b16 %v199
        %v995 = vunpack.c.h.b16 %v199
        %v996 = vunpack.c.l.b16 %v200
        %v997 = vunpack.c.h.b16 %v200
        %v998 = vunpack.c.l.b16 %v201
        %v999 = vunpack.c.h.b16 %v201
        %v1000 = vunpack.c.l.b16 %v202
        %v1001 = vunpack.c.h.b16 %v202
        %v1002 = vunpack.c.l.b16 %v203
        %v1003 = vunpack.c.h.b16 %v203
        %v1004 = vunpack.c.l.b16 %v204
        %v1005 = vunpack.c.h.b16 %v204
        %v1006 = vunpack.c.l.b16 %v205
        %v1007 = vunpack.c.h.b16 %v205
        %v1008 = vunpack.c.l.b16 %v206
        %v1009 = vunpack.c.h.b16 %v206
        %v1010 = vunpack.c.l.b16 %v207
        %v1011 = vunpack.c.h.b16 %v207
        %v1012 = vunpack.c.l.b16 %v208
        %v1013 = vunpack.c.h.b16 %v208
        %v1014 = vunpack.c.l.b16 %v209
        %v1015 = vunpack.c.h.b16 %v209
        %v1016 = vunpack.c.l.b16 %v210
        %v1017 = vunpack.c.h.b16 %v210
        %v1018 = vunpack.c.l.b16 %v211
        %v1019 = vunpack.c.h.b16 %v211
        %v1020 = vunpack.c.l.b16 %v212
        %v1021 = vunpack.c.h.b16 %v212
        %v1022 = vunpack.c.l.b16 %v213
        %v1023 = vunpack.c.h.b16 %v213
        %v1024 = vunpack.c.l.b16 %v214
        %v1025 = vunpack.c.h.b16 %v214
        %v1026 = vunpack.c.l.b16 %v215
        %v1027 = vunpack.c.h.b16 %v215
        %v1028 = vunpack.c.l.b16 %v216
        %v1029 = vunpack.c.h.b16 %v216
        %v1030 = vunpack.c.l.b16 %v217
        %v1031 = vunpack.c.h.b16 %v217
        %v1032 = vunpack.c.l.b16 %v218
        %v1033 = vunpack.c.h.b16 %v218
        %v1034 = vunpack.c.l.b16 %v219
        %v1035 = vunpack.c.h.b16 %v219
        %v1036 = vunpack.c.l.b16 %v220
        %v1037 = vunpack.c.h.b16 %v220
        %v1038 = vunpack.c.l.b16 %v221
        %v1039 = vunpack.c.h.b16 %v221
        %v1040 = vunpack.c.l.b16 %v222
        %v1041 = vunpack.c.h.b16 %v222
        %v1042 = vunpack.c.l.b16 %v223
        %v1043 = vunpack.c.h.b16 %v223
        %v1044 = vunpack.c.l.b16 %v224
        %v1045 = vunpack.c.h.b16 %v224
        %v1046 = vunpack.c.l.b16 %v225
        %v1047 = vunpack.c.h.b16 %v225
        %v1048 = vunpack.c.l.b16 %v226
        %v1049 = vunpack.c.h.b16 %v226
        %v1050 = vunpack.c.l.b16 %v227
        %v1051 = vunpack.c.h.b16 %v227
        %v1052 = vunpack.c.l.b16 %v228
        %v1053 = vunpack.c.h.b16 %v228
        %v1054 = vunpack.c.l.b16 %v229
        %v1055 = vunpack.c.h.b16 %v229
        %v1056 = vunpack.c.l.b16 %v230
        %v1057 = vunpack.c.h.b16 %v230
        %v1058 = vunpack.c.l.b16 %v231
        %v1059 = vunpack.c.h.b16 %v231
        %v1060 = vunpack.c.l.b16 %v232
        %v1061 = vunpack.c.h.b16 %v232
        %v1062 = vunpack.c.l.b16 %v233
        %v1063 = vunpack.c.h.b16 %v233
        %v1064 = vunpack.c.l.b16 %v234
        %v1065 = vunpack.c.h.b16 %v234
        %v1066 = vunpack.c.l.b16 %v235
        %v1067 = vunpack.c.h.b16 %v235
        %v1068 = vunpack.c.l.b16 %v236
        %v1069 = vunpack.c.h.b16 %v236
        %v1070 = vunpack.c.l.b16 %v237
        %v1071 = vunpack.c.h.b16 %v237
        %v1072 = vunpack.c.l.b16 %v238
        %v1073 = vunpack.c.h.b16 %v238
        %v1074 = vunpack.c.l.b16 %v239
        %v1075 = vunpack.c.h.b16 %v239
        %v1076 = vunpack.c.l.b16 %v240
        %v1077 = vunpack.c.h.b16 %v240
        %v1078 = vunpack.c.l.b16 %v241
        %v1079 = vunpack.c.h.b16 %v241
        %v1080 = vunpack.c.l.b16 %v242
        %v1081 = vunpack.c.h.b16 %v242
        %v1082 = vunpack.c.l.b16 %v243
        %v1083 = vunpack.c.h.b16 %v243
        %v1084 = vunpack.c.l.b16 %v244
        %v1085 = vunpack.c.h.b16 %v244
        %v1086 = vunpack.c.l.b16 %v245
        %v1087 = vunpack.c.h.b16 %v245
        %v1088 = vunpack.c.l.b16 %v246
        %v1089 = vunpack.c.h.b16 %v246
        %v1090 = vunpack.c.l.b16 %v247
        %v1091 = vunpack.c.h.b16 %v247
        %v1092 = vunpack.c.l.b16 %v248
        %v1093 = vunpack.c.h.b16 %v248
        %v1094 = vunpack.c.l.b16 %v249
        %v1095 = vunpack.c.h.b16 %v249
        %v1096 = vunpack.c.l.b16 %v250
        %v1097 = vunpack.c.h.b16 %v250
        %v1098 = vunpack.c.l.b16 %v251
        %v1099 = vunpack.c.h.b16 %v251
        %v1100 = vunpack.c.l.b16 %v252
        %v1101 = vunpack.c.h.b16 %v252
        %v1102 = vunpack.c.l.b16 %v253
        %v1103 = vunpack.c.h.b16 %v253
        %v1104 = vunpack.c.l.b16 %v254
        %v1105 = vunpack.c.h.b16 %v254
        %v1106 = vunpack.c.l.b16 %v255
        %v1107 = vunpack.c.h.b16 %v255
        %v1108 = vunpack.c.l.b16 %v256
        %v1109 = vunpack.c.h.b16 %v256
        %v1110 = vunpack.c.l.b16 %v257
        %v1111 = vunpack.c.h.b16 %v257
        %v1112 = vunpack.c.l.b16 %v258
        %v1113 = vunpack.c.h.b16 %v258
        %v1114 = vunpack.c.l.b16 %v259
        %v1115 = vunpack.c.h.b16 %v259
        %v1116 = vunpack.c.l.b16 %v260
        %v1117 = vunpack.c.h.b16 %v260
        %v1118 = vunpack.c.l.b16 %v261
        %v1119 = vunpack.c.h.b16 %v261
        %v1120 = vunpack.c.l.b16 %v262
        %v1121 = vunpack.c.h.b16 %v262
        %v1122 = vunpack.c.l.b16 %v263
        %v1123 = vunpack.c.h.b16 %v263
        %v1124 = vunpack.c.l.b16 %v264
        %v1125 = vunpack.c.h.b16 %v264
        %v1126 = vunpack.c.l.b16 %v265
        %v1127 = vunpack.c.h.b16 %v265
        %v1128 = vunpack.c.l.b16 %v266
        %v1129 = vunpack.c.h.b16 %v266
        %v1130 = vunpack.c.l.b16 %v267
        %v1131 = vunpack.c.h.b16 %v267
        %v1132 = vunpack.c.l.b16 %v268
        %v1133 = vunpack.c.h.b16 %v268
        %v1134 = vunpack.c.l.b16 %v269
        %v1135 = vunpack.c.h.b16 %v269
        %v1136 = vunpack.c.l.b16 %v270
        %v1137 = vunpack.c.h.b16 %v270
        %v1138 = vunpack.c.l.b16 %v271
        %v1139 = vunpack.c.h.b16 %v271
        %v1140 = vunpack.c.l.b16 %v272
        %v1141 = vunpack.c.h.b16 %v272
        %v1142 = vunpack.c.l.b16 %v273
        %v1143 = vunpack.c.h.b16 %v273
        %v1144 = vunpack.c.l.b16 %v274
        %v1145 = vunpack.c.h.b16 %v274
        %v1146 = vunpack.c.l.b16 %v275
        %v1147 = vunpack.c.h.b16 %v275
        %v1148 = vunpack.c.l.b16 %v276
        %v1149 = vunpack.c.h.b16 %v276
        %v1150 = vunpack.c.l.b16 %v277
        %v1151 = vunpack.c.h.b16 %v277
        %v1152 = vunpack.c.l.b16 %v278
        %v1153 = vunpack.c.h.b16 %v278
        %v1154 = vunpack.c.l.b16 %v279
        %v1155 = vunpack.c.h.b16 %v279
        %v1156 = vunpack.c.l.b16 %v280
        %v1157 = vunpack.c.h.b16 %v280
        %v1158 = vunpack.c.l.b16 %v281
        %v1159 = vunpack.c.h.b16 %v281
        %v1160 = vunpack.c.l.b16 %v282
        %v1161 = vunpack.c.h.b16 %v282
        %v1162 = vunpack.c.l.b16 %v283
        %v1163 = vunpack.c.h.b16 %v283
        %v1164 = vunpack.c.l.b16 %v284
        %v1165 = vunpack.c.h.b16 %v284
        %v1166 = vunpack.c.l.b16 %v285
        %v1167 = vunpack.c.h.b16 %v285
        %v1168 = vunpack.c.l.b16 %v286
        %v1169 = vunpack.c.h.b16 %v286
        %v1170 = vunpack.c.l.b16 %v287
        %v1171 = vunpack.c.h.b16 %v287
        %v1172 = vunpack.c.l.b16 %v288
        %v1173 = vunpack.c.h.b16 %v288
        %v1174 = vunpack.c.l.b16 %v289
        %v1175 = vunpack.c.h.b16 %v289
        %v1176 = vunpack.c.l.b16 %v290
        %v1177 = vunpack.c.h.b16 %v290
        %v1178 = vunpack.c.l.b16 %v291
        %v1179 = vunpack.c.h.b16 %v291
        %v1180 = vunpack.c.l.b16 %v292
        %v1181 = vunpack.c.h.b16 %v292
        %v1182 = vunpack.c.l.b16 %v293
        %v1183 = vunpack.c.h.b16 %v293
        %v1184 = vunpack.c.l.b16 %v294
        %v1185 = vunpack.c.h.b16 %v294
        %v1186 = vunpack.c.l.b16 %v295
        %v1187 = vunpack.c.h.b16 %v295
        %v1188 = vunpack.c.l.b16 %v296
        %v1189 = vunpack.c.h.b16 %v296
        %v1190 = vunpack.c.l.b16 %v297
        %v1191 = vunpack.c.h.b16 %v297
        %v1192 = vunpack.c.l.b16 %v298
        %v1193 = vunpack.c.h.b16 %v298
        %v1194 = vunpack.c.l.b16 %v299
        %v1195 = vunpack.c.h.b16 %v299
        %v1196 = vpack.c.b16 %v948, %v940
        %v1197 = vpack.c.b16 %v949, %v941
        %v1198 = vpack.c.b16 %v950, %v942
        %v1199 = vpack.c.b16 %v951, %v943
        %v1200 = vpack.c.b16 %v952, %v944
        %v1201 = vpack.c.b16 %v953, %v945
        %v1202 = vpack.c.b16 %v954, %v946
        %v1203 = vpack.c.b16 %v955, %v947
        %v1204 = vpack.c.b16 %v964, %v956
        %v1205 = vpack.c.b16 %v965, %v957
        %v1206 = vpack.c.b16 %v966, %v958
        %v1207 = vpack.c.b16 %v967, %v959
        %v1208 = vpack.c.b16 %v968, %v960
        %v1209 = vpack.c.b16 %v969, %v961
        %v1210 = vpack.c.b16 %v970, %v962
        %v1211 = vpack.c.b16 %v971, %v963
        %v1212 = vpack.c.b16 %v980, %v972
        %v1213 = vpack.c.b16 %v981, %v973
        %v1214 = vpack.c.b16 %v982, %v974
        %v1215 = vpack.c.b16 %v983, %v975
        %v1216 = vpack.c.b16 %v984, %v976
        %v1217 = vpack.c.b16 %v985, %v977
        %v1218 = vpack.c.b16 %v986, %v978
        %v1219 = vpack.c.b16 %v987, %v979
        %v1220 = vpack.c.b16 %v996, %v988
        %v1221 = vpack.c.b16 %v997, %v989
        %v1222 = vpack.c.b16 %v998, %v990
        %v1223 = vpack.c.b16 %v999, %v991
        %v1224 = vpack.c.b16 %v1000, %v992
        %v1225 = vpack.c.b16 %v1001, %v993
        %v1226 = vpack.c.b16 %v1002, %v994
        %v1227 = vpack.c.b16 %v1003, %v995
        %v1228 = vpack.c.b16 %v1012, %v1004
        %v1229 = vpack.c.b16 %v1013, %v1005
        %v1230 = vpack.c.b16 %v1014, %v1006
        %v1231 = vpack.c.b16 %v1015, %v1007
        %v1232 = vpack.c.b16 %v1016, %v1008
        %v1233 = vpack.c.b16 %v1017, %v1009
        %v1234 = vpack.c.b16 %v1018, %v1010
        %v1235 = vpack.c.b16 %v1019, %v1011
        %v1236 = vpack.c.b16 %v1028, %v1020
        %v1237 = vpack.c.b16 %v1029, %v1021
        %v1238 = vpack.c.b16 %v1030, %v1022
        %v1239 = vpack.c.b16 %v1031, %v1023
        %v1240 = vpack.c.b16 %v1032, %v1024
        %v1241 = vpack.c.b16 %v1033, %v1025
        %v1242 = vpack.c.b16 %v1034, %v1026
        %v1243 = vpack.c.b16 %v1035, %v1027
        %v1244 = vpack.c.b16 %v1044, %v1036
        %v1245 = vpack.c.b16 %v1045, %v1037
        %v1246 = vpack.c.b16 %v1046, %v1038
        %v1247 = vpack.c.b16 %v1047, %v1039
        %v1248 = vpack.c.b16 %v1048, %v1040
        %v1249 = vpack.c.b16 %v1049, %v1041
        %v1250 = vpack.c.b16 %v1050, %v1042
        %v1251 = vpack.c.b16 %v1051, %v1043
        %v1252 = vpack.c.b16 %v1060, %v1052
        %v1253 = vpack.c.b16 %v1061, %v1053
        %v1254 = vpack.c.b16 %v1062, %v1054
        %v1255 = vpack.c.b16 %v1063, %v1055
        %v1256 = vpack.c.b16 %v1064, %v1056
        %v1257 = vpack.c.b16 %v1065, %v1057
        %v1258 = vpack.c.b16 %v1066, %v1058
        %v1259 = vpack.c.b16 %v1067, %v1059
        %v1260 = vpack.c.b16 %v1076, %v1068
        %v1261 = vpack.c.b16 %v1077, %v1069
        %v1262 = vpack.c.b16 %v1078, %v1070
        %v1263 = vpack.c.b16 %v1079, %v1071
        %v1264 = vpack.c.b16 %v1080, %v1072
        %v1265 = vpack.c.b16 %v1081, %v1073
        %v1266 = vpack.c.b16 %v1082, %v1074
        %v1267 = vpack.c.b16 %v1083, %v1075
        %v1268 = vpack.c.b16 %v1092, %v1084
        %v1269 = vpack.c.b16 %v1093, %v1085
        %v1270 = vpack.c.b16 %v1094, %v1086
        %v1271 = vpack.c.b16 %v1095, %v1087
        %v1272 = vpack.c.b16 %v1096, %v1088
        %v1273 = vpack.c.b16 %v1097, %v1089
        %v1274 = vpack.c.b16 %v1098, %v1090
        %v1275 = vpack.c.b16 %v1099, %v1091
        %v1276 = vpack.c.b16 %v1108, %v1100
        %v1277 = vpack.c.b16 %v1109, %v1101
        %v1278 = vpack.c.b16 %v1110, %v1102
        %v1279 = vpack.c.b16 %v1111, %v1103
        %v1280 = vpack.c.b16 %v1112, %v1104
        %v1281 = vpack.c.b16 %v1113, %v1105
        %v1282 = vpack.c.b16 %v1114, %v1106
        %v1283 = vpack.c.b16 %v1115, %v1107
        %v1284 = vpack.c.b16 %v1124, %v1116
        %v1285 = vpack.c.b16 %v1125, %v1117
        %v1286 = vpack.c.b16 %v1126, %v1118
        %v1287 = vpack.c.b16 %v1127, %v1119
        %v1288 = vpack.c.b16 %v1128, %v1120
        %v1289 = vpack.c.b16 %v1129, %v1121
        %v1290 = vpack.c.b16 %v1130, %v1122
        %v1291 = vpack.c.b16 %v1131, %v1123
        %v1292 = vpack.c.b16 %v1140, %v1132
        %v1293 = vpack.c.b16 %v1141, %v1133
        %v1294 = vpack.c.b16 %v1142, %v1134
        %v1295 = vpack.c.b16 %v1143, %v1135
        %v1296 = vpack.c.b16 %v1144, %v1136
        %v1297 = vpack.c.b16 %v1145, %v1137
        %v1298 = vpack.c.b16 %v1146, %v1138
        %v1299 = vpack.c.b16 %v1147, %v1139
        %v1300 = vpack.c.b16 %v1156, %v1148
        %v1301 = vpack.c.b16 %v1157, %v1149
        %v1302 = vpack.c.b16 %v1158, %v1150
        %v1303 = vpack.c.b16 %v1159, %v1151
        %v1304 = vpack.c.b16 %v1160, %v1152
        %v1305 = vpack.c.b16 %v1161, %v1153
        %v1306 = vpack.c.b16 %v1162, %v1154
        %v1307 = vpack.c.b16 %v1163, %v1155
        %v1308 = vpack.c.b16 %v1172, %v1164
        %v1309 = vpack.c.b16 %v1173, %v1165
        %v1310 = vpack.c.b16 %v1174, %v1166
        %v1311 = vpack.c.b16 %v1175, %v1167
        %v1312 = vpack.c.b16 %v1176, %v1168
        %v1313 = vpack.c.b16 %v1177, %v1169
        %v1314 = vpack.c.b16 %v1178, %v1170
        %v1315 = vpack.c.b16 %v1179, %v1171
        %v1316 = vpack.c.b16 %v1188, %v1180
        %v1317 = vpack.c.b16 %v1189, %v1181
        %v1318 = vpack.c.b16 %v1190, %v1182
        %v1319 = vpack.c.b16 %v1191, %v1183
        %v1320 = vpack.c.b16 %v1192, %v1184
        %v1321 = vpack.c.b16 %v1193, %v1185
        %v1322 = vpack.c.b16 %v1194, %v1186
        %v1323 = vpack.c.b16 %v1195, %v1187
        %v1964 = vunpack.c.l.b16 %v300
        %v1965 = vunpack.c.h.b16 %v300
        %v1966 = vunpack.c.l.b16 %v301
        %v1967 = vunpack.c.h.b16 %v301
        %v1968 = vunpack.c.l.b16 %v302
        %v1969 = vunpack.c.h.b16 %v302
        %v1970 = vunpack.c.l.b16 %v303
        %v1971 = vunpack.c.h.b16 %v303
        %v1972 = vunpack.c.l.b16 %v304
        %v1973 = vunpack.c.h.b16 %v304
        %v1974 = vunpack.c.l.b16 %v305
        %v1975 = vunpack.c.h.b16 %v305
        %v1976 = vunpack.c.l.b16 %v306
        %v1977 = vunpack.c.h.b16 %v306
        %v1978 = vunpack.c.l.b16 %v307
        %v1979 = vunpack.c.h.b16 %v307
        %v1980 = vunpack.c.l.b16 %v308
        %v1981 = vunpack.c.h.b16 %v308
        %v1982 = vunpack.c.l.b16 %v309
        %v1983 = vunpack.c.h.b16 %v309
        %v1984 = vunpack.c.l.b16 %v310
        %v1985 = vunpack.c.h.b16 %v310
        %v1986 = vunpack.c.l.b16 %v311
        %v1987 = vunpack.c.h.b16 %v311
        %v1988 = vunpack.c.l.b16 %v312
        %v1989 = vunpack.c.h.b16 %v312
        %v1990 = vunpack.c.l.b16 %v313
        %v1991 = vunpack.c.h.b16 %v313
        %v1992 = vunpack.c.l.b16 %v314
        %v1993 = vunpack.c.h.b16 %v314
        %v1994 = vunpack.c.l.b16 %v315
        %v1995 = vunpack.c.h.b16 %v315
        %v1996 = vunpack.c.l.b16 %v316
        %v1997 = vunpack.c.h.b16 %v316
        %v1998 = vunpack.c.l.b16 %v317
        %v1999 = vunpack.c.h.b16 %v317
        %v2000 = vunpack.c.l.b16 %v318
        %v2001 = vunpack.c.h.b16 %v318
        %v2002 = vunpack.c.l.b16 %v319
        %v2003 = vunpack.c.h.b16 %v319
        %v2004 = vunpack.c.l.b16 %v320
        %v2005 = vunpack.c.h.b16 %v320
        %v2006 = vunpack.c.l.b16 %v321
        %v2007 = vunpack.c.h.b16 %v321
        %v2008 = vunpack.c.l.b16 %v322
        %v2009 = vunpack.c.h.b16 %v322
        %v2010 = vunpack.c.l.b16 %v323
        %v2011 = vunpack.c.h.b16 %v323
        %v2012 = vunpack.c.l.b16 %v324
        %v2013 = vunpack.c.h.b16 %v324
        %v2014 = vunpack.c.l.b16 %v325
        %v2015 = vunpack.c.h.b16 %v325
        %v2016 = vunpack.c.l.b16 %v326
        %v2017 = vunpack.c.h.b16 %v326
        %v2018 = vunpack.c.l.b16 %v327
        %v2019 = vunpack.c.h.b16 %v327
        %v2020 = vunpack.c.l.b16 %v328
        %v2021 = vunpack.c.h.b16 %v328
        %v2022 = vunpack.c.l.b16 %v329
        %v2023 = vunpack.c.h.b16 %v329
        %v2024 = vunpack.c.l.b16 %v330
        %v2025 = vunpack.c.h.b16 %v330
        %v2026 = vunpack.c.l.b16 %v331
        %v2027 = vunpack.c.h.b16 %v331
        %v2028 = vunpack.c.l.b16 %v332
        %v2029 = vunpack.c.h.b16 %v332
        %v2030 = vunpack.c.l.b16 %v333
        %v2031 = vunpack.c.h.b16 %v333
        %v2032 = vunpack.c.l.b16 %v334
        %v2033 = vunpack.c.h.b16 %v334
        %v2034 = vunpack.c.l.b16 %v335
        %v2035 = vunpack.c.h.b16 %v335
        %v2036 = vunpack.c.l.b16 %v336
        %v2037 = vunpack.c.h.b16 %v336
        %v2038 = vunpack.c.l.b16 %v337
        %v2039 = vunpack.c.h.b16 %v337
        %v2040 = vunpack.c.l.b16 %v338
        %v2041 = vunpack.c.h.b16 %v338
        %v2042 = vunpack.c.l.b16 %v339
        %v2043 = vunpack.c.h.b16 %v339
        %v2044 = vunpack.c.l.b16 %v340
        %v2045 = vunpack.c.h.b16 %v340
        %v2046 = vunpack.c.l.b16 %v341
        %v2047 = vunpack.c.h.b16 %v341
        %v2048 = vunpack.c.l.b16 %v342
        %v2049 = vunpack.c.h.b16 %v342
        %v2050 = vunpack.c.l.b16 %v343
        %v2051 = vunpack.c.h.b16 %v343
        %v2052 = vunpack.c.l.b16 %v344
        %v2053 = vunpack.c.h.b16 %v344
        %v2054 = vunpack.c.l.b16 %v345
        %v2055 = vunpack.c.h.b16 %v345
        %v2056 = vunpack.c.l.b16 %v346
        %v2057 = vunpack.c.h.b16 %v346
        %v2058 = vunpack.c.l.b16 %v347
        %v2059 = vunpack.c.h.b16 %v347
        %v2060 = vunpack.c.l.b16 %v348
        %v2061 = vunpack.c.h.b16 %v348
        %v2062 = vunpack.c.l.b16 %v349
        %v2063 = vunpack.c.h.b16 %v349
        %v2064 = vunpack.c.l.b16 %v350
        %v2065 = vunpack.c.h.b16 %v350
        %v2066 = vunpack.c.l.b16 %v351
        %v2067 = vunpack.c.h.b16 %v351
        %v2068 = vunpack.c.l.b16 %v352
        %v2069 = vunpack.c.h.b16 %v352
        %v2070 = vunpack.c.l.b16 %v353
        %v2071 = vunpack.c.h.b16 %v353
        %v2072 = vunpack.c.l.b16 %v354
        %v2073 = vunpack.c.h.b16 %v354
        %v2074 = vunpack.c.l.b16 %v355
        %v2075 = vunpack.c.h.b16 %v355
        %v2076 = vunpack.c.l.b16 %v356
        %v2077 = vunpack.c.h.b16 %v356
        %v2078 = vunpack.c.l.b16 %v357
        %v2079 = vunpack.c.h.b16 %v357
        %v2080 = vunpack.c.l.b16 %v358
        %v2081 = vunpack.c.h.b16 %v358
        %v2082 = vunpack.c.l.b16 %v359
        %v2083 = vunpack.c.h.b16 %v359
        %v2084 = vunpack.c.l.b16 %v360
        %v2085 = vunpack.c.h.b16 %v360
        %v2086 = vunpack.c.l.b16 %v361
        %v2087 = vunpack.c.h.b16 %v361
        %v2088 = vunpack.c.l.b16 %v362
        %v2089 = vunpack.c.h.b16 %v362
        %v2090 = vunpack.c.l.b16 %v363
        %v2091 = vunpack.c.h.b16 %v363
        %v2092 = vunpack.c.l.b16 %v364
        %v2093 = vunpack.c.h.b16 %v364
        %v2094 = vunpack.c.l.b16 %v365
        %v2095 = vunpack.c.h.b16 %v365
        %v2096 = vunpack.c.l.b16 %v366
        %v2097 = vunpack.c.h.b16 %v366
        %v2098 = vunpack.c.l.b16 %v367
        %v2099 = vunpack.c.h.b16 %v367
        %v2100 = vunpack.c.l.b16 %v368
        %v2101 = vunpack.c.h.b16 %v368
        %v2102 = vunpack.c.l.b16 %v369
        %v2103 = vunpack.c.h.b16 %v369
        %v2104 = vunpack.c.l.b16 %v370
        %v2105 = vunpack.c.h.b16 %v370
        %v2106 = vunpack.c.l.b16 %v371
        %v2107 = vunpack.c.h.b16 %v371
        %v2108 = vunpack.c.l.b16 %v372
        %v2109 = vunpack.c.h.b16 %v372
        %v2110 = vunpack.c.l.b16 %v373
        %v2111 = vunpack.c.h.b16 %v373
        %v2112 = vunpack.c.l.b16 %v374
        %v2113 = vunpack.c.h.b16 %v374
        %v2114 = vunpack.c.l.b16 %v375
        %v2115 = vunpack.c.h.b16 %v375
        %v2116 = vunpack.c.l.b16 %v376
        %v2117 = vunpack.c.h.b16 %v376
        %v2118 = vunpack.c.l.b16 %v377
        %v2119 = vunpack.c.h.b16 %v377
        %v2120 = vunpack.c.l.b16 %v378
        %v2121 = vunpack.c.h.b16 %v378
        %v2122 = vunpack.c.l.b16 %v379
        %v2123 = vunpack.c.h.b16 %v379
        %v2124 = vunpack.c.l.b16 %v380
        %v2125 = vunpack.c.h.b16 %v380
        %v2126 = vunpack.c.l.b16 %v381
        %v2127 = vunpack.c.h.b16 %v381
        %v2128 = vunpack.c.l.b16 %v382
        %v2129 = vunpack.c.h.b16 %v382
        %v2130 = vunpack.c.l.b16 %v383
        %v2131 = vunpack.c.h.b16 %v383
        %v2132 = vunpack.c.l.b16 %v384
        %v2133 = vunpack.c.h.b16 %v384
        %v2134 = vunpack.c.l.b16 %v385
        %v2135 = vunpack.c.h.b16 %v385
        %v2136 = vunpack.c.l.b16 %v386
        %v2137 = vunpack.c.h.b16 %v386
        %v2138 = vunpack.c.l.b16 %v387
        %v2139 = vunpack.c.h.b16 %v387
        %v2140 = vunpack.c.l.b16 %v388
        %v2141 = vunpack.c.h.b16 %v388
        %v2142 = vunpack.c.l.b16 %v389
        %v2143 = vunpack.c.h.b16 %v389
        %v2144 = vunpack.c.l.b16 %v390
        %v2145 = vunpack.c.h.b16 %v390
        %v2146 = vunpack.c.l.b16 %v391
        %v2147 = vunpack.c.h.b16 %v391
        %v2148 = vunpack.c.l.b16 %v392
        %v2149 = vunpack.c.h.b16 %v392
        %v2150 = vunpack.c.l.b16 %v393
        %v2151 = vunpack.c.h.b16 %v393
        %v2152 = vunpack.c.l.b16 %v394
        %v2153 = vunpack.c.h.b16 %v394
        %v2154 = vunpack.c.l.b16 %v395
        %v2155 = vunpack.c.h.b16 %v395
        %v2156 = vunpack.c.l.b16 %v396
        %v2157 = vunpack.c.h.b16 %v396
        %v2158 = vunpack.c.l.b16 %v397
        %v2159 = vunpack.c.h.b16 %v397
        %v2160 = vunpack.c.l.b16 %v398
        %v2161 = vunpack.c.h.b16 %v398
        %v2162 = vunpack.c.l.b16 %v399
        %v2163 = vunpack.c.h.b16 %v399
        %v2164 = vunpack.c.l.b16 %v400
        %v2165 = vunpack.c.h.b16 %v400
        %v2166 = vunpack.c.l.b16 %v401
        %v2167 = vunpack.c.h.b16 %v401
        %v2168 = vunpack.c.l.b16 %v402
        %v2169 = vunpack.c.h.b16 %v402
        %v2170 = vunpack.c.l.b16 %v403
        %v2171 = vunpack.c.h.b16 %v403
        %v2172 = vunpack.c.l.b16 %v404
        %v2173 = vunpack.c.h.b16 %v404
        %v2174 = vunpack.c.l.b16 %v405
        %v2175 = vunpack.c.h.b16 %v405
        %v2176 = vunpack.c.l.b16 %v406
        %v2177 = vunpack.c.h.b16 %v406
        %v2178 = vunpack.c.l.b16 %v407
        %v2179 = vunpack.c.h.b16 %v407
        %v2180 = vunpack.c.l.b16 %v408
        %v2181 = vunpack.c.h.b16 %v408
        %v2182 = vunpack.c.l.b16 %v409
        %v2183 = vunpack.c.h.b16 %v409
        %v2184 = vunpack.c.l.b16 %v410
        %v2185 = vunpack.c.h.b16 %v410
        %v2186 = vunpack.c.l.b16 %v411
        %v2187 = vunpack.c.h.b16 %v411
        %v2188 = vunpack.c.l.b16 %v412
        %v2189 = vunpack.c.h.b16 %v412
        %v2190 = vunpack.c.l.b16 %v413
        %v2191 = vunpack.c.h.b16 %v413
        %v2192 = vunpack.c.l.b16 %v414
        %v2193 = vunpack.c.h.b16 %v414
        %v2194 = vunpack.c.l.b16 %v415
        %v2195 = vunpack.c.h.b16 %v415
        %v2196 = vunpack.c.l.b16 %v416
        %v2197 = vunpack.c.h.b16 %v416
        %v2198 = vunpack.c.l.b16 %v417
        %v2199 = vunpack.c.h.b16 %v417
        %v2200 = vunpack.c.l.b16 %v418
        %v2201 = vunpack.c.h.b16 %v418
        %v2202 = vunpack.c.l.b16 %v419
        %v2203 = vunpack.c.h.b16 %v419
        %v2204 = vunpack.c.l.b16 %v420
        %v2205 = vunpack.c.h.b16 %v420
        %v2206 = vunpack.c.l.b16 %v421
        %v2207 = vunpack.c.h.b16 %v421
        %v2208 = vunpack.c.l.b16 %v422
        %v2209 = vunpack.c.h.b16 %v422
        %v2210 = vunpack.c.l.b16 %v423
        %v2211 = vunpack.c.h.b16 %v423
        %v2212 = vunpack.c.l.b16 %v424
        %v2213 = vunpack.c.h.b16 %v424
        %v2214 = vunpack.c.l.b16 %v425
        %v2215 = vunpack.c.h.b16 %v425
        %v2216 = vunpack.c.l.b16 %v426
        %v2217 = vunpack.c.h.b16 %v426
        %v2218 = vunpack.c.l.b16 %v427
        %v2219 = vunpack.c.h.b16 %v427
        %v2220 = vunpack.c.l.b16 %v428
        %v2221 = vunpack.c.h.b16 %v428
        %v2222 = vunpack.c.l.b16 %v429
        %v2223 = vunpack.c.h.b16 %v429
        %v2224 = vunpack.c.l.b16 %v430
        %v2225 = vunpack.c.h.b16 %v430
        %v2226 = vunpack.c.l.b16 %v431
        %v2227 = vunpack.c.h.b16 %v431
        %v2228 = vunpack.c.l.b16 %v432
        %v2229 = vunpack.c.h.b16 %v432
        %v2230 = vunpack.c.l.b16 %v433
        %v2231 = vunpack.c.h.b16 %v433
        %v2232 = vunpack.c.l.b16 %v434
        %v2233 = vunpack.c.h.b16 %v434
        %v2234 = vunpack.c.l.b16 %v435
        %v2235 = vunpack.c.h.b16 %v435
        %v2236 = vunpack.c.l.b16 %v436
        %v2237 = vunpack.c.h.b16 %v436
        %v2238 = vunpack.c.l.b16 %v437
        %v2239 = vunpack.c.h.b16 %v437
        %v2240 = vunpack.c.l.b16 %v438
        %v2241 = vunpack.c.h.b16 %v438
        %v2242 = vunpack.c.l.b16 %v439
        %v2243 = vunpack.c.h.b16 %v439
        %v2244 = vunpack.c.l.b16 %v440
        %v2245 = vunpack.c.h.b16 %v440
        %v2246 = vunpack.c.l.b16 %v441
        %v2247 = vunpack.c.h.b16 %v441
        %v2248 = vunpack.c.l.b16 %v442
        %v2249 = vunpack.c.h.b16 %v442
        %v2250 = vunpack.c.l.b16 %v443
        %v2251 = vunpack.c.h.b16 %v443
        %v2252 = vunpack.c.l.b16 %v444
        %v2253 = vunpack.c.h.b16 %v444
        %v2254 = vunpack.c.l.b16 %v445
        %v2255 = vunpack.c.h.b16 %v445
        %v2256 = vunpack.c.l.b16 %v446
        %v2257 = vunpack.c.h.b16 %v446
        %v2258 = vunpack.c.l.b16 %v447
        %v2259 = vunpack.c.h.b16 %v447
        %v2260 = vunpack.c.l.b16 %v448
        %v2261 = vunpack.c.h.b16 %v448
        %v2262 = vunpack.c.l.b16 %v449
        %v2263 = vunpack.c.h.b16 %v449
        %v2264 = vunpack.c.l.b16 %v450
        %v2265 = vunpack.c.h.b16 %v450
        %v2266 = vunpack.c.l.b16 %v451
        %v2267 = vunpack.c.h.b16 %v451
        %v2268 = vunpack.c.l.b16 %v452
        %v2269 = vunpack.c.h.b16 %v452
        %v2270 = vunpack.c.l.b16 %v453
        %v2271 = vunpack.c.h.b16 %v453
        %v2272 = vunpack.c.l.b16 %v454
        %v2273 = vunpack.c.h.b16 %v454
        %v2274 = vunpack.c.l.b16 %v455
        %v2275 = vunpack.c.h.b16 %v455
        %v2276 = vunpack.c.l.b16 %v456
        %v2277 = vunpack.c.h.b16 %v456
        %v2278 = vunpack.c.l.b16 %v457
        %v2279 = vunpack.c.h.b16 %v457
        %v2280 = vunpack.c.l.b16 %v458
        %v2281 = vunpack.c.h.b16 %v458
        %v2282 = vunpack.c.l.b16 %v459
        %v2283 = vunpack.c.h.b16 %v459
        %v2284 = vunpack.c.l.b16 %v460
        %v2285 = vunpack.c.h.b16 %v460
        %v2286 = vunpack.c.l.b16 %v461
        %v2287 = vunpack.c.h.b16 %v461
        %v2288 = vunpack.c.l.b16 %v462
        %v2289 = vunpack.c.h.b16 %v462
        %v2290 = vunpack.c.l.b16 %v463
        %v2291 = vunpack.c.h.b16 %v463
        %v2292 = vunpack.c.l.b16 %v464
        %v2293 = vunpack.c.h.b16 %v464
        %v2294 = vunpack.c.l.b16 %v465
        %v2295 = vunpack.c.h.b16 %v465
        %v2296 = vunpack.c.l.b16 %v466
        %v2297 = vunpack.c.h.b16 %v466
        %v2298 = vunpack.c.l.b16 %v467
        %v2299 = vunpack.c.h.b16 %v467
        %v2300 = vunpack.c.l.b16 %v468
        %v2301 = vunpack.c.h.b16 %v468
        %v2302 = vunpack.c.l.b16 %v469
        %v2303 = vunpack.c.h.b16 %v469
        %v2304 = vunpack.c.l.b16 %v470
        %v2305 = vunpack.c.h.b16 %v470
        %v2306 = vunpack.c.l.b16 %v471
        %v2307 = vunpack.c.h.b16 %v471
        %v2308 = vunpack.c.l.b16 %v472
        %v2309 = vunpack.c.h.b16 %v472
        %v2310 = vunpack.c.l.b16 %v473
        %v2311 = vunpack.c.h.b16 %v473
        %v2312 = vunpack.c.l.b16 %v474
        %v2313 = vunpack.c.h.b16 %v474
        %v2314 = vunpack.c.l.b16 %v475
        %v2315 = vunpack.c.h.b16 %v475
        %v2316 = vunpack.c.l.b16 %v476
        %v2317 = vunpack.c.h.b16 %v476
        %v2318 = vunpack.c.l.b16 %v477
        %v2319 = vunpack.c.h.b16 %v477
        %v2320 = vunpack.c.l.b16 %v478
        %v2321 = vunpack.c.h.b16 %v478
        %v2322 = vunpack.c.l.b16 %v479
        %v2323 = vunpack.c.h.b16 %v479
        %v2324 = vunpack.c.l.b16 %v480
        %v2325 = vunpack.c.h.b16 %v480
        %v2326 = vunpack.c.l.b16 %v481
        %v2327 = vunpack.c.h.b16 %v481
        %v2328 = vunpack.c.l.b16 %v482
        %v2329 = vunpack.c.h.b16 %v482
        %v2330 = vunpack.c.l.b16 %v483
        %v2331 = vunpack.c.h.b16 %v483
        %v2332 = vunpack.c.l.b16 %v484
        %v2333 = vunpack.c.h.b16 %v484
        %v2334 = vunpack.c.l.b16 %v485
        %v2335 = vunpack.c.h.b16 %v485
        %v2336 = vunpack.c.l.b16 %v486
        %v2337 = vunpack.c.h.b16 %v486
        %v2338 = vunpack.c.l.b16 %v487
        %v2339 = vunpack.c.h.b16 %v487
        %v2340 = vunpack.c.l.b16 %v488
        %v2341 = vunpack.c.h.b16 %v488
        %v2342 = vunpack.c.l.b16 %v489
        %v2343 = vunpack.c.h.b16 %v489
        %v2344 = vunpack.c.l.b16 %v490
        %v2345 = vunpack.c.h.b16 %v490
        %v2346 = vunpack.c.l.b16 %v491
        %v2347 = vunpack.c.h.b16 %v491
        %v2348 = vunpack.c.l.b16 %v492
        %v2349 = vunpack.c.h.b16 %v492
        %v2350 = vunpack.c.l.b16 %v493
        %v2351 = vunpack.c.h.b16 %v493
        %v2352 = vunpack.c.l.b16 %v494
        %v2353 = vunpack.c.h.b16 %v494
        %v2354 = vunpack.c.l.b16 %v495
        %v2355 = vunpack.c.h.b16 %v495
        %v2356 = vunpack.c.l.b16 %v496
        %v2357 = vunpack.c.h.b16 %v496
        %v2358 = vunpack.c.l.b16 %v497
        %v2359 = vunpack.c.h.b16 %v497
        %v2360 = vunpack.c.l.b16 %v498
        %v2361 = vunpack.c.h.b16 %v498
        %v2362 = vunpack.c.l.b16 %v499
        %v2363 = vunpack.c.h.b16 %v499
        %v2364 = vunpack.c.l.b16 %v500
        %v2365 = vunpack.c.h.b16 %v500
        %v2366 = vunpack.c.l.b16 %v501
        %v2367 = vunpack.c.h.b16 %v501
        %v2368 = vunpack.c.l.b16 %v502
        %v2369 = vunpack.c.h.b16 %v502
        %v2370 = vunpack.c.l.b16 %v503
        %v2371 = vunpack.c.h.b16 %v503
        %v2372 = vunpack.c.l.b16 %v504
        %v2373 = vunpack.c.h.b16 %v504
        %v2374 = vunpack.c.l.b16 %v505
        %v2375 = vunpack.c.h.b16 %v505
        %v2376 = vunpack.c.l.b16 %v506
        %v2377 = vunpack.c.h.b16 %v506
        %v2378 = vunpack.c.l.b16 %v507
        %v2379 = vunpack.c.h.b16 %v507
        %v2380 = vunpack.c.l.b16 %v508
        %v2381 = vunpack.c.h.b16 %v508
        %v2382 = vunpack.c.l.b16 %v509
        %v2383 = vunpack.c.h.b16 %v509
        %v2384 = vunpack.c.l.b16 %v510
        %v2385 = vunpack.c.h.b16 %v510
        %v2386 = vunpack.c.l.b16 %v511
        %v2387 = vunpack.c.h.b16 %v511
        %v2388 = vunpack.c.l.b16 %v512
        %v2389 = vunpack.c.h.b16 %v512
        %v2390 = vunpack.c.l.b16 %v513
        %v2391 = vunpack.c.h.b16 %v513
        %v2392 = vunpack.c.l.b16 %v514
        %v2393 = vunpack.c.h.b16 %v514
        %v2394 = vunpack.c.l.b16 %v515
        %v2395 = vunpack.c.h.b16 %v515
        %v2396 = vunpack.c.l.b16 %v516
        %v2397 = vunpack.c.h.b16 %v516
        %v2398 = vunpack.c.l.b16 %v517
        %v2399 = vunpack.c.h.b16 %v517
        %v2400 = vunpack.c.l.b16 %v518
        %v2401 = vunpack.c.h.b16 %v518
        %v2402 = vunpack.c.l.b16 %v519
        %v2403 = vunpack.c.h.b16 %v519
        %v2404 = vunpack.c.l.b16 %v520
        %v2405 = vunpack.c.h.b16 %v520
        %v2406 = vunpack.c.l.b16 %v521
        %v2407 = vunpack.c.h.b16 %v521
        %v2408 = vunpack.c.l.b16 %v522
        %v2409 = vunpack.c.h.b16 %v522
        %v2410 = vunpack.c.l.b16 %v523
        %v2411 = vunpack.c.h.b16 %v523
        %v2412 = vunpack.c.l.b16 %v524
        %v2413 = vunpack.c.h.b16 %v524
        %v2414 = vunpack.c.l.b16 %v525
        %v2415 = vunpack.c.h.b16 %v525
        %v2416 = vunpack.c.l.b16 %v526
        %v2417 = vunpack.c.h.b16 %v526
        %v2418 = vunpack.c.l.b16 %v527
        %v2419 = vunpack.c.h.b16 %v527
        %v2420 = vunpack.c.l.b16 %v528
        %v2421 = vunpack.c.h.b16 %v528
        %v2422 = vunpack.c.l.b16 %v529
        %v2423 = vunpack.c.h.b16 %v529
        %v2424 = vunpack.c.l.b16 %v530
        %v2425 = vunpack.c.h.b16 %v530
        %v2426 = vunpack.c.l.b16 %v531
        %v2427 = vunpack.c.h.b16 %v531
        %v2428 = vunpack.c.l.b16 %v532
        %v2429 = vunpack.c.h.b16 %v532
        %v2430 = vunpack.c.l.b16 %v533
        %v2431 = vunpack.c.h.b16 %v533
        %v2432 = vunpack.c.l.b16 %v534
        %v2433 = vunpack.c.h.b16 %v534
        %v2434 = vunpack.c.l.b16 %v535
        %v2435 = vunpack.c.h.b16 %v535
        %v2436 = vunpack.c.l.b16 %v536
        %v2437 = vunpack.c.h.b16 %v536
        %v2438 = vunpack.c.l.b16 %v537
        %v2439 = vunpack.c.h.b16 %v537
        %v2440 = vunpack.c.l.b16 %v538
        %v2441 = vunpack.c.h.b16 %v538
        %v2442 = vunpack.c.l.b16 %v539
        %v2443 = vunpack.c.h.b16 %v539
        %v2444 = vunpack.c.l.b16 %v540
        %v2445 = vunpack.c.h.b16 %v540
        %v2446 = vunpack.c.l.b16 %v541
        %v2447 = vunpack.c.h.b16 %v541
        %v2448 = vunpack.c.l.b16 %v542
        %v2449 = vunpack.c.h.b16 %v542
        %v2450 = vunpack.c.l.b16 %v543
        %v2451 = vunpack.c.h.b16 %v543
        %v2452 = vunpack.c.l.b16 %v544
        %v2453 = vunpack.c.h.b16 %v544
        %v2454 = vunpack.c.l.b16 %v545
        %v2455 = vunpack.c.h.b16 %v545
        %v2456 = vunpack.c.l.b16 %v546
        %v2457 = vunpack.c.h.b16 %v546
        %v2458 = vunpack.c.l.b16 %v547
        %v2459 = vunpack.c.h.b16 %v547
        %v2460 = vunpack.c.l.b16 %v548
        %v2461 = vunpack.c.h.b16 %v548
        %v2462 = vunpack.c.l.b16 %v549
        %v2463 = vunpack.c.h.b16 %v549
        %v2464 = vunpack.c.l.b16 %v550
        %v2465 = vunpack.c.h.b16 %v550
        %v2466 = vunpack.c.l.b16 %v551
        %v2467 = vunpack.c.h.b16 %v551
        %v2468 = vunpack.c.l.b16 %v552
        %v2469 = vunpack.c.h.b16 %v552
        %v2470 = vunpack.c.l.b16 %v553
        %v2471 = vunpack.c.h.b16 %v553
        %v2472 = vunpack.c.l.b16 %v554
        %v2473 = vunpack.c.h.b16 %v554
        %v2474 = vunpack.c.l.b16 %v555
        %v2475 = vunpack.c.h.b16 %v555
        %v2476 = vunpack.c.l.b16 %v556
        %v2477 = vunpack.c.h.b16 %v556
        %v2478 = vunpack.c.l.b16 %v557
        %v2479 = vunpack.c.h.b16 %v557
        %v2480 = vunpack.c.l.b16 %v558
        %v2481 = vunpack.c.h.b16 %v558
        %v2482 = vunpack.c.l.b16 %v559
        %v2483 = vunpack.c.h.b16 %v559
        %v2484 = vunpack.c.l.b16 %v560
        %v2485 = vunpack.c.h.b16 %v560
        %v2486 = vunpack.c.l.b16 %v561
        %v2487 = vunpack.c.h.b16 %v561
        %v2488 = vunpack.c.l.b16 %v562
        %v2489 = vunpack.c.h.b16 %v562
        %v2490 = vunpack.c.l.b16 %v563
        %v2491 = vunpack.c.h.b16 %v563
        %v2492 = vunpack.c.l.b16 %v564
        %v2493 = vunpack.c.h.b16 %v564
        %v2494 = vunpack.c.l.b16 %v565
        %v2495 = vunpack.c.h.b16 %v565
        %v2496 = vunpack.c.l.b16 %v566
        %v2497 = vunpack.c.h.b16 %v566
        %v2498 = vunpack.c.l.b16 %v567
        %v2499 = vunpack.c.h.b16 %v567
        %v2500 = vunpack.c.l.b16 %v568
        %v2501 = vunpack.c.h.b16 %v568
        %v2502 = vunpack.c.l.b16 %v569
        %v2503 = vunpack.c.h.b16 %v569
        %v2504 = vunpack.c.l.b16 %v570
        %v2505 = vunpack.c.h.b16 %v570
        %v2506 = vunpack.c.l.b16 %v571
        %v2507 = vunpack.c.h.b16 %v571
        %v2508 = vunpack.c.l.b16 %v572
        %v2509 = vunpack.c.h.b16 %v572
        %v2510 = vunpack.c.l.b16 %v573
        %v2511 = vunpack.c.h.b16 %v573
        %v2512 = vunpack.c.l.b16 %v574
        %v2513 = vunpack.c.h.b16 %v574
        %v2514 = vunpack.c.l.b16 %v575
        %v2515 = vunpack.c.h.b16 %v575
        %v2516 = vunpack.c.l.b16 %v576
        %v2517 = vunpack.c.h.b16 %v576
        %v2518 = vunpack.c.l.b16 %v577
        %v2519 = vunpack.c.h.b16 %v577
        %v2520 = vunpack.c.l.b16 %v578
        %v2521 = vunpack.c.h.b16 %v578
        %v2522 = vunpack.c.l.b16 %v579
        %v2523 = vunpack.c.h.b16 %v579
        %v2524 = vunpack.c.l.b16 %v580
        %v2525 = vunpack.c.h.b16 %v580
        %v2526 = vunpack.c.l.b16 %v581
        %v2527 = vunpack.c.h.b16 %v581
        %v2528 = vunpack.c.l.b16 %v582
        %v2529 = vunpack.c.h.b16 %v582
        %v2530 = vunpack.c.l.b16 %v583
        %v2531 = vunpack.c.h.b16 %v583
        %v2532 = vunpack.c.l.b16 %v584
        %v2533 = vunpack.c.h.b16 %v584
        %v2534 = vunpack.c.l.b16 %v585
        %v2535 = vunpack.c.h.b16 %v585
        %v2536 = vunpack.c.l.b16 %v586
        %v2537 = vunpack.c.h.b16 %v586
        %v2538 = vunpack.c.l.b16 %v587
        %v2539 = vunpack.c.h.b16 %v587
        %v2540 = vunpack.c.l.b16 %v588
        %v2541 = vunpack.c.h.b16 %v588
        %v2542 = vunpack.c.l.b16 %v589
        %v2543 = vunpack.c.h.b16 %v589
        %v2544 = vunpack.c.l.b16 %v590
        %v2545 = vunpack.c.h.b16 %v590
        %v2546 = vunpack.c.l.b16 %v591
        %v2547 = vunpack.c.h.b16 %v591
        %v2548 = vunpack.c.l.b16 %v592
        %v2549 = vunpack.c.h.b16 %v592
        %v2550 = vunpack.c.l.b16 %v593
        %v2551 = vunpack.c.h.b16 %v593
        %v2552 = vunpack.c.l.b16 %v594
        %v2553 = vunpack.c.h.b16 %v594
        %v2554 = vunpack.c.l.b16 %v595
        %v2555 = vunpack.c.h.b16 %v595
        %v2556 = vunpack.c.l.b16 %v596
        %v2557 = vunpack.c.h.b16 %v596
        %v2558 = vunpack.c.l.b16 %v597
        %v2559 = vunpack.c.h.b16 %v597
        %v2560 = vunpack.c.l.b16 %v598
        %v2561 = vunpack.c.h.b16 %v598
        %v2562 = vunpack.c.l.b16 %v599
        %v2563 = vunpack.c.h.b16 %v599
        %v2564 = vunpack.c.l.b16 %v600
        %v2565 = vunpack.c.h.b16 %v600
        %v2566 = vunpack.c.l.b16 %v601
        %v2567 = vunpack.c.h.b16 %v601
        %v2568 = vunpack.c.l.b16 %v602
        %v2569 = vunpack.c.h.b16 %v602
        %v2570 = vunpack.c.l.b16 %v603
        %v2571 = vunpack.c.h.b16 %v603
        %v2572 = vunpack.c.l.b16 %v604
        %v2573 = vunpack.c.h.b16 %v604
        %v2574 = vunpack.c.l.b16 %v605
        %v2575 = vunpack.c.h.b16 %v605
        %v2576 = vunpack.c.l.b16 %v606
        %v2577 = vunpack.c.h.b16 %v606
        %v2578 = vunpack.c.l.b16 %v607
        %v2579 = vunpack.c.h.b16 %v607
        %v2580 = vunpack.c.l.b16 %v608
        %v2581 = vunpack.c.h.b16 %v608
        %v2582 = vunpack.c.l.b16 %v609
        %v2583 = vunpack.c.h.b16 %v609
        %v2584 = vunpack.c.l.b16 %v610
        %v2585 = vunpack.c.h.b16 %v610
        %v2586 = vunpack.c.l.b16 %v611
        %v2587 = vunpack.c.h.b16 %v611
        %v2588 = vunpack.c.l.b16 %v612
        %v2589 = vunpack.c.h.b16 %v612
        %v2590 = vunpack.c.l.b16 %v613
        %v2591 = vunpack.c.h.b16 %v613
        %v2592 = vunpack.c.l.b16 %v614
        %v2593 = vunpack.c.h.b16 %v614
        %v2594 = vunpack.c.l.b16 %v615
        %v2595 = vunpack.c.h.b16 %v615
        %v2596 = vunpack.c.l.b16 %v616
        %v2597 = vunpack.c.h.b16 %v616
        %v2598 = vunpack.c.l.b16 %v617
        %v2599 = vunpack.c.h.b16 %v617
        %v2600 = vunpack.c.l.b16 %v618
        %v2601 = vunpack.c.h.b16 %v618
        %v2602 = vunpack.c.l.b16 %v619
        %v2603 = vunpack.c.h.b16 %v619
        %v2604 = vunpack.c.l.b16 %v620
        %v2605 = vunpack.c.h.b16 %v620
        %v2606 = vunpack.c.l.b16 %v621
        %v2607 = vunpack.c.h.b16 %v621
        %v2608 = vunpack.c.l.b16 %v622
        %v2609 = vunpack.c.h.b16 %v622
        %v2610 = vunpack.c.l.b16 %v623
        %v2611 = vunpack.c.h.b16 %v623
        %v2612 = vunpack.c.l.b16 %v624
        %v2613 = vunpack.c.h.b16 %v624
        %v2614 = vunpack.c.l.b16 %v625
        %v2615 = vunpack.c.h.b16 %v625
        %v2616 = vunpack.c.l.b16 %v626
        %v2617 = vunpack.c.h.b16 %v626
        %v2618 = vunpack.c.l.b16 %v627
        %v2619 = vunpack.c.h.b16 %v627
        %v2620 = vunpack.c.l.b16 %v628
        %v2621 = vunpack.c.h.b16 %v628
        %v2622 = vunpack.c.l.b16 %v629
        %v2623 = vunpack.c.h.b16 %v629
        %v2624 = vunpack.c.l.b16 %v630
        %v2625 = vunpack.c.h.b16 %v630
        %v2626 = vunpack.c.l.b16 %v631
        %v2627 = vunpack.c.h.b16 %v631
        %v2628 = vunpack.c.l.b16 %v632
        %v2629 = vunpack.c.h.b16 %v632
        %v2630 = vunpack.c.l.b16 %v633
        %v2631 = vunpack.c.h.b16 %v633
        %v2632 = vunpack.c.l.b16 %v634
        %v2633 = vunpack.c.h.b16 %v634
        %v2634 = vunpack.c.l.b16 %v635
        %v2635 = vunpack.c.h.b16 %v635
        %v2636 = vunpack.c.l.b16 %v636
        %v2637 = vunpack.c.h.b16 %v636
        %v2638 = vunpack.c.l.b16 %v637
        %v2639 = vunpack.c.h.b16 %v637
        %v2640 = vunpack.c.l.b16 %v638
        %v2641 = vunpack.c.h.b16 %v638
        %v2642 = vunpack.c.l.b16 %v639
        %v2643 = vunpack.c.h.b16 %v639
        %v2644 = vunpack.c.l.b16 %v640
        %v2645 = vunpack.c.h.b16 %v640
        %v2646 = vunpack.c.l.b16 %v641
        %v2647 = vunpack.c.h.b16 %v641
        %v2648 = vunpack.c.l.b16 %v642
        %v2649 = vunpack.c.h.b16 %v642
        %v2650 = vunpack.c.l.b16 %v643
        %v2651 = vunpack.c.h.b16 %v643
        %v2652 = vunpack.c.l.b16 %v644
        %v2653 = vunpack.c.h.b16 %v644
        %v2654 = vunpack.c.l.b16 %v645
        %v2655 = vunpack.c.h.b16 %v645
        %v2656 = vunpack.c.l.b16 %v646
        %v2657 = vunpack.c.h.b16 %v646
        %v2658 = vunpack.c.l.b16 %v647
        %v2659 = vunpack.c.h.b16 %v647
        %v2660 = vunpack.c.l.b16 %v648
        %v2661 = vunpack.c.h.b16 %v648
        %v2662 = vunpack.c.l.b16 %v649
        %v2663 = vunpack.c.h.b16 %v649
        %v2664 = vunpack.c.l.b16 %v650
        %v2665 = vunpack.c.h.b16 %v650
        %v2666 = vunpack.c.l.b16 %v651
        %v2667 = vunpack.c.h.b16 %v651
        %v2668 = vunpack.c.l.b16 %v652
        %v2669 = vunpack.c.h.b16 %v652
        %v2670 = vunpack.c.l.b16 %v653
        %v2671 = vunpack.c.h.b16 %v653
        %v2672 = vunpack.c.l.b16 %v654
        %v2673 = vunpack.c.h.b16 %v654
        %v2674 = vunpack.c.l.b16 %v655
        %v2675 = vunpack.c.h.b16 %v655
        %v2676 = vunpack.c.l.b16 %v656
        %v2677 = vunpack.c.h.b16 %v656
        %v2678 = vunpack.c.l.b16 %v657
        %v2679 = vunpack.c.h.b16 %v657
        %v2680 = vunpack.c.l.b16 %v658
        %v2681 = vunpack.c.h.b16 %v658
        %v2682 = vunpack.c.l.b16 %v659
        %v2683 = vunpack.c.h.b16 %v659
        %v2684 = vunpack.c.l.b16 %v660
        %v2685 = vunpack.c.h.b16 %v660
        %v2686 = vunpack.c.l.b16 %v661
        %v2687 = vunpack.c.h.b16 %v661
        %v2688 = vunpack.c.l.b16 %v662
        %v2689 = vunpack.c.h.b16 %v662
        %v2690 = vunpack.c.l.b16 %v663
        %v2691 = vunpack.c.h.b16 %v663
        %v2692 = vunpack.c.l.b16 %v664
        %v2693 = vunpack.c.h.b16 %v664
        %v2694 = vunpack.c.l.b16 %v665
        %v2695 = vunpack.c.h.b16 %v665
        %v2696 = vunpack.c.l.b16 %v666
        %v2697 = vunpack.c.h.b16 %v666
        %v2698 = vunpack.c.l.b16 %v667
        %v2699 = vunpack.c.h.b16 %v667
        %v2700 = vunpack.c.l.b16 %v668
        %v2701 = vunpack.c.h.b16 %v668
        %v2702 = vunpack.c.l.b16 %v669
        %v2703 = vunpack.c.h.b16 %v669
        %v2704 = vunpack.c.l.b16 %v670
        %v2705 = vunpack.c.h.b16 %v670
        %v2706 = vunpack.c.l.b16 %v671
        %v2707 = vunpack.c.h.b16 %v671
        %v2708 = vunpack.c.l.b16 %v672
        %v2709 = vunpack.c.h.b16 %v672
        %v2710 = vunpack.c.l.b16 %v673
        %v2711 = vunpack.c.h.b16 %v673
        %v2712 = vunpack.c.l.b16 %v674
        %v2713 = vunpack.c.h.b16 %v674
        %v2714 = vunpack.c.l.b16 %v675
        %v2715 = vunpack.c.h.b16 %v675
        %v2716 = vunpack.c.l.b16 %v676
        %v2717 = vunpack.c.h.b16 %v676
        %v2718 = vunpack.c.l.b16 %v677
        %v2719 = vunpack.c.h.b16 %v677
        %v2720 = vunpack.c.l.b16 %v678
        %v2721 = vunpack.c.h.b16 %v678
        %v2722 = vunpack.c.l.b16 %v679
        %v2723 = vunpack.c.h.b16 %v679
        %v2724 = vunpack.c.l.b16 %v680
        %v2725 = vunpack.c.h.b16 %v680
        %v2726 = vunpack.c.l.b16 %v681
        %v2727 = vunpack.c.h.b16 %v681
        %v2728 = vunpack.c.l.b16 %v682
        %v2729 = vunpack.c.h.b16 %v682
        %v2730 = vunpack.c.l.b16 %v683
        %v2731 = vunpack.c.h.b16 %v683
        %v2732 = vunpack.c.l.b16 %v684
        %v2733 = vunpack.c.h.b16 %v684
        %v2734 = vunpack.c.l.b16 %v685
        %v2735 = vunpack.c.h.b16 %v685
        %v2736 = vunpack.c.l.b16 %v686
        %v2737 = vunpack.c.h.b16 %v686
        %v2738 = vunpack.c.l.b16 %v687
        %v2739 = vunpack.c.h.b16 %v687
        %v2740 = vunpack.c.l.b16 %v688
        %v2741 = vunpack.c.h.b16 %v688
        %v2742 = vunpack.c.l.b16 %v689
        %v2743 = vunpack.c.h.b16 %v689
        %v2744 = vunpack.c.l.b16 %v690
        %v2745 = vunpack.c.h.b16 %v690
        %v2746 = vunpack.c.l.b16 %v691
        %v2747 = vunpack.c.h.b16 %v691
        %v2748 = vunpack.c.l.b16 %v692
        %v2749 = vunpack.c.h.b16 %v692
        %v2750 = vunpack.c.l.b16 %v693
        %v2751 = vunpack.c.h.b16 %v693
        %v2752 = vunpack.c.l.b16 %v694
        %v2753 = vunpack.c.h.b16 %v694
        %v2754 = vunpack.c.l.b16 %v695
        %v2755 = vunpack.c.h.b16 %v695
        %v2756 = vunpack.c.l.b16 %v696
        %v2757 = vunpack.c.h.b16 %v696
        %v2758 = vunpack.c.l.b16 %v697
        %v2759 = vunpack.c.h.b16 %v697
        %v2760 = vunpack.c.l.b16 %v698
        %v2761 = vunpack.c.h.b16 %v698
        %v2762 = vunpack.c.l.b16 %v699
        %v2763 = vunpack.c.h.b16 %v699
        %v2764 = vunpack.c.l.b16 %v700
        %v2765 = vunpack.c.h.b16 %v700
        %v2766 = vunpack.c.l.b16 %v701
        %v2767 = vunpack.c.h.b16 %v701
        %v2768 = vunpack.c.l.b16 %v702
        %v2769 = vunpack.c.h.b16 %v702
        %v2770 = vunpack.c.l.b16 %v703
        %v2771 = vunpack.c.h.b16 %v703
        %v2772 = vunpack.c.l.b16 %v704
        %v2773 = vunpack.c.h.b16 %v704
        %v2774 = vunpack.c.l.b16 %v705
        %v2775 = vunpack.c.h.b16 %v705
        %v2776 = vunpack.c.l.b16 %v706
        %v2777 = vunpack.c.h.b16 %v706
        %v2778 = vunpack.c.l.b16 %v707
        %v2779 = vunpack.c.h.b16 %v707
        %v2780 = vunpack.c.l.b16 %v708
        %v2781 = vunpack.c.h.b16 %v708
        %v2782 = vunpack.c.l.b16 %v709
        %v2783 = vunpack.c.h.b16 %v709
        %v2784 = vunpack.c.l.b16 %v710
        %v2785 = vunpack.c.h.b16 %v710
        %v2786 = vunpack.c.l.b16 %v711
        %v2787 = vunpack.c.h.b16 %v711
        %v2788 = vunpack.c.l.b16 %v712
        %v2789 = vunpack.c.h.b16 %v712
        %v2790 = vunpack.c.l.b16 %v713
        %v2791 = vunpack.c.h.b16 %v713
        %v2792 = vunpack.c.l.b16 %v714
        %v2793 = vunpack.c.h.b16 %v714
        %v2794 = vunpack.c.l.b16 %v715
        %v2795 = vunpack.c.h.b16 %v715
        %v2796 = vunpack.c.l.b16 %v716
        %v2797 = vunpack.c.h.b16 %v716
        %v2798 = vunpack.c.l.b16 %v717
        %v2799 = vunpack.c.h.b16 %v717
        %v2800 = vunpack.c.l.b16 %v718
        %v2801 = vunpack.c.h.b16 %v718
        %v2802 = vunpack.c.l.b16 %v719
        %v2803 = vunpack.c.h.b16 %v719
        %v2804 = vunpack.c.l.b16 %v720
        %v2805 = vunpack.c.h.b16 %v720
        %v2806 = vunpack.c.l.b16 %v721
        %v2807 = vunpack.c.h.b16 %v721
        %v2808 = vunpack.c.l.b16 %v722
        %v2809 = vunpack.c.h.b16 %v722
        %v2810 = vunpack.c.l.b16 %v723
        %v2811 = vunpack.c.h.b16 %v723
        %v2812 = vunpack.c.l.b16 %v724
        %v2813 = vunpack.c.h.b16 %v724
        %v2814 = vunpack.c.l.b16 %v725
        %v2815 = vunpack.c.h.b16 %v725
        %v2816 = vunpack.c.l.b16 %v726
        %v2817 = vunpack.c.h.b16 %v726
        %v2818 = vunpack.c.l.b16 %v727
        %v2819 = vunpack.c.h.b16 %v727
        %v2820 = vunpack.c.l.b16 %v728
        %v2821 = vunpack.c.h.b16 %v728
        %v2822 = vunpack.c.l.b16 %v729
        %v2823 = vunpack.c.h.b16 %v729
        %v2824 = vunpack.c.l.b16 %v730
        %v2825 = vunpack.c.h.b16 %v730
        %v2826 = vunpack.c.l.b16 %v731
        %v2827 = vunpack.c.h.b16 %v731
        %v2828 = vunpack.c.l.b16 %v732
        %v2829 = vunpack.c.h.b16 %v732
        %v2830 = vunpack.c.l.b16 %v733
        %v2831 = vunpack.c.h.b16 %v733
        %v2832 = vunpack.c.l.b16 %v734
        %v2833 = vunpack.c.h.b16 %v734
        %v2834 = vunpack.c.l.b16 %v735
        %v2835 = vunpack.c.h.b16 %v735
        %v2836 = vunpack.c.l.b16 %v736
        %v2837 = vunpack.c.h.b16 %v736
        %v2838 = vunpack.c.l.b16 %v737
        %v2839 = vunpack.c.h.b16 %v737
        %v2840 = vunpack.c.l.b16 %v738
        %v2841 = vunpack.c.h.b16 %v738
        %v2842 = vunpack.c.l.b16 %v739
        %v2843 = vunpack.c.h.b16 %v739
        %v2844 = vunpack.c.l.b16 %v740
        %v2845 = vunpack.c.h.b16 %v740
        %v2846 = vunpack.c.l.b16 %v741
        %v2847 = vunpack.c.h.b16 %v741
        %v2848 = vunpack.c.l.b16 %v742
        %v2849 = vunpack.c.h.b16 %v742
        %v2850 = vunpack.c.l.b16 %v743
        %v2851 = vunpack.c.h.b16 %v743
        %v2852 = vunpack.c.l.b16 %v744
        %v2853 = vunpack.c.h.b16 %v744
        %v2854 = vunpack.c.l.b16 %v745
        %v2855 = vunpack.c.h.b16 %v745
        %v2856 = vunpack.c.l.b16 %v746
        %v2857 = vunpack.c.h.b16 %v746
        %v2858 = vunpack.c.l.b16 %v747
        %v2859 = vunpack.c.h.b16 %v747
        %v2860 = vunpack.c.l.b16 %v748
        %v2861 = vunpack.c.h.b16 %v748
        %v2862 = vunpack.c.l.b16 %v749
        %v2863 = vunpack.c.h.b16 %v749
        %v2864 = vunpack.c.l.b16 %v750
        %v2865 = vunpack.c.h.b16 %v750
        %v2866 = vunpack.c.l.b16 %v751
        %v2867 = vunpack.c.h.b16 %v751
        %v2868 = vunpack.c.l.b16 %v752
        %v2869 = vunpack.c.h.b16 %v752
        %v2870 = vunpack.c.l.b16 %v753
        %v2871 = vunpack.c.h.b16 %v753
        %v2872 = vunpack.c.l.b16 %v754
        %v2873 = vunpack.c.h.b16 %v754
        %v2874 = vunpack.c.l.b16 %v755
        %v2875 = vunpack.c.h.b16 %v755
        %v2876 = vunpack.c.l.b16 %v756
        %v2877 = vunpack.c.h.b16 %v756
        %v2878 = vunpack.c.l.b16 %v757
        %v2879 = vunpack.c.h.b16 %v757
        %v2880 = vunpack.c.l.b16 %v758
        %v2881 = vunpack.c.h.b16 %v758
        %v2882 = vunpack.c.l.b16 %v759
        %v2883 = vunpack.c.h.b16 %v759
        %v2884 = vunpack.c.l.b16 %v760
        %v2885 = vunpack.c.h.b16 %v760
        %v2886 = vunpack.c.l.b16 %v761
        %v2887 = vunpack.c.h.b16 %v761
        %v2888 = vunpack.c.l.b16 %v762
        %v2889 = vunpack.c.h.b16 %v762
        %v2890 = vunpack.c.l.b16 %v763
        %v2891 = vunpack.c.h.b16 %v763
        %v2892 = vunpack.c.l.b16 %v764
        %v2893 = vunpack.c.h.b16 %v764
        %v2894 = vunpack.c.l.b16 %v765
        %v2895 = vunpack.c.h.b16 %v765
        %v2896 = vunpack.c.l.b16 %v766
        %v2897 = vunpack.c.h.b16 %v766
        %v2898 = vunpack.c.l.b16 %v767
        %v2899 = vunpack.c.h.b16 %v767
        %v2900 = vunpack.c.l.b16 %v768
        %v2901 = vunpack.c.h.b16 %v768
        %v2902 = vunpack.c.l.b16 %v769
        %v2903 = vunpack.c.h.b16 %v769
        %v2904 = vunpack.c.l.b16 %v770
        %v2905 = vunpack.c.h.b16 %v770
        %v2906 = vunpack.c.l.b16 %v771
        %v2907 = vunpack.c.h.b16 %v771
        %v2908 = vunpack.c.l.b16 %v772
        %v2909 = vunpack.c.h.b16 %v772
        %v2910 = vunpack.c.l.b16 %v773
        %v2911 = vunpack.c.h.b16 %v773
        %v2912 = vunpack.c.l.b16 %v774
        %v2913 = vunpack.c.h.b16 %v774
        %v2914 = vunpack.c.l.b16 %v775
        %v2915 = vunpack.c.h.b16 %v775
        %v2916 = vunpack.c.l.b16 %v776
        %v2917 = vunpack.c.h.b16 %v776
        %v2918 = vunpack.c.l.b16 %v777
        %v2919 = vunpack.c.h.b16 %v777
        %v2920 = vunpack.c.l.b16 %v778
        %v2921 = vunpack.c.h.b16 %v778
        %v2922 = vunpack.c.l.b16 %v779
        %v2923 = vunpack.c.h.b16 %v779
        %v2924 = vunpack.c.l.b16 %v780
        %v2925 = vunpack.c.h.b16 %v780
        %v2926 = vunpack.c.l.b16 %v781
        %v2927 = vunpack.c.h.b16 %v781
        %v2928 = vunpack.c.l.b16 %v782
        %v2929 = vunpack.c.h.b16 %v782
        %v2930 = vunpack.c.l.b16 %v783
        %v2931 = vunpack.c.h.b16 %v783
        %v2932 = vunpack.c.l.b16 %v784
        %v2933 = vunpack.c.h.b16 %v784
        %v2934 = vunpack.c.l.b16 %v785
        %v2935 = vunpack.c.h.b16 %v785
        %v2936 = vunpack.c.l.b16 %v786
        %v2937 = vunpack.c.h.b16 %v786
        %v2938 = vunpack.c.l.b16 %v787
        %v2939 = vunpack.c.h.b16 %v787
        %v2940 = vunpack.c.l.b16 %v788
        %v2941 = vunpack.c.h.b16 %v788
        %v2942 = vunpack.c.l.b16 %v789
        %v2943 = vunpack.c.h.b16 %v789
        %v2944 = vunpack.c.l.b16 %v790
        %v2945 = vunpack.c.h.b16 %v790
        %v2946 = vunpack.c.l.b16 %v791
        %v2947 = vunpack.c.h.b16 %v791
        %v2948 = vunpack.c.l.b16 %v792
        %v2949 = vunpack.c.h.b16 %v792
        %v2950 = vunpack.c.l.b16 %v793
        %v2951 = vunpack.c.h.b16 %v793
        %v2952 = vunpack.c.l.b16 %v794
        %v2953 = vunpack.c.h.b16 %v794
        %v2954 = vunpack.c.l.b16 %v795
        %v2955 = vunpack.c.h.b16 %v795
        %v2956 = vunpack.c.l.b16 %v796
        %v2957 = vunpack.c.h.b16 %v796
        %v2958 = vunpack.c.l.b16 %v797
        %v2959 = vunpack.c.h.b16 %v797
        %v2960 = vunpack.c.l.b16 %v798
        %v2961 = vunpack.c.h.b16 %v798
        %v2962 = vunpack.c.l.b16 %v799
        %v2963 = vunpack.c.h.b16 %v799
        %v2964 = vunpack.c.l.b16 %v800
        %v2965 = vunpack.c.h.b16 %v800
        %v2966 = vunpack.c.l.b16 %v801
        %v2967 = vunpack.c.h.b16 %v801
        %v2968 = vunpack.c.l.b16 %v802
        %v2969 = vunpack.c.h.b16 %v802
        %v2970 = vunpack.c.l.b16 %v803
        %v2971 = vunpack.c.h.b16 %v803
        %v2972 = vunpack.c.l.b16 %v804
        %v2973 = vunpack.c.h.b16 %v804
        %v2974 = vunpack.c.l.b16 %v805
        %v2975 = vunpack.c.h.b16 %v805
        %v2976 = vunpack.c.l.b16 %v806
        %v2977 = vunpack.c.h.b16 %v806
        %v2978 = vunpack.c.l.b16 %v807
        %v2979 = vunpack.c.h.b16 %v807
        %v2980 = vunpack.c.l.b16 %v808
        %v2981 = vunpack.c.h.b16 %v808
        %v2982 = vunpack.c.l.b16 %v809
        %v2983 = vunpack.c.h.b16 %v809
        %v2984 = vunpack.c.l.b16 %v810
        %v2985 = vunpack.c.h.b16 %v810
        %v2986 = vunpack.c.l.b16 %v811
        %v2987 = vunpack.c.h.b16 %v811
        %v2988 = vpack.c.b16 %v1972, %v1964
        %v2989 = vpack.c.b16 %v1973, %v1965
        %v2990 = vpack.c.b16 %v1974, %v1966
        %v2991 = vpack.c.b16 %v1975, %v1967
        %v2992 = vpack.c.b16 %v1976, %v1968
        %v2993 = vpack.c.b16 %v1977, %v1969
        %v2994 = vpack.c.b16 %v1978, %v1970
        %v2995 = vpack.c.b16 %v1979, %v1971
        %v2996 = vpack.c.b16 %v1988, %v1980
        %v2997 = vpack.c.b16 %v1989, %v1981
        %v2998 = vpack.c.b16 %v1990, %v1982
        %v2999 = vpack.c.b16 %v1991, %v1983
        %v3000 = vpack.c.b16 %v1992, %v1984
        %v3001 = vpack.c.b16 %v1993, %v1985
        %v3002 = vpack.c.b16 %v1994, %v1986
        %v3003 = vpack.c.b16 %v1995, %v1987
        %v3004 = vpack.c.b16 %v2004, %v1996
        %v3005 = vpack.c.b16 %v2005, %v1997
        %v3006 = vpack.c.b16 %v2006, %v1998
        %v3007 = vpack.c.b16 %v2007, %v1999
        %v3008 = vpack.c.b16 %v2008, %v2000
        %v3009 = vpack.c.b16 %v2009, %v2001
        %v3010 = vpack.c.b16 %v2010, %v2002
        %v3011 = vpack.c.b16 %v2011, %v2003
        %v3012 = vpack.c.b16 %v2020, %v2012
        %v3013 = vpack.c.b16 %v2021, %v2013
        %v3014 = vpack.c.b16 %v2022, %v2014
        %v3015 = vpack.c.b16 %v2023, %v2015
        %v3016 = vpack.c.b16 %v2024, %v2016
        %v3017 = vpack.c.b16 %v2025, %v2017
        %v3018 = vpack.c.b16 %v2026, %v2018
        %v3019 = vpack.c.b16 %v2027, %v2019
        %v3020 = vpack.c.b16 %v2036, %v2028
        %v3021 = vpack.c.b16 %v2037, %v2029
        %v3022 = vpack.c.b16 %v2038, %v2030
        %v3023 = vpack.c.b16 %v2039, %v2031
        %v3024 = vpack.c.b16 %v2040, %v2032
        %v3025 = vpack.c.b16 %v2041, %v2033
        %v3026 = vpack.c.b16 %v2042, %v2034
        %v3027 = vpack.c.b16 %v2043, %v2035
        %v3028 = vpack.c.b16 %v2052, %v2044
        %v3029 = vpack.c.b16 %v2053, %v2045
        %v3030 = vpack.c.b16 %v2054, %v2046
        %v3031 = vpack.c.b16 %v2055, %v2047
        %v3032 = vpack.c.b16 %v2056, %v2048
        %v3033 = vpack.c.b16 %v2057, %v2049
        %v3034 = vpack.c.b16 %v2058, %v2050
        %v3035 = vpack.c.b16 %v2059, %v2051
        %v3036 = vpack.c.b16 %v2068, %v2060
        %v3037 = vpack.c.b16 %v2069, %v2061
        %v3038 = vpack.c.b16 %v2070, %v2062
        %v3039 = vpack.c.b16 %v2071, %v2063
        %v3040 = vpack.c.b16 %v2072, %v2064
        %v3041 = vpack.c.b16 %v2073, %v2065
        %v3042 = vpack.c.b16 %v2074, %v2066
        %v3043 = vpack.c.b16 %v2075, %v2067
        %v3044 = vpack.c.b16 %v2084, %v2076
        %v3045 = vpack.c.b16 %v2085, %v2077
        %v3046 = vpack.c.b16 %v2086, %v2078
        %v3047 = vpack.c.b16 %v2087, %v2079
        %v3048 = vpack.c.b16 %v2088, %v2080
        %v3049 = vpack.c.b16 %v2089, %v2081
        %v3050 = vpack.c.b16 %v2090, %v2082
        %v3051 = vpack.c.b16 %v2091, %v2083
        %v3052 = vpack.c.b16 %v2100, %v2092
        %v3053 = vpack.c.b16 %v2101, %v2093
        %v3054 = vpack.c.b16 %v2102, %v2094
        %v3055 = vpack.c.b16 %v2103, %v2095
        %v3056 = vpack.c.b16 %v2104, %v2096
        %v3057 = vpack.c.b16 %v2105, %v2097
        %v3058 = vpack.c.b16 %v2106, %v2098
        %v3059 = vpack.c.b16 %v2107, %v2099
        %v3060 = vpack.c.b16 %v2116, %v2108
        %v3061 = vpack.c.b16 %v2117, %v2109
        %v3062 = vpack.c.b16 %v2118, %v2110
        %v3063 = vpack.c.b16 %v2119, %v2111
        %v3064 = vpack.c.b16 %v2120, %v2112
        %v3065 = vpack.c.b16 %v2121, %v2113
        %v3066 = vpack.c.b16 %v2122, %v2114
        %v3067 = vpack.c.b16 %v2123, %v2115
        %v3068 = vpack.c.b16 %v2132, %v2124
        %v3069 = vpack.c.b16 %v2133, %v2125
        %v3070 = vpack.c.b16 %v2134, %v2126
        %v3071 = vpack.c.b16 %v2135, %v2127
        %v3072 = vpack.c.b16 %v2136, %v2128
        %v3073 = vpack.c.b16 %v2137, %v2129
        %v3074 = vpack.c.b16 %v2138, %v2130
        %v3075 = vpack.c.b16 %v2139, %v2131
        %v3076 = vpack.c.b16 %v2148, %v2140
        %v3077 = vpack.c.b16 %v2149, %v2141
        %v3078 = vpack.c.b16 %v2150, %v2142
        %v3079 = vpack.c.b16 %v2151, %v2143
        %v3080 = vpack.c.b16 %v2152, %v2144
        %v3081 = vpack.c.b16 %v2153, %v2145
        %v3082 = vpack.c.b16 %v2154, %v2146
        %v3083 = vpack.c.b16 %v2155, %v2147
        %v3084 = vpack.c.b16 %v2164, %v2156
        %v3085 = vpack.c.b16 %v2165, %v2157
        %v3086 = vpack.c.b16 %v2166, %v2158
        %v3087 = vpack.c.b16 %v2167, %v2159
        %v3088 = vpack.c.b16 %v2168, %v2160
        %v3089 = vpack.c.b16 %v2169, %v2161
        %v3090 = vpack.c.b16 %v2170, %v2162
        %v3091 = vpack.c.b16 %v2171, %v2163
        %v3092 = vpack.c.b16 %v2180, %v2172
        %v3093 = vpack.c.b16 %v2181, %v2173
        %v3094 = vpack.c.b16 %v2182, %v2174
        %v3095 = vpack.c.b16 %v2183, %v2175
        %v3096 = vpack.c.b16 %v2184, %v2176
        %v3097 = vpack.c.b16 %v2185, %v2177
        %v3098 = vpack.c.b16 %v2186, %v2178
        %v3099 = vpack.c.b16 %v2187, %v2179
        %v3100 = vpack.c.b16 %v2196, %v2188
        %v3101 = vpack.c.b16 %v2197, %v2189
        %v3102 = vpack.c.b16 %v2198, %v2190
        %v3103 = vpack.c.b16 %v2199, %v2191
        %v3104 = vpack.c.b16 %v2200, %v2192
        %v3105 = vpack.c.b16 %v2201, %v2193
        %v3106 = vpack.c.b16 %v2202, %v2194
        %v3107 = vpack.c.b16 %v2203, %v2195
        %v3108 = vpack.c.b16 %v2212, %v2204
        %v3109 = vpack.c.b16 %v2213, %v2205
        %v3110 = vpack.c.b16 %v2214, %v2206
        %v3111 = vpack.c.b16 %v2215, %v2207
        %v3112 = vpack.c.b16 %v2216, %v2208
        %v3113 = vpack.c.b16 %v2217, %v2209
        %v3114 = vpack.c.b16 %v2218, %v2210
        %v3115 = vpack.c.b16 %v2219, %v2211
        %v3116 = vpack.c.b16 %v2228, %v2220
        %v3117 = vpack.c.b16 %v2229, %v2221
        %v3118 = vpack.c.b16 %v2230, %v2222
        %v3119 = vpack.c.b16 %v2231, %v2223
        %v3120 = vpack.c.b16 %v2232, %v2224
        %v3121 = vpack.c.b16 %v2233, %v2225
        %v3122 = vpack.c.b16 %v2234, %v2226
        %v3123 = vpack.c.b16 %v2235, %v2227
        %v3124 = vpack.c.b16 %v2244, %v2236
        %v3125 = vpack.c.b16 %v2245, %v2237
        %v3126 = vpack.c.b16 %v2246, %v2238
        %v3127 = vpack.c.b16 %v2247, %v2239
        %v3128 = vpack.c.b16 %v2248, %v2240
        %v3129 = vpack.c.b16 %v2249, %v2241
        %v3130 = vpack.c.b16 %v2250, %v2242
        %v3131 = vpack.c.b16 %v2251, %v2243
        %v3132 = vpack.c.b16 %v2260, %v2252
        %v3133 = vpack.c.b16 %v2261, %v2253
        %v3134 = vpack.c.b16 %v2262, %v2254
        %v3135 = vpack.c.b16 %v2263, %v2255
        %v3136 = vpack.c.b16 %v2264, %v2256
        %v3137 = vpack.c.b16 %v2265, %v2257
        %v3138 = vpack.c.b16 %v2266, %v2258
        %v3139 = vpack.c.b16 %v2267, %v2259
        %v3140 = vpack.c.b16 %v2276, %v2268
        %v3141 = vpack.c.b16 %v2277, %v2269
        %v3142 = vpack.c.b16 %v2278, %v2270
        %v3143 = vpack.c.b16 %v2279, %v2271
        %v3144 = vpack.c.b16 %v2280, %v2272
        %v3145 = vpack.c.b16 %v2281, %v2273
        %v3146 = vpack.c.b16 %v2282, %v2274
        %v3147 = vpack.c.b16 %v2283, %v2275
        %v3148 = vpack.c.b16 %v2292, %v2284
        %v3149 = vpack.c.b16 %v2293, %v2285
        %v3150 = vpack.c.b16 %v2294, %v2286
        %v3151 = vpack.c.b16 %v2295, %v2287
        %v3152 = vpack.c.b16 %v2296, %v2288
        %v3153 = vpack.c.b16 %v2297, %v2289
        %v3154 = vpack.c.b16 %v2298, %v2290
        %v3155 = vpack.c.b16 %v2299, %v2291
        %v3156 = vpack.c.b16 %v2308, %v2300
        %v3157 = vpack.c.b16 %v2309, %v2301
        %v3158 = vpack.c.b16 %v2310, %v2302
        %v3159 = vpack.c.b16 %v2311, %v2303
        %v3160 = vpack.c.b16 %v2312, %v2304
        %v3161 = vpack.c.b16 %v2313, %v2305
        %v3162 = vpack.c.b16 %v2314, %v2306
        %v3163 = vpack.c.b16 %v2315, %v2307
        %v3164 = vpack.c.b16 %v2324, %v2316
        %v3165 = vpack.c.b16 %v2325, %v2317
        %v3166 = vpack.c.b16 %v2326, %v2318
        %v3167 = vpack.c.b16 %v2327, %v2319
        %v3168 = vpack.c.b16 %v2328, %v2320
        %v3169 = vpack.c.b16 %v2329, %v2321
        %v3170 = vpack.c.b16 %v2330, %v2322
        %v3171 = vpack.c.b16 %v2331, %v2323
        %v3172 = vpack.c.b16 %v2340, %v2332
        %v3173 = vpack.c.b16 %v2341, %v2333
        %v3174 = vpack.c.b16 %v2342, %v2334
        %v3175 = vpack.c.b16 %v2343, %v2335
        %v3176 = vpack.c.b16 %v2344, %v2336
        %v3177 = vpack.c.b16 %v2345, %v2337
        %v3178 = vpack.c.b16 %v2346, %v2338
        %v3179 = vpack.c.b16 %v2347, %v2339
        %v3180 = vpack.c.b16 %v2356, %v2348
        %v3181 = vpack.c.b16 %v2357, %v2349
        %v3182 = vpack.c.b16 %v2358, %v2350
        %v3183 = vpack.c.b16 %v2359, %v2351
        %v3184 = vpack.c.b16 %v2360, %v2352
        %v3185 = vpack.c.b16 %v2361, %v2353
        %v3186 = vpack.c.b16 %v2362, %v2354
        %v3187 = vpack.c.b16 %v2363, %v2355
        %v3188 = vpack.c.b16 %v2372, %v2364
        %v3189 = vpack.c.b16 %v2373, %v2365
        %v3190 = vpack.c.b16 %v2374, %v2366
        %v3191 = vpack.c.b16 %v2375, %v2367
        %v3192 = vpack.c.b16 %v2376, %v2368
        %v3193 = vpack.c.b16 %v2377, %v2369
        %v3194 = vpack.c.b16 %v2378, %v2370
        %v3195 = vpack.c.b16 %v2379, %v2371
        %v3196 = vpack.c.b16 %v2388, %v2380
        %v3197 = vpack.c.b16 %v2389, %v2381
        %v3198 = vpack.c.b16 %v2390, %v2382
        %v3199 = vpack.c.b16 %v2391, %v2383
        %v3200 = vpack.c.b16 %v2392, %v2384
        %v3201 = vpack.c.b16 %v2393, %v2385
        %v3202 = vpack.c.b16 %v2394, %v2386
        %v3203 = vpack.c.b16 %v2395, %v2387
        %v3204 = vpack.c.b16 %v2404, %v2396
        %v3205 = vpack.c.b16 %v2405, %v2397
        %v3206 = vpack.c.b16 %v2406, %v2398
        %v3207 = vpack.c.b16 %v2407, %v2399
        %v3208 = vpack.c.b16 %v2408, %v2400
        %v3209 = vpack.c.b16 %v2409, %v2401
        %v3210 = vpack.c.b16 %v2410, %v2402
        %v3211 = vpack.c.b16 %v2411, %v2403
        %v3212 = vpack.c.b16 %v2420, %v2412
        %v3213 = vpack.c.b16 %v2421, %v2413
        %v3214 = vpack.c.b16 %v2422, %v2414
        %v3215 = vpack.c.b16 %v2423, %v2415
        %v3216 = vpack.c.b16 %v2424, %v2416
        %v3217 = vpack.c.b16 %v2425, %v2417
        %v3218 = vpack.c.b16 %v2426, %v2418
        %v3219 = vpack.c.b16 %v2427, %v2419
        %v3220 = vpack.c.b16 %v2436, %v2428
        %v3221 = vpack.c.b16 %v2437, %v2429
        %v3222 = vpack.c.b16 %v2438, %v2430
        %v3223 = vpack.c.b16 %v2439, %v2431
        %v3224 = vpack.c.b16 %v2440, %v2432
        %v3225 = vpack.c.b16 %v2441, %v2433
        %v3226 = vpack.c.b16 %v2442, %v2434
        %v3227 = vpack.c.b16 %v2443, %v2435
        %v3228 = vpack.c.b16 %v2452, %v2444
        %v3229 = vpack.c.b16 %v2453, %v2445
        %v3230 = vpack.c.b16 %v2454, %v2446
        %v3231 = vpack.c.b16 %v2455, %v2447
        %v3232 = vpack.c.b16 %v2456, %v2448
        %v3233 = vpack.c.b16 %v2457, %v2449
        %v3234 = vpack.c.b16 %v2458, %v2450
        %v3235 = vpack.c.b16 %v2459, %v2451
        %v3236 = vpack.c.b16 %v2468, %v2460
        %v3237 = vpack.c.b16 %v2469, %v2461
        %v3238 = vpack.c.b16 %v2470, %v2462
        %v3239 = vpack.c.b16 %v2471, %v2463
        %v3240 = vpack.c.b16 %v2472, %v2464
        %v3241 = vpack.c.b16 %v2473, %v2465
        %v3242 = vpack.c.b16 %v2474, %v2466
        %v3243 = vpack.c.b16 %v2475, %v2467
        %v3244 = vpack.c.b16 %v2484, %v2476
        %v3245 = vpack.c.b16 %v2485, %v2477
        %v3246 = vpack.c.b16 %v2486, %v2478
        %v3247 = vpack.c.b16 %v2487, %v2479
        %v3248 = vpack.c.b16 %v2488, %v2480
        %v3249 = vpack.c.b16 %v2489, %v2481
        %v3250 = vpack.c.b16 %v2490, %v2482
        %v3251 = vpack.c.b16 %v2491, %v2483
        %v3252 = vpack.c.b16 %v2500, %v2492
        %v3253 = vpack.c.b16 %v2501, %v2493
        %v3254 = vpack.c.b16 %v2502, %v2494
        %v3255 = vpack.c.b16 %v2503, %v2495
        %v3256 = vpack.c.b16 %v2504, %v2496
        %v3257 = vpack.c.b16 %v2505, %v2497
        %v3258 = vpack.c.b16 %v2506, %v2498
        %v3259 = vpack.c.b16 %v2507, %v2499
        %v3260 = vpack.c.b16 %v2516, %v2508
        %v3261 = vpack.c.b16 %v2517, %v2509
        %v3262 = vpack.c.b16 %v2518, %v2510
        %v3263 = vpack.c.b16 %v2519, %v2511
        %v3264 = vpack.c.b16 %v2520, %v2512
        %v3265 = vpack.c.b16 %v2521, %v2513
        %v3266 = vpack.c.b16 %v2522, %v2514
        %v3267 = vpack.c.b16 %v2523, %v2515
        %v3268 = vpack.c.b16 %v2532, %v2524
        %v3269 = vpack.c.b16 %v2533, %v2525
        %v3270 = vpack.c.b16 %v2534, %v2526
        %v3271 = vpack.c.b16 %v2535, %v2527
        %v3272 = vpack.c.b16 %v2536, %v2528
        %v3273 = vpack.c.b16 %v2537, %v2529
        %v3274 = vpack.c.b16 %v2538, %v2530
        %v3275 = vpack.c.b16 %v2539, %v2531
        %v3276 = vpack.c.b16 %v2548, %v2540
        %v3277 = vpack.c.b16 %v2549, %v2541
        %v3278 = vpack.c.b16 %v2550, %v2542
        %v3279 = vpack.c.b16 %v2551, %v2543
        %v3280 = vpack.c.b16 %v2552, %v2544
        %v3281 = vpack.c.b16 %v2553, %v2545
        %v3282 = vpack.c.b16 %v2554, %v2546
        %v3283 = vpack.c.b16 %v2555, %v2547
        %v3284 = vpack.c.b16 %v2564, %v2556
        %v3285 = vpack.c.b16 %v2565, %v2557
        %v3286 = vpack.c.b16 %v2566, %v2558
        %v3287 = vpack.c.b16 %v2567, %v2559
        %v3288 = vpack.c.b16 %v2568, %v2560
        %v3289 = vpack.c.b16 %v2569, %v2561
        %v3290 = vpack.c.b16 %v2570, %v2562
        %v3291 = vpack.c.b16 %v2571, %v2563
        %v3292 = vpack.c.b16 %v2580, %v2572
        %v3293 = vpack.c.b16 %v2581, %v2573
        %v3294 = vpack.c.b16 %v2582, %v2574
        %v3295 = vpack.c.b16 %v2583, %v2575
        %v3296 = vpack.c.b16 %v2584, %v2576
        %v3297 = vpack.c.b16 %v2585, %v2577
        %v3298 = vpack.c.b16 %v2586, %v2578
        %v3299 = vpack.c.b16 %v2587, %v2579
        %v3300 = vpack.c.b16 %v2596, %v2588
        %v3301 = vpack.c.b16 %v2597, %v2589
        %v3302 = vpack.c.b16 %v2598, %v2590
        %v3303 = vpack.c.b16 %v2599, %v2591
        %v3304 = vpack.c.b16 %v2600, %v2592
        %v3305 = vpack.c.b16 %v2601, %v2593
        %v3306 = vpack.c.b16 %v2602, %v2594
        %v3307 = vpack.c.b16 %v2603, %v2595
        %v3308 = vpack.c.b16 %v2612, %v2604
        %v3309 = vpack.c.b16 %v2613, %v2605
        %v3310 = vpack.c.b16 %v2614, %v2606
        %v3311 = vpack.c.b16 %v2615, %v2607
        %v3312 = vpack.c.b16 %v2616, %v2608
        %v3313 = vpack.c.b16 %v2617, %v2609
        %v3314 = vpack.c.b16 %v2618, %v2610
        %v3315 = vpack.c.b16 %v2619, %v2611
        %v3316 = vpack.c.b16 %v2628, %v2620
        %v3317 = vpack.c.b16 %v2629, %v2621
        %v3318 = vpack.c.b16 %v2630, %v2622
        %v3319 = vpack.c.b16 %v2631, %v2623
        %v3320 = vpack.c.b16 %v2632, %v2624
        %v3321 = vpack.c.b16 %v2633, %v2625
        %v3322 = vpack.c.b16 %v2634, %v2626
        %v3323 = vpack.c.b16 %v2635, %v2627
        %v3324 = vpack.c.b16 %v2644, %v2636
        %v3325 = vpack.c.b16 %v2645, %v2637
        %v3326 = vpack.c.b16 %v2646, %v2638
        %v3327 = vpack.c.b16 %v2647, %v2639
        %v3328 = vpack.c.b16 %v2648, %v2640
        %v3329 = vpack.c.b16 %v2649, %v2641
        %v3330 = vpack.c.b16 %v2650, %v2642
        %v3331 = vpack.c.b16 %v2651, %v2643
        %v3332 = vpack.c.b16 %v2660, %v2652
        %v3333 = vpack.c.b16 %v2661, %v2653
        %v3334 = vpack.c.b16 %v2662, %v2654
        %v3335 = vpack.c.b16 %v2663, %v2655
        %v3336 = vpack.c.b16 %v2664, %v2656
        %v3337 = vpack.c.b16 %v2665, %v2657
        %v3338 = vpack.c.b16 %v2666, %v2658
        %v3339 = vpack.c.b16 %v2667, %v2659
        %v3340 = vpack.c.b16 %v2676, %v2668
        %v3341 = vpack.c.b16 %v2677, %v2669
        %v3342 = vpack.c.b16 %v2678, %v2670
        %v3343 = vpack.c.b16 %v2679, %v2671
        %v3344 = vpack.c.b16 %v2680, %v2672
        %v3345 = vpack.c.b16 %v2681, %v2673
        %v3346 = vpack.c.b16 %v2682, %v2674
        %v3347 = vpack.c.b16 %v2683, %v2675
        %v3348 = vpack.c.b16 %v2692, %v2684
        %v3349 = vpack.c.b16 %v2693, %v2685
        %v3350 = vpack.c.b16 %v2694, %v2686
        %v3351 = vpack.c.b16 %v2695, %v2687
        %v3352 = vpack.c.b16 %v2696, %v2688
        %v3353 = vpack.c.b16 %v2697, %v2689
        %v3354 = vpack.c.b16 %v2698, %v2690
        %v3355 = vpack.c.b16 %v2699, %v2691
        %v3356 = vpack.c.b16 %v2708, %v2700
        %v3357 = vpack.c.b16 %v2709, %v2701
        %v3358 = vpack.c.b16 %v2710, %v2702
        %v3359 = vpack.c.b16 %v2711, %v2703
        %v3360 = vpack.c.b16 %v2712, %v2704
        %v3361 = vpack.c.b16 %v2713, %v2705
        %v3362 = vpack.c.b16 %v2714, %v2706
        %v3363 = vpack.c.b16 %v2715, %v2707
        %v3364 = vpack.c.b16 %v2724, %v2716
        %v3365 = vpack.c.b16 %v2725, %v2717
        %v3366 = vpack.c.b16 %v2726, %v2718
        %v3367 = vpack.c.b16 %v2727, %v2719
        %v3368 = vpack.c.b16 %v2728, %v2720
        %v3369 = vpack.c.b16 %v2729, %v2721
        %v3370 = vpack.c.b16 %v2730, %v2722
        %v3371 = vpack.c.b16 %v2731, %v2723
        %v3372 = vpack.c.b16 %v2740, %v2732
        %v3373 = vpack.c.b16 %v2741, %v2733
        %v3374 = vpack.c.b16 %v2742, %v2734
        %v3375 = vpack.c.b16 %v2743, %v2735
        %v3376 = vpack.c.b16 %v2744, %v2736
        %v3377 = vpack.c.b16 %v2745, %v2737
        %v3378 = vpack.c.b16 %v2746, %v2738
        %v3379 = vpack.c.b16 %v2747, %v2739
        %v3380 = vpack.c.b16 %v2756, %v2748
        %v3381 = vpack.c.b16 %v2757, %v2749
        %v3382 = vpack.c.b16 %v2758, %v2750
        %v3383 = vpack.c.b16 %v2759, %v2751
        %v3384 = vpack.c.b16 %v2760, %v2752
        %v3385 = vpack.c.b16 %v2761, %v2753
        %v3386 = vpack.c.b16 %v2762, %v2754
        %v3387 = vpack.c.b16 %v2763, %v2755
        %v3388 = vpack.c.b16 %v2772, %v2764
        %v3389 = vpack.c.b16 %v2773, %v2765
        %v3390 = vpack.c.b16 %v2774, %v2766
        %v3391 = vpack.c.b16 %v2775, %v2767
        %v3392 = vpack.c.b16 %v2776, %v2768
        %v3393 = vpack.c.b16 %v2777, %v2769
        %v3394 = vpack.c.b16 %v2778, %v2770
        %v3395 = vpack.c.b16 %v2779, %v2771
        %v3396 = vpack.c.b16 %v2788, %v2780
        %v3397 = vpack.c.b16 %v2789, %v2781
        %v3398 = vpack.c.b16 %v2790, %v2782
        %v3399 = vpack.c.b16 %v2791, %v2783
        %v3400 = vpack.c.b16 %v2792, %v2784
        %v3401 = vpack.c.b16 %v2793, %v2785
        %v3402 = vpack.c.b16 %v2794, %v2786
        %v3403 = vpack.c.b16 %v2795, %v2787
        %v3404 = vpack.c.b16 %v2804, %v2796
        %v3405 = vpack.c.b16 %v2805, %v2797
        %v3406 = vpack.c.b16 %v2806, %v2798
        %v3407 = vpack.c.b16 %v2807, %v2799
        %v3408 = vpack.c.b16 %v2808, %v2800
        %v3409 = vpack.c.b16 %v2809, %v2801
        %v3410 = vpack.c.b16 %v2810, %v2802
        %v3411 = vpack.c.b16 %v2811, %v2803
        %v3412 = vpack.c.b16 %v2820, %v2812
        %v3413 = vpack.c.b16 %v2821, %v2813
        %v3414 = vpack.c.b16 %v2822, %v2814
        %v3415 = vpack.c.b16 %v2823, %v2815
        %v3416 = vpack.c.b16 %v2824, %v2816
        %v3417 = vpack.c.b16 %v2825, %v2817
        %v3418 = vpack.c.b16 %v2826, %v2818
        %v3419 = vpack.c.b16 %v2827, %v2819
        %v3420 = vpack.c.b16 %v2836, %v2828
        %v3421 = vpack.c.b16 %v2837, %v2829
        %v3422 = vpack.c.b16 %v2838, %v2830
        %v3423 = vpack.c.b16 %v2839, %v2831
        %v3424 = vpack.c.b16 %v2840, %v2832
        %v3425 = vpack.c.b16 %v2841, %v2833
        %v3426 = vpack.c.b16 %v2842, %v2834
        %v3427 = vpack.c.b16 %v2843, %v2835
        %v3428 = vpack.c.b16 %v2852, %v2844
        %v3429 = vpack.c.b16 %v2853, %v2845
        %v3430 = vpack.c.b16 %v2854, %v2846
        %v3431 = vpack.c.b16 %v2855, %v2847
        %v3432 = vpack.c.b16 %v2856, %v2848
        %v3433 = vpack.c.b16 %v2857, %v2849
        %v3434 = vpack.c.b16 %v2858, %v2850
        %v3435 = vpack.c.b16 %v2859, %v2851
        %v3436 = vpack.c.b16 %v2868, %v2860
        %v3437 = vpack.c.b16 %v2869, %v2861
        %v3438 = vpack.c.b16 %v2870, %v2862
        %v3439 = vpack.c.b16 %v2871, %v2863
        %v3440 = vpack.c.b16 %v2872, %v2864
        %v3441 = vpack.c.b16 %v2873, %v2865
        %v3442 = vpack.c.b16 %v2874, %v2866
        %v3443 = vpack.c.b16 %v2875, %v2867
        %v3444 = vpack.c.b16 %v2884, %v2876
        %v3445 = vpack.c.b16 %v2885, %v2877
        %v3446 = vpack.c.b16 %v2886, %v2878
        %v3447 = vpack.c.b16 %v2887, %v2879
        %v3448 = vpack.c.b16 %v2888, %v2880
        %v3449 = vpack.c.b16 %v2889, %v2881
        %v3450 = vpack.c.b16 %v2890, %v2882
        %v3451 = vpack.c.b16 %v2891, %v2883
        %v3452 = vpack.c.b16 %v2900, %v2892
        %v3453 = vpack.c.b16 %v2901, %v2893
        %v3454 = vpack.c.b16 %v2902, %v2894
        %v3455 = vpack.c.b16 %v2903, %v2895
        %v3456 = vpack.c.b16 %v2904, %v2896
        %v3457 = vpack.c.b16 %v2905, %v2897
        %v3458 = vpack.c.b16 %v2906, %v2898
        %v3459 = vpack.c.b16 %v2907, %v2899
        %v3460 = vpack.c.b16 %v2916, %v2908
        %v3461 = vpack.c.b16 %v2917, %v2909
        %v3462 = vpack.c.b16 %v2918, %v2910
        %v3463 = vpack.c.b16 %v2919, %v2911
        %v3464 = vpack.c.b16 %v2920, %v2912
        %v3465 = vpack.c.b16 %v2921, %v2913
        %v3466 = vpack.c.b16 %v2922, %v2914
        %v3467 = vpack.c.b16 %v2923, %v2915
        %v3468 = vpack.c.b16 %v2932, %v2924
        %v3469 = vpack.c.b16 %v2933, %v2925
        %v3470 = vpack.c.b16 %v2934, %v2926
        %v3471 = vpack.c.b16 %v2935, %v2927
        %v3472 = vpack.c.b16 %v2936, %v2928
        %v3473 = vpack.c.b16 %v2937, %v2929
        %v3474 = vpack.c.b16 %v2938, %v2930
        %v3475 = vpack.c.b16 %v2939, %v2931
        %v3476 = vpack.c.b16 %v2948, %v2940
        %v3477 = vpack.c.b16 %v2949, %v2941
        %v3478 = vpack.c.b16 %v2950, %v2942
        %v3479 = vpack.c.b16 %v2951, %v2943
        %v3480 = vpack.c.b16 %v2952, %v2944
        %v3481 = vpack.c.b16 %v2953, %v2945
        %v3482 = vpack.c.b16 %v2954, %v2946
        %v3483 = vpack.c.b16 %v2955, %v2947
        %v3484 = vpack.c.b16 %v2964, %v2956
        %v3485 = vpack.c.b16 %v2965, %v2957
        %v3486 = vpack.c.b16 %v2966, %v2958
        %v3487 = vpack.c.b16 %v2967, %v2959
        %v3488 = vpack.c.b16 %v2968, %v2960
        %v3489 = vpack.c.b16 %v2969, %v2961
        %v3490 = vpack.c.b16 %v2970, %v2962
        %v3491 = vpack.c.b16 %v2971, %v2963
        %v3492 = vpack.c.b16 %v2980, %v2972
        %v3493 = vpack.c.b16 %v2981, %v2973
        %v3494 = vpack.c.b16 %v2982, %v2974
        %v3495 = vpack.c.b16 %v2983, %v2975
        %v3496 = vpack.c.b16 %v2984, %v2976
        %v3497 = vpack.c.b16 %v2985, %v2977
        %v3498 = vpack.c.b16 %v2986, %v2978
        %v3499 = vpack.c.b16 %v2987, %v2979
        %4012 = vmatprep.subr.bf16.mxu0 %v3045
        %4013 = vmatpush1.bf16.msra.mxu0 %v3044
        %4014 = vmatprep.subr.bf16.mxu0 %v3037
        %4015 = vmatpush1.bf16.msra.mxu0 %v3036
        %4016 = vmatprep.subr.bf16.mxu0 %v3029
        %4017 = vmatpush1.bf16.msra.mxu0 %v3028
        %4018 = vmatprep.subr.bf16.mxu0 %v3021
        %4019 = vmatpush1.bf16.msra.mxu0 %v3020
        %4020 = vmatprep.subr.bf16.mxu0 %v3013
        %4021 = vmatpush1.bf16.msra.mxu0 %v3012
        %4022 = vmatprep.subr.bf16.mxu0 %v3005
        %4023 = vmatpush1.bf16.msra.mxu0 %v3004
        %4024 = vmatprep.subr.bf16.mxu0 %v2997
        %4025 = vmatpush1.bf16.msra.mxu0 %v2996
        %4026 = vmatprep.subr.bf16.mxu0 %v2989
        %4027 = vmatpush1.bf16.msra.mxu0 %v2988
        %4028 = vmatprep.subr.bf16.mxu0 %v3109
        %4029 = vmatpush2.bf16.msra.mxu0 %v3108
        %4030 = vmatprep.subr.bf16.mxu0 %v3101
        %4031 = vmatpush2.bf16.msra.mxu0 %v3100
        %4032 = vmatprep.subr.bf16.mxu0 %v3093
        %4033 = vmatpush2.bf16.msra.mxu0 %v3092
        %4034 = vmatprep.subr.bf16.mxu0 %v3085
        %4035 = vmatpush2.bf16.msra.mxu0 %v3084
        %4036 = vmatprep.subr.bf16.mxu0 %v3077
        %4037 = vmatpush2.bf16.msra.mxu0 %v3076
        %4038 = vmatprep.subr.bf16.mxu0 %v3069
        %4039 = vmatpush2.bf16.msra.mxu0 %v3068
        %4040 = vmatprep.subr.bf16.mxu0 %v3061
        %4041 = vmatpush2.bf16.msra.mxu0 %v3060
        %4042 = vmatprep.subr.bf16.mxu0 %v3053
        %4043 = vmatpush2.bf16.msra.mxu0 %v3052
        %4044 = vmatprep.mubr.bf16.mxu0 %v1197
        %4045 = vmatmul.mubr.bf16.gmra.mxu0 %v1196
        %v4046 = vpop.f32.mrf.mxu0
        %v4047 = vadd.f32 0.0, %v4046
        %v4048 = vpop.f32.mrf.mxu0
        %v4049 = vadd.f32 0.0, %v4048
        %v4050 = vpop.f32.mrf.mxu0
        %v4051 = vadd.f32 0.0, %v4050
        %v4052 = vpop.f32.mrf.mxu0
        %v4053 = vadd.f32 0.0, %v4052
        %4054 = vmatprep.mubr.bf16.mxu0 %v1205
        %4055 = vmatmul.mubr.bf16.gmra.mxu0 %v1204
        %v4056 = vpop.f32.mrf.mxu0
        %v4057 = vadd.f32 0.0, %v4056
        %v4058 = vpop.f32.mrf.mxu0
        %v4059 = vadd.f32 0.0, %v4058
        %v4060 = vpop.f32.mrf.mxu0
        %v4061 = vadd.f32 0.0, %v4060
        %v4062 = vpop.f32.mrf.mxu0
        %v4063 = vadd.f32 0.0, %v4062
        %4064 = vmatprep.mubr.bf16.mxu0 %v1213
        %4065 = vmatmul.mubr.bf16.gmra.mxu0 %v1212
        %v4066 = vpop.f32.mrf.mxu0
        %v4067 = vadd.f32 0.0, %v4066
        %v4068 = vpop.f32.mrf.mxu0
        %v4069 = vadd.f32 0.0, %v4068
        %v4070 = vpop.f32.mrf.mxu0
        %v4071 = vadd.f32 0.0, %v4070
        %v4072 = vpop.f32.mrf.mxu0
        %v4073 = vadd.f32 0.0, %v4072
        %4074 = vmatprep.mubr.bf16.mxu0 %v1221
        %4075 = vmatmul.mubr.bf16.gmra.mxu0 %v1220
        %v4076 = vpop.f32.mrf.mxu0
        %v4077 = vadd.f32 0.0, %v4076
        %v4078 = vpop.f32.mrf.mxu0
        %v4079 = vadd.f32 0.0, %v4078
        %v4080 = vpop.f32.mrf.mxu0
        %v4081 = vadd.f32 0.0, %v4080
        %v4082 = vpop.f32.mrf.mxu0
        %v4083 = vadd.f32 0.0, %v4082
        %4084 = vmatprep.mubr.bf16.mxu0 %v1229
        %4085 = vmatmul.mubr.bf16.gmra.mxu0 %v1228
        %v4086 = vpop.f32.mrf.mxu0
        %v4087 = vadd.f32 0.0, %v4086
        %v4088 = vpop.f32.mrf.mxu0
        %v4089 = vadd.f32 0.0, %v4088
        %v4090 = vpop.f32.mrf.mxu0
        %v4091 = vadd.f32 0.0, %v4090
        %v4092 = vpop.f32.mrf.mxu0
        %v4093 = vadd.f32 0.0, %v4092
        %4094 = vmatprep.mubr.bf16.mxu0 %v1237
        %4095 = vmatmul.mubr.bf16.gmra.mxu0 %v1236
        %v4096 = vpop.f32.mrf.mxu0
        %v4097 = vadd.f32 0.0, %v4096
        %v4098 = vpop.f32.mrf.mxu0
        %v4099 = vadd.f32 0.0, %v4098
        %v4100 = vpop.f32.mrf.mxu0
        %v4101 = vadd.f32 0.0, %v4100
        %v4102 = vpop.f32.mrf.mxu0
        %v4103 = vadd.f32 0.0, %v4102
        %4104 = vmatprep.mubr.bf16.mxu0 %v1245
        %4105 = vmatmul.mubr.bf16.gmra.mxu0 %v1244
        %v4106 = vpop.f32.mrf.mxu0
        %v4107 = vadd.f32 0.0, %v4106
        %v4108 = vpop.f32.mrf.mxu0
        %v4109 = vadd.f32 0.0, %v4108
        %v4110 = vpop.f32.mrf.mxu0
        %v4111 = vadd.f32 0.0, %v4110
        %v4112 = vpop.f32.mrf.mxu0
        %v4113 = vadd.f32 0.0, %v4112
        %4114 = vmatprep.mubr.bf16.mxu0 %v1253
        %4115 = vmatmul.mubr.bf16.gmra.mxu0 %v1252
        %v4116 = vpop.f32.mrf.mxu0
        %v4117 = vadd.f32 0.0, %v4116
        %v4118 = vpop.f32.mrf.mxu0
        %v4119 = vadd.f32 0.0, %v4118
        %v4120 = vpop.f32.mrf.mxu0
        %v4121 = vadd.f32 0.0, %v4120
        %v4122 = vpop.f32.mrf.mxu0
        %v4123 = vadd.f32 0.0, %v4122
        %4124 = vmatprep.mubr.bf16.mxu0 %v1261
        %4125 = vmatmul.mubr.bf16.gmra.mxu0 %v1260
        %v4126 = vpop.f32.mrf.mxu0
        %v4127 = vadd.f32 0.0, %v4126
        %v4128 = vpop.f32.mrf.mxu0
        %v4129 = vadd.f32 0.0, %v4128
        %v4130 = vpop.f32.mrf.mxu0
        %v4131 = vadd.f32 0.0, %v4130
        %v4132 = vpop.f32.mrf.mxu0
        %v4133 = vadd.f32 0.0, %v4132
        %4134 = vmatprep.mubr.bf16.mxu0 %v1269
        %4135 = vmatmul.mubr.bf16.gmra.mxu0 %v1268
        %v4136 = vpop.f32.mrf.mxu0
        %v4137 = vadd.f32 0.0, %v4136
        %v4138 = vpop.f32.mrf.mxu0
        %v4139 = vadd.f32 0.0, %v4138
        %v4140 = vpop.f32.mrf.mxu0
        %v4141 = vadd.f32 0.0, %v4140
        %v4142 = vpop.f32.mrf.mxu0
        %v4143 = vadd.f32 0.0, %v4142
        %4144 = vmatprep.mubr.bf16.mxu0 %v1277
        %4145 = vmatmul.mubr.bf16.gmra.mxu0 %v1276
        %v4146 = vpop.f32.mrf.mxu0
        %v4147 = vadd.f32 0.0, %v4146
        %v4148 = vpop.f32.mrf.mxu0
        %v4149 = vadd.f32 0.0, %v4148
        %v4150 = vpop.f32.mrf.mxu0
        %v4151 = vadd.f32 0.0, %v4150
        %v4152 = vpop.f32.mrf.mxu0
        %v4153 = vadd.f32 0.0, %v4152
        %4154 = vmatprep.mubr.bf16.mxu0 %v1285
        %4155 = vmatmul.mubr.bf16.gmra.mxu0 %v1284
        %v4156 = vpop.f32.mrf.mxu0
        %v4157 = vadd.f32 0.0, %v4156
        %v4158 = vpop.f32.mrf.mxu0
        %v4159 = vadd.f32 0.0, %v4158
        %v4160 = vpop.f32.mrf.mxu0
        %v4161 = vadd.f32 0.0, %v4160
        %v4162 = vpop.f32.mrf.mxu0
        %v4163 = vadd.f32 0.0, %v4162
        %4164 = vmatprep.mubr.bf16.mxu0 %v1293
        %4165 = vmatmul.mubr.bf16.gmra.mxu0 %v1292
        %v4166 = vpop.f32.mrf.mxu0
        %v4167 = vadd.f32 0.0, %v4166
        %v4168 = vpop.f32.mrf.mxu0
        %v4169 = vadd.f32 0.0, %v4168
        %v4170 = vpop.f32.mrf.mxu0
        %v4171 = vadd.f32 0.0, %v4170
        %v4172 = vpop.f32.mrf.mxu0
        %v4173 = vadd.f32 0.0, %v4172
        %4174 = vmatprep.mubr.bf16.mxu0 %v1301
        %4175 = vmatmul.mubr.bf16.gmra.mxu0 %v1300
        %v4176 = vpop.f32.mrf.mxu0
        %v4177 = vadd.f32 0.0, %v4176
        %v4178 = vpop.f32.mrf.mxu0
        %v4179 = vadd.f32 0.0, %v4178
        %v4180 = vpop.f32.mrf.mxu0
        %v4181 = vadd.f32 0.0, %v4180
        %v4182 = vpop.f32.mrf.mxu0
        %v4183 = vadd.f32 0.0, %v4182
        %4184 = vmatprep.mubr.bf16.mxu0 %v1309
        %4185 = vmatmul.mubr.bf16.gmra.mxu0 %v1308
        %v4186 = vpop.f32.mrf.mxu0
        %v4187 = vadd.f32 0.0, %v4186
        %v4188 = vpop.f32.mrf.mxu0
        %v4189 = vadd.f32 0.0, %v4188
        %v4190 = vpop.f32.mrf.mxu0
        %v4191 = vadd.f32 0.0, %v4190
        %v4192 = vpop.f32.mrf.mxu0
        %v4193 = vadd.f32 0.0, %v4192
        %4194 = vmatprep.mubr.bf16.mxu0 %v1317
        %4195 = vmatmul.mubr.bf16.gmra.mxu0 %v1316
        %v4196 = vpop.f32.mrf.mxu0
        %v4197 = vadd.f32 0.0, %v4196
        %v4198 = vpop.f32.mrf.mxu0
        %v4199 = vadd.f32 0.0, %v4198
        %v4200 = vpop.f32.mrf.mxu0
        %v4201 = vadd.f32 0.0, %v4200
        %v4202 = vpop.f32.mrf.mxu0
        %v4203 = vadd.f32 0.0, %v4202
        %4204 = vdwg.mxu0
        %4205 = vmatprep.subr.bf16.mxu0 %v3173
        %4206 = vmatpush1.bf16.msra.mxu0 %v3172
        %4207 = vmatprep.subr.bf16.mxu0 %v3165
        %4208 = vmatpush1.bf16.msra.mxu0 %v3164
        %4209 = vmatprep.subr.bf16.mxu0 %v3157
        %4210 = vmatpush1.bf16.msra.mxu0 %v3156
        %4211 = vmatprep.subr.bf16.mxu0 %v3149
        %4212 = vmatpush1.bf16.msra.mxu0 %v3148
        %4213 = vmatprep.subr.bf16.mxu0 %v3141
        %4214 = vmatpush1.bf16.msra.mxu0 %v3140
        %4215 = vmatprep.subr.bf16.mxu0 %v3133
        %4216 = vmatpush1.bf16.msra.mxu0 %v3132
        %4217 = vmatprep.subr.bf16.mxu0 %v3125
        %4218 = vmatpush1.bf16.msra.mxu0 %v3124
        %4219 = vmatprep.subr.bf16.mxu0 %v3117
        %4220 = vmatpush1.bf16.msra.mxu0 %v3116
        %4221 = vmatprep.subr.bf16.mxu0 %v3237
        %4222 = vmatpush2.bf16.msra.mxu0 %v3236
        %4223 = vmatprep.subr.bf16.mxu0 %v3229
        %4224 = vmatpush2.bf16.msra.mxu0 %v3228
        %4225 = vmatprep.subr.bf16.mxu0 %v3221
        %4226 = vmatpush2.bf16.msra.mxu0 %v3220
        %4227 = vmatprep.subr.bf16.mxu0 %v3213
        %4228 = vmatpush2.bf16.msra.mxu0 %v3212
        %4229 = vmatprep.subr.bf16.mxu0 %v3205
        %4230 = vmatpush2.bf16.msra.mxu0 %v3204
        %4231 = vmatprep.subr.bf16.mxu0 %v3197
        %4232 = vmatpush2.bf16.msra.mxu0 %v3196
        %4233 = vmatprep.subr.bf16.mxu0 %v3189
        %4234 = vmatpush2.bf16.msra.mxu0 %v3188
        %4235 = vmatprep.subr.bf16.mxu0 %v3181
        %4236 = vmatpush2.bf16.msra.mxu0 %v3180
        %4237 = vmatprep.mubr.bf16.mxu0 %v1199
        %4238 = vmatmul.mubr.bf16.gmra.mxu0 %v1198
        %v4239 = vpop.f32.mrf.mxu0
        %v4240 = vadd.f32 %v4047, %v4239
        %v4241 = vpop.f32.mrf.mxu0
        %v4242 = vadd.f32 %v4049, %v4241
        %v4243 = vpop.f32.mrf.mxu0
        %v4244 = vadd.f32 %v4051, %v4243
        %v4245 = vpop.f32.mrf.mxu0
        %v4246 = vadd.f32 %v4053, %v4245
        %4247 = vmatprep.mubr.bf16.mxu0 %v1207
        %4248 = vmatmul.mubr.bf16.gmra.mxu0 %v1206
        %v4249 = vpop.f32.mrf.mxu0
        %v4250 = vadd.f32 %v4057, %v4249
        %v4251 = vpop.f32.mrf.mxu0
        %v4252 = vadd.f32 %v4059, %v4251
        %v4253 = vpop.f32.mrf.mxu0
        %v4254 = vadd.f32 %v4061, %v4253
        %v4255 = vpop.f32.mrf.mxu0
        %v4256 = vadd.f32 %v4063, %v4255
        %4257 = vmatprep.mubr.bf16.mxu0 %v1215
        %4258 = vmatmul.mubr.bf16.gmra.mxu0 %v1214
        %v4259 = vpop.f32.mrf.mxu0
        %v4260 = vadd.f32 %v4067, %v4259
        %v4261 = vpop.f32.mrf.mxu0
        %v4262 = vadd.f32 %v4069, %v4261
        %v4263 = vpop.f32.mrf.mxu0
        %v4264 = vadd.f32 %v4071, %v4263
        %v4265 = vpop.f32.mrf.mxu0
        %v4266 = vadd.f32 %v4073, %v4265
        %4267 = vmatprep.mubr.bf16.mxu0 %v1223
        %4268 = vmatmul.mubr.bf16.gmra.mxu0 %v1222
        %v4269 = vpop.f32.mrf.mxu0
        %v4270 = vadd.f32 %v4077, %v4269
        %v4271 = vpop.f32.mrf.mxu0
        %v4272 = vadd.f32 %v4079, %v4271
        %v4273 = vpop.f32.mrf.mxu0
        %v4274 = vadd.f32 %v4081, %v4273
        %v4275 = vpop.f32.mrf.mxu0
        %v4276 = vadd.f32 %v4083, %v4275
        %4277 = vmatprep.mubr.bf16.mxu0 %v1231
        %4278 = vmatmul.mubr.bf16.gmra.mxu0 %v1230
        %v4279 = vpop.f32.mrf.mxu0
        %v4280 = vadd.f32 %v4087, %v4279
        %v4281 = vpop.f32.mrf.mxu0
        %v4282 = vadd.f32 %v4089, %v4281
        %v4283 = vpop.f32.mrf.mxu0
        %v4284 = vadd.f32 %v4091, %v4283
        %v4285 = vpop.f32.mrf.mxu0
        %v4286 = vadd.f32 %v4093, %v4285
        %4287 = vmatprep.mubr.bf16.mxu0 %v1239
        %4288 = vmatmul.mubr.bf16.gmra.mxu0 %v1238
        %v4289 = vpop.f32.mrf.mxu0
        %v4290 = vadd.f32 %v4097, %v4289
        %v4291 = vpop.f32.mrf.mxu0
        %v4292 = vadd.f32 %v4099, %v4291
        %v4293 = vpop.f32.mrf.mxu0
        %v4294 = vadd.f32 %v4101, %v4293
        %v4295 = vpop.f32.mrf.mxu0
        %v4296 = vadd.f32 %v4103, %v4295
        %4297 = vmatprep.mubr.bf16.mxu0 %v1247
        %4298 = vmatmul.mubr.bf16.gmra.mxu0 %v1246
        %v4299 = vpop.f32.mrf.mxu0
        %v4300 = vadd.f32 %v4107, %v4299
        %v4301 = vpop.f32.mrf.mxu0
        %v4302 = vadd.f32 %v4109, %v4301
        %v4303 = vpop.f32.mrf.mxu0
        %v4304 = vadd.f32 %v4111, %v4303
        %v4305 = vpop.f32.mrf.mxu0
        %v4306 = vadd.f32 %v4113, %v4305
        %4307 = vmatprep.mubr.bf16.mxu0 %v1255
        %4308 = vmatmul.mubr.bf16.gmra.mxu0 %v1254
        %v4309 = vpop.f32.mrf.mxu0
        %v4310 = vadd.f32 %v4117, %v4309
        %v4311 = vpop.f32.mrf.mxu0
        %v4312 = vadd.f32 %v4119, %v4311
        %v4313 = vpop.f32.mrf.mxu0
        %v4314 = vadd.f32 %v4121, %v4313
        %v4315 = vpop.f32.mrf.mxu0
        %v4316 = vadd.f32 %v4123, %v4315
        %4317 = vmatprep.mubr.bf16.mxu0 %v1263
        %4318 = vmatmul.mubr.bf16.gmra.mxu0 %v1262
        %v4319 = vpop.f32.mrf.mxu0
        %v4320 = vadd.f32 %v4127, %v4319
        %v4321 = vpop.f32.mrf.mxu0
        %v4322 = vadd.f32 %v4129, %v4321
        %v4323 = vpop.f32.mrf.mxu0
        %v4324 = vadd.f32 %v4131, %v4323
        %v4325 = vpop.f32.mrf.mxu0
        %v4326 = vadd.f32 %v4133, %v4325
        %4327 = vmatprep.mubr.bf16.mxu0 %v1271
        %4328 = vmatmul.mubr.bf16.gmra.mxu0 %v1270
        %v4329 = vpop.f32.mrf.mxu0
        %v4330 = vadd.f32 %v4137, %v4329
        %v4331 = vpop.f32.mrf.mxu0
        %v4332 = vadd.f32 %v4139, %v4331
        %v4333 = vpop.f32.mrf.mxu0
        %v4334 = vadd.f32 %v4141, %v4333
        %v4335 = vpop.f32.mrf.mxu0
        %v4336 = vadd.f32 %v4143, %v4335
        %4337 = vmatprep.mubr.bf16.mxu0 %v1279
        %4338 = vmatmul.mubr.bf16.gmra.mxu0 %v1278
        %v4339 = vpop.f32.mrf.mxu0
        %v4340 = vadd.f32 %v4147, %v4339
        %v4341 = vpop.f32.mrf.mxu0
        %v4342 = vadd.f32 %v4149, %v4341
        %v4343 = vpop.f32.mrf.mxu0
        %v4344 = vadd.f32 %v4151, %v4343
        %v4345 = vpop.f32.mrf.mxu0
        %v4346 = vadd.f32 %v4153, %v4345
        %4347 = vmatprep.mubr.bf16.mxu0 %v1287
        %4348 = vmatmul.mubr.bf16.gmra.mxu0 %v1286
        %v4349 = vpop.f32.mrf.mxu0
        %v4350 = vadd.f32 %v4157, %v4349
        %v4351 = vpop.f32.mrf.mxu0
        %v4352 = vadd.f32 %v4159, %v4351
        %v4353 = vpop.f32.mrf.mxu0
        %v4354 = vadd.f32 %v4161, %v4353
        %v4355 = vpop.f32.mrf.mxu0
        %v4356 = vadd.f32 %v4163, %v4355
        %4357 = vmatprep.mubr.bf16.mxu0 %v1295
        %4358 = vmatmul.mubr.bf16.gmra.mxu0 %v1294
        %v4359 = vpop.f32.mrf.mxu0
        %v4360 = vadd.f32 %v4167, %v4359
        %v4361 = vpop.f32.mrf.mxu0
        %v4362 = vadd.f32 %v4169, %v4361
        %v4363 = vpop.f32.mrf.mxu0
        %v4364 = vadd.f32 %v4171, %v4363
        %v4365 = vpop.f32.mrf.mxu0
        %v4366 = vadd.f32 %v4173, %v4365
        %4367 = vmatprep.mubr.bf16.mxu0 %v1303
        %4368 = vmatmul.mubr.bf16.gmra.mxu0 %v1302
        %v4369 = vpop.f32.mrf.mxu0
        %v4370 = vadd.f32 %v4177, %v4369
        %v4371 = vpop.f32.mrf.mxu0
        %v4372 = vadd.f32 %v4179, %v4371
        %v4373 = vpop.f32.mrf.mxu0
        %v4374 = vadd.f32 %v4181, %v4373
        %v4375 = vpop.f32.mrf.mxu0
        %v4376 = vadd.f32 %v4183, %v4375
        %4377 = vmatprep.mubr.bf16.mxu0 %v1311
        %4378 = vmatmul.mubr.bf16.gmra.mxu0 %v1310
        %v4379 = vpop.f32.mrf.mxu0
        %v4380 = vadd.f32 %v4187, %v4379
        %v4381 = vpop.f32.mrf.mxu0
        %v4382 = vadd.f32 %v4189, %v4381
        %v4383 = vpop.f32.mrf.mxu0
        %v4384 = vadd.f32 %v4191, %v4383
        %v4385 = vpop.f32.mrf.mxu0
        %v4386 = vadd.f32 %v4193, %v4385
        %4387 = vmatprep.mubr.bf16.mxu0 %v1319
        %4388 = vmatmul.mubr.bf16.gmra.mxu0 %v1318
        %v4389 = vpop.f32.mrf.mxu0
        %v4390 = vadd.f32 %v4197, %v4389
        %v4391 = vpop.f32.mrf.mxu0
        %v4392 = vadd.f32 %v4199, %v4391
        %v4393 = vpop.f32.mrf.mxu0
        %v4394 = vadd.f32 %v4201, %v4393
        %v4395 = vpop.f32.mrf.mxu0
        %v4396 = vadd.f32 %v4203, %v4395
        %4397 = vdwg.mxu0
        %4398 = vmatprep.subr.bf16.mxu0 %v3301
        %4399 = vmatpush1.bf16.msra.mxu0 %v3300
        %4400 = vmatprep.subr.bf16.mxu0 %v3293
        %4401 = vmatpush1.bf16.msra.mxu0 %v3292
        %4402 = vmatprep.subr.bf16.mxu0 %v3285
        %4403 = vmatpush1.bf16.msra.mxu0 %v3284
        %4404 = vmatprep.subr.bf16.mxu0 %v3277
        %4405 = vmatpush1.bf16.msra.mxu0 %v3276
        %4406 = vmatprep.subr.bf16.mxu0 %v3269
        %4407 = vmatpush1.bf16.msra.mxu0 %v3268
        %4408 = vmatprep.subr.bf16.mxu0 %v3261
        %4409 = vmatpush1.bf16.msra.mxu0 %v3260
        %4410 = vmatprep.subr.bf16.mxu0 %v3253
        %4411 = vmatpush1.bf16.msra.mxu0 %v3252
        %4412 = vmatprep.subr.bf16.mxu0 %v3245
        %4413 = vmatpush1.bf16.msra.mxu0 %v3244
        %4414 = vmatprep.subr.bf16.mxu0 %v3365
        %4415 = vmatpush2.bf16.msra.mxu0 %v3364
        %4416 = vmatprep.subr.bf16.mxu0 %v3357
        %4417 = vmatpush2.bf16.msra.mxu0 %v3356
        %4418 = vmatprep.subr.bf16.mxu0 %v3349
        %4419 = vmatpush2.bf16.msra.mxu0 %v3348
        %4420 = vmatprep.subr.bf16.mxu0 %v3341
        %4421 = vmatpush2.bf16.msra.mxu0 %v3340
        %4422 = vmatprep.subr.bf16.mxu0 %v3333
        %4423 = vmatpush2.bf16.msra.mxu0 %v3332
        %4424 = vmatprep.subr.bf16.mxu0 %v3325
        %4425 = vmatpush2.bf16.msra.mxu0 %v3324
        %4426 = vmatprep.subr.bf16.mxu0 %v3317
        %4427 = vmatpush2.bf16.msra.mxu0 %v3316
        %4428 = vmatprep.subr.bf16.mxu0 %v3309
        %4429 = vmatpush2.bf16.msra.mxu0 %v3308
        %4430 = vmatprep.mubr.bf16.mxu0 %v1201
        %4431 = vmatmul.mubr.bf16.gmra.mxu0 %v1200
        %v4432 = vpop.f32.mrf.mxu0
        %v4433 = vadd.f32 %v4240, %v4432
        %v4434 = vpop.f32.mrf.mxu0
        %v4435 = vadd.f32 %v4242, %v4434
        %v4436 = vpop.f32.mrf.mxu0
        %v4437 = vadd.f32 %v4244, %v4436
        %v4438 = vpop.f32.mrf.mxu0
        %v4439 = vadd.f32 %v4246, %v4438
        %4440 = vmatprep.mubr.bf16.mxu0 %v1209
        %4441 = vmatmul.mubr.bf16.gmra.mxu0 %v1208
        %v4442 = vpop.f32.mrf.mxu0
        %v4443 = vadd.f32 %v4250, %v4442
        %v4444 = vpop.f32.mrf.mxu0
        %v4445 = vadd.f32 %v4252, %v4444
        %v4446 = vpop.f32.mrf.mxu0
        %v4447 = vadd.f32 %v4254, %v4446
        %v4448 = vpop.f32.mrf.mxu0
        %v4449 = vadd.f32 %v4256, %v4448
        %4450 = vmatprep.mubr.bf16.mxu0 %v1217
        %4451 = vmatmul.mubr.bf16.gmra.mxu0 %v1216
        %v4452 = vpop.f32.mrf.mxu0
        %v4453 = vadd.f32 %v4260, %v4452
        %v4454 = vpop.f32.mrf.mxu0
        %v4455 = vadd.f32 %v4262, %v4454
        %v4456 = vpop.f32.mrf.mxu0
        %v4457 = vadd.f32 %v4264, %v4456
        %v4458 = vpop.f32.mrf.mxu0
        %v4459 = vadd.f32 %v4266, %v4458
        %4460 = vmatprep.mubr.bf16.mxu0 %v1225
        %4461 = vmatmul.mubr.bf16.gmra.mxu0 %v1224
        %v4462 = vpop.f32.mrf.mxu0
        %v4463 = vadd.f32 %v4270, %v4462
        %v4464 = vpop.f32.mrf.mxu0
        %v4465 = vadd.f32 %v4272, %v4464
        %v4466 = vpop.f32.mrf.mxu0
        %v4467 = vadd.f32 %v4274, %v4466
        %v4468 = vpop.f32.mrf.mxu0
        %v4469 = vadd.f32 %v4276, %v4468
        %4470 = vmatprep.mubr.bf16.mxu0 %v1233
        %4471 = vmatmul.mubr.bf16.gmra.mxu0 %v1232
        %v4472 = vpop.f32.mrf.mxu0
        %v4473 = vadd.f32 %v4280, %v4472
        %v4474 = vpop.f32.mrf.mxu0
        %v4475 = vadd.f32 %v4282, %v4474
        %v4476 = vpop.f32.mrf.mxu0
        %v4477 = vadd.f32 %v4284, %v4476
        %v4478 = vpop.f32.mrf.mxu0
        %v4479 = vadd.f32 %v4286, %v4478
        %4480 = vmatprep.mubr.bf16.mxu0 %v1241
        %4481 = vmatmul.mubr.bf16.gmra.mxu0 %v1240
        %v4482 = vpop.f32.mrf.mxu0
        %v4483 = vadd.f32 %v4290, %v4482
        %v4484 = vpop.f32.mrf.mxu0
        %v4485 = vadd.f32 %v4292, %v4484
        %v4486 = vpop.f32.mrf.mxu0
        %v4487 = vadd.f32 %v4294, %v4486
        %v4488 = vpop.f32.mrf.mxu0
        %v4489 = vadd.f32 %v4296, %v4488
        %4490 = vmatprep.mubr.bf16.mxu0 %v1249
        %4491 = vmatmul.mubr.bf16.gmra.mxu0 %v1248
        %v4492 = vpop.f32.mrf.mxu0
        %v4493 = vadd.f32 %v4300, %v4492
        %v4494 = vpop.f32.mrf.mxu0
        %v4495 = vadd.f32 %v4302, %v4494
        %v4496 = vpop.f32.mrf.mxu0
        %v4497 = vadd.f32 %v4304, %v4496
        %v4498 = vpop.f32.mrf.mxu0
        %v4499 = vadd.f32 %v4306, %v4498
        %4500 = vmatprep.mubr.bf16.mxu0 %v1257
        %4501 = vmatmul.mubr.bf16.gmra.mxu0 %v1256
        %v4502 = vpop.f32.mrf.mxu0
        %v4503 = vadd.f32 %v4310, %v4502
        %v4504 = vpop.f32.mrf.mxu0
        %v4505 = vadd.f32 %v4312, %v4504
        %v4506 = vpop.f32.mrf.mxu0
        %v4507 = vadd.f32 %v4314, %v4506
        %v4508 = vpop.f32.mrf.mxu0
        %v4509 = vadd.f32 %v4316, %v4508
        %4510 = vmatprep.mubr.bf16.mxu0 %v1265
        %4511 = vmatmul.mubr.bf16.gmra.mxu0 %v1264
        %v4512 = vpop.f32.mrf.mxu0
        %v4513 = vadd.f32 %v4320, %v4512
        %v4514 = vpop.f32.mrf.mxu0
        %v4515 = vadd.f32 %v4322, %v4514
        %v4516 = vpop.f32.mrf.mxu0
        %v4517 = vadd.f32 %v4324, %v4516
        %v4518 = vpop.f32.mrf.mxu0
        %v4519 = vadd.f32 %v4326, %v4518
        %4520 = vmatprep.mubr.bf16.mxu0 %v1273
        %4521 = vmatmul.mubr.bf16.gmra.mxu0 %v1272
        %v4522 = vpop.f32.mrf.mxu0
        %v4523 = vadd.f32 %v4330, %v4522
        %v4524 = vpop.f32.mrf.mxu0
        %v4525 = vadd.f32 %v4332, %v4524
        %v4526 = vpop.f32.mrf.mxu0
        %v4527 = vadd.f32 %v4334, %v4526
        %v4528 = vpop.f32.mrf.mxu0
        %v4529 = vadd.f32 %v4336, %v4528
        %4530 = vmatprep.mubr.bf16.mxu0 %v1281
        %4531 = vmatmul.mubr.bf16.gmra.mxu0 %v1280
        %v4532 = vpop.f32.mrf.mxu0
        %v4533 = vadd.f32 %v4340, %v4532
        %v4534 = vpop.f32.mrf.mxu0
        %v4535 = vadd.f32 %v4342, %v4534
        %v4536 = vpop.f32.mrf.mxu0
        %v4537 = vadd.f32 %v4344, %v4536
        %v4538 = vpop.f32.mrf.mxu0
        %v4539 = vadd.f32 %v4346, %v4538
        %4540 = vmatprep.mubr.bf16.mxu0 %v1289
        %4541 = vmatmul.mubr.bf16.gmra.mxu0 %v1288
        %v4542 = vpop.f32.mrf.mxu0
        %v4543 = vadd.f32 %v4350, %v4542
        %v4544 = vpop.f32.mrf.mxu0
        %v4545 = vadd.f32 %v4352, %v4544
        %v4546 = vpop.f32.mrf.mxu0
        %v4547 = vadd.f32 %v4354, %v4546
        %v4548 = vpop.f32.mrf.mxu0
        %v4549 = vadd.f32 %v4356, %v4548
        %4550 = vmatprep.mubr.bf16.mxu0 %v1297
        %4551 = vmatmul.mubr.bf16.gmra.mxu0 %v1296
        %v4552 = vpop.f32.mrf.mxu0
        %v4553 = vadd.f32 %v4360, %v4552
        %v4554 = vpop.f32.mrf.mxu0
        %v4555 = vadd.f32 %v4362, %v4554
        %v4556 = vpop.f32.mrf.mxu0
        %v4557 = vadd.f32 %v4364, %v4556
        %v4558 = vpop.f32.mrf.mxu0
        %v4559 = vadd.f32 %v4366, %v4558
        %4560 = vmatprep.mubr.bf16.mxu0 %v1305
        %4561 = vmatmul.mubr.bf16.gmra.mxu0 %v1304
        %v4562 = vpop.f32.mrf.mxu0
        %v4563 = vadd.f32 %v4370, %v4562
        %v4564 = vpop.f32.mrf.mxu0
        %v4565 = vadd.f32 %v4372, %v4564
        %v4566 = vpop.f32.mrf.mxu0
        %v4567 = vadd.f32 %v4374, %v4566
        %v4568 = vpop.f32.mrf.mxu0
        %v4569 = vadd.f32 %v4376, %v4568
        %4570 = vmatprep.mubr.bf16.mxu0 %v1313
        %4571 = vmatmul.mubr.bf16.gmra.mxu0 %v1312
        %v4572 = vpop.f32.mrf.mxu0
        %v4573 = vadd.f32 %v4380, %v4572
        %v4574 = vpop.f32.mrf.mxu0
        %v4575 = vadd.f32 %v4382, %v4574
        %v4576 = vpop.f32.mrf.mxu0
        %v4577 = vadd.f32 %v4384, %v4576
        %v4578 = vpop.f32.mrf.mxu0
        %v4579 = vadd.f32 %v4386, %v4578
        %4580 = vmatprep.mubr.bf16.mxu0 %v1321
        %4581 = vmatmul.mubr.bf16.gmra.mxu0 %v1320
        %v4582 = vpop.f32.mrf.mxu0
        %v4583 = vadd.f32 %v4390, %v4582
        %v4584 = vpop.f32.mrf.mxu0
        %v4585 = vadd.f32 %v4392, %v4584
        %v4586 = vpop.f32.mrf.mxu0
        %v4587 = vadd.f32 %v4394, %v4586
        %v4588 = vpop.f32.mrf.mxu0
        %v4589 = vadd.f32 %v4396, %v4588
        %4590 = vdwg.mxu0
        %4591 = vmatprep.subr.bf16.mxu0 %v3429
        %4592 = vmatpush1.bf16.msra.mxu0 %v3428
        %4593 = vmatprep.subr.bf16.mxu0 %v3421
        %4594 = vmatpush1.bf16.msra.mxu0 %v3420
        %4595 = vmatprep.subr.bf16.mxu0 %v3413
        %4596 = vmatpush1.bf16.msra.mxu0 %v3412
        %4597 = vmatprep.subr.bf16.mxu0 %v3405
        %4598 = vmatpush1.bf16.msra.mxu0 %v3404
        %4599 = vmatprep.subr.bf16.mxu0 %v3397
        %4600 = vmatpush1.bf16.msra.mxu0 %v3396
        %4601 = vmatprep.subr.bf16.mxu0 %v3389
        %4602 = vmatpush1.bf16.msra.mxu0 %v3388
        %4603 = vmatprep.subr.bf16.mxu0 %v3381
        %4604 = vmatpush1.bf16.msra.mxu0 %v3380
        %4605 = vmatprep.subr.bf16.mxu0 %v3373
        %4606 = vmatpush1.bf16.msra.mxu0 %v3372
        %4607 = vmatprep.subr.bf16.mxu0 %v3493
        %4608 = vmatpush2.bf16.msra.mxu0 %v3492
        %4609 = vmatprep.subr.bf16.mxu0 %v3485
        %4610 = vmatpush2.bf16.msra.mxu0 %v3484
        %4611 = vmatprep.subr.bf16.mxu0 %v3477
        %4612 = vmatpush2.bf16.msra.mxu0 %v3476
        %4613 = vmatprep.subr.bf16.mxu0 %v3469
        %4614 = vmatpush2.bf16.msra.mxu0 %v3468
        %4615 = vmatprep.subr.bf16.mxu0 %v3461
        %4616 = vmatpush2.bf16.msra.mxu0 %v3460
        %4617 = vmatprep.subr.bf16.mxu0 %v3453
        %4618 = vmatpush2.bf16.msra.mxu0 %v3452
        %4619 = vmatprep.subr.bf16.mxu0 %v3445
        %4620 = vmatpush2.bf16.msra.mxu0 %v3444
        %4621 = vmatprep.subr.bf16.mxu0 %v3437
        %4622 = vmatpush2.bf16.msra.mxu0 %v3436
        %4623 = vmatprep.mubr.bf16.mxu0 %v1203
        %4624 = vmatmul.mubr.bf16.gmra.mxu0 %v1202
        %v4625 = vpop.f32.mrf.mxu0
        %v4626 = vadd.f32 %v4433, %v4625
        %v4627 = vpop.f32.mrf.mxu0
        %v4628 = vadd.f32 %v4435, %v4627
        %v4629 = vpop.f32.mrf.mxu0
        %v4630 = vadd.f32 %v4437, %v4629
        %v4631 = vpop.f32.mrf.mxu0
        %v4632 = vadd.f32 %v4439, %v4631
        %4633 = vmatprep.mubr.bf16.mxu0 %v1211
        %4634 = vmatmul.mubr.bf16.gmra.mxu0 %v1210
        %v4635 = vpop.f32.mrf.mxu0
        %v4636 = vadd.f32 %v4443, %v4635
        %v4637 = vpop.f32.mrf.mxu0
        %v4638 = vadd.f32 %v4445, %v4637
        %v4639 = vpop.f32.mrf.mxu0
        %v4640 = vadd.f32 %v4447, %v4639
        %v4641 = vpop.f32.mrf.mxu0
        %v4642 = vadd.f32 %v4449, %v4641
        %4643 = vmatprep.mubr.bf16.mxu0 %v1219
        %4644 = vmatmul.mubr.bf16.gmra.mxu0 %v1218
        %v4645 = vpop.f32.mrf.mxu0
        %v4646 = vadd.f32 %v4453, %v4645
        %v4647 = vpop.f32.mrf.mxu0
        %v4648 = vadd.f32 %v4455, %v4647
        %v4649 = vpop.f32.mrf.mxu0
        %v4650 = vadd.f32 %v4457, %v4649
        %v4651 = vpop.f32.mrf.mxu0
        %v4652 = vadd.f32 %v4459, %v4651
        %4653 = vmatprep.mubr.bf16.mxu0 %v1227
        %4654 = vmatmul.mubr.bf16.gmra.mxu0 %v1226
        %v4655 = vpop.f32.mrf.mxu0
        %v4656 = vadd.f32 %v4463, %v4655
        %v4657 = vpop.f32.mrf.mxu0
        %v4658 = vadd.f32 %v4465, %v4657
        %v4659 = vpop.f32.mrf.mxu0
        %v4660 = vadd.f32 %v4467, %v4659
        %v4661 = vpop.f32.mrf.mxu0
        %v4662 = vadd.f32 %v4469, %v4661
        %4663 = vmatprep.mubr.bf16.mxu0 %v1235
        %4664 = vmatmul.mubr.bf16.gmra.mxu0 %v1234
        %v4665 = vpop.f32.mrf.mxu0
        %v4666 = vadd.f32 %v4473, %v4665
        %v4667 = vpop.f32.mrf.mxu0
        %v4668 = vadd.f32 %v4475, %v4667
        %v4669 = vpop.f32.mrf.mxu0
        %v4670 = vadd.f32 %v4477, %v4669
        %v4671 = vpop.f32.mrf.mxu0
        %v4672 = vadd.f32 %v4479, %v4671
        %4673 = vmatprep.mubr.bf16.mxu0 %v1243
        %4674 = vmatmul.mubr.bf16.gmra.mxu0 %v1242
        %v4675 = vpop.f32.mrf.mxu0
        %v4676 = vadd.f32 %v4483, %v4675
        %v4677 = vpop.f32.mrf.mxu0
        %v4678 = vadd.f32 %v4485, %v4677
        %v4679 = vpop.f32.mrf.mxu0
        %v4680 = vadd.f32 %v4487, %v4679
        %v4681 = vpop.f32.mrf.mxu0
        %v4682 = vadd.f32 %v4489, %v4681
        %4683 = vmatprep.mubr.bf16.mxu0 %v1251
        %4684 = vmatmul.mubr.bf16.gmra.mxu0 %v1250
        %v4685 = vpop.f32.mrf.mxu0
        %v4686 = vadd.f32 %v4493, %v4685
        %v4687 = vpop.f32.mrf.mxu0
        %v4688 = vadd.f32 %v4495, %v4687
        %v4689 = vpop.f32.mrf.mxu0
        %v4690 = vadd.f32 %v4497, %v4689
        %v4691 = vpop.f32.mrf.mxu0
        %v4692 = vadd.f32 %v4499, %v4691
        %4693 = vmatprep.mubr.bf16.mxu0 %v1259
        %4694 = vmatmul.mubr.bf16.gmra.mxu0 %v1258
        %v4695 = vpop.f32.mrf.mxu0
        %v4696 = vadd.f32 %v4503, %v4695
        %v4697 = vpop.f32.mrf.mxu0
        %v4698 = vadd.f32 %v4505, %v4697
        %v4699 = vpop.f32.mrf.mxu0
        %v4700 = vadd.f32 %v4507, %v4699
        %v4701 = vpop.f32.mrf.mxu0
        %v4702 = vadd.f32 %v4509, %v4701
        %4703 = vmatprep.mubr.bf16.mxu0 %v1267
        %4704 = vmatmul.mubr.bf16.gmra.mxu0 %v1266
        %v4705 = vpop.f32.mrf.mxu0
        %v4706 = vadd.f32 %v4513, %v4705
        %v4707 = vpop.f32.mrf.mxu0
        %v4708 = vadd.f32 %v4515, %v4707
        %v4709 = vpop.f32.mrf.mxu0
        %v4710 = vadd.f32 %v4517, %v4709
        %v4711 = vpop.f32.mrf.mxu0
        %v4712 = vadd.f32 %v4519, %v4711
        %4713 = vmatprep.mubr.bf16.mxu0 %v1275
        %4714 = vmatmul.mubr.bf16.gmra.mxu0 %v1274
        %v4715 = vpop.f32.mrf.mxu0
        %v4716 = vadd.f32 %v4523, %v4715
        %v4717 = vpop.f32.mrf.mxu0
        %v4718 = vadd.f32 %v4525, %v4717
        %v4719 = vpop.f32.mrf.mxu0
        %v4720 = vadd.f32 %v4527, %v4719
        %v4721 = vpop.f32.mrf.mxu0
        %v4722 = vadd.f32 %v4529, %v4721
        %4723 = vmatprep.mubr.bf16.mxu0 %v1283
        %4724 = vmatmul.mubr.bf16.gmra.mxu0 %v1282
        %v4725 = vpop.f32.mrf.mxu0
        %v4726 = vadd.f32 %v4533, %v4725
        %v4727 = vpop.f32.mrf.mxu0
        %v4728 = vadd.f32 %v4535, %v4727
        %v4729 = vpop.f32.mrf.mxu0
        %v4730 = vadd.f32 %v4537, %v4729
        %v4731 = vpop.f32.mrf.mxu0
        %v4732 = vadd.f32 %v4539, %v4731
        %4733 = vmatprep.mubr.bf16.mxu0 %v1291
        %4734 = vmatmul.mubr.bf16.gmra.mxu0 %v1290
        %v4735 = vpop.f32.mrf.mxu0
        %v4736 = vadd.f32 %v4543, %v4735
        %v4737 = vpop.f32.mrf.mxu0
        %v4738 = vadd.f32 %v4545, %v4737
        %v4739 = vpop.f32.mrf.mxu0
        %v4740 = vadd.f32 %v4547, %v4739
        %v4741 = vpop.f32.mrf.mxu0
        %v4742 = vadd.f32 %v4549, %v4741
        %4743 = vmatprep.mubr.bf16.mxu0 %v1299
        %4744 = vmatmul.mubr.bf16.gmra.mxu0 %v1298
        %v4745 = vpop.f32.mrf.mxu0
        %v4746 = vadd.f32 %v4553, %v4745
        %v4747 = vpop.f32.mrf.mxu0
        %v4748 = vadd.f32 %v4555, %v4747
        %v4749 = vpop.f32.mrf.mxu0
        %v4750 = vadd.f32 %v4557, %v4749
        %v4751 = vpop.f32.mrf.mxu0
        %v4752 = vadd.f32 %v4559, %v4751
        %4753 = vmatprep.mubr.bf16.mxu0 %v1307
        %4754 = vmatmul.mubr.bf16.gmra.mxu0 %v1306
        %v4755 = vpop.f32.mrf.mxu0
        %v4756 = vadd.f32 %v4563, %v4755
        %v4757 = vpop.f32.mrf.mxu0
        %v4758 = vadd.f32 %v4565, %v4757
        %v4759 = vpop.f32.mrf.mxu0
        %v4760 = vadd.f32 %v4567, %v4759
        %v4761 = vpop.f32.mrf.mxu0
        %v4762 = vadd.f32 %v4569, %v4761
        %4763 = vmatprep.mubr.bf16.mxu0 %v1315
        %4764 = vmatmul.mubr.bf16.gmra.mxu0 %v1314
        %v4765 = vpop.f32.mrf.mxu0
        %v4766 = vadd.f32 %v4573, %v4765
        %v4767 = vpop.f32.mrf.mxu0
        %v4768 = vadd.f32 %v4575, %v4767
        %v4769 = vpop.f32.mrf.mxu0
        %v4770 = vadd.f32 %v4577, %v4769
        %v4771 = vpop.f32.mrf.mxu0
        %v4772 = vadd.f32 %v4579, %v4771
        %4773 = vmatprep.mubr.bf16.mxu0 %v1323
        %4774 = vmatmul.mubr.bf16.gmra.mxu0 %v1322
        %v4775 = vpop.f32.mrf.mxu0
        %v4776 = vadd.f32 %v4583, %v4775
        %v4777 = vpop.f32.mrf.mxu0
        %v4778 = vadd.f32 %v4585, %v4777
        %v4779 = vpop.f32.mrf.mxu0
        %v4780 = vadd.f32 %v4587, %v4779
        %v4781 = vpop.f32.mrf.mxu0
        %v4782 = vadd.f32 %v4589, %v4781
        %4783 = vdwg.mxu0
        %4784 = vmatprep.subr.bf16.mxu0 %v3047
        %4785 = vmatpush1.bf16.msra.mxu0 %v3046
        %4786 = vmatprep.subr.bf16.mxu0 %v3039
        %4787 = vmatpush1.bf16.msra.mxu0 %v3038
        %4788 = vmatprep.subr.bf16.mxu0 %v3031
        %4789 = vmatpush1.bf16.msra.mxu0 %v3030
        %4790 = vmatprep.subr.bf16.mxu0 %v3023
        %4791 = vmatpush1.bf16.msra.mxu0 %v3022
        %4792 = vmatprep.subr.bf16.mxu0 %v3015
        %4793 = vmatpush1.bf16.msra.mxu0 %v3014
        %4794 = vmatprep.subr.bf16.mxu0 %v3007
        %4795 = vmatpush1.bf16.msra.mxu0 %v3006
        %4796 = vmatprep.subr.bf16.mxu0 %v2999
        %4797 = vmatpush1.bf16.msra.mxu0 %v2998
        %4798 = vmatprep.subr.bf16.mxu0 %v2991
        %4799 = vmatpush1.bf16.msra.mxu0 %v2990
        %4800 = vmatprep.subr.bf16.mxu0 %v3111
        %4801 = vmatpush2.bf16.msra.mxu0 %v3110
        %4802 = vmatprep.subr.bf16.mxu0 %v3103
        %4803 = vmatpush2.bf16.msra.mxu0 %v3102
        %4804 = vmatprep.subr.bf16.mxu0 %v3095
        %4805 = vmatpush2.bf16.msra.mxu0 %v3094
        %4806 = vmatprep.subr.bf16.mxu0 %v3087
        %4807 = vmatpush2.bf16.msra.mxu0 %v3086
        %4808 = vmatprep.subr.bf16.mxu0 %v3079
        %4809 = vmatpush2.bf16.msra.mxu0 %v3078
        %4810 = vmatprep.subr.bf16.mxu0 %v3071
        %4811 = vmatpush2.bf16.msra.mxu0 %v3070
        %4812 = vmatprep.subr.bf16.mxu0 %v3063
        %4813 = vmatpush2.bf16.msra.mxu0 %v3062
        %4814 = vmatprep.subr.bf16.mxu0 %v3055
        %4815 = vmatpush2.bf16.msra.mxu0 %v3054
        %4816 = vmatprep.mubr.bf16.mxu0 %v1197
        %4817 = vmatmul.mubr.bf16.gmra.mxu0 %v1196
        %v4818 = vpop.f32.mrf.mxu0
        %v4819 = vadd.f32 0.0, %v4818
        %v4820 = vpop.f32.mrf.mxu0
        %v4821 = vadd.f32 0.0, %v4820
        %v4822 = vpop.f32.mrf.mxu0
        %v4823 = vadd.f32 0.0, %v4822
        %v4824 = vpop.f32.mrf.mxu0
        %v4825 = vadd.f32 0.0, %v4824
        %4826 = vmatprep.mubr.bf16.mxu0 %v1205
        %4827 = vmatmul.mubr.bf16.gmra.mxu0 %v1204
        %v4828 = vpop.f32.mrf.mxu0
        %v4829 = vadd.f32 0.0, %v4828
        %v4830 = vpop.f32.mrf.mxu0
        %v4831 = vadd.f32 0.0, %v4830
        %v4832 = vpop.f32.mrf.mxu0
        %v4833 = vadd.f32 0.0, %v4832
        %v4834 = vpop.f32.mrf.mxu0
        %v4835 = vadd.f32 0.0, %v4834
        %4836 = vmatprep.mubr.bf16.mxu0 %v1213
        %4837 = vmatmul.mubr.bf16.gmra.mxu0 %v1212
        %v4838 = vpop.f32.mrf.mxu0
        %v4839 = vadd.f32 0.0, %v4838
        %v4840 = vpop.f32.mrf.mxu0
        %v4841 = vadd.f32 0.0, %v4840
        %v4842 = vpop.f32.mrf.mxu0
        %v4843 = vadd.f32 0.0, %v4842
        %v4844 = vpop.f32.mrf.mxu0
        %v4845 = vadd.f32 0.0, %v4844
        %4846 = vmatprep.mubr.bf16.mxu0 %v1221
        %4847 = vmatmul.mubr.bf16.gmra.mxu0 %v1220
        %v4848 = vpop.f32.mrf.mxu0
        %v4849 = vadd.f32 0.0, %v4848
        %v4850 = vpop.f32.mrf.mxu0
        %v4851 = vadd.f32 0.0, %v4850
        %v4852 = vpop.f32.mrf.mxu0
        %v4853 = vadd.f32 0.0, %v4852
        %v4854 = vpop.f32.mrf.mxu0
        %v4855 = vadd.f32 0.0, %v4854
        %4856 = vmatprep.mubr.bf16.mxu0 %v1229
        %4857 = vmatmul.mubr.bf16.gmra.mxu0 %v1228
        %v4858 = vpop.f32.mrf.mxu0
        %v4859 = vadd.f32 0.0, %v4858
        %v4860 = vpop.f32.mrf.mxu0
        %v4861 = vadd.f32 0.0, %v4860
        %v4862 = vpop.f32.mrf.mxu0
        %v4863 = vadd.f32 0.0, %v4862
        %v4864 = vpop.f32.mrf.mxu0
        %v4865 = vadd.f32 0.0, %v4864
        %4866 = vmatprep.mubr.bf16.mxu0 %v1237
        %4867 = vmatmul.mubr.bf16.gmra.mxu0 %v1236
        %v4868 = vpop.f32.mrf.mxu0
        %v4869 = vadd.f32 0.0, %v4868
        %v4870 = vpop.f32.mrf.mxu0
        %v4871 = vadd.f32 0.0, %v4870
        %v4872 = vpop.f32.mrf.mxu0
        %v4873 = vadd.f32 0.0, %v4872
        %v4874 = vpop.f32.mrf.mxu0
        %v4875 = vadd.f32 0.0, %v4874
        %4876 = vmatprep.mubr.bf16.mxu0 %v1245
        %4877 = vmatmul.mubr.bf16.gmra.mxu0 %v1244
        %v4878 = vpop.f32.mrf.mxu0
        %v4879 = vadd.f32 0.0, %v4878
        %v4880 = vpop.f32.mrf.mxu0
        %v4881 = vadd.f32 0.0, %v4880
        %v4882 = vpop.f32.mrf.mxu0
        %v4883 = vadd.f32 0.0, %v4882
        %v4884 = vpop.f32.mrf.mxu0
        %v4885 = vadd.f32 0.0, %v4884
        %4886 = vmatprep.mubr.bf16.mxu0 %v1253
        %4887 = vmatmul.mubr.bf16.gmra.mxu0 %v1252
        %v4888 = vpop.f32.mrf.mxu0
        %v4889 = vadd.f32 0.0, %v4888
        %v4890 = vpop.f32.mrf.mxu0
        %v4891 = vadd.f32 0.0, %v4890
        %v4892 = vpop.f32.mrf.mxu0
        %v4893 = vadd.f32 0.0, %v4892
        %v4894 = vpop.f32.mrf.mxu0
        %v4895 = vadd.f32 0.0, %v4894
        %4896 = vmatprep.mubr.bf16.mxu0 %v1261
        %4897 = vmatmul.mubr.bf16.gmra.mxu0 %v1260
        %v4898 = vpop.f32.mrf.mxu0
        %v4899 = vadd.f32 0.0, %v4898
        %v4900 = vpop.f32.mrf.mxu0
        %v4901 = vadd.f32 0.0, %v4900
        %v4902 = vpop.f32.mrf.mxu0
        %v4903 = vadd.f32 0.0, %v4902
        %v4904 = vpop.f32.mrf.mxu0
        %v4905 = vadd.f32 0.0, %v4904
        %4906 = vmatprep.mubr.bf16.mxu0 %v1269
        %4907 = vmatmul.mubr.bf16.gmra.mxu0 %v1268
        %v4908 = vpop.f32.mrf.mxu0
        %v4909 = vadd.f32 0.0, %v4908
        %v4910 = vpop.f32.mrf.mxu0
        %v4911 = vadd.f32 0.0, %v4910
        %v4912 = vpop.f32.mrf.mxu0
        %v4913 = vadd.f32 0.0, %v4912
        %v4914 = vpop.f32.mrf.mxu0
        %v4915 = vadd.f32 0.0, %v4914
        %4916 = vmatprep.mubr.bf16.mxu0 %v1277
        %4917 = vmatmul.mubr.bf16.gmra.mxu0 %v1276
        %v4918 = vpop.f32.mrf.mxu0
        %v4919 = vadd.f32 0.0, %v4918
        %v4920 = vpop.f32.mrf.mxu0
        %v4921 = vadd.f32 0.0, %v4920
        %v4922 = vpop.f32.mrf.mxu0
        %v4923 = vadd.f32 0.0, %v4922
        %v4924 = vpop.f32.mrf.mxu0
        %v4925 = vadd.f32 0.0, %v4924
        %4926 = vmatprep.mubr.bf16.mxu0 %v1285
        %4927 = vmatmul.mubr.bf16.gmra.mxu0 %v1284
        %v4928 = vpop.f32.mrf.mxu0
        %v4929 = vadd.f32 0.0, %v4928
        %v4930 = vpop.f32.mrf.mxu0
        %v4931 = vadd.f32 0.0, %v4930
        %v4932 = vpop.f32.mrf.mxu0
        %v4933 = vadd.f32 0.0, %v4932
        %v4934 = vpop.f32.mrf.mxu0
        %v4935 = vadd.f32 0.0, %v4934
        %4936 = vmatprep.mubr.bf16.mxu0 %v1293
        %4937 = vmatmul.mubr.bf16.gmra.mxu0 %v1292
        %v4938 = vpop.f32.mrf.mxu0
        %v4939 = vadd.f32 0.0, %v4938
        %v4940 = vpop.f32.mrf.mxu0
        %v4941 = vadd.f32 0.0, %v4940
        %v4942 = vpop.f32.mrf.mxu0
        %v4943 = vadd.f32 0.0, %v4942
        %v4944 = vpop.f32.mrf.mxu0
        %v4945 = vadd.f32 0.0, %v4944
        %4946 = vmatprep.mubr.bf16.mxu0 %v1301
        %4947 = vmatmul.mubr.bf16.gmra.mxu0 %v1300
        %v4948 = vpop.f32.mrf.mxu0
        %v4949 = vadd.f32 0.0, %v4948
        %v4950 = vpop.f32.mrf.mxu0
        %v4951 = vadd.f32 0.0, %v4950
        %v4952 = vpop.f32.mrf.mxu0
        %v4953 = vadd.f32 0.0, %v4952
        %v4954 = vpop.f32.mrf.mxu0
        %v4955 = vadd.f32 0.0, %v4954
        %4956 = vmatprep.mubr.bf16.mxu0 %v1309
        %4957 = vmatmul.mubr.bf16.gmra.mxu0 %v1308
        %v4958 = vpop.f32.mrf.mxu0
        %v4959 = vadd.f32 0.0, %v4958
        %v4960 = vpop.f32.mrf.mxu0
        %v4961 = vadd.f32 0.0, %v4960
        %v4962 = vpop.f32.mrf.mxu0
        %v4963 = vadd.f32 0.0, %v4962
        %v4964 = vpop.f32.mrf.mxu0
        %v4965 = vadd.f32 0.0, %v4964
        %4966 = vmatprep.mubr.bf16.mxu0 %v1317
        %4967 = vmatmul.mubr.bf16.gmra.mxu0 %v1316
        %v4968 = vpop.f32.mrf.mxu0
        %v4969 = vadd.f32 0.0, %v4968
        %v4970 = vpop.f32.mrf.mxu0
        %v4971 = vadd.f32 0.0, %v4970
        %v4972 = vpop.f32.mrf.mxu0
        %v4973 = vadd.f32 0.0, %v4972
        %v4974 = vpop.f32.mrf.mxu0
        %v4975 = vadd.f32 0.0, %v4974
        %4976 = vdwg.mxu0
        %4977 = vmatprep.subr.bf16.mxu0 %v3175
        %4978 = vmatpush1.bf16.msra.mxu0 %v3174
        %4979 = vmatprep.subr.bf16.mxu0 %v3167
        %4980 = vmatpush1.bf16.msra.mxu0 %v3166
        %4981 = vmatprep.subr.bf16.mxu0 %v3159
        %4982 = vmatpush1.bf16.msra.mxu0 %v3158
        %4983 = vmatprep.subr.bf16.mxu0 %v3151
        %4984 = vmatpush1.bf16.msra.mxu0 %v3150
        %4985 = vmatprep.subr.bf16.mxu0 %v3143
        %4986 = vmatpush1.bf16.msra.mxu0 %v3142
        %4987 = vmatprep.subr.bf16.mxu0 %v3135
        %4988 = vmatpush1.bf16.msra.mxu0 %v3134
        %4989 = vmatprep.subr.bf16.mxu0 %v3127
        %4990 = vmatpush1.bf16.msra.mxu0 %v3126
        %4991 = vmatprep.subr.bf16.mxu0 %v3119
        %4992 = vmatpush1.bf16.msra.mxu0 %v3118
        %4993 = vmatprep.subr.bf16.mxu0 %v3239
        %4994 = vmatpush2.bf16.msra.mxu0 %v3238
        %4995 = vmatprep.subr.bf16.mxu0 %v3231
        %4996 = vmatpush2.bf16.msra.mxu0 %v3230
        %4997 = vmatprep.subr.bf16.mxu0 %v3223
        %4998 = vmatpush2.bf16.msra.mxu0 %v3222
        %4999 = vmatprep.subr.bf16.mxu0 %v3215
        %5000 = vmatpush2.bf16.msra.mxu0 %v3214
        %5001 = vmatprep.subr.bf16.mxu0 %v3207
        %5002 = vmatpush2.bf16.msra.mxu0 %v3206
        %5003 = vmatprep.subr.bf16.mxu0 %v3199
        %5004 = vmatpush2.bf16.msra.mxu0 %v3198
        %5005 = vmatprep.subr.bf16.mxu0 %v3191
        %5006 = vmatpush2.bf16.msra.mxu0 %v3190
        %5007 = vmatprep.subr.bf16.mxu0 %v3183
        %5008 = vmatpush2.bf16.msra.mxu0 %v3182
        %5009 = vmatprep.mubr.bf16.mxu0 %v1199
        %5010 = vmatmul.mubr.bf16.gmra.mxu0 %v1198
        %v5011 = vpop.f32.mrf.mxu0
        %v5012 = vadd.f32 %v4819, %v5011
        %v5013 = vpop.f32.mrf.mxu0
        %v5014 = vadd.f32 %v4821, %v5013
        %v5015 = vpop.f32.mrf.mxu0
        %v5016 = vadd.f32 %v4823, %v5015
        %v5017 = vpop.f32.mrf.mxu0
        %v5018 = vadd.f32 %v4825, %v5017
        %5019 = vmatprep.mubr.bf16.mxu0 %v1207
        %5020 = vmatmul.mubr.bf16.gmra.mxu0 %v1206
        %v5021 = vpop.f32.mrf.mxu0
        %v5022 = vadd.f32 %v4829, %v5021
        %v5023 = vpop.f32.mrf.mxu0
        %v5024 = vadd.f32 %v4831, %v5023
        %v5025 = vpop.f32.mrf.mxu0
        %v5026 = vadd.f32 %v4833, %v5025
        %v5027 = vpop.f32.mrf.mxu0
        %v5028 = vadd.f32 %v4835, %v5027
        %5029 = vmatprep.mubr.bf16.mxu0 %v1215
        %5030 = vmatmul.mubr.bf16.gmra.mxu0 %v1214
        %v5031 = vpop.f32.mrf.mxu0
        %v5032 = vadd.f32 %v4839, %v5031
        %v5033 = vpop.f32.mrf.mxu0
        %v5034 = vadd.f32 %v4841, %v5033
        %v5035 = vpop.f32.mrf.mxu0
        %v5036 = vadd.f32 %v4843, %v5035
        %v5037 = vpop.f32.mrf.mxu0
        %v5038 = vadd.f32 %v4845, %v5037
        %5039 = vmatprep.mubr.bf16.mxu0 %v1223
        %5040 = vmatmul.mubr.bf16.gmra.mxu0 %v1222
        %v5041 = vpop.f32.mrf.mxu0
        %v5042 = vadd.f32 %v4849, %v5041
        %v5043 = vpop.f32.mrf.mxu0
        %v5044 = vadd.f32 %v4851, %v5043
        %v5045 = vpop.f32.mrf.mxu0
        %v5046 = vadd.f32 %v4853, %v5045
        %v5047 = vpop.f32.mrf.mxu0
        %v5048 = vadd.f32 %v4855, %v5047
        %5049 = vmatprep.mubr.bf16.mxu0 %v1231
        %5050 = vmatmul.mubr.bf16.gmra.mxu0 %v1230
        %v5051 = vpop.f32.mrf.mxu0
        %v5052 = vadd.f32 %v4859, %v5051
        %v5053 = vpop.f32.mrf.mxu0
        %v5054 = vadd.f32 %v4861, %v5053
        %v5055 = vpop.f32.mrf.mxu0
        %v5056 = vadd.f32 %v4863, %v5055
        %v5057 = vpop.f32.mrf.mxu0
        %v5058 = vadd.f32 %v4865, %v5057
        %5059 = vmatprep.mubr.bf16.mxu0 %v1239
        %5060 = vmatmul.mubr.bf16.gmra.mxu0 %v1238
        %v5061 = vpop.f32.mrf.mxu0
        %v5062 = vadd.f32 %v4869, %v5061
        %v5063 = vpop.f32.mrf.mxu0
        %v5064 = vadd.f32 %v4871, %v5063
        %v5065 = vpop.f32.mrf.mxu0
        %v5066 = vadd.f32 %v4873, %v5065
        %v5067 = vpop.f32.mrf.mxu0
        %v5068 = vadd.f32 %v4875, %v5067
        %5069 = vmatprep.mubr.bf16.mxu0 %v1247
        %5070 = vmatmul.mubr.bf16.gmra.mxu0 %v1246
        %v5071 = vpop.f32.mrf.mxu0
        %v5072 = vadd.f32 %v4879, %v5071
        %v5073 = vpop.f32.mrf.mxu0
        %v5074 = vadd.f32 %v4881, %v5073
        %v5075 = vpop.f32.mrf.mxu0
        %v5076 = vadd.f32 %v4883, %v5075
        %v5077 = vpop.f32.mrf.mxu0
        %v5078 = vadd.f32 %v4885, %v5077
        %5079 = vmatprep.mubr.bf16.mxu0 %v1255
        %5080 = vmatmul.mubr.bf16.gmra.mxu0 %v1254
        %v5081 = vpop.f32.mrf.mxu0
        %v5082 = vadd.f32 %v4889, %v5081
        %v5083 = vpop.f32.mrf.mxu0
        %v5084 = vadd.f32 %v4891, %v5083
        %v5085 = vpop.f32.mrf.mxu0
        %v5086 = vadd.f32 %v4893, %v5085
        %v5087 = vpop.f32.mrf.mxu0
        %v5088 = vadd.f32 %v4895, %v5087
        %5089 = vmatprep.mubr.bf16.mxu0 %v1263
        %5090 = vmatmul.mubr.bf16.gmra.mxu0 %v1262
        %v5091 = vpop.f32.mrf.mxu0
        %v5092 = vadd.f32 %v4899, %v5091
        %v5093 = vpop.f32.mrf.mxu0
        %v5094 = vadd.f32 %v4901, %v5093
        %v5095 = vpop.f32.mrf.mxu0
        %v5096 = vadd.f32 %v4903, %v5095
        %v5097 = vpop.f32.mrf.mxu0
        %v5098 = vadd.f32 %v4905, %v5097
        %5099 = vmatprep.mubr.bf16.mxu0 %v1271
        %5100 = vmatmul.mubr.bf16.gmra.mxu0 %v1270
        %v5101 = vpop.f32.mrf.mxu0
        %v5102 = vadd.f32 %v4909, %v5101
        %v5103 = vpop.f32.mrf.mxu0
        %v5104 = vadd.f32 %v4911, %v5103
        %v5105 = vpop.f32.mrf.mxu0
        %v5106 = vadd.f32 %v4913, %v5105
        %v5107 = vpop.f32.mrf.mxu0
        %v5108 = vadd.f32 %v4915, %v5107
        %5109 = vmatprep.mubr.bf16.mxu0 %v1279
        %5110 = vmatmul.mubr.bf16.gmra.mxu0 %v1278
        %v5111 = vpop.f32.mrf.mxu0
        %v5112 = vadd.f32 %v4919, %v5111
        %v5113 = vpop.f32.mrf.mxu0
        %v5114 = vadd.f32 %v4921, %v5113
        %v5115 = vpop.f32.mrf.mxu0
        %v5116 = vadd.f32 %v4923, %v5115
        %v5117 = vpop.f32.mrf.mxu0
        %v5118 = vadd.f32 %v4925, %v5117
        %5119 = vmatprep.mubr.bf16.mxu0 %v1287
        %5120 = vmatmul.mubr.bf16.gmra.mxu0 %v1286
        %v5121 = vpop.f32.mrf.mxu0
        %v5122 = vadd.f32 %v4929, %v5121
        %v5123 = vpop.f32.mrf.mxu0
        %v5124 = vadd.f32 %v4931, %v5123
        %v5125 = vpop.f32.mrf.mxu0
        %v5126 = vadd.f32 %v4933, %v5125
        %v5127 = vpop.f32.mrf.mxu0
        %v5128 = vadd.f32 %v4935, %v5127
        %5129 = vmatprep.mubr.bf16.mxu0 %v1295
        %5130 = vmatmul.mubr.bf16.gmra.mxu0 %v1294
        %v5131 = vpop.f32.mrf.mxu0
        %v5132 = vadd.f32 %v4939, %v5131
        %v5133 = vpop.f32.mrf.mxu0
        %v5134 = vadd.f32 %v4941, %v5133
        %v5135 = vpop.f32.mrf.mxu0
        %v5136 = vadd.f32 %v4943, %v5135
        %v5137 = vpop.f32.mrf.mxu0
        %v5138 = vadd.f32 %v4945, %v5137
        %5139 = vmatprep.mubr.bf16.mxu0 %v1303
        %5140 = vmatmul.mubr.bf16.gmra.mxu0 %v1302
        %v5141 = vpop.f32.mrf.mxu0
        %v5142 = vadd.f32 %v4949, %v5141
        %v5143 = vpop.f32.mrf.mxu0
        %v5144 = vadd.f32 %v4951, %v5143
        %v5145 = vpop.f32.mrf.mxu0
        %v5146 = vadd.f32 %v4953, %v5145
        %v5147 = vpop.f32.mrf.mxu0
        %v5148 = vadd.f32 %v4955, %v5147
        %5149 = vmatprep.mubr.bf16.mxu0 %v1311
        %5150 = vmatmul.mubr.bf16.gmra.mxu0 %v1310
        %v5151 = vpop.f32.mrf.mxu0
        %v5152 = vadd.f32 %v4959, %v5151
        %v5153 = vpop.f32.mrf.mxu0
        %v5154 = vadd.f32 %v4961, %v5153
        %v5155 = vpop.f32.mrf.mxu0
        %v5156 = vadd.f32 %v4963, %v5155
        %v5157 = vpop.f32.mrf.mxu0
        %v5158 = vadd.f32 %v4965, %v5157
        %5159 = vmatprep.mubr.bf16.mxu0 %v1319
        %5160 = vmatmul.mubr.bf16.gmra.mxu0 %v1318
        %v5161 = vpop.f32.mrf.mxu0
        %v5162 = vadd.f32 %v4969, %v5161
        %v5163 = vpop.f32.mrf.mxu0
        %v5164 = vadd.f32 %v4971, %v5163
        %v5165 = vpop.f32.mrf.mxu0
        %v5166 = vadd.f32 %v4973, %v5165
        %v5167 = vpop.f32.mrf.mxu0
        %v5168 = vadd.f32 %v4975, %v5167
        %5169 = vdwg.mxu0
        %5170 = vmatprep.subr.bf16.mxu0 %v3303
        %5171 = vmatpush1.bf16.msra.mxu0 %v3302
        %5172 = vmatprep.subr.bf16.mxu0 %v3295
        %5173 = vmatpush1.bf16.msra.mxu0 %v3294
        %5174 = vmatprep.subr.bf16.mxu0 %v3287
        %5175 = vmatpush1.bf16.msra.mxu0 %v3286
        %5176 = vmatprep.subr.bf16.mxu0 %v3279
        %5177 = vmatpush1.bf16.msra.mxu0 %v3278
        %5178 = vmatprep.subr.bf16.mxu0 %v3271
        %5179 = vmatpush1.bf16.msra.mxu0 %v3270
        %5180 = vmatprep.subr.bf16.mxu0 %v3263
        %5181 = vmatpush1.bf16.msra.mxu0 %v3262
        %5182 = vmatprep.subr.bf16.mxu0 %v3255
        %5183 = vmatpush1.bf16.msra.mxu0 %v3254
        %5184 = vmatprep.subr.bf16.mxu0 %v3247
        %5185 = vmatpush1.bf16.msra.mxu0 %v3246
        %5186 = vmatprep.subr.bf16.mxu0 %v3367
        %5187 = vmatpush2.bf16.msra.mxu0 %v3366
        %5188 = vmatprep.subr.bf16.mxu0 %v3359
        %5189 = vmatpush2.bf16.msra.mxu0 %v3358
        %5190 = vmatprep.subr.bf16.mxu0 %v3351
        %5191 = vmatpush2.bf16.msra.mxu0 %v3350
        %5192 = vmatprep.subr.bf16.mxu0 %v3343
        %5193 = vmatpush2.bf16.msra.mxu0 %v3342
        %5194 = vmatprep.subr.bf16.mxu0 %v3335
        %5195 = vmatpush2.bf16.msra.mxu0 %v3334
        %5196 = vmatprep.subr.bf16.mxu0 %v3327
        %5197 = vmatpush2.bf16.msra.mxu0 %v3326
        %5198 = vmatprep.subr.bf16.mxu0 %v3319
        %5199 = vmatpush2.bf16.msra.mxu0 %v3318
        %5200 = vmatprep.subr.bf16.mxu0 %v3311
        %5201 = vmatpush2.bf16.msra.mxu0 %v3310
        %5202 = vmatprep.mubr.bf16.mxu0 %v1201
        %5203 = vmatmul.mubr.bf16.gmra.mxu0 %v1200
        %v5204 = vpop.f32.mrf.mxu0
        %v5205 = vadd.f32 %v5012, %v5204
        %v5206 = vpop.f32.mrf.mxu0
        %v5207 = vadd.f32 %v5014, %v5206
        %v5208 = vpop.f32.mrf.mxu0
        %v5209 = vadd.f32 %v5016, %v5208
        %v5210 = vpop.f32.mrf.mxu0
        %v5211 = vadd.f32 %v5018, %v5210
        %5212 = vmatprep.mubr.bf16.mxu0 %v1209
        %5213 = vmatmul.mubr.bf16.gmra.mxu0 %v1208
        %v5214 = vpop.f32.mrf.mxu0
        %v5215 = vadd.f32 %v5022, %v5214
        %v5216 = vpop.f32.mrf.mxu0
        %v5217 = vadd.f32 %v5024, %v5216
        %v5218 = vpop.f32.mrf.mxu0
        %v5219 = vadd.f32 %v5026, %v5218
        %v5220 = vpop.f32.mrf.mxu0
        %v5221 = vadd.f32 %v5028, %v5220
        %5222 = vmatprep.mubr.bf16.mxu0 %v1217
        %5223 = vmatmul.mubr.bf16.gmra.mxu0 %v1216
        %v5224 = vpop.f32.mrf.mxu0
        %v5225 = vadd.f32 %v5032, %v5224
        %v5226 = vpop.f32.mrf.mxu0
        %v5227 = vadd.f32 %v5034, %v5226
        %v5228 = vpop.f32.mrf.mxu0
        %v5229 = vadd.f32 %v5036, %v5228
        %v5230 = vpop.f32.mrf.mxu0
        %v5231 = vadd.f32 %v5038, %v5230
        %5232 = vmatprep.mubr.bf16.mxu0 %v1225
        %5233 = vmatmul.mubr.bf16.gmra.mxu0 %v1224
        %v5234 = vpop.f32.mrf.mxu0
        %v5235 = vadd.f32 %v5042, %v5234
        %v5236 = vpop.f32.mrf.mxu0
        %v5237 = vadd.f32 %v5044, %v5236
        %v5238 = vpop.f32.mrf.mxu0
        %v5239 = vadd.f32 %v5046, %v5238
        %v5240 = vpop.f32.mrf.mxu0
        %v5241 = vadd.f32 %v5048, %v5240
        %5242 = vmatprep.mubr.bf16.mxu0 %v1233
        %5243 = vmatmul.mubr.bf16.gmra.mxu0 %v1232
        %v5244 = vpop.f32.mrf.mxu0
        %v5245 = vadd.f32 %v5052, %v5244
        %v5246 = vpop.f32.mrf.mxu0
        %v5247 = vadd.f32 %v5054, %v5246
        %v5248 = vpop.f32.mrf.mxu0
        %v5249 = vadd.f32 %v5056, %v5248
        %v5250 = vpop.f32.mrf.mxu0
        %v5251 = vadd.f32 %v5058, %v5250
        %5252 = vmatprep.mubr.bf16.mxu0 %v1241
        %5253 = vmatmul.mubr.bf16.gmra.mxu0 %v1240
        %v5254 = vpop.f32.mrf.mxu0
        %v5255 = vadd.f32 %v5062, %v5254
        %v5256 = vpop.f32.mrf.mxu0
        %v5257 = vadd.f32 %v5064, %v5256
        %v5258 = vpop.f32.mrf.mxu0
        %v5259 = vadd.f32 %v5066, %v5258
        %v5260 = vpop.f32.mrf.mxu0
        %v5261 = vadd.f32 %v5068, %v5260
        %5262 = vmatprep.mubr.bf16.mxu0 %v1249
        %5263 = vmatmul.mubr.bf16.gmra.mxu0 %v1248
        %v5264 = vpop.f32.mrf.mxu0
        %v5265 = vadd.f32 %v5072, %v5264
        %v5266 = vpop.f32.mrf.mxu0
        %v5267 = vadd.f32 %v5074, %v5266
        %v5268 = vpop.f32.mrf.mxu0
        %v5269 = vadd.f32 %v5076, %v5268
        %v5270 = vpop.f32.mrf.mxu0
        %v5271 = vadd.f32 %v5078, %v5270
        %5272 = vmatprep.mubr.bf16.mxu0 %v1257
        %5273 = vmatmul.mubr.bf16.gmra.mxu0 %v1256
        %v5274 = vpop.f32.mrf.mxu0
        %v5275 = vadd.f32 %v5082, %v5274
        %v5276 = vpop.f32.mrf.mxu0
        %v5277 = vadd.f32 %v5084, %v5276
        %v5278 = vpop.f32.mrf.mxu0
        %v5279 = vadd.f32 %v5086, %v5278
        %v5280 = vpop.f32.mrf.mxu0
        %v5281 = vadd.f32 %v5088, %v5280
        %5282 = vmatprep.mubr.bf16.mxu0 %v1265
        %5283 = vmatmul.mubr.bf16.gmra.mxu0 %v1264
        %v5284 = vpop.f32.mrf.mxu0
        %v5285 = vadd.f32 %v5092, %v5284
        %v5286 = vpop.f32.mrf.mxu0
        %v5287 = vadd.f32 %v5094, %v5286
        %v5288 = vpop.f32.mrf.mxu0
        %v5289 = vadd.f32 %v5096, %v5288
        %v5290 = vpop.f32.mrf.mxu0
        %v5291 = vadd.f32 %v5098, %v5290
        %5292 = vmatprep.mubr.bf16.mxu0 %v1273
        %5293 = vmatmul.mubr.bf16.gmra.mxu0 %v1272
        %v5294 = vpop.f32.mrf.mxu0
        %v5295 = vadd.f32 %v5102, %v5294
        %v5296 = vpop.f32.mrf.mxu0
        %v5297 = vadd.f32 %v5104, %v5296
        %v5298 = vpop.f32.mrf.mxu0
        %v5299 = vadd.f32 %v5106, %v5298
        %v5300 = vpop.f32.mrf.mxu0
        %v5301 = vadd.f32 %v5108, %v5300
        %5302 = vmatprep.mubr.bf16.mxu0 %v1281
        %5303 = vmatmul.mubr.bf16.gmra.mxu0 %v1280
        %v5304 = vpop.f32.mrf.mxu0
        %v5305 = vadd.f32 %v5112, %v5304
        %v5306 = vpop.f32.mrf.mxu0
        %v5307 = vadd.f32 %v5114, %v5306
        %v5308 = vpop.f32.mrf.mxu0
        %v5309 = vadd.f32 %v5116, %v5308
        %v5310 = vpop.f32.mrf.mxu0
        %v5311 = vadd.f32 %v5118, %v5310
        %5312 = vmatprep.mubr.bf16.mxu0 %v1289
        %5313 = vmatmul.mubr.bf16.gmra.mxu0 %v1288
        %v5314 = vpop.f32.mrf.mxu0
        %v5315 = vadd.f32 %v5122, %v5314
        %v5316 = vpop.f32.mrf.mxu0
        %v5317 = vadd.f32 %v5124, %v5316
        %v5318 = vpop.f32.mrf.mxu0
        %v5319 = vadd.f32 %v5126, %v5318
        %v5320 = vpop.f32.mrf.mxu0
        %v5321 = vadd.f32 %v5128, %v5320
        %5322 = vmatprep.mubr.bf16.mxu0 %v1297
        %5323 = vmatmul.mubr.bf16.gmra.mxu0 %v1296
        %v5324 = vpop.f32.mrf.mxu0
        %v5325 = vadd.f32 %v5132, %v5324
        %v5326 = vpop.f32.mrf.mxu0
        %v5327 = vadd.f32 %v5134, %v5326
        %v5328 = vpop.f32.mrf.mxu0
        %v5329 = vadd.f32 %v5136, %v5328
        %v5330 = vpop.f32.mrf.mxu0
        %v5331 = vadd.f32 %v5138, %v5330
        %5332 = vmatprep.mubr.bf16.mxu0 %v1305
        %5333 = vmatmul.mubr.bf16.gmra.mxu0 %v1304
        %v5334 = vpop.f32.mrf.mxu0
        %v5335 = vadd.f32 %v5142, %v5334
        %v5336 = vpop.f32.mrf.mxu0
        %v5337 = vadd.f32 %v5144, %v5336
        %v5338 = vpop.f32.mrf.mxu0
        %v5339 = vadd.f32 %v5146, %v5338
        %v5340 = vpop.f32.mrf.mxu0
        %v5341 = vadd.f32 %v5148, %v5340
        %5342 = vmatprep.mubr.bf16.mxu0 %v1313
        %5343 = vmatmul.mubr.bf16.gmra.mxu0 %v1312
        %v5344 = vpop.f32.mrf.mxu0
        %v5345 = vadd.f32 %v5152, %v5344
        %v5346 = vpop.f32.mrf.mxu0
        %v5347 = vadd.f32 %v5154, %v5346
        %v5348 = vpop.f32.mrf.mxu0
        %v5349 = vadd.f32 %v5156, %v5348
        %v5350 = vpop.f32.mrf.mxu0
        %v5351 = vadd.f32 %v5158, %v5350
        %5352 = vmatprep.mubr.bf16.mxu0 %v1321
        %5353 = vmatmul.mubr.bf16.gmra.mxu0 %v1320
        %v5354 = vpop.f32.mrf.mxu0
        %v5355 = vadd.f32 %v5162, %v5354
        %v5356 = vpop.f32.mrf.mxu0
        %v5357 = vadd.f32 %v5164, %v5356
        %v5358 = vpop.f32.mrf.mxu0
        %v5359 = vadd.f32 %v5166, %v5358
        %v5360 = vpop.f32.mrf.mxu0
        %v5361 = vadd.f32 %v5168, %v5360
        %5362 = vdwg.mxu0
        %5363 = vmatprep.subr.bf16.mxu0 %v3431
        %5364 = vmatpush1.bf16.msra.mxu0 %v3430
        %5365 = vmatprep.subr.bf16.mxu0 %v3423
        %5366 = vmatpush1.bf16.msra.mxu0 %v3422
        %5367 = vmatprep.subr.bf16.mxu0 %v3415
        %5368 = vmatpush1.bf16.msra.mxu0 %v3414
        %5369 = vmatprep.subr.bf16.mxu0 %v3407
        %5370 = vmatpush1.bf16.msra.mxu0 %v3406
        %5371 = vmatprep.subr.bf16.mxu0 %v3399
        %5372 = vmatpush1.bf16.msra.mxu0 %v3398
        %5373 = vmatprep.subr.bf16.mxu0 %v3391
        %5374 = vmatpush1.bf16.msra.mxu0 %v3390
        %5375 = vmatprep.subr.bf16.mxu0 %v3383
        %5376 = vmatpush1.bf16.msra.mxu0 %v3382
        %5377 = vmatprep.subr.bf16.mxu0 %v3375
        %5378 = vmatpush1.bf16.msra.mxu0 %v3374
        %5379 = vmatprep.subr.bf16.mxu0 %v3495
        %5380 = vmatpush2.bf16.msra.mxu0 %v3494
        %5381 = vmatprep.subr.bf16.mxu0 %v3487
        %5382 = vmatpush2.bf16.msra.mxu0 %v3486
        %5383 = vmatprep.subr.bf16.mxu0 %v3479
        %5384 = vmatpush2.bf16.msra.mxu0 %v3478
        %5385 = vmatprep.subr.bf16.mxu0 %v3471
        %5386 = vmatpush2.bf16.msra.mxu0 %v3470
        %5387 = vmatprep.subr.bf16.mxu0 %v3463
        %5388 = vmatpush2.bf16.msra.mxu0 %v3462
        %5389 = vmatprep.subr.bf16.mxu0 %v3455
        %5390 = vmatpush2.bf16.msra.mxu0 %v3454
        %5391 = vmatprep.subr.bf16.mxu0 %v3447
        %5392 = vmatpush2.bf16.msra.mxu0 %v3446
        %5393 = vmatprep.subr.bf16.mxu0 %v3439
        %5394 = vmatpush2.bf16.msra.mxu0 %v3438
        %5395 = vmatprep.mubr.bf16.mxu0 %v1203
        %5396 = vmatmul.mubr.bf16.gmra.mxu0 %v1202
        %v5397 = vpop.f32.mrf.mxu0
        %v5398 = vadd.f32 %v5205, %v5397
        %v5399 = vpop.f32.mrf.mxu0
        %v5400 = vadd.f32 %v5207, %v5399
        %v5401 = vpop.f32.mrf.mxu0
        %v5402 = vadd.f32 %v5209, %v5401
        %v5403 = vpop.f32.mrf.mxu0
        %v5404 = vadd.f32 %v5211, %v5403
        %5405 = vmatprep.mubr.bf16.mxu0 %v1211
        %5406 = vmatmul.mubr.bf16.gmra.mxu0 %v1210
        %v5407 = vpop.f32.mrf.mxu0
        %v5408 = vadd.f32 %v5215, %v5407
        %v5409 = vpop.f32.mrf.mxu0
        %v5410 = vadd.f32 %v5217, %v5409
        %v5411 = vpop.f32.mrf.mxu0
        %v5412 = vadd.f32 %v5219, %v5411
        %v5413 = vpop.f32.mrf.mxu0
        %v5414 = vadd.f32 %v5221, %v5413
        %5415 = vmatprep.mubr.bf16.mxu0 %v1219
        %5416 = vmatmul.mubr.bf16.gmra.mxu0 %v1218
        %v5417 = vpop.f32.mrf.mxu0
        %v5418 = vadd.f32 %v5225, %v5417
        %v5419 = vpop.f32.mrf.mxu0
        %v5420 = vadd.f32 %v5227, %v5419
        %v5421 = vpop.f32.mrf.mxu0
        %v5422 = vadd.f32 %v5229, %v5421
        %v5423 = vpop.f32.mrf.mxu0
        %v5424 = vadd.f32 %v5231, %v5423
        %5425 = vmatprep.mubr.bf16.mxu0 %v1227
        %5426 = vmatmul.mubr.bf16.gmra.mxu0 %v1226
        %v5427 = vpop.f32.mrf.mxu0
        %v5428 = vadd.f32 %v5235, %v5427
        %v5429 = vpop.f32.mrf.mxu0
        %v5430 = vadd.f32 %v5237, %v5429
        %v5431 = vpop.f32.mrf.mxu0
        %v5432 = vadd.f32 %v5239, %v5431
        %v5433 = vpop.f32.mrf.mxu0
        %v5434 = vadd.f32 %v5241, %v5433
        %5435 = vmatprep.mubr.bf16.mxu0 %v1235
        %5436 = vmatmul.mubr.bf16.gmra.mxu0 %v1234
        %v5437 = vpop.f32.mrf.mxu0
        %v5438 = vadd.f32 %v5245, %v5437
        %v5439 = vpop.f32.mrf.mxu0
        %v5440 = vadd.f32 %v5247, %v5439
        %v5441 = vpop.f32.mrf.mxu0
        %v5442 = vadd.f32 %v5249, %v5441
        %v5443 = vpop.f32.mrf.mxu0
        %v5444 = vadd.f32 %v5251, %v5443
        %5445 = vmatprep.mubr.bf16.mxu0 %v1243
        %5446 = vmatmul.mubr.bf16.gmra.mxu0 %v1242
        %v5447 = vpop.f32.mrf.mxu0
        %v5448 = vadd.f32 %v5255, %v5447
        %v5449 = vpop.f32.mrf.mxu0
        %v5450 = vadd.f32 %v5257, %v5449
        %v5451 = vpop.f32.mrf.mxu0
        %v5452 = vadd.f32 %v5259, %v5451
        %v5453 = vpop.f32.mrf.mxu0
        %v5454 = vadd.f32 %v5261, %v5453
        %5455 = vmatprep.mubr.bf16.mxu0 %v1251
        %5456 = vmatmul.mubr.bf16.gmra.mxu0 %v1250
        %v5457 = vpop.f32.mrf.mxu0
        %v5458 = vadd.f32 %v5265, %v5457
        %v5459 = vpop.f32.mrf.mxu0
        %v5460 = vadd.f32 %v5267, %v5459
        %v5461 = vpop.f32.mrf.mxu0
        %v5462 = vadd.f32 %v5269, %v5461
        %v5463 = vpop.f32.mrf.mxu0
        %v5464 = vadd.f32 %v5271, %v5463
        %5465 = vmatprep.mubr.bf16.mxu0 %v1259
        %5466 = vmatmul.mubr.bf16.gmra.mxu0 %v1258
        %v5467 = vpop.f32.mrf.mxu0
        %v5468 = vadd.f32 %v5275, %v5467
        %v5469 = vpop.f32.mrf.mxu0
        %v5470 = vadd.f32 %v5277, %v5469
        %v5471 = vpop.f32.mrf.mxu0
        %v5472 = vadd.f32 %v5279, %v5471
        %v5473 = vpop.f32.mrf.mxu0
        %v5474 = vadd.f32 %v5281, %v5473
        %5475 = vmatprep.mubr.bf16.mxu0 %v1267
        %5476 = vmatmul.mubr.bf16.gmra.mxu0 %v1266
        %v5477 = vpop.f32.mrf.mxu0
        %v5478 = vadd.f32 %v5285, %v5477
        %v5479 = vpop.f32.mrf.mxu0
        %v5480 = vadd.f32 %v5287, %v5479
        %v5481 = vpop.f32.mrf.mxu0
        %v5482 = vadd.f32 %v5289, %v5481
        %v5483 = vpop.f32.mrf.mxu0
        %v5484 = vadd.f32 %v5291, %v5483
        %5485 = vmatprep.mubr.bf16.mxu0 %v1275
        %5486 = vmatmul.mubr.bf16.gmra.mxu0 %v1274
        %v5487 = vpop.f32.mrf.mxu0
        %v5488 = vadd.f32 %v5295, %v5487
        %v5489 = vpop.f32.mrf.mxu0
        %v5490 = vadd.f32 %v5297, %v5489
        %v5491 = vpop.f32.mrf.mxu0
        %v5492 = vadd.f32 %v5299, %v5491
        %v5493 = vpop.f32.mrf.mxu0
        %v5494 = vadd.f32 %v5301, %v5493
        %5495 = vmatprep.mubr.bf16.mxu0 %v1283
        %5496 = vmatmul.mubr.bf16.gmra.mxu0 %v1282
        %v5497 = vpop.f32.mrf.mxu0
        %v5498 = vadd.f32 %v5305, %v5497
        %v5499 = vpop.f32.mrf.mxu0
        %v5500 = vadd.f32 %v5307, %v5499
        %v5501 = vpop.f32.mrf.mxu0
        %v5502 = vadd.f32 %v5309, %v5501
        %v5503 = vpop.f32.mrf.mxu0
        %v5504 = vadd.f32 %v5311, %v5503
        %5505 = vmatprep.mubr.bf16.mxu0 %v1291
        %5506 = vmatmul.mubr.bf16.gmra.mxu0 %v1290
        %v5507 = vpop.f32.mrf.mxu0
        %v5508 = vadd.f32 %v5315, %v5507
        %v5509 = vpop.f32.mrf.mxu0
        %v5510 = vadd.f32 %v5317, %v5509
        %v5511 = vpop.f32.mrf.mxu0
        %v5512 = vadd.f32 %v5319, %v5511
        %v5513 = vpop.f32.mrf.mxu0
        %v5514 = vadd.f32 %v5321, %v5513
        %5515 = vmatprep.mubr.bf16.mxu0 %v1299
        %5516 = vmatmul.mubr.bf16.gmra.mxu0 %v1298
        %v5517 = vpop.f32.mrf.mxu0
        %v5518 = vadd.f32 %v5325, %v5517
        %v5519 = vpop.f32.mrf.mxu0
        %v5520 = vadd.f32 %v5327, %v5519
        %v5521 = vpop.f32.mrf.mxu0
        %v5522 = vadd.f32 %v5329, %v5521
        %v5523 = vpop.f32.mrf.mxu0
        %v5524 = vadd.f32 %v5331, %v5523
        %5525 = vmatprep.mubr.bf16.mxu0 %v1307
        %5526 = vmatmul.mubr.bf16.gmra.mxu0 %v1306
        %v5527 = vpop.f32.mrf.mxu0
        %v5528 = vadd.f32 %v5335, %v5527
        %v5529 = vpop.f32.mrf.mxu0
        %v5530 = vadd.f32 %v5337, %v5529
        %v5531 = vpop.f32.mrf.mxu0
        %v5532 = vadd.f32 %v5339, %v5531
        %v5533 = vpop.f32.mrf.mxu0
        %v5534 = vadd.f32 %v5341, %v5533
        %5535 = vmatprep.mubr.bf16.mxu0 %v1315
        %5536 = vmatmul.mubr.bf16.gmra.mxu0 %v1314
        %v5537 = vpop.f32.mrf.mxu0
        %v5538 = vadd.f32 %v5345, %v5537
        %v5539 = vpop.f32.mrf.mxu0
        %v5540 = vadd.f32 %v5347, %v5539
        %v5541 = vpop.f32.mrf.mxu0
        %v5542 = vadd.f32 %v5349, %v5541
        %v5543 = vpop.f32.mrf.mxu0
        %v5544 = vadd.f32 %v5351, %v5543
        %5545 = vmatprep.mubr.bf16.mxu0 %v1323
        %5546 = vmatmul.mubr.bf16.gmra.mxu0 %v1322
        %v5547 = vpop.f32.mrf.mxu0
        %v5548 = vadd.f32 %v5355, %v5547
        %v5549 = vpop.f32.mrf.mxu0
        %v5550 = vadd.f32 %v5357, %v5549
        %v5551 = vpop.f32.mrf.mxu0
        %v5552 = vadd.f32 %v5359, %v5551
        %v5553 = vpop.f32.mrf.mxu0
        %v5554 = vadd.f32 %v5361, %v5553
        %5555 = vdwg.mxu0
        %5556 = vmatprep.subr.bf16.mxu0 %v3049
        %5557 = vmatpush1.bf16.msra.mxu0 %v3048
        %5558 = vmatprep.subr.bf16.mxu0 %v3041
        %5559 = vmatpush1.bf16.msra.mxu0 %v3040
        %5560 = vmatprep.subr.bf16.mxu0 %v3033
        %5561 = vmatpush1.bf16.msra.mxu0 %v3032
        %5562 = vmatprep.subr.bf16.mxu0 %v3025
        %5563 = vmatpush1.bf16.msra.mxu0 %v3024
        %5564 = vmatprep.subr.bf16.mxu0 %v3017
        %5565 = vmatpush1.bf16.msra.mxu0 %v3016
        %5566 = vmatprep.subr.bf16.mxu0 %v3009
        %5567 = vmatpush1.bf16.msra.mxu0 %v3008
        %5568 = vmatprep.subr.bf16.mxu0 %v3001
        %5569 = vmatpush1.bf16.msra.mxu0 %v3000
        %5570 = vmatprep.subr.bf16.mxu0 %v2993
        %5571 = vmatpush1.bf16.msra.mxu0 %v2992
        %5572 = vmatprep.subr.bf16.mxu0 %v3113
        %5573 = vmatpush2.bf16.msra.mxu0 %v3112
        %5574 = vmatprep.subr.bf16.mxu0 %v3105
        %5575 = vmatpush2.bf16.msra.mxu0 %v3104
        %5576 = vmatprep.subr.bf16.mxu0 %v3097
        %5577 = vmatpush2.bf16.msra.mxu0 %v3096
        %5578 = vmatprep.subr.bf16.mxu0 %v3089
        %5579 = vmatpush2.bf16.msra.mxu0 %v3088
        %5580 = vmatprep.subr.bf16.mxu0 %v3081
        %5581 = vmatpush2.bf16.msra.mxu0 %v3080
        %5582 = vmatprep.subr.bf16.mxu0 %v3073
        %5583 = vmatpush2.bf16.msra.mxu0 %v3072
        %5584 = vmatprep.subr.bf16.mxu0 %v3065
        %5585 = vmatpush2.bf16.msra.mxu0 %v3064
        %5586 = vmatprep.subr.bf16.mxu0 %v3057
        %5587 = vmatpush2.bf16.msra.mxu0 %v3056
        %5588 = vmatprep.mubr.bf16.mxu0 %v1197
        %5589 = vmatmul.mubr.bf16.gmra.mxu0 %v1196
        %v5590 = vpop.f32.mrf.mxu0
        %v5591 = vadd.f32 0.0, %v5590
        %v5592 = vpop.f32.mrf.mxu0
        %v5593 = vadd.f32 0.0, %v5592
        %v5594 = vpop.f32.mrf.mxu0
        %v5595 = vadd.f32 0.0, %v5594
        %v5596 = vpop.f32.mrf.mxu0
        %v5597 = vadd.f32 0.0, %v5596
        %5598 = vmatprep.mubr.bf16.mxu0 %v1205
        %5599 = vmatmul.mubr.bf16.gmra.mxu0 %v1204
        %v5600 = vpop.f32.mrf.mxu0
        %v5601 = vadd.f32 0.0, %v5600
        %v5602 = vpop.f32.mrf.mxu0
        %v5603 = vadd.f32 0.0, %v5602
        %v5604 = vpop.f32.mrf.mxu0
        %v5605 = vadd.f32 0.0, %v5604
        %v5606 = vpop.f32.mrf.mxu0
        %v5607 = vadd.f32 0.0, %v5606
        %5608 = vmatprep.mubr.bf16.mxu0 %v1213
        %5609 = vmatmul.mubr.bf16.gmra.mxu0 %v1212
        %v5610 = vpop.f32.mrf.mxu0
        %v5611 = vadd.f32 0.0, %v5610
        %v5612 = vpop.f32.mrf.mxu0
        %v5613 = vadd.f32 0.0, %v5612
        %v5614 = vpop.f32.mrf.mxu0
        %v5615 = vadd.f32 0.0, %v5614
        %v5616 = vpop.f32.mrf.mxu0
        %v5617 = vadd.f32 0.0, %v5616
        %5618 = vmatprep.mubr.bf16.mxu0 %v1221
        %5619 = vmatmul.mubr.bf16.gmra.mxu0 %v1220
        %v5620 = vpop.f32.mrf.mxu0
        %v5621 = vadd.f32 0.0, %v5620
        %v5622 = vpop.f32.mrf.mxu0
        %v5623 = vadd.f32 0.0, %v5622
        %v5624 = vpop.f32.mrf.mxu0
        %v5625 = vadd.f32 0.0, %v5624
        %v5626 = vpop.f32.mrf.mxu0
        %v5627 = vadd.f32 0.0, %v5626
        %5628 = vmatprep.mubr.bf16.mxu0 %v1229
        %5629 = vmatmul.mubr.bf16.gmra.mxu0 %v1228
        %v5630 = vpop.f32.mrf.mxu0
        %v5631 = vadd.f32 0.0, %v5630
        %v5632 = vpop.f32.mrf.mxu0
        %v5633 = vadd.f32 0.0, %v5632
        %v5634 = vpop.f32.mrf.mxu0
        %v5635 = vadd.f32 0.0, %v5634
        %v5636 = vpop.f32.mrf.mxu0
        %v5637 = vadd.f32 0.0, %v5636
        %5638 = vmatprep.mubr.bf16.mxu0 %v1237
        %5639 = vmatmul.mubr.bf16.gmra.mxu0 %v1236
        %v5640 = vpop.f32.mrf.mxu0
        %v5641 = vadd.f32 0.0, %v5640
        %v5642 = vpop.f32.mrf.mxu0
        %v5643 = vadd.f32 0.0, %v5642
        %v5644 = vpop.f32.mrf.mxu0
        %v5645 = vadd.f32 0.0, %v5644
        %v5646 = vpop.f32.mrf.mxu0
        %v5647 = vadd.f32 0.0, %v5646
        %5648 = vmatprep.mubr.bf16.mxu0 %v1245
        %5649 = vmatmul.mubr.bf16.gmra.mxu0 %v1244
        %v5650 = vpop.f32.mrf.mxu0
        %v5651 = vadd.f32 0.0, %v5650
        %v5652 = vpop.f32.mrf.mxu0
        %v5653 = vadd.f32 0.0, %v5652
        %v5654 = vpop.f32.mrf.mxu0
        %v5655 = vadd.f32 0.0, %v5654
        %v5656 = vpop.f32.mrf.mxu0
        %v5657 = vadd.f32 0.0, %v5656
        %5658 = vmatprep.mubr.bf16.mxu0 %v1253
        %5659 = vmatmul.mubr.bf16.gmra.mxu0 %v1252
        %v5660 = vpop.f32.mrf.mxu0
        %v5661 = vadd.f32 0.0, %v5660
        %v5662 = vpop.f32.mrf.mxu0
        %v5663 = vadd.f32 0.0, %v5662
        %v5664 = vpop.f32.mrf.mxu0
        %v5665 = vadd.f32 0.0, %v5664
        %v5666 = vpop.f32.mrf.mxu0
        %v5667 = vadd.f32 0.0, %v5666
        %5668 = vmatprep.mubr.bf16.mxu0 %v1261
        %5669 = vmatmul.mubr.bf16.gmra.mxu0 %v1260
        %v5670 = vpop.f32.mrf.mxu0
        %v5671 = vadd.f32 0.0, %v5670
        %v5672 = vpop.f32.mrf.mxu0
        %v5673 = vadd.f32 0.0, %v5672
        %v5674 = vpop.f32.mrf.mxu0
        %v5675 = vadd.f32 0.0, %v5674
        %v5676 = vpop.f32.mrf.mxu0
        %v5677 = vadd.f32 0.0, %v5676
        %5678 = vmatprep.mubr.bf16.mxu0 %v1269
        %5679 = vmatmul.mubr.bf16.gmra.mxu0 %v1268
        %v5680 = vpop.f32.mrf.mxu0
        %v5681 = vadd.f32 0.0, %v5680
        %v5682 = vpop.f32.mrf.mxu0
        %v5683 = vadd.f32 0.0, %v5682
        %v5684 = vpop.f32.mrf.mxu0
        %v5685 = vadd.f32 0.0, %v5684
        %v5686 = vpop.f32.mrf.mxu0
        %v5687 = vadd.f32 0.0, %v5686
        %5688 = vmatprep.mubr.bf16.mxu0 %v1277
        %5689 = vmatmul.mubr.bf16.gmra.mxu0 %v1276
        %v5690 = vpop.f32.mrf.mxu0
        %v5691 = vadd.f32 0.0, %v5690
        %v5692 = vpop.f32.mrf.mxu0
        %v5693 = vadd.f32 0.0, %v5692
        %v5694 = vpop.f32.mrf.mxu0
        %v5695 = vadd.f32 0.0, %v5694
        %v5696 = vpop.f32.mrf.mxu0
        %v5697 = vadd.f32 0.0, %v5696
        %5698 = vmatprep.mubr.bf16.mxu0 %v1285
        %5699 = vmatmul.mubr.bf16.gmra.mxu0 %v1284
        %v5700 = vpop.f32.mrf.mxu0
        %v5701 = vadd.f32 0.0, %v5700
        %v5702 = vpop.f32.mrf.mxu0
        %v5703 = vadd.f32 0.0, %v5702
        %v5704 = vpop.f32.mrf.mxu0
        %v5705 = vadd.f32 0.0, %v5704
        %v5706 = vpop.f32.mrf.mxu0
        %v5707 = vadd.f32 0.0, %v5706
        %5708 = vmatprep.mubr.bf16.mxu0 %v1293
        %5709 = vmatmul.mubr.bf16.gmra.mxu0 %v1292
        %v5710 = vpop.f32.mrf.mxu0
        %v5711 = vadd.f32 0.0, %v5710
        %v5712 = vpop.f32.mrf.mxu0
        %v5713 = vadd.f32 0.0, %v5712
        %v5714 = vpop.f32.mrf.mxu0
        %v5715 = vadd.f32 0.0, %v5714
        %v5716 = vpop.f32.mrf.mxu0
        %v5717 = vadd.f32 0.0, %v5716
        %5718 = vmatprep.mubr.bf16.mxu0 %v1301
        %5719 = vmatmul.mubr.bf16.gmra.mxu0 %v1300
        %v5720 = vpop.f32.mrf.mxu0
        %v5721 = vadd.f32 0.0, %v5720
        %v5722 = vpop.f32.mrf.mxu0
        %v5723 = vadd.f32 0.0, %v5722
        %v5724 = vpop.f32.mrf.mxu0
        %v5725 = vadd.f32 0.0, %v5724
        %v5726 = vpop.f32.mrf.mxu0
        %v5727 = vadd.f32 0.0, %v5726
        %5728 = vmatprep.mubr.bf16.mxu0 %v1309
        %5729 = vmatmul.mubr.bf16.gmra.mxu0 %v1308
        %v5730 = vpop.f32.mrf.mxu0
        %v5731 = vadd.f32 0.0, %v5730
        %v5732 = vpop.f32.mrf.mxu0
        %v5733 = vadd.f32 0.0, %v5732
        %v5734 = vpop.f32.mrf.mxu0
        %v5735 = vadd.f32 0.0, %v5734
        %v5736 = vpop.f32.mrf.mxu0
        %v5737 = vadd.f32 0.0, %v5736
        %5738 = vmatprep.mubr.bf16.mxu0 %v1317
        %5739 = vmatmul.mubr.bf16.gmra.mxu0 %v1316
        %v5740 = vpop.f32.mrf.mxu0
        %v5741 = vadd.f32 0.0, %v5740
        %v5742 = vpop.f32.mrf.mxu0
        %v5743 = vadd.f32 0.0, %v5742
        %v5744 = vpop.f32.mrf.mxu0
        %v5745 = vadd.f32 0.0, %v5744
        %v5746 = vpop.f32.mrf.mxu0
        %v5747 = vadd.f32 0.0, %v5746
        %5748 = vdwg.mxu0
        %5749 = vmatprep.subr.bf16.mxu0 %v3177
        %5750 = vmatpush1.bf16.msra.mxu0 %v3176
        %5751 = vmatprep.subr.bf16.mxu0 %v3169
        %5752 = vmatpush1.bf16.msra.mxu0 %v3168
        %5753 = vmatprep.subr.bf16.mxu0 %v3161
        %5754 = vmatpush1.bf16.msra.mxu0 %v3160
        %5755 = vmatprep.subr.bf16.mxu0 %v3153
        %5756 = vmatpush1.bf16.msra.mxu0 %v3152
        %5757 = vmatprep.subr.bf16.mxu0 %v3145
        %5758 = vmatpush1.bf16.msra.mxu0 %v3144
        %5759 = vmatprep.subr.bf16.mxu0 %v3137
        %5760 = vmatpush1.bf16.msra.mxu0 %v3136
        %5761 = vmatprep.subr.bf16.mxu0 %v3129
        %5762 = vmatpush1.bf16.msra.mxu0 %v3128
        %5763 = vmatprep.subr.bf16.mxu0 %v3121
        %5764 = vmatpush1.bf16.msra.mxu0 %v3120
        %5765 = vmatprep.subr.bf16.mxu0 %v3241
        %5766 = vmatpush2.bf16.msra.mxu0 %v3240
        %5767 = vmatprep.subr.bf16.mxu0 %v3233
        %5768 = vmatpush2.bf16.msra.mxu0 %v3232
        %5769 = vmatprep.subr.bf16.mxu0 %v3225
        %5770 = vmatpush2.bf16.msra.mxu0 %v3224
        %5771 = vmatprep.subr.bf16.mxu0 %v3217
        %5772 = vmatpush2.bf16.msra.mxu0 %v3216
        %5773 = vmatprep.subr.bf16.mxu0 %v3209
        %5774 = vmatpush2.bf16.msra.mxu0 %v3208
        %5775 = vmatprep.subr.bf16.mxu0 %v3201
        %5776 = vmatpush2.bf16.msra.mxu0 %v3200
        %5777 = vmatprep.subr.bf16.mxu0 %v3193
        %5778 = vmatpush2.bf16.msra.mxu0 %v3192
        %5779 = vmatprep.subr.bf16.mxu0 %v3185
        %5780 = vmatpush2.bf16.msra.mxu0 %v3184
        %5781 = vmatprep.mubr.bf16.mxu0 %v1199
        %5782 = vmatmul.mubr.bf16.gmra.mxu0 %v1198
        %v5783 = vpop.f32.mrf.mxu0
        %v5784 = vadd.f32 %v5591, %v5783
        %v5785 = vpop.f32.mrf.mxu0
        %v5786 = vadd.f32 %v5593, %v5785
        %v5787 = vpop.f32.mrf.mxu0
        %v5788 = vadd.f32 %v5595, %v5787
        %v5789 = vpop.f32.mrf.mxu0
        %v5790 = vadd.f32 %v5597, %v5789
        %5791 = vmatprep.mubr.bf16.mxu0 %v1207
        %5792 = vmatmul.mubr.bf16.gmra.mxu0 %v1206
        %v5793 = vpop.f32.mrf.mxu0
        %v5794 = vadd.f32 %v5601, %v5793
        %v5795 = vpop.f32.mrf.mxu0
        %v5796 = vadd.f32 %v5603, %v5795
        %v5797 = vpop.f32.mrf.mxu0
        %v5798 = vadd.f32 %v5605, %v5797
        %v5799 = vpop.f32.mrf.mxu0
        %v5800 = vadd.f32 %v5607, %v5799
        %5801 = vmatprep.mubr.bf16.mxu0 %v1215
        %5802 = vmatmul.mubr.bf16.gmra.mxu0 %v1214
        %v5803 = vpop.f32.mrf.mxu0
        %v5804 = vadd.f32 %v5611, %v5803
        %v5805 = vpop.f32.mrf.mxu0
        %v5806 = vadd.f32 %v5613, %v5805
        %v5807 = vpop.f32.mrf.mxu0
        %v5808 = vadd.f32 %v5615, %v5807
        %v5809 = vpop.f32.mrf.mxu0
        %v5810 = vadd.f32 %v5617, %v5809
        %5811 = vmatprep.mubr.bf16.mxu0 %v1223
        %5812 = vmatmul.mubr.bf16.gmra.mxu0 %v1222
        %v5813 = vpop.f32.mrf.mxu0
        %v5814 = vadd.f32 %v5621, %v5813
        %v5815 = vpop.f32.mrf.mxu0
        %v5816 = vadd.f32 %v5623, %v5815
        %v5817 = vpop.f32.mrf.mxu0
        %v5818 = vadd.f32 %v5625, %v5817
        %v5819 = vpop.f32.mrf.mxu0
        %v5820 = vadd.f32 %v5627, %v5819
        %5821 = vmatprep.mubr.bf16.mxu0 %v1231
        %5822 = vmatmul.mubr.bf16.gmra.mxu0 %v1230
        %v5823 = vpop.f32.mrf.mxu0
        %v5824 = vadd.f32 %v5631, %v5823
        %v5825 = vpop.f32.mrf.mxu0
        %v5826 = vadd.f32 %v5633, %v5825
        %v5827 = vpop.f32.mrf.mxu0
        %v5828 = vadd.f32 %v5635, %v5827
        %v5829 = vpop.f32.mrf.mxu0
        %v5830 = vadd.f32 %v5637, %v5829
        %5831 = vmatprep.mubr.bf16.mxu0 %v1239
        %5832 = vmatmul.mubr.bf16.gmra.mxu0 %v1238
        %v5833 = vpop.f32.mrf.mxu0
        %v5834 = vadd.f32 %v5641, %v5833
        %v5835 = vpop.f32.mrf.mxu0
        %v5836 = vadd.f32 %v5643, %v5835
        %v5837 = vpop.f32.mrf.mxu0
        %v5838 = vadd.f32 %v5645, %v5837
        %v5839 = vpop.f32.mrf.mxu0
        %v5840 = vadd.f32 %v5647, %v5839
        %5841 = vmatprep.mubr.bf16.mxu0 %v1247
        %5842 = vmatmul.mubr.bf16.gmra.mxu0 %v1246
        %v5843 = vpop.f32.mrf.mxu0
        %v5844 = vadd.f32 %v5651, %v5843
        %v5845 = vpop.f32.mrf.mxu0
        %v5846 = vadd.f32 %v5653, %v5845
        %v5847 = vpop.f32.mrf.mxu0
        %v5848 = vadd.f32 %v5655, %v5847
        %v5849 = vpop.f32.mrf.mxu0
        %v5850 = vadd.f32 %v5657, %v5849
        %5851 = vmatprep.mubr.bf16.mxu0 %v1255
        %5852 = vmatmul.mubr.bf16.gmra.mxu0 %v1254
        %v5853 = vpop.f32.mrf.mxu0
        %v5854 = vadd.f32 %v5661, %v5853
        %v5855 = vpop.f32.mrf.mxu0
        %v5856 = vadd.f32 %v5663, %v5855
        %v5857 = vpop.f32.mrf.mxu0
        %v5858 = vadd.f32 %v5665, %v5857
        %v5859 = vpop.f32.mrf.mxu0
        %v5860 = vadd.f32 %v5667, %v5859
        %5861 = vmatprep.mubr.bf16.mxu0 %v1263
        %5862 = vmatmul.mubr.bf16.gmra.mxu0 %v1262
        %v5863 = vpop.f32.mrf.mxu0
        %v5864 = vadd.f32 %v5671, %v5863
        %v5865 = vpop.f32.mrf.mxu0
        %v5866 = vadd.f32 %v5673, %v5865
        %v5867 = vpop.f32.mrf.mxu0
        %v5868 = vadd.f32 %v5675, %v5867
        %v5869 = vpop.f32.mrf.mxu0
        %v5870 = vadd.f32 %v5677, %v5869
        %5871 = vmatprep.mubr.bf16.mxu0 %v1271
        %5872 = vmatmul.mubr.bf16.gmra.mxu0 %v1270
        %v5873 = vpop.f32.mrf.mxu0
        %v5874 = vadd.f32 %v5681, %v5873
        %v5875 = vpop.f32.mrf.mxu0
        %v5876 = vadd.f32 %v5683, %v5875
        %v5877 = vpop.f32.mrf.mxu0
        %v5878 = vadd.f32 %v5685, %v5877
        %v5879 = vpop.f32.mrf.mxu0
        %v5880 = vadd.f32 %v5687, %v5879
        %5881 = vmatprep.mubr.bf16.mxu0 %v1279
        %5882 = vmatmul.mubr.bf16.gmra.mxu0 %v1278
        %v5883 = vpop.f32.mrf.mxu0
        %v5884 = vadd.f32 %v5691, %v5883
        %v5885 = vpop.f32.mrf.mxu0
        %v5886 = vadd.f32 %v5693, %v5885
        %v5887 = vpop.f32.mrf.mxu0
        %v5888 = vadd.f32 %v5695, %v5887
        %v5889 = vpop.f32.mrf.mxu0
        %v5890 = vadd.f32 %v5697, %v5889
        %5891 = vmatprep.mubr.bf16.mxu0 %v1287
        %5892 = vmatmul.mubr.bf16.gmra.mxu0 %v1286
        %v5893 = vpop.f32.mrf.mxu0
        %v5894 = vadd.f32 %v5701, %v5893
        %v5895 = vpop.f32.mrf.mxu0
        %v5896 = vadd.f32 %v5703, %v5895
        %v5897 = vpop.f32.mrf.mxu0
        %v5898 = vadd.f32 %v5705, %v5897
        %v5899 = vpop.f32.mrf.mxu0
        %v5900 = vadd.f32 %v5707, %v5899
        %5901 = vmatprep.mubr.bf16.mxu0 %v1295
        %5902 = vmatmul.mubr.bf16.gmra.mxu0 %v1294
        %v5903 = vpop.f32.mrf.mxu0
        %v5904 = vadd.f32 %v5711, %v5903
        %v5905 = vpop.f32.mrf.mxu0
        %v5906 = vadd.f32 %v5713, %v5905
        %v5907 = vpop.f32.mrf.mxu0
        %v5908 = vadd.f32 %v5715, %v5907
        %v5909 = vpop.f32.mrf.mxu0
        %v5910 = vadd.f32 %v5717, %v5909
        %5911 = vmatprep.mubr.bf16.mxu0 %v1303
        %5912 = vmatmul.mubr.bf16.gmra.mxu0 %v1302
        %v5913 = vpop.f32.mrf.mxu0
        %v5914 = vadd.f32 %v5721, %v5913
        %v5915 = vpop.f32.mrf.mxu0
        %v5916 = vadd.f32 %v5723, %v5915
        %v5917 = vpop.f32.mrf.mxu0
        %v5918 = vadd.f32 %v5725, %v5917
        %v5919 = vpop.f32.mrf.mxu0
        %v5920 = vadd.f32 %v5727, %v5919
        %5921 = vmatprep.mubr.bf16.mxu0 %v1311
        %5922 = vmatmul.mubr.bf16.gmra.mxu0 %v1310
        %v5923 = vpop.f32.mrf.mxu0
        %v5924 = vadd.f32 %v5731, %v5923
        %v5925 = vpop.f32.mrf.mxu0
        %v5926 = vadd.f32 %v5733, %v5925
        %v5927 = vpop.f32.mrf.mxu0
        %v5928 = vadd.f32 %v5735, %v5927
        %v5929 = vpop.f32.mrf.mxu0
        %v5930 = vadd.f32 %v5737, %v5929
        %5931 = vmatprep.mubr.bf16.mxu0 %v1319
        %5932 = vmatmul.mubr.bf16.gmra.mxu0 %v1318
        %v5933 = vpop.f32.mrf.mxu0
        %v5934 = vadd.f32 %v5741, %v5933
        %v5935 = vpop.f32.mrf.mxu0
        %v5936 = vadd.f32 %v5743, %v5935
        %v5937 = vpop.f32.mrf.mxu0
        %v5938 = vadd.f32 %v5745, %v5937
        %v5939 = vpop.f32.mrf.mxu0
        %v5940 = vadd.f32 %v5747, %v5939
        %5941 = vdwg.mxu0
        %5942 = vmatprep.subr.bf16.mxu0 %v3305
        %5943 = vmatpush1.bf16.msra.mxu0 %v3304
        %5944 = vmatprep.subr.bf16.mxu0 %v3297
        %5945 = vmatpush1.bf16.msra.mxu0 %v3296
        %5946 = vmatprep.subr.bf16.mxu0 %v3289
        %5947 = vmatpush1.bf16.msra.mxu0 %v3288
        %5948 = vmatprep.subr.bf16.mxu0 %v3281
        %5949 = vmatpush1.bf16.msra.mxu0 %v3280
        %5950 = vmatprep.subr.bf16.mxu0 %v3273
        %5951 = vmatpush1.bf16.msra.mxu0 %v3272
        %5952 = vmatprep.subr.bf16.mxu0 %v3265
        %5953 = vmatpush1.bf16.msra.mxu0 %v3264
        %5954 = vmatprep.subr.bf16.mxu0 %v3257
        %5955 = vmatpush1.bf16.msra.mxu0 %v3256
        %5956 = vmatprep.subr.bf16.mxu0 %v3249
        %5957 = vmatpush1.bf16.msra.mxu0 %v3248
        %5958 = vmatprep.subr.bf16.mxu0 %v3369
        %5959 = vmatpush2.bf16.msra.mxu0 %v3368
        %5960 = vmatprep.subr.bf16.mxu0 %v3361
        %5961 = vmatpush2.bf16.msra.mxu0 %v3360
        %5962 = vmatprep.subr.bf16.mxu0 %v3353
        %5963 = vmatpush2.bf16.msra.mxu0 %v3352
        %5964 = vmatprep.subr.bf16.mxu0 %v3345
        %5965 = vmatpush2.bf16.msra.mxu0 %v3344
        %5966 = vmatprep.subr.bf16.mxu0 %v3337
        %5967 = vmatpush2.bf16.msra.mxu0 %v3336
        %5968 = vmatprep.subr.bf16.mxu0 %v3329
        %5969 = vmatpush2.bf16.msra.mxu0 %v3328
        %5970 = vmatprep.subr.bf16.mxu0 %v3321
        %5971 = vmatpush2.bf16.msra.mxu0 %v3320
        %5972 = vmatprep.subr.bf16.mxu0 %v3313
        %5973 = vmatpush2.bf16.msra.mxu0 %v3312
        %5974 = vmatprep.mubr.bf16.mxu0 %v1201
        %5975 = vmatmul.mubr.bf16.gmra.mxu0 %v1200
        %v5976 = vpop.f32.mrf.mxu0
        %v5977 = vadd.f32 %v5784, %v5976
        %v5978 = vpop.f32.mrf.mxu0
        %v5979 = vadd.f32 %v5786, %v5978
        %v5980 = vpop.f32.mrf.mxu0
        %v5981 = vadd.f32 %v5788, %v5980
        %v5982 = vpop.f32.mrf.mxu0
        %v5983 = vadd.f32 %v5790, %v5982
        %5984 = vmatprep.mubr.bf16.mxu0 %v1209
        %5985 = vmatmul.mubr.bf16.gmra.mxu0 %v1208
        %v5986 = vpop.f32.mrf.mxu0
        %v5987 = vadd.f32 %v5794, %v5986
        %v5988 = vpop.f32.mrf.mxu0
        %v5989 = vadd.f32 %v5796, %v5988
        %v5990 = vpop.f32.mrf.mxu0
        %v5991 = vadd.f32 %v5798, %v5990
        %v5992 = vpop.f32.mrf.mxu0
        %v5993 = vadd.f32 %v5800, %v5992
        %5994 = vmatprep.mubr.bf16.mxu0 %v1217
        %5995 = vmatmul.mubr.bf16.gmra.mxu0 %v1216
        %v5996 = vpop.f32.mrf.mxu0
        %v5997 = vadd.f32 %v5804, %v5996
        %v5998 = vpop.f32.mrf.mxu0
        %v5999 = vadd.f32 %v5806, %v5998
        %v6000 = vpop.f32.mrf.mxu0
        %v6001 = vadd.f32 %v5808, %v6000
        %v6002 = vpop.f32.mrf.mxu0
        %v6003 = vadd.f32 %v5810, %v6002
        %6004 = vmatprep.mubr.bf16.mxu0 %v1225
        %6005 = vmatmul.mubr.bf16.gmra.mxu0 %v1224
        %v6006 = vpop.f32.mrf.mxu0
        %v6007 = vadd.f32 %v5814, %v6006
        %v6008 = vpop.f32.mrf.mxu0
        %v6009 = vadd.f32 %v5816, %v6008
        %v6010 = vpop.f32.mrf.mxu0
        %v6011 = vadd.f32 %v5818, %v6010
        %v6012 = vpop.f32.mrf.mxu0
        %v6013 = vadd.f32 %v5820, %v6012
        %6014 = vmatprep.mubr.bf16.mxu0 %v1233
        %6015 = vmatmul.mubr.bf16.gmra.mxu0 %v1232
        %v6016 = vpop.f32.mrf.mxu0
        %v6017 = vadd.f32 %v5824, %v6016
        %v6018 = vpop.f32.mrf.mxu0
        %v6019 = vadd.f32 %v5826, %v6018
        %v6020 = vpop.f32.mrf.mxu0
        %v6021 = vadd.f32 %v5828, %v6020
        %v6022 = vpop.f32.mrf.mxu0
        %v6023 = vadd.f32 %v5830, %v6022
        %6024 = vmatprep.mubr.bf16.mxu0 %v1241
        %6025 = vmatmul.mubr.bf16.gmra.mxu0 %v1240
        %v6026 = vpop.f32.mrf.mxu0
        %v6027 = vadd.f32 %v5834, %v6026
        %v6028 = vpop.f32.mrf.mxu0
        %v6029 = vadd.f32 %v5836, %v6028
        %v6030 = vpop.f32.mrf.mxu0
        %v6031 = vadd.f32 %v5838, %v6030
        %v6032 = vpop.f32.mrf.mxu0
        %v6033 = vadd.f32 %v5840, %v6032
        %6034 = vmatprep.mubr.bf16.mxu0 %v1249
        %6035 = vmatmul.mubr.bf16.gmra.mxu0 %v1248
        %v6036 = vpop.f32.mrf.mxu0
        %v6037 = vadd.f32 %v5844, %v6036
        %v6038 = vpop.f32.mrf.mxu0
        %v6039 = vadd.f32 %v5846, %v6038
        %v6040 = vpop.f32.mrf.mxu0
        %v6041 = vadd.f32 %v5848, %v6040
        %v6042 = vpop.f32.mrf.mxu0
        %v6043 = vadd.f32 %v5850, %v6042
        %6044 = vmatprep.mubr.bf16.mxu0 %v1257
        %6045 = vmatmul.mubr.bf16.gmra.mxu0 %v1256
        %v6046 = vpop.f32.mrf.mxu0
        %v6047 = vadd.f32 %v5854, %v6046
        %v6048 = vpop.f32.mrf.mxu0
        %v6049 = vadd.f32 %v5856, %v6048
        %v6050 = vpop.f32.mrf.mxu0
        %v6051 = vadd.f32 %v5858, %v6050
        %v6052 = vpop.f32.mrf.mxu0
        %v6053 = vadd.f32 %v5860, %v6052
        %6054 = vmatprep.mubr.bf16.mxu0 %v1265
        %6055 = vmatmul.mubr.bf16.gmra.mxu0 %v1264
        %v6056 = vpop.f32.mrf.mxu0
        %v6057 = vadd.f32 %v5864, %v6056
        %v6058 = vpop.f32.mrf.mxu0
        %v6059 = vadd.f32 %v5866, %v6058
        %v6060 = vpop.f32.mrf.mxu0
        %v6061 = vadd.f32 %v5868, %v6060
        %v6062 = vpop.f32.mrf.mxu0
        %v6063 = vadd.f32 %v5870, %v6062
        %6064 = vmatprep.mubr.bf16.mxu0 %v1273
        %6065 = vmatmul.mubr.bf16.gmra.mxu0 %v1272
        %v6066 = vpop.f32.mrf.mxu0
        %v6067 = vadd.f32 %v5874, %v6066
        %v6068 = vpop.f32.mrf.mxu0
        %v6069 = vadd.f32 %v5876, %v6068
        %v6070 = vpop.f32.mrf.mxu0
        %v6071 = vadd.f32 %v5878, %v6070
        %v6072 = vpop.f32.mrf.mxu0
        %v6073 = vadd.f32 %v5880, %v6072
        %6074 = vmatprep.mubr.bf16.mxu0 %v1281
        %6075 = vmatmul.mubr.bf16.gmra.mxu0 %v1280
        %v6076 = vpop.f32.mrf.mxu0
        %v6077 = vadd.f32 %v5884, %v6076
        %v6078 = vpop.f32.mrf.mxu0
        %v6079 = vadd.f32 %v5886, %v6078
        %v6080 = vpop.f32.mrf.mxu0
        %v6081 = vadd.f32 %v5888, %v6080
        %v6082 = vpop.f32.mrf.mxu0
        %v6083 = vadd.f32 %v5890, %v6082
        %6084 = vmatprep.mubr.bf16.mxu0 %v1289
        %6085 = vmatmul.mubr.bf16.gmra.mxu0 %v1288
        %v6086 = vpop.f32.mrf.mxu0
        %v6087 = vadd.f32 %v5894, %v6086
        %v6088 = vpop.f32.mrf.mxu0
        %v6089 = vadd.f32 %v5896, %v6088
        %v6090 = vpop.f32.mrf.mxu0
        %v6091 = vadd.f32 %v5898, %v6090
        %v6092 = vpop.f32.mrf.mxu0
        %v6093 = vadd.f32 %v5900, %v6092
        %6094 = vmatprep.mubr.bf16.mxu0 %v1297
        %6095 = vmatmul.mubr.bf16.gmra.mxu0 %v1296
        %v6096 = vpop.f32.mrf.mxu0
        %v6097 = vadd.f32 %v5904, %v6096
        %v6098 = vpop.f32.mrf.mxu0
        %v6099 = vadd.f32 %v5906, %v6098
        %v6100 = vpop.f32.mrf.mxu0
        %v6101 = vadd.f32 %v5908, %v6100
        %v6102 = vpop.f32.mrf.mxu0
        %v6103 = vadd.f32 %v5910, %v6102
        %6104 = vmatprep.mubr.bf16.mxu0 %v1305
        %6105 = vmatmul.mubr.bf16.gmra.mxu0 %v1304
        %v6106 = vpop.f32.mrf.mxu0
        %v6107 = vadd.f32 %v5914, %v6106
        %v6108 = vpop.f32.mrf.mxu0
        %v6109 = vadd.f32 %v5916, %v6108
        %v6110 = vpop.f32.mrf.mxu0
        %v6111 = vadd.f32 %v5918, %v6110
        %v6112 = vpop.f32.mrf.mxu0
        %v6113 = vadd.f32 %v5920, %v6112
        %6114 = vmatprep.mubr.bf16.mxu0 %v1313
        %6115 = vmatmul.mubr.bf16.gmra.mxu0 %v1312
        %v6116 = vpop.f32.mrf.mxu0
        %v6117 = vadd.f32 %v5924, %v6116
        %v6118 = vpop.f32.mrf.mxu0
        %v6119 = vadd.f32 %v5926, %v6118
        %v6120 = vpop.f32.mrf.mxu0
        %v6121 = vadd.f32 %v5928, %v6120
        %v6122 = vpop.f32.mrf.mxu0
        %v6123 = vadd.f32 %v5930, %v6122
        %6124 = vmatprep.mubr.bf16.mxu0 %v1321
        %6125 = vmatmul.mubr.bf16.gmra.mxu0 %v1320
        %v6126 = vpop.f32.mrf.mxu0
        %v6127 = vadd.f32 %v5934, %v6126
        %v6128 = vpop.f32.mrf.mxu0
        %v6129 = vadd.f32 %v5936, %v6128
        %v6130 = vpop.f32.mrf.mxu0
        %v6131 = vadd.f32 %v5938, %v6130
        %v6132 = vpop.f32.mrf.mxu0
        %v6133 = vadd.f32 %v5940, %v6132
        %6134 = vdwg.mxu0
        %6135 = vmatprep.subr.bf16.mxu0 %v3433
        %6136 = vmatpush1.bf16.msra.mxu0 %v3432
        %6137 = vmatprep.subr.bf16.mxu0 %v3425
        %6138 = vmatpush1.bf16.msra.mxu0 %v3424
        %6139 = vmatprep.subr.bf16.mxu0 %v3417
        %6140 = vmatpush1.bf16.msra.mxu0 %v3416
        %6141 = vmatprep.subr.bf16.mxu0 %v3409
        %6142 = vmatpush1.bf16.msra.mxu0 %v3408
        %6143 = vmatprep.subr.bf16.mxu0 %v3401
        %6144 = vmatpush1.bf16.msra.mxu0 %v3400
        %6145 = vmatprep.subr.bf16.mxu0 %v3393
        %6146 = vmatpush1.bf16.msra.mxu0 %v3392
        %6147 = vmatprep.subr.bf16.mxu0 %v3385
        %6148 = vmatpush1.bf16.msra.mxu0 %v3384
        %6149 = vmatprep.subr.bf16.mxu0 %v3377
        %6150 = vmatpush1.bf16.msra.mxu0 %v3376
        %6151 = vmatprep.subr.bf16.mxu0 %v3497
        %6152 = vmatpush2.bf16.msra.mxu0 %v3496
        %6153 = vmatprep.subr.bf16.mxu0 %v3489
        %6154 = vmatpush2.bf16.msra.mxu0 %v3488
        %6155 = vmatprep.subr.bf16.mxu0 %v3481
        %6156 = vmatpush2.bf16.msra.mxu0 %v3480
        %6157 = vmatprep.subr.bf16.mxu0 %v3473
        %6158 = vmatpush2.bf16.msra.mxu0 %v3472
        %6159 = vmatprep.subr.bf16.mxu0 %v3465
        %6160 = vmatpush2.bf16.msra.mxu0 %v3464
        %6161 = vmatprep.subr.bf16.mxu0 %v3457
        %6162 = vmatpush2.bf16.msra.mxu0 %v3456
        %6163 = vmatprep.subr.bf16.mxu0 %v3449
        %6164 = vmatpush2.bf16.msra.mxu0 %v3448
        %6165 = vmatprep.subr.bf16.mxu0 %v3441
        %6166 = vmatpush2.bf16.msra.mxu0 %v3440
        %6167 = vmatprep.mubr.bf16.mxu0 %v1203
        %6168 = vmatmul.mubr.bf16.gmra.mxu0 %v1202
        %v6169 = vpop.f32.mrf.mxu0
        %v6170 = vadd.f32 %v5977, %v6169
        %v6171 = vpop.f32.mrf.mxu0
        %v6172 = vadd.f32 %v5979, %v6171
        %v6173 = vpop.f32.mrf.mxu0
        %v6174 = vadd.f32 %v5981, %v6173
        %v6175 = vpop.f32.mrf.mxu0
        %v6176 = vadd.f32 %v5983, %v6175
        %6177 = vmatprep.mubr.bf16.mxu0 %v1211
        %6178 = vmatmul.mubr.bf16.gmra.mxu0 %v1210
        %v6179 = vpop.f32.mrf.mxu0
        %v6180 = vadd.f32 %v5987, %v6179
        %v6181 = vpop.f32.mrf.mxu0
        %v6182 = vadd.f32 %v5989, %v6181
        %v6183 = vpop.f32.mrf.mxu0
        %v6184 = vadd.f32 %v5991, %v6183
        %v6185 = vpop.f32.mrf.mxu0
        %v6186 = vadd.f32 %v5993, %v6185
        %6187 = vmatprep.mubr.bf16.mxu0 %v1219
        %6188 = vmatmul.mubr.bf16.gmra.mxu0 %v1218
        %v6189 = vpop.f32.mrf.mxu0
        %v6190 = vadd.f32 %v5997, %v6189
        %v6191 = vpop.f32.mrf.mxu0
        %v6192 = vadd.f32 %v5999, %v6191
        %v6193 = vpop.f32.mrf.mxu0
        %v6194 = vadd.f32 %v6001, %v6193
        %v6195 = vpop.f32.mrf.mxu0
        %v6196 = vadd.f32 %v6003, %v6195
        %6197 = vmatprep.mubr.bf16.mxu0 %v1227
        %6198 = vmatmul.mubr.bf16.gmra.mxu0 %v1226
        %v6199 = vpop.f32.mrf.mxu0
        %v6200 = vadd.f32 %v6007, %v6199
        %v6201 = vpop.f32.mrf.mxu0
        %v6202 = vadd.f32 %v6009, %v6201
        %v6203 = vpop.f32.mrf.mxu0
        %v6204 = vadd.f32 %v6011, %v6203
        %v6205 = vpop.f32.mrf.mxu0
        %v6206 = vadd.f32 %v6013, %v6205
        %6207 = vmatprep.mubr.bf16.mxu0 %v1235
        %6208 = vmatmul.mubr.bf16.gmra.mxu0 %v1234
        %v6209 = vpop.f32.mrf.mxu0
        %v6210 = vadd.f32 %v6017, %v6209
        %v6211 = vpop.f32.mrf.mxu0
        %v6212 = vadd.f32 %v6019, %v6211
        %v6213 = vpop.f32.mrf.mxu0
        %v6214 = vadd.f32 %v6021, %v6213
        %v6215 = vpop.f32.mrf.mxu0
        %v6216 = vadd.f32 %v6023, %v6215
        %6217 = vmatprep.mubr.bf16.mxu0 %v1243
        %6218 = vmatmul.mubr.bf16.gmra.mxu0 %v1242
        %v6219 = vpop.f32.mrf.mxu0
        %v6220 = vadd.f32 %v6027, %v6219
        %v6221 = vpop.f32.mrf.mxu0
        %v6222 = vadd.f32 %v6029, %v6221
        %v6223 = vpop.f32.mrf.mxu0
        %v6224 = vadd.f32 %v6031, %v6223
        %v6225 = vpop.f32.mrf.mxu0
        %v6226 = vadd.f32 %v6033, %v6225
        %6227 = vmatprep.mubr.bf16.mxu0 %v1251
        %6228 = vmatmul.mubr.bf16.gmra.mxu0 %v1250
        %v6229 = vpop.f32.mrf.mxu0
        %v6230 = vadd.f32 %v6037, %v6229
        %v6231 = vpop.f32.mrf.mxu0
        %v6232 = vadd.f32 %v6039, %v6231
        %v6233 = vpop.f32.mrf.mxu0
        %v6234 = vadd.f32 %v6041, %v6233
        %v6235 = vpop.f32.mrf.mxu0
        %v6236 = vadd.f32 %v6043, %v6235
        %6237 = vmatprep.mubr.bf16.mxu0 %v1259
        %6238 = vmatmul.mubr.bf16.gmra.mxu0 %v1258
        %v6239 = vpop.f32.mrf.mxu0
        %v6240 = vadd.f32 %v6047, %v6239
        %v6241 = vpop.f32.mrf.mxu0
        %v6242 = vadd.f32 %v6049, %v6241
        %v6243 = vpop.f32.mrf.mxu0
        %v6244 = vadd.f32 %v6051, %v6243
        %v6245 = vpop.f32.mrf.mxu0
        %v6246 = vadd.f32 %v6053, %v6245
        %6247 = vmatprep.mubr.bf16.mxu0 %v1267
        %6248 = vmatmul.mubr.bf16.gmra.mxu0 %v1266
        %v6249 = vpop.f32.mrf.mxu0
        %v6250 = vadd.f32 %v6057, %v6249
        %v6251 = vpop.f32.mrf.mxu0
        %v6252 = vadd.f32 %v6059, %v6251
        %v6253 = vpop.f32.mrf.mxu0
        %v6254 = vadd.f32 %v6061, %v6253
        %v6255 = vpop.f32.mrf.mxu0
        %v6256 = vadd.f32 %v6063, %v6255
        %6257 = vmatprep.mubr.bf16.mxu0 %v1275
        %6258 = vmatmul.mubr.bf16.gmra.mxu0 %v1274
        %v6259 = vpop.f32.mrf.mxu0
        %v6260 = vadd.f32 %v6067, %v6259
        %v6261 = vpop.f32.mrf.mxu0
        %v6262 = vadd.f32 %v6069, %v6261
        %v6263 = vpop.f32.mrf.mxu0
        %v6264 = vadd.f32 %v6071, %v6263
        %v6265 = vpop.f32.mrf.mxu0
        %v6266 = vadd.f32 %v6073, %v6265
        %6267 = vmatprep.mubr.bf16.mxu0 %v1283
        %6268 = vmatmul.mubr.bf16.gmra.mxu0 %v1282
        %v6269 = vpop.f32.mrf.mxu0
        %v6270 = vadd.f32 %v6077, %v6269
        %v6271 = vpop.f32.mrf.mxu0
        %v6272 = vadd.f32 %v6079, %v6271
        %v6273 = vpop.f32.mrf.mxu0
        %v6274 = vadd.f32 %v6081, %v6273
        %v6275 = vpop.f32.mrf.mxu0
        %v6276 = vadd.f32 %v6083, %v6275
        %6277 = vmatprep.mubr.bf16.mxu0 %v1291
        %6278 = vmatmul.mubr.bf16.gmra.mxu0 %v1290
        %v6279 = vpop.f32.mrf.mxu0
        %v6280 = vadd.f32 %v6087, %v6279
        %v6281 = vpop.f32.mrf.mxu0
        %v6282 = vadd.f32 %v6089, %v6281
        %v6283 = vpop.f32.mrf.mxu0
        %v6284 = vadd.f32 %v6091, %v6283
        %v6285 = vpop.f32.mrf.mxu0
        %v6286 = vadd.f32 %v6093, %v6285
        %6287 = vmatprep.mubr.bf16.mxu0 %v1299
        %6288 = vmatmul.mubr.bf16.gmra.mxu0 %v1298
        %v6289 = vpop.f32.mrf.mxu0
        %v6290 = vadd.f32 %v6097, %v6289
        %v6291 = vpop.f32.mrf.mxu0
        %v6292 = vadd.f32 %v6099, %v6291
        %v6293 = vpop.f32.mrf.mxu0
        %v6294 = vadd.f32 %v6101, %v6293
        %v6295 = vpop.f32.mrf.mxu0
        %v6296 = vadd.f32 %v6103, %v6295
        %6297 = vmatprep.mubr.bf16.mxu0 %v1307
        %6298 = vmatmul.mubr.bf16.gmra.mxu0 %v1306
        %v6299 = vpop.f32.mrf.mxu0
        %v6300 = vadd.f32 %v6107, %v6299
        %v6301 = vpop.f32.mrf.mxu0
        %v6302 = vadd.f32 %v6109, %v6301
        %v6303 = vpop.f32.mrf.mxu0
        %v6304 = vadd.f32 %v6111, %v6303
        %v6305 = vpop.f32.mrf.mxu0
        %v6306 = vadd.f32 %v6113, %v6305
        %6307 = vmatprep.mubr.bf16.mxu0 %v1315
        %6308 = vmatmul.mubr.bf16.gmra.mxu0 %v1314
        %v6309 = vpop.f32.mrf.mxu0
        %v6310 = vadd.f32 %v6117, %v6309
        %v6311 = vpop.f32.mrf.mxu0
        %v6312 = vadd.f32 %v6119, %v6311
        %v6313 = vpop.f32.mrf.mxu0
        %v6314 = vadd.f32 %v6121, %v6313
        %v6315 = vpop.f32.mrf.mxu0
        %v6316 = vadd.f32 %v6123, %v6315
        %6317 = vmatprep.mubr.bf16.mxu0 %v1323
        %6318 = vmatmul.mubr.bf16.gmra.mxu0 %v1322
        %v6319 = vpop.f32.mrf.mxu0
        %v6320 = vadd.f32 %v6127, %v6319
        %v6321 = vpop.f32.mrf.mxu0
        %v6322 = vadd.f32 %v6129, %v6321
        %v6323 = vpop.f32.mrf.mxu0
        %v6324 = vadd.f32 %v6131, %v6323
        %v6325 = vpop.f32.mrf.mxu0
        %v6326 = vadd.f32 %v6133, %v6325
        %6327 = vdwg.mxu0
        %6328 = vmatprep.subr.bf16.mxu0 %v3051
        %6329 = vmatpush1.bf16.msra.mxu0 %v3050
        %6330 = vmatprep.subr.bf16.mxu0 %v3043
        %6331 = vmatpush1.bf16.msra.mxu0 %v3042
        %6332 = vmatprep.subr.bf16.mxu0 %v3035
        %6333 = vmatpush1.bf16.msra.mxu0 %v3034
        %6334 = vmatprep.subr.bf16.mxu0 %v3027
        %6335 = vmatpush1.bf16.msra.mxu0 %v3026
        %6336 = vmatprep.subr.bf16.mxu0 %v3019
        %6337 = vmatpush1.bf16.msra.mxu0 %v3018
        %6338 = vmatprep.subr.bf16.mxu0 %v3011
        %6339 = vmatpush1.bf16.msra.mxu0 %v3010
        %6340 = vmatprep.subr.bf16.mxu0 %v3003
        %6341 = vmatpush1.bf16.msra.mxu0 %v3002
        %6342 = vmatprep.subr.bf16.mxu0 %v2995
        %6343 = vmatpush1.bf16.msra.mxu0 %v2994
        %6344 = vmatprep.subr.bf16.mxu0 %v3115
        %6345 = vmatpush2.bf16.msra.mxu0 %v3114
        %6346 = vmatprep.subr.bf16.mxu0 %v3107
        %6347 = vmatpush2.bf16.msra.mxu0 %v3106
        %6348 = vmatprep.subr.bf16.mxu0 %v3099
        %6349 = vmatpush2.bf16.msra.mxu0 %v3098
        %6350 = vmatprep.subr.bf16.mxu0 %v3091
        %6351 = vmatpush2.bf16.msra.mxu0 %v3090
        %6352 = vmatprep.subr.bf16.mxu0 %v3083
        %6353 = vmatpush2.bf16.msra.mxu0 %v3082
        %6354 = vmatprep.subr.bf16.mxu0 %v3075
        %6355 = vmatpush2.bf16.msra.mxu0 %v3074
        %6356 = vmatprep.subr.bf16.mxu0 %v3067
        %6357 = vmatpush2.bf16.msra.mxu0 %v3066
        %6358 = vmatprep.subr.bf16.mxu0 %v3059
        %6359 = vmatpush2.bf16.msra.mxu0 %v3058
        %6360 = vmatprep.mubr.bf16.mxu0 %v1197
        %6361 = vmatmul.mubr.bf16.gmra.mxu0 %v1196
        %v6362 = vpop.f32.mrf.mxu0
        %v6363 = vadd.f32 0.0, %v6362
        %v6364 = vpop.f32.mrf.mxu0
        %v6365 = vadd.f32 0.0, %v6364
        %v6366 = vpop.f32.mrf.mxu0
        %v6367 = vadd.f32 0.0, %v6366
        %v6368 = vpop.f32.mrf.mxu0
        %v6369 = vadd.f32 0.0, %v6368
        %6370 = vmatprep.mubr.bf16.mxu0 %v1205
        %6371 = vmatmul.mubr.bf16.gmra.mxu0 %v1204
        %v6372 = vpop.f32.mrf.mxu0
        %v6373 = vadd.f32 0.0, %v6372
        %v6374 = vpop.f32.mrf.mxu0
        %v6375 = vadd.f32 0.0, %v6374
        %v6376 = vpop.f32.mrf.mxu0
        %v6377 = vadd.f32 0.0, %v6376
        %v6378 = vpop.f32.mrf.mxu0
        %v6379 = vadd.f32 0.0, %v6378
        %6380 = vmatprep.mubr.bf16.mxu0 %v1213
        %6381 = vmatmul.mubr.bf16.gmra.mxu0 %v1212
        %v6382 = vpop.f32.mrf.mxu0
        %v6383 = vadd.f32 0.0, %v6382
        %v6384 = vpop.f32.mrf.mxu0
        %v6385 = vadd.f32 0.0, %v6384
        %v6386 = vpop.f32.mrf.mxu0
        %v6387 = vadd.f32 0.0, %v6386
        %v6388 = vpop.f32.mrf.mxu0
        %v6389 = vadd.f32 0.0, %v6388
        %6390 = vmatprep.mubr.bf16.mxu0 %v1221
        %6391 = vmatmul.mubr.bf16.gmra.mxu0 %v1220
        %v6392 = vpop.f32.mrf.mxu0
        %v6393 = vadd.f32 0.0, %v6392
        %v6394 = vpop.f32.mrf.mxu0
        %v6395 = vadd.f32 0.0, %v6394
        %v6396 = vpop.f32.mrf.mxu0
        %v6397 = vadd.f32 0.0, %v6396
        %v6398 = vpop.f32.mrf.mxu0
        %v6399 = vadd.f32 0.0, %v6398
        %6400 = vmatprep.mubr.bf16.mxu0 %v1229
        %6401 = vmatmul.mubr.bf16.gmra.mxu0 %v1228
        %v6402 = vpop.f32.mrf.mxu0
        %v6403 = vadd.f32 0.0, %v6402
        %v6404 = vpop.f32.mrf.mxu0
        %v6405 = vadd.f32 0.0, %v6404
        %v6406 = vpop.f32.mrf.mxu0
        %v6407 = vadd.f32 0.0, %v6406
        %v6408 = vpop.f32.mrf.mxu0
        %v6409 = vadd.f32 0.0, %v6408
        %6410 = vmatprep.mubr.bf16.mxu0 %v1237
        %6411 = vmatmul.mubr.bf16.gmra.mxu0 %v1236
        %v6412 = vpop.f32.mrf.mxu0
        %v6413 = vadd.f32 0.0, %v6412
        %v6414 = vpop.f32.mrf.mxu0
        %v6415 = vadd.f32 0.0, %v6414
        %v6416 = vpop.f32.mrf.mxu0
        %v6417 = vadd.f32 0.0, %v6416
        %v6418 = vpop.f32.mrf.mxu0
        %v6419 = vadd.f32 0.0, %v6418
        %6420 = vmatprep.mubr.bf16.mxu0 %v1245
        %6421 = vmatmul.mubr.bf16.gmra.mxu0 %v1244
        %v6422 = vpop.f32.mrf.mxu0
        %v6423 = vadd.f32 0.0, %v6422
        %v6424 = vpop.f32.mrf.mxu0
        %v6425 = vadd.f32 0.0, %v6424
        %v6426 = vpop.f32.mrf.mxu0
        %v6427 = vadd.f32 0.0, %v6426
        %v6428 = vpop.f32.mrf.mxu0
        %v6429 = vadd.f32 0.0, %v6428
        %6430 = vmatprep.mubr.bf16.mxu0 %v1253
        %6431 = vmatmul.mubr.bf16.gmra.mxu0 %v1252
        %v6432 = vpop.f32.mrf.mxu0
        %v6433 = vadd.f32 0.0, %v6432
        %v6434 = vpop.f32.mrf.mxu0
        %v6435 = vadd.f32 0.0, %v6434
        %v6436 = vpop.f32.mrf.mxu0
        %v6437 = vadd.f32 0.0, %v6436
        %v6438 = vpop.f32.mrf.mxu0
        %v6439 = vadd.f32 0.0, %v6438
        %6440 = vmatprep.mubr.bf16.mxu0 %v1261
        %6441 = vmatmul.mubr.bf16.gmra.mxu0 %v1260
        %v6442 = vpop.f32.mrf.mxu0
        %v6443 = vadd.f32 0.0, %v6442
        %v6444 = vpop.f32.mrf.mxu0
        %v6445 = vadd.f32 0.0, %v6444
        %v6446 = vpop.f32.mrf.mxu0
        %v6447 = vadd.f32 0.0, %v6446
        %v6448 = vpop.f32.mrf.mxu0
        %v6449 = vadd.f32 0.0, %v6448
        %6450 = vmatprep.mubr.bf16.mxu0 %v1269
        %6451 = vmatmul.mubr.bf16.gmra.mxu0 %v1268
        %v6452 = vpop.f32.mrf.mxu0
        %v6453 = vadd.f32 0.0, %v6452
        %v6454 = vpop.f32.mrf.mxu0
        %v6455 = vadd.f32 0.0, %v6454
        %v6456 = vpop.f32.mrf.mxu0
        %v6457 = vadd.f32 0.0, %v6456
        %v6458 = vpop.f32.mrf.mxu0
        %v6459 = vadd.f32 0.0, %v6458
        %6460 = vmatprep.mubr.bf16.mxu0 %v1277
        %6461 = vmatmul.mubr.bf16.gmra.mxu0 %v1276
        %v6462 = vpop.f32.mrf.mxu0
        %v6463 = vadd.f32 0.0, %v6462
        %v6464 = vpop.f32.mrf.mxu0
        %v6465 = vadd.f32 0.0, %v6464
        %v6466 = vpop.f32.mrf.mxu0
        %v6467 = vadd.f32 0.0, %v6466
        %v6468 = vpop.f32.mrf.mxu0
        %v6469 = vadd.f32 0.0, %v6468
        %6470 = vmatprep.mubr.bf16.mxu0 %v1285
        %6471 = vmatmul.mubr.bf16.gmra.mxu0 %v1284
        %v6472 = vpop.f32.mrf.mxu0
        %v6473 = vadd.f32 0.0, %v6472
        %v6474 = vpop.f32.mrf.mxu0
        %v6475 = vadd.f32 0.0, %v6474
        %v6476 = vpop.f32.mrf.mxu0
        %v6477 = vadd.f32 0.0, %v6476
        %v6478 = vpop.f32.mrf.mxu0
        %v6479 = vadd.f32 0.0, %v6478
        %6480 = vmatprep.mubr.bf16.mxu0 %v1293
        %6481 = vmatmul.mubr.bf16.gmra.mxu0 %v1292
        %v6482 = vpop.f32.mrf.mxu0
        %v6483 = vadd.f32 0.0, %v6482
        %v6484 = vpop.f32.mrf.mxu0
        %v6485 = vadd.f32 0.0, %v6484
        %v6486 = vpop.f32.mrf.mxu0
        %v6487 = vadd.f32 0.0, %v6486
        %v6488 = vpop.f32.mrf.mxu0
        %v6489 = vadd.f32 0.0, %v6488
        %6490 = vmatprep.mubr.bf16.mxu0 %v1301
        %6491 = vmatmul.mubr.bf16.gmra.mxu0 %v1300
        %v6492 = vpop.f32.mrf.mxu0
        %v6493 = vadd.f32 0.0, %v6492
        %v6494 = vpop.f32.mrf.mxu0
        %v6495 = vadd.f32 0.0, %v6494
        %v6496 = vpop.f32.mrf.mxu0
        %v6497 = vadd.f32 0.0, %v6496
        %v6498 = vpop.f32.mrf.mxu0
        %v6499 = vadd.f32 0.0, %v6498
        %6500 = vmatprep.mubr.bf16.mxu0 %v1309
        %6501 = vmatmul.mubr.bf16.gmra.mxu0 %v1308
        %v6502 = vpop.f32.mrf.mxu0
        %v6503 = vadd.f32 0.0, %v6502
        %v6504 = vpop.f32.mrf.mxu0
        %v6505 = vadd.f32 0.0, %v6504
        %v6506 = vpop.f32.mrf.mxu0
        %v6507 = vadd.f32 0.0, %v6506
        %v6508 = vpop.f32.mrf.mxu0
        %v6509 = vadd.f32 0.0, %v6508
        %6510 = vmatprep.mubr.bf16.mxu0 %v1317
        %6511 = vmatmul.mubr.bf16.gmra.mxu0 %v1316
        %v6512 = vpop.f32.mrf.mxu0
        %v6513 = vadd.f32 0.0, %v6512
        %v6514 = vpop.f32.mrf.mxu0
        %v6515 = vadd.f32 0.0, %v6514
        %v6516 = vpop.f32.mrf.mxu0
        %v6517 = vadd.f32 0.0, %v6516
        %v6518 = vpop.f32.mrf.mxu0
        %v6519 = vadd.f32 0.0, %v6518
        %6520 = vdwg.mxu0
        %6521 = vmatprep.subr.bf16.mxu0 %v3179
        %6522 = vmatpush1.bf16.msra.mxu0 %v3178
        %6523 = vmatprep.subr.bf16.mxu0 %v3171
        %6524 = vmatpush1.bf16.msra.mxu0 %v3170
        %6525 = vmatprep.subr.bf16.mxu0 %v3163
        %6526 = vmatpush1.bf16.msra.mxu0 %v3162
        %6527 = vmatprep.subr.bf16.mxu0 %v3155
        %6528 = vmatpush1.bf16.msra.mxu0 %v3154
        %6529 = vmatprep.subr.bf16.mxu0 %v3147
        %6530 = vmatpush1.bf16.msra.mxu0 %v3146
        %6531 = vmatprep.subr.bf16.mxu0 %v3139
        %6532 = vmatpush1.bf16.msra.mxu0 %v3138
        %6533 = vmatprep.subr.bf16.mxu0 %v3131
        %6534 = vmatpush1.bf16.msra.mxu0 %v3130
        %6535 = vmatprep.subr.bf16.mxu0 %v3123
        %6536 = vmatpush1.bf16.msra.mxu0 %v3122
        %6537 = vmatprep.subr.bf16.mxu0 %v3243
        %6538 = vmatpush2.bf16.msra.mxu0 %v3242
        %6539 = vmatprep.subr.bf16.mxu0 %v3235
        %6540 = vmatpush2.bf16.msra.mxu0 %v3234
        %6541 = vmatprep.subr.bf16.mxu0 %v3227
        %6542 = vmatpush2.bf16.msra.mxu0 %v3226
        %6543 = vmatprep.subr.bf16.mxu0 %v3219
        %6544 = vmatpush2.bf16.msra.mxu0 %v3218
        %6545 = vmatprep.subr.bf16.mxu0 %v3211
        %6546 = vmatpush2.bf16.msra.mxu0 %v3210
        %6547 = vmatprep.subr.bf16.mxu0 %v3203
        %6548 = vmatpush2.bf16.msra.mxu0 %v3202
        %6549 = vmatprep.subr.bf16.mxu0 %v3195
        %6550 = vmatpush2.bf16.msra.mxu0 %v3194
        %6551 = vmatprep.subr.bf16.mxu0 %v3187
        %6552 = vmatpush2.bf16.msra.mxu0 %v3186
        %6553 = vmatprep.mubr.bf16.mxu0 %v1199
        %6554 = vmatmul.mubr.bf16.gmra.mxu0 %v1198
        %v6555 = vpop.f32.mrf.mxu0
        %v6556 = vadd.f32 %v6363, %v6555
        %v6557 = vpop.f32.mrf.mxu0
        %v6558 = vadd.f32 %v6365, %v6557
        %v6559 = vpop.f32.mrf.mxu0
        %v6560 = vadd.f32 %v6367, %v6559
        %v6561 = vpop.f32.mrf.mxu0
        %v6562 = vadd.f32 %v6369, %v6561
        %6563 = vmatprep.mubr.bf16.mxu0 %v1207
        %6564 = vmatmul.mubr.bf16.gmra.mxu0 %v1206
        %v6565 = vpop.f32.mrf.mxu0
        %v6566 = vadd.f32 %v6373, %v6565
        %v6567 = vpop.f32.mrf.mxu0
        %v6568 = vadd.f32 %v6375, %v6567
        %v6569 = vpop.f32.mrf.mxu0
        %v6570 = vadd.f32 %v6377, %v6569
        %v6571 = vpop.f32.mrf.mxu0
        %v6572 = vadd.f32 %v6379, %v6571
        %6573 = vmatprep.mubr.bf16.mxu0 %v1215
        %6574 = vmatmul.mubr.bf16.gmra.mxu0 %v1214
        %v6575 = vpop.f32.mrf.mxu0
        %v6576 = vadd.f32 %v6383, %v6575
        %v6577 = vpop.f32.mrf.mxu0
        %v6578 = vadd.f32 %v6385, %v6577
        %v6579 = vpop.f32.mrf.mxu0
        %v6580 = vadd.f32 %v6387, %v6579
        %v6581 = vpop.f32.mrf.mxu0
        %v6582 = vadd.f32 %v6389, %v6581
        %6583 = vmatprep.mubr.bf16.mxu0 %v1223
        %6584 = vmatmul.mubr.bf16.gmra.mxu0 %v1222
        %v6585 = vpop.f32.mrf.mxu0
        %v6586 = vadd.f32 %v6393, %v6585
        %v6587 = vpop.f32.mrf.mxu0
        %v6588 = vadd.f32 %v6395, %v6587
        %v6589 = vpop.f32.mrf.mxu0
        %v6590 = vadd.f32 %v6397, %v6589
        %v6591 = vpop.f32.mrf.mxu0
        %v6592 = vadd.f32 %v6399, %v6591
        %6593 = vmatprep.mubr.bf16.mxu0 %v1231
        %6594 = vmatmul.mubr.bf16.gmra.mxu0 %v1230
        %v6595 = vpop.f32.mrf.mxu0
        %v6596 = vadd.f32 %v6403, %v6595
        %v6597 = vpop.f32.mrf.mxu0
        %v6598 = vadd.f32 %v6405, %v6597
        %v6599 = vpop.f32.mrf.mxu0
        %v6600 = vadd.f32 %v6407, %v6599
        %v6601 = vpop.f32.mrf.mxu0
        %v6602 = vadd.f32 %v6409, %v6601
        %6603 = vmatprep.mubr.bf16.mxu0 %v1239
        %6604 = vmatmul.mubr.bf16.gmra.mxu0 %v1238
        %v6605 = vpop.f32.mrf.mxu0
        %v6606 = vadd.f32 %v6413, %v6605
        %v6607 = vpop.f32.mrf.mxu0
        %v6608 = vadd.f32 %v6415, %v6607
        %v6609 = vpop.f32.mrf.mxu0
        %v6610 = vadd.f32 %v6417, %v6609
        %v6611 = vpop.f32.mrf.mxu0
        %v6612 = vadd.f32 %v6419, %v6611
        %6613 = vmatprep.mubr.bf16.mxu0 %v1247
        %6614 = vmatmul.mubr.bf16.gmra.mxu0 %v1246
        %v6615 = vpop.f32.mrf.mxu0
        %v6616 = vadd.f32 %v6423, %v6615
        %v6617 = vpop.f32.mrf.mxu0
        %v6618 = vadd.f32 %v6425, %v6617
        %v6619 = vpop.f32.mrf.mxu0
        %v6620 = vadd.f32 %v6427, %v6619
        %v6621 = vpop.f32.mrf.mxu0
        %v6622 = vadd.f32 %v6429, %v6621
        %6623 = vmatprep.mubr.bf16.mxu0 %v1255
        %6624 = vmatmul.mubr.bf16.gmra.mxu0 %v1254
        %v6625 = vpop.f32.mrf.mxu0
        %v6626 = vadd.f32 %v6433, %v6625
        %v6627 = vpop.f32.mrf.mxu0
        %v6628 = vadd.f32 %v6435, %v6627
        %v6629 = vpop.f32.mrf.mxu0
        %v6630 = vadd.f32 %v6437, %v6629
        %v6631 = vpop.f32.mrf.mxu0
        %v6632 = vadd.f32 %v6439, %v6631
        %6633 = vmatprep.mubr.bf16.mxu0 %v1263
        %6634 = vmatmul.mubr.bf16.gmra.mxu0 %v1262
        %v6635 = vpop.f32.mrf.mxu0
        %v6636 = vadd.f32 %v6443, %v6635
        %v6637 = vpop.f32.mrf.mxu0
        %v6638 = vadd.f32 %v6445, %v6637
        %v6639 = vpop.f32.mrf.mxu0
        %v6640 = vadd.f32 %v6447, %v6639
        %v6641 = vpop.f32.mrf.mxu0
        %v6642 = vadd.f32 %v6449, %v6641
        %6643 = vmatprep.mubr.bf16.mxu0 %v1271
        %6644 = vmatmul.mubr.bf16.gmra.mxu0 %v1270
        %v6645 = vpop.f32.mrf.mxu0
        %v6646 = vadd.f32 %v6453, %v6645
        %v6647 = vpop.f32.mrf.mxu0
        %v6648 = vadd.f32 %v6455, %v6647
        %v6649 = vpop.f32.mrf.mxu0
        %v6650 = vadd.f32 %v6457, %v6649
        %v6651 = vpop.f32.mrf.mxu0
        %v6652 = vadd.f32 %v6459, %v6651
        %6653 = vmatprep.mubr.bf16.mxu0 %v1279
        %6654 = vmatmul.mubr.bf16.gmra.mxu0 %v1278
        %v6655 = vpop.f32.mrf.mxu0
        %v6656 = vadd.f32 %v6463, %v6655
        %v6657 = vpop.f32.mrf.mxu0
        %v6658 = vadd.f32 %v6465, %v6657
        %v6659 = vpop.f32.mrf.mxu0
        %v6660 = vadd.f32 %v6467, %v6659
        %v6661 = vpop.f32.mrf.mxu0
        %v6662 = vadd.f32 %v6469, %v6661
        %6663 = vmatprep.mubr.bf16.mxu0 %v1287
        %6664 = vmatmul.mubr.bf16.gmra.mxu0 %v1286
        %v6665 = vpop.f32.mrf.mxu0
        %v6666 = vadd.f32 %v6473, %v6665
        %v6667 = vpop.f32.mrf.mxu0
        %v6668 = vadd.f32 %v6475, %v6667
        %v6669 = vpop.f32.mrf.mxu0
        %v6670 = vadd.f32 %v6477, %v6669
        %v6671 = vpop.f32.mrf.mxu0
        %v6672 = vadd.f32 %v6479, %v6671
        %6673 = vmatprep.mubr.bf16.mxu0 %v1295
        %6674 = vmatmul.mubr.bf16.gmra.mxu0 %v1294
        %v6675 = vpop.f32.mrf.mxu0
        %v6676 = vadd.f32 %v6483, %v6675
        %v6677 = vpop.f32.mrf.mxu0
        %v6678 = vadd.f32 %v6485, %v6677
        %v6679 = vpop.f32.mrf.mxu0
        %v6680 = vadd.f32 %v6487, %v6679
        %v6681 = vpop.f32.mrf.mxu0
        %v6682 = vadd.f32 %v6489, %v6681
        %6683 = vmatprep.mubr.bf16.mxu0 %v1303
        %6684 = vmatmul.mubr.bf16.gmra.mxu0 %v1302
        %v6685 = vpop.f32.mrf.mxu0
        %v6686 = vadd.f32 %v6493, %v6685
        %v6687 = vpop.f32.mrf.mxu0
        %v6688 = vadd.f32 %v6495, %v6687
        %v6689 = vpop.f32.mrf.mxu0
        %v6690 = vadd.f32 %v6497, %v6689
        %v6691 = vpop.f32.mrf.mxu0
        %v6692 = vadd.f32 %v6499, %v6691
        %6693 = vmatprep.mubr.bf16.mxu0 %v1311
        %6694 = vmatmul.mubr.bf16.gmra.mxu0 %v1310
        %v6695 = vpop.f32.mrf.mxu0
        %v6696 = vadd.f32 %v6503, %v6695
        %v6697 = vpop.f32.mrf.mxu0
        %v6698 = vadd.f32 %v6505, %v6697
        %v6699 = vpop.f32.mrf.mxu0
        %v6700 = vadd.f32 %v6507, %v6699
        %v6701 = vpop.f32.mrf.mxu0
        %v6702 = vadd.f32 %v6509, %v6701
        %6703 = vmatprep.mubr.bf16.mxu0 %v1319
        %6704 = vmatmul.mubr.bf16.gmra.mxu0 %v1318
        %v6705 = vpop.f32.mrf.mxu0
        %v6706 = vadd.f32 %v6513, %v6705
        %v6707 = vpop.f32.mrf.mxu0
        %v6708 = vadd.f32 %v6515, %v6707
        %v6709 = vpop.f32.mrf.mxu0
        %v6710 = vadd.f32 %v6517, %v6709
        %v6711 = vpop.f32.mrf.mxu0
        %v6712 = vadd.f32 %v6519, %v6711
        %6713 = vdwg.mxu0
        %6714 = vmatprep.subr.bf16.mxu0 %v3307
        %6715 = vmatpush1.bf16.msra.mxu0 %v3306
        %6716 = vmatprep.subr.bf16.mxu0 %v3299
        %6717 = vmatpush1.bf16.msra.mxu0 %v3298
        %6718 = vmatprep.subr.bf16.mxu0 %v3291
        %6719 = vmatpush1.bf16.msra.mxu0 %v3290
        %6720 = vmatprep.subr.bf16.mxu0 %v3283
        %6721 = vmatpush1.bf16.msra.mxu0 %v3282
        %6722 = vmatprep.subr.bf16.mxu0 %v3275
        %6723 = vmatpush1.bf16.msra.mxu0 %v3274
        %6724 = vmatprep.subr.bf16.mxu0 %v3267
        %6725 = vmatpush1.bf16.msra.mxu0 %v3266
        %6726 = vmatprep.subr.bf16.mxu0 %v3259
        %6727 = vmatpush1.bf16.msra.mxu0 %v3258
        %6728 = vmatprep.subr.bf16.mxu0 %v3251
        %6729 = vmatpush1.bf16.msra.mxu0 %v3250
        %6730 = vmatprep.subr.bf16.mxu0 %v3371
        %6731 = vmatpush2.bf16.msra.mxu0 %v3370
        %6732 = vmatprep.subr.bf16.mxu0 %v3363
        %6733 = vmatpush2.bf16.msra.mxu0 %v3362
        %6734 = vmatprep.subr.bf16.mxu0 %v3355
        %6735 = vmatpush2.bf16.msra.mxu0 %v3354
        %6736 = vmatprep.subr.bf16.mxu0 %v3347
        %6737 = vmatpush2.bf16.msra.mxu0 %v3346
        %6738 = vmatprep.subr.bf16.mxu0 %v3339
        %6739 = vmatpush2.bf16.msra.mxu0 %v3338
        %6740 = vmatprep.subr.bf16.mxu0 %v3331
        %6741 = vmatpush2.bf16.msra.mxu0 %v3330
        %6742 = vmatprep.subr.bf16.mxu0 %v3323
        %6743 = vmatpush2.bf16.msra.mxu0 %v3322
        %6744 = vmatprep.subr.bf16.mxu0 %v3315
        %6745 = vmatpush2.bf16.msra.mxu0 %v3314
        %6746 = vmatprep.mubr.bf16.mxu0 %v1201
        %6747 = vmatmul.mubr.bf16.gmra.mxu0 %v1200
        %v6748 = vpop.f32.mrf.mxu0
        %v6749 = vadd.f32 %v6556, %v6748
        %v6750 = vpop.f32.mrf.mxu0
        %v6751 = vadd.f32 %v6558, %v6750
        %v6752 = vpop.f32.mrf.mxu0
        %v6753 = vadd.f32 %v6560, %v6752
        %v6754 = vpop.f32.mrf.mxu0
        %v6755 = vadd.f32 %v6562, %v6754
        %6756 = vmatprep.mubr.bf16.mxu0 %v1209
        %6757 = vmatmul.mubr.bf16.gmra.mxu0 %v1208
        %v6758 = vpop.f32.mrf.mxu0
        %v6759 = vadd.f32 %v6566, %v6758
        %v6760 = vpop.f32.mrf.mxu0
        %v6761 = vadd.f32 %v6568, %v6760
        %v6762 = vpop.f32.mrf.mxu0
        %v6763 = vadd.f32 %v6570, %v6762
        %v6764 = vpop.f32.mrf.mxu0
        %v6765 = vadd.f32 %v6572, %v6764
        %6766 = vmatprep.mubr.bf16.mxu0 %v1217
        %6767 = vmatmul.mubr.bf16.gmra.mxu0 %v1216
        %v6768 = vpop.f32.mrf.mxu0
        %v6769 = vadd.f32 %v6576, %v6768
        %v6770 = vpop.f32.mrf.mxu0
        %v6771 = vadd.f32 %v6578, %v6770
        %v6772 = vpop.f32.mrf.mxu0
        %v6773 = vadd.f32 %v6580, %v6772
        %v6774 = vpop.f32.mrf.mxu0
        %v6775 = vadd.f32 %v6582, %v6774
        %6776 = vmatprep.mubr.bf16.mxu0 %v1225
        %6777 = vmatmul.mubr.bf16.gmra.mxu0 %v1224
        %v6778 = vpop.f32.mrf.mxu0
        %v6779 = vadd.f32 %v6586, %v6778
        %v6780 = vpop.f32.mrf.mxu0
        %v6781 = vadd.f32 %v6588, %v6780
        %v6782 = vpop.f32.mrf.mxu0
        %v6783 = vadd.f32 %v6590, %v6782
        %v6784 = vpop.f32.mrf.mxu0
        %v6785 = vadd.f32 %v6592, %v6784
        %6786 = vmatprep.mubr.bf16.mxu0 %v1233
        %6787 = vmatmul.mubr.bf16.gmra.mxu0 %v1232
        %v6788 = vpop.f32.mrf.mxu0
        %v6789 = vadd.f32 %v6596, %v6788
        %v6790 = vpop.f32.mrf.mxu0
        %v6791 = vadd.f32 %v6598, %v6790
        %v6792 = vpop.f32.mrf.mxu0
        %v6793 = vadd.f32 %v6600, %v6792
        %v6794 = vpop.f32.mrf.mxu0
        %v6795 = vadd.f32 %v6602, %v6794
        %6796 = vmatprep.mubr.bf16.mxu0 %v1241
        %6797 = vmatmul.mubr.bf16.gmra.mxu0 %v1240
        %v6798 = vpop.f32.mrf.mxu0
        %v6799 = vadd.f32 %v6606, %v6798
        %v6800 = vpop.f32.mrf.mxu0
        %v6801 = vadd.f32 %v6608, %v6800
        %v6802 = vpop.f32.mrf.mxu0
        %v6803 = vadd.f32 %v6610, %v6802
        %v6804 = vpop.f32.mrf.mxu0
        %v6805 = vadd.f32 %v6612, %v6804
        %6806 = vmatprep.mubr.bf16.mxu0 %v1249
        %6807 = vmatmul.mubr.bf16.gmra.mxu0 %v1248
        %v6808 = vpop.f32.mrf.mxu0
        %v6809 = vadd.f32 %v6616, %v6808
        %v6810 = vpop.f32.mrf.mxu0
        %v6811 = vadd.f32 %v6618, %v6810
        %v6812 = vpop.f32.mrf.mxu0
        %v6813 = vadd.f32 %v6620, %v6812
        %v6814 = vpop.f32.mrf.mxu0
        %v6815 = vadd.f32 %v6622, %v6814
        %6816 = vmatprep.mubr.bf16.mxu0 %v1257
        %6817 = vmatmul.mubr.bf16.gmra.mxu0 %v1256
        %v6818 = vpop.f32.mrf.mxu0
        %v6819 = vadd.f32 %v6626, %v6818
        %v6820 = vpop.f32.mrf.mxu0
        %v6821 = vadd.f32 %v6628, %v6820
        %v6822 = vpop.f32.mrf.mxu0
        %v6823 = vadd.f32 %v6630, %v6822
        %v6824 = vpop.f32.mrf.mxu0
        %v6825 = vadd.f32 %v6632, %v6824
        %6826 = vmatprep.mubr.bf16.mxu0 %v1265
        %6827 = vmatmul.mubr.bf16.gmra.mxu0 %v1264
        %v6828 = vpop.f32.mrf.mxu0
        %v6829 = vadd.f32 %v6636, %v6828
        %v6830 = vpop.f32.mrf.mxu0
        %v6831 = vadd.f32 %v6638, %v6830
        %v6832 = vpop.f32.mrf.mxu0
        %v6833 = vadd.f32 %v6640, %v6832
        %v6834 = vpop.f32.mrf.mxu0
        %v6835 = vadd.f32 %v6642, %v6834
        %6836 = vmatprep.mubr.bf16.mxu0 %v1273
        %6837 = vmatmul.mubr.bf16.gmra.mxu0 %v1272
        %v6838 = vpop.f32.mrf.mxu0
        %v6839 = vadd.f32 %v6646, %v6838
        %v6840 = vpop.f32.mrf.mxu0
        %v6841 = vadd.f32 %v6648, %v6840
        %v6842 = vpop.f32.mrf.mxu0
        %v6843 = vadd.f32 %v6650, %v6842
        %v6844 = vpop.f32.mrf.mxu0
        %v6845 = vadd.f32 %v6652, %v6844
        %6846 = vmatprep.mubr.bf16.mxu0 %v1281
        %6847 = vmatmul.mubr.bf16.gmra.mxu0 %v1280
        %v6848 = vpop.f32.mrf.mxu0
        %v6849 = vadd.f32 %v6656, %v6848
        %v6850 = vpop.f32.mrf.mxu0
        %v6851 = vadd.f32 %v6658, %v6850
        %v6852 = vpop.f32.mrf.mxu0
        %v6853 = vadd.f32 %v6660, %v6852
        %v6854 = vpop.f32.mrf.mxu0
        %v6855 = vadd.f32 %v6662, %v6854
        %6856 = vmatprep.mubr.bf16.mxu0 %v1289
        %6857 = vmatmul.mubr.bf16.gmra.mxu0 %v1288
        %v6858 = vpop.f32.mrf.mxu0
        %v6859 = vadd.f32 %v6666, %v6858
        %v6860 = vpop.f32.mrf.mxu0
        %v6861 = vadd.f32 %v6668, %v6860
        %v6862 = vpop.f32.mrf.mxu0
        %v6863 = vadd.f32 %v6670, %v6862
        %v6864 = vpop.f32.mrf.mxu0
        %v6865 = vadd.f32 %v6672, %v6864
        %6866 = vmatprep.mubr.bf16.mxu0 %v1297
        %6867 = vmatmul.mubr.bf16.gmra.mxu0 %v1296
        %v6868 = vpop.f32.mrf.mxu0
        %v6869 = vadd.f32 %v6676, %v6868
        %v6870 = vpop.f32.mrf.mxu0
        %v6871 = vadd.f32 %v6678, %v6870
        %v6872 = vpop.f32.mrf.mxu0
        %v6873 = vadd.f32 %v6680, %v6872
        %v6874 = vpop.f32.mrf.mxu0
        %v6875 = vadd.f32 %v6682, %v6874
        %6876 = vmatprep.mubr.bf16.mxu0 %v1305
        %6877 = vmatmul.mubr.bf16.gmra.mxu0 %v1304
        %v6878 = vpop.f32.mrf.mxu0
        %v6879 = vadd.f32 %v6686, %v6878
        %v6880 = vpop.f32.mrf.mxu0
        %v6881 = vadd.f32 %v6688, %v6880
        %v6882 = vpop.f32.mrf.mxu0
        %v6883 = vadd.f32 %v6690, %v6882
        %v6884 = vpop.f32.mrf.mxu0
        %v6885 = vadd.f32 %v6692, %v6884
        %6886 = vmatprep.mubr.bf16.mxu0 %v1313
        %6887 = vmatmul.mubr.bf16.gmra.mxu0 %v1312
        %v6888 = vpop.f32.mrf.mxu0
        %v6889 = vadd.f32 %v6696, %v6888
        %v6890 = vpop.f32.mrf.mxu0
        %v6891 = vadd.f32 %v6698, %v6890
        %v6892 = vpop.f32.mrf.mxu0
        %v6893 = vadd.f32 %v6700, %v6892
        %v6894 = vpop.f32.mrf.mxu0
        %v6895 = vadd.f32 %v6702, %v6894
        %6896 = vmatprep.mubr.bf16.mxu0 %v1321
        %6897 = vmatmul.mubr.bf16.gmra.mxu0 %v1320
        %v6898 = vpop.f32.mrf.mxu0
        %v6899 = vadd.f32 %v6706, %v6898
        %v6900 = vpop.f32.mrf.mxu0
        %v6901 = vadd.f32 %v6708, %v6900
        %v6902 = vpop.f32.mrf.mxu0
        %v6903 = vadd.f32 %v6710, %v6902
        %v6904 = vpop.f32.mrf.mxu0
        %v6905 = vadd.f32 %v6712, %v6904
        %6906 = vdwg.mxu0
        %6907 = vmatprep.subr.bf16.mxu0 %v3435
        %6908 = vmatpush1.bf16.msra.mxu0 %v3434
        %6909 = vmatprep.subr.bf16.mxu0 %v3427
        %6910 = vmatpush1.bf16.msra.mxu0 %v3426
        %6911 = vmatprep.subr.bf16.mxu0 %v3419
        %6912 = vmatpush1.bf16.msra.mxu0 %v3418
        %6913 = vmatprep.subr.bf16.mxu0 %v3411
        %6914 = vmatpush1.bf16.msra.mxu0 %v3410
        %6915 = vmatprep.subr.bf16.mxu0 %v3403
        %6916 = vmatpush1.bf16.msra.mxu0 %v3402
        %6917 = vmatprep.subr.bf16.mxu0 %v3395
        %6918 = vmatpush1.bf16.msra.mxu0 %v3394
        %6919 = vmatprep.subr.bf16.mxu0 %v3387
        %6920 = vmatpush1.bf16.msra.mxu0 %v3386
        %6921 = vmatprep.subr.bf16.mxu0 %v3379
        %6922 = vmatpush1.bf16.msra.mxu0 %v3378
        %6923 = vmatprep.subr.bf16.mxu0 %v3499
        %6924 = vmatpush2.bf16.msra.mxu0 %v3498
        %6925 = vmatprep.subr.bf16.mxu0 %v3491
        %6926 = vmatpush2.bf16.msra.mxu0 %v3490
        %6927 = vmatprep.subr.bf16.mxu0 %v3483
        %6928 = vmatpush2.bf16.msra.mxu0 %v3482
        %6929 = vmatprep.subr.bf16.mxu0 %v3475
        %6930 = vmatpush2.bf16.msra.mxu0 %v3474
        %6931 = vmatprep.subr.bf16.mxu0 %v3467
        %6932 = vmatpush2.bf16.msra.mxu0 %v3466
        %6933 = vmatprep.subr.bf16.mxu0 %v3459
        %6934 = vmatpush2.bf16.msra.mxu0 %v3458
        %6935 = vmatprep.subr.bf16.mxu0 %v3451
        %6936 = vmatpush2.bf16.msra.mxu0 %v3450
        %6937 = vmatprep.subr.bf16.mxu0 %v3443
        %6938 = vmatpush2.bf16.msra.mxu0 %v3442
        %6939 = vmatprep.mubr.bf16.mxu0 %v1203
        %6940 = vmatmul.mubr.bf16.gmra.mxu0 %v1202
        %v6941 = vpop.f32.mrf.mxu0
        %v6942 = vadd.f32 %v6749, %v6941
        %v6943 = vpop.f32.mrf.mxu0
        %v6944 = vadd.f32 %v6751, %v6943
        %v6945 = vpop.f32.mrf.mxu0
        %v6946 = vadd.f32 %v6753, %v6945
        %v6947 = vpop.f32.mrf.mxu0
        %v6948 = vadd.f32 %v6755, %v6947
        %6949 = vmatprep.mubr.bf16.mxu0 %v1211
        %6950 = vmatmul.mubr.bf16.gmra.mxu0 %v1210
        %v6951 = vpop.f32.mrf.mxu0
        %v6952 = vadd.f32 %v6759, %v6951
        %v6953 = vpop.f32.mrf.mxu0
        %v6954 = vadd.f32 %v6761, %v6953
        %v6955 = vpop.f32.mrf.mxu0
        %v6956 = vadd.f32 %v6763, %v6955
        %v6957 = vpop.f32.mrf.mxu0
        %v6958 = vadd.f32 %v6765, %v6957
        %6959 = vmatprep.mubr.bf16.mxu0 %v1219
        %6960 = vmatmul.mubr.bf16.gmra.mxu0 %v1218
        %v6961 = vpop.f32.mrf.mxu0
        %v6962 = vadd.f32 %v6769, %v6961
        %v6963 = vpop.f32.mrf.mxu0
        %v6964 = vadd.f32 %v6771, %v6963
        %v6965 = vpop.f32.mrf.mxu0
        %v6966 = vadd.f32 %v6773, %v6965
        %v6967 = vpop.f32.mrf.mxu0
        %v6968 = vadd.f32 %v6775, %v6967
        %6969 = vmatprep.mubr.bf16.mxu0 %v1227
        %6970 = vmatmul.mubr.bf16.gmra.mxu0 %v1226
        %v6971 = vpop.f32.mrf.mxu0
        %v6972 = vadd.f32 %v6779, %v6971
        %v6973 = vpop.f32.mrf.mxu0
        %v6974 = vadd.f32 %v6781, %v6973
        %v6975 = vpop.f32.mrf.mxu0
        %v6976 = vadd.f32 %v6783, %v6975
        %v6977 = vpop.f32.mrf.mxu0
        %v6978 = vadd.f32 %v6785, %v6977
        %6979 = vmatprep.mubr.bf16.mxu0 %v1235
        %6980 = vmatmul.mubr.bf16.gmra.mxu0 %v1234
        %v6981 = vpop.f32.mrf.mxu0
        %v6982 = vadd.f32 %v6789, %v6981
        %v6983 = vpop.f32.mrf.mxu0
        %v6984 = vadd.f32 %v6791, %v6983
        %v6985 = vpop.f32.mrf.mxu0
        %v6986 = vadd.f32 %v6793, %v6985
        %v6987 = vpop.f32.mrf.mxu0
        %v6988 = vadd.f32 %v6795, %v6987
        %6989 = vmatprep.mubr.bf16.mxu0 %v1243
        %6990 = vmatmul.mubr.bf16.gmra.mxu0 %v1242
        %v6991 = vpop.f32.mrf.mxu0
        %v6992 = vadd.f32 %v6799, %v6991
        %v6993 = vpop.f32.mrf.mxu0
        %v6994 = vadd.f32 %v6801, %v6993
        %v6995 = vpop.f32.mrf.mxu0
        %v6996 = vadd.f32 %v6803, %v6995
        %v6997 = vpop.f32.mrf.mxu0
        %v6998 = vadd.f32 %v6805, %v6997
        %6999 = vmatprep.mubr.bf16.mxu0 %v1251
        %7000 = vmatmul.mubr.bf16.gmra.mxu0 %v1250
        %v7001 = vpop.f32.mrf.mxu0
        %v7002 = vadd.f32 %v6809, %v7001
        %v7003 = vpop.f32.mrf.mxu0
        %v7004 = vadd.f32 %v6811, %v7003
        %v7005 = vpop.f32.mrf.mxu0
        %v7006 = vadd.f32 %v6813, %v7005
        %v7007 = vpop.f32.mrf.mxu0
        %v7008 = vadd.f32 %v6815, %v7007
        %7009 = vmatprep.mubr.bf16.mxu0 %v1259
        %7010 = vmatmul.mubr.bf16.gmra.mxu0 %v1258
        %v7011 = vpop.f32.mrf.mxu0
        %v7012 = vadd.f32 %v6819, %v7011
        %v7013 = vpop.f32.mrf.mxu0
        %v7014 = vadd.f32 %v6821, %v7013
        %v7015 = vpop.f32.mrf.mxu0
        %v7016 = vadd.f32 %v6823, %v7015
        %v7017 = vpop.f32.mrf.mxu0
        %v7018 = vadd.f32 %v6825, %v7017
        %7019 = vmatprep.mubr.bf16.mxu0 %v1267
        %7020 = vmatmul.mubr.bf16.gmra.mxu0 %v1266
        %v7021 = vpop.f32.mrf.mxu0
        %v7022 = vadd.f32 %v6829, %v7021
        %v7023 = vpop.f32.mrf.mxu0
        %v7024 = vadd.f32 %v6831, %v7023
        %v7025 = vpop.f32.mrf.mxu0
        %v7026 = vadd.f32 %v6833, %v7025
        %v7027 = vpop.f32.mrf.mxu0
        %v7028 = vadd.f32 %v6835, %v7027
        %7029 = vmatprep.mubr.bf16.mxu0 %v1275
        %7030 = vmatmul.mubr.bf16.gmra.mxu0 %v1274
        %v7031 = vpop.f32.mrf.mxu0
        %v7032 = vadd.f32 %v6839, %v7031
        %v7033 = vpop.f32.mrf.mxu0
        %v7034 = vadd.f32 %v6841, %v7033
        %v7035 = vpop.f32.mrf.mxu0
        %v7036 = vadd.f32 %v6843, %v7035
        %v7037 = vpop.f32.mrf.mxu0
        %v7038 = vadd.f32 %v6845, %v7037
        %7039 = vmatprep.mubr.bf16.mxu0 %v1283
        %7040 = vmatmul.mubr.bf16.gmra.mxu0 %v1282
        %v7041 = vpop.f32.mrf.mxu0
        %v7042 = vadd.f32 %v6849, %v7041
        %v7043 = vpop.f32.mrf.mxu0
        %v7044 = vadd.f32 %v6851, %v7043
        %v7045 = vpop.f32.mrf.mxu0
        %v7046 = vadd.f32 %v6853, %v7045
        %v7047 = vpop.f32.mrf.mxu0
        %v7048 = vadd.f32 %v6855, %v7047
        %7049 = vmatprep.mubr.bf16.mxu0 %v1291
        %7050 = vmatmul.mubr.bf16.gmra.mxu0 %v1290
        %v7051 = vpop.f32.mrf.mxu0
        %v7052 = vadd.f32 %v6859, %v7051
        %v7053 = vpop.f32.mrf.mxu0
        %v7054 = vadd.f32 %v6861, %v7053
        %v7055 = vpop.f32.mrf.mxu0
        %v7056 = vadd.f32 %v6863, %v7055
        %v7057 = vpop.f32.mrf.mxu0
        %v7058 = vadd.f32 %v6865, %v7057
        %7059 = vmatprep.mubr.bf16.mxu0 %v1299
        %7060 = vmatmul.mubr.bf16.gmra.mxu0 %v1298
        %v7061 = vpop.f32.mrf.mxu0
        %v7062 = vadd.f32 %v6869, %v7061
        %v7063 = vpop.f32.mrf.mxu0
        %v7064 = vadd.f32 %v6871, %v7063
        %v7065 = vpop.f32.mrf.mxu0
        %v7066 = vadd.f32 %v6873, %v7065
        %v7067 = vpop.f32.mrf.mxu0
        %v7068 = vadd.f32 %v6875, %v7067
        %7069 = vmatprep.mubr.bf16.mxu0 %v1307
        %7070 = vmatmul.mubr.bf16.gmra.mxu0 %v1306
        %v7071 = vpop.f32.mrf.mxu0
        %v7072 = vadd.f32 %v6879, %v7071
        %v7073 = vpop.f32.mrf.mxu0
        %v7074 = vadd.f32 %v6881, %v7073
        %v7075 = vpop.f32.mrf.mxu0
        %v7076 = vadd.f32 %v6883, %v7075
        %v7077 = vpop.f32.mrf.mxu0
        %v7078 = vadd.f32 %v6885, %v7077
        %7079 = vmatprep.mubr.bf16.mxu0 %v1315
        %7080 = vmatmul.mubr.bf16.gmra.mxu0 %v1314
        %v7081 = vpop.f32.mrf.mxu0
        %v7082 = vadd.f32 %v6889, %v7081
        %v7083 = vpop.f32.mrf.mxu0
        %v7084 = vadd.f32 %v6891, %v7083
        %v7085 = vpop.f32.mrf.mxu0
        %v7086 = vadd.f32 %v6893, %v7085
        %v7087 = vpop.f32.mrf.mxu0
        %v7088 = vadd.f32 %v6895, %v7087
        %7089 = vmatprep.mubr.bf16.mxu0 %v1323
        %7090 = vmatmul.mubr.bf16.gmra.mxu0 %v1322
        %v7091 = vpop.f32.mrf.mxu0
        %v7092 = vadd.f32 %v6899, %v7091
        %v7093 = vpop.f32.mrf.mxu0
        %v7094 = vadd.f32 %v6901, %v7093
        %v7095 = vpop.f32.mrf.mxu0
        %v7096 = vadd.f32 %v6903, %v7095
        %v7097 = vpop.f32.mrf.mxu0
        %v7098 = vadd.f32 %v6905, %v7097
        %7099 = vdwg.mxu0
        %v7100 = vmul.f32 %v4626, %v4626
        %v7101 = vmul.f32 %v4628, %v4628
        %v7102 = vmul.f32 %v5398, %v5398
        %v7103 = vmul.f32 %v5400, %v5400
        %v7104 = vmul.f32 %v4630, %v4630
        %v7105 = vmul.f32 %v4632, %v4632
        %v7106 = vmul.f32 %v5402, %v5402
        %v7107 = vmul.f32 %v5404, %v5404
        %v7108 = vmul.f32 %v4636, %v4636
        %v7109 = vmul.f32 %v4638, %v4638
        %v7110 = vmul.f32 %v5408, %v5408
        %v7111 = vmul.f32 %v5410, %v5410
        %v7112 = vmul.f32 %v4640, %v4640
        %v7113 = vmul.f32 %v4642, %v4642
        %v7114 = vmul.f32 %v5412, %v5412
        %v7115 = vmul.f32 %v5414, %v5414
        %v7116 = vmul.f32 %v4646, %v4646
        %v7117 = vmul.f32 %v4648, %v4648
        %v7118 = vmul.f32 %v5418, %v5418
        %v7119 = vmul.f32 %v5420, %v5420
        %v7120 = vmul.f32 %v4650, %v4650
        %v7121 = vmul.f32 %v4652, %v4652
        %v7122 = vmul.f32 %v5422, %v5422
        %v7123 = vmul.f32 %v5424, %v5424
        %v7124 = vmul.f32 %v4656, %v4656
        %v7125 = vmul.f32 %v4658, %v4658
        %v7126 = vmul.f32 %v5428, %v5428
        %v7127 = vmul.f32 %v5430, %v5430
        %v7128 = vmul.f32 %v4660, %v4660
        %v7129 = vmul.f32 %v4662, %v4662
        %v7130 = vmul.f32 %v5432, %v5432
        %v7131 = vmul.f32 %v5434, %v5434
        %v7132 = vmul.f32 %v4666, %v4666
        %v7133 = vmul.f32 %v4668, %v4668
        %v7134 = vmul.f32 %v5438, %v5438
        %v7135 = vmul.f32 %v5440, %v5440
        %v7136 = vmul.f32 %v4670, %v4670
        %v7137 = vmul.f32 %v4672, %v4672
        %v7138 = vmul.f32 %v5442, %v5442
        %v7139 = vmul.f32 %v5444, %v5444
        %v7140 = vmul.f32 %v4676, %v4676
        %v7141 = vmul.f32 %v4678, %v4678
        %v7142 = vmul.f32 %v5448, %v5448
        %v7143 = vmul.f32 %v5450, %v5450
        %v7144 = vmul.f32 %v4680, %v4680
        %v7145 = vmul.f32 %v4682, %v4682
        %v7146 = vmul.f32 %v5452, %v5452
        %v7147 = vmul.f32 %v5454, %v5454
        %v7148 = vmul.f32 %v4686, %v4686
        %v7149 = vmul.f32 %v4688, %v4688
        %v7150 = vmul.f32 %v5458, %v5458
        %v7151 = vmul.f32 %v5460, %v5460
        %v7152 = vmul.f32 %v4690, %v4690
        %v7153 = vmul.f32 %v4692, %v4692
        %v7154 = vmul.f32 %v5462, %v5462
        %v7155 = vmul.f32 %v5464, %v5464
        %v7156 = vmul.f32 %v4696, %v4696
        %v7157 = vmul.f32 %v4698, %v4698
        %v7158 = vmul.f32 %v5468, %v5468
        %v7159 = vmul.f32 %v5470, %v5470
        %v7160 = vmul.f32 %v4700, %v4700
        %v7161 = vmul.f32 %v4702, %v4702
        %v7162 = vmul.f32 %v5472, %v5472
        %v7163 = vmul.f32 %v5474, %v5474
        %v7164 = vmul.f32 %v4706, %v4706
        %v7165 = vmul.f32 %v4708, %v4708
        %v7166 = vmul.f32 %v5478, %v5478
        %v7167 = vmul.f32 %v5480, %v5480
        %v7168 = vmul.f32 %v4710, %v4710
        %v7169 = vmul.f32 %v4712, %v4712
        %v7170 = vmul.f32 %v5482, %v5482
        %v7171 = vmul.f32 %v5484, %v5484
        %v7172 = vmul.f32 %v4716, %v4716
        %v7173 = vmul.f32 %v4718, %v4718
        %v7174 = vmul.f32 %v5488, %v5488
        %v7175 = vmul.f32 %v5490, %v5490
        %v7176 = vmul.f32 %v4720, %v4720
        %v7177 = vmul.f32 %v4722, %v4722
        %v7178 = vmul.f32 %v5492, %v5492
        %v7179 = vmul.f32 %v5494, %v5494
        %v7180 = vmul.f32 %v4726, %v4726
        %v7181 = vmul.f32 %v4728, %v4728
        %v7182 = vmul.f32 %v5498, %v5498
        %v7183 = vmul.f32 %v5500, %v5500
        %v7184 = vmul.f32 %v4730, %v4730
        %v7185 = vmul.f32 %v4732, %v4732
        %v7186 = vmul.f32 %v5502, %v5502
        %v7187 = vmul.f32 %v5504, %v5504
        %v7188 = vmul.f32 %v4736, %v4736
        %v7189 = vmul.f32 %v4738, %v4738
        %v7190 = vmul.f32 %v5508, %v5508
        %v7191 = vmul.f32 %v5510, %v5510
        %v7192 = vmul.f32 %v4740, %v4740
        %v7193 = vmul.f32 %v4742, %v4742
        %v7194 = vmul.f32 %v5512, %v5512
        %v7195 = vmul.f32 %v5514, %v5514
        %v7196 = vmul.f32 %v4746, %v4746
        %v7197 = vmul.f32 %v4748, %v4748
        %v7198 = vmul.f32 %v5518, %v5518
        %v7199 = vmul.f32 %v5520, %v5520
        %v7200 = vmul.f32 %v4750, %v4750
        %v7201 = vmul.f32 %v4752, %v4752
        %v7202 = vmul.f32 %v5522, %v5522
        %v7203 = vmul.f32 %v5524, %v5524
        %v7204 = vmul.f32 %v4756, %v4756
        %v7205 = vmul.f32 %v4758, %v4758
        %v7206 = vmul.f32 %v5528, %v5528
        %v7207 = vmul.f32 %v5530, %v5530
        %v7208 = vmul.f32 %v4760, %v4760
        %v7209 = vmul.f32 %v4762, %v4762
        %v7210 = vmul.f32 %v5532, %v5532
        %v7211 = vmul.f32 %v5534, %v5534
        %v7212 = vmul.f32 %v4766, %v4766
        %v7213 = vmul.f32 %v4768, %v4768
        %v7214 = vmul.f32 %v5538, %v5538
        %v7215 = vmul.f32 %v5540, %v5540
        %v7216 = vmul.f32 %v4770, %v4770
        %v7217 = vmul.f32 %v4772, %v4772
        %v7218 = vmul.f32 %v5542, %v5542
        %v7219 = vmul.f32 %v5544, %v5544
        %v7220 = vmul.f32 %v4776, %v4776
        %v7221 = vmul.f32 %v4778, %v4778
        %v7222 = vmul.f32 %v5548, %v5548
        %v7223 = vmul.f32 %v5550, %v5550
        %v7224 = vmul.f32 %v4780, %v4780
        %v7225 = vmul.f32 %v4782, %v4782
        %v7226 = vmul.f32 %v5552, %v5552
        %v7227 = vmul.f32 %v5554, %v5554
        %v7228 = vmul.f32 %v6170, %v6170
        %v7229 = vmul.f32 %v6172, %v6172
        %v7230 = vmul.f32 %v6942, %v6942
        %v7231 = vmul.f32 %v6944, %v6944
        %v7232 = vmul.f32 %v6174, %v6174
        %v7233 = vmul.f32 %v6176, %v6176
        %v7234 = vmul.f32 %v6946, %v6946
        %v7235 = vmul.f32 %v6948, %v6948
        %v7236 = vmul.f32 %v6180, %v6180
        %v7237 = vmul.f32 %v6182, %v6182
        %v7238 = vmul.f32 %v6952, %v6952
        %v7239 = vmul.f32 %v6954, %v6954
        %v7240 = vmul.f32 %v6184, %v6184
        %v7241 = vmul.f32 %v6186, %v6186
        %v7242 = vmul.f32 %v6956, %v6956
        %v7243 = vmul.f32 %v6958, %v6958
        %v7244 = vmul.f32 %v6190, %v6190
        %v7245 = vmul.f32 %v6192, %v6192
        %v7246 = vmul.f32 %v6962, %v6962
        %v7247 = vmul.f32 %v6964, %v6964
        %v7248 = vmul.f32 %v6194, %v6194
        %v7249 = vmul.f32 %v6196, %v6196
        %v7250 = vmul.f32 %v6966, %v6966
        %v7251 = vmul.f32 %v6968, %v6968
        %v7252 = vmul.f32 %v6200, %v6200
        %v7253 = vmul.f32 %v6202, %v6202
        %v7254 = vmul.f32 %v6972, %v6972
        %v7255 = vmul.f32 %v6974, %v6974
        %v7256 = vmul.f32 %v6204, %v6204
        %v7257 = vmul.f32 %v6206, %v6206
        %v7258 = vmul.f32 %v6976, %v6976
        %v7259 = vmul.f32 %v6978, %v6978
        %v7260 = vmul.f32 %v6210, %v6210
        %v7261 = vmul.f32 %v6212, %v6212
        %v7262 = vmul.f32 %v6982, %v6982
        %v7263 = vmul.f32 %v6984, %v6984
        %v7264 = vmul.f32 %v6214, %v6214
        %v7265 = vmul.f32 %v6216, %v6216
        %v7266 = vmul.f32 %v6986, %v6986
        %v7267 = vmul.f32 %v6988, %v6988
        %v7268 = vmul.f32 %v6220, %v6220
        %v7269 = vmul.f32 %v6222, %v6222
        %v7270 = vmul.f32 %v6992, %v6992
        %v7271 = vmul.f32 %v6994, %v6994
        %v7272 = vmul.f32 %v6224, %v6224
        %v7273 = vmul.f32 %v6226, %v6226
        %v7274 = vmul.f32 %v6996, %v6996
        %v7275 = vmul.f32 %v6998, %v6998
        %v7276 = vmul.f32 %v6230, %v6230
        %v7277 = vmul.f32 %v6232, %v6232
        %v7278 = vmul.f32 %v7002, %v7002
        %v7279 = vmul.f32 %v7004, %v7004
        %v7280 = vmul.f32 %v6234, %v6234
        %v7281 = vmul.f32 %v6236, %v6236
        %v7282 = vmul.f32 %v7006, %v7006
        %v7283 = vmul.f32 %v7008, %v7008
        %v7284 = vmul.f32 %v6240, %v6240
        %v7285 = vmul.f32 %v6242, %v6242
        %v7286 = vmul.f32 %v7012, %v7012
        %v7287 = vmul.f32 %v7014, %v7014
        %v7288 = vmul.f32 %v6244, %v6244
        %v7289 = vmul.f32 %v6246, %v6246
        %v7290 = vmul.f32 %v7016, %v7016
        %v7291 = vmul.f32 %v7018, %v7018
        %v7292 = vmul.f32 %v6250, %v6250
        %v7293 = vmul.f32 %v6252, %v6252
        %v7294 = vmul.f32 %v7022, %v7022
        %v7295 = vmul.f32 %v7024, %v7024
        %v7296 = vmul.f32 %v6254, %v6254
        %v7297 = vmul.f32 %v6256, %v6256
        %v7298 = vmul.f32 %v7026, %v7026
        %v7299 = vmul.f32 %v7028, %v7028
        %v7300 = vmul.f32 %v6260, %v6260
        %v7301 = vmul.f32 %v6262, %v6262
        %v7302 = vmul.f32 %v7032, %v7032
        %v7303 = vmul.f32 %v7034, %v7034
        %v7304 = vmul.f32 %v6264, %v6264
        %v7305 = vmul.f32 %v6266, %v6266
        %v7306 = vmul.f32 %v7036, %v7036
        %v7307 = vmul.f32 %v7038, %v7038
        %v7308 = vmul.f32 %v6270, %v6270
        %v7309 = vmul.f32 %v6272, %v6272
        %v7310 = vmul.f32 %v7042, %v7042
        %v7311 = vmul.f32 %v7044, %v7044
        %v7312 = vmul.f32 %v6274, %v6274
        %v7313 = vmul.f32 %v6276, %v6276
        %v7314 = vmul.f32 %v7046, %v7046
        %v7315 = vmul.f32 %v7048, %v7048
        %v7316 = vmul.f32 %v6280, %v6280
        %v7317 = vmul.f32 %v6282, %v6282
        %v7318 = vmul.f32 %v7052, %v7052
        %v7319 = vmul.f32 %v7054, %v7054
        %v7320 = vmul.f32 %v6284, %v6284
        %v7321 = vmul.f32 %v6286, %v6286
        %v7322 = vmul.f32 %v7056, %v7056
        %v7323 = vmul.f32 %v7058, %v7058
        %v7324 = vmul.f32 %v6290, %v6290
        %v7325 = vmul.f32 %v6292, %v6292
        %v7326 = vmul.f32 %v7062, %v7062
        %v7327 = vmul.f32 %v7064, %v7064
        %v7328 = vmul.f32 %v6294, %v6294
        %v7329 = vmul.f32 %v6296, %v6296
        %v7330 = vmul.f32 %v7066, %v7066
        %v7331 = vmul.f32 %v7068, %v7068
        %v7332 = vmul.f32 %v6300, %v6300
        %v7333 = vmul.f32 %v6302, %v6302
        %v7334 = vmul.f32 %v7072, %v7072
        %v7335 = vmul.f32 %v7074, %v7074
        %v7336 = vmul.f32 %v6304, %v6304
        %v7337 = vmul.f32 %v6306, %v6306
        %v7338 = vmul.f32 %v7076, %v7076
        %v7339 = vmul.f32 %v7078, %v7078
        %v7340 = vmul.f32 %v6310, %v6310
        %v7341 = vmul.f32 %v6312, %v6312
        %v7342 = vmul.f32 %v7082, %v7082
        %v7343 = vmul.f32 %v7084, %v7084
        %v7344 = vmul.f32 %v6314, %v6314
        %v7345 = vmul.f32 %v6316, %v6316
        %v7346 = vmul.f32 %v7086, %v7086
        %v7347 = vmul.f32 %v7088, %v7088
        %v7348 = vmul.f32 %v6320, %v6320
        %v7349 = vmul.f32 %v6322, %v6322
        %v7350 = vmul.f32 %v7092, %v7092
        %v7351 = vmul.f32 %v7094, %v7094
        %v7352 = vmul.f32 %v6324, %v6324
        %v7353 = vmul.f32 %v6326, %v6326
        %v7354 = vmul.f32 %v7096, %v7096
        %v7355 = vmul.f32 %v7098, %v7098
        %v7356 = vadd.f32 %v7100, %v7228
        %v7357 = vadd.f32 %v7101, %v7229
        %v7358 = vadd.f32 %v7102, %v7230
        %v7359 = vadd.f32 %v7103, %v7231
        %v7360 = vadd.f32 %v7104, %v7232
        %v7361 = vadd.f32 %v7105, %v7233
        %v7362 = vadd.f32 %v7106, %v7234
        %v7363 = vadd.f32 %v7107, %v7235
        %v7364 = vadd.f32 %v7108, %v7236
        %v7365 = vadd.f32 %v7109, %v7237
        %v7366 = vadd.f32 %v7110, %v7238
        %v7367 = vadd.f32 %v7111, %v7239
        %v7368 = vadd.f32 %v7112, %v7240
        %v7369 = vadd.f32 %v7113, %v7241
        %v7370 = vadd.f32 %v7114, %v7242
        %v7371 = vadd.f32 %v7115, %v7243
        %v7372 = vadd.f32 %v7116, %v7244
        %v7373 = vadd.f32 %v7117, %v7245
        %v7374 = vadd.f32 %v7118, %v7246
        %v7375 = vadd.f32 %v7119, %v7247
        %v7376 = vadd.f32 %v7120, %v7248
        %v7377 = vadd.f32 %v7121, %v7249
        %v7378 = vadd.f32 %v7122, %v7250
        %v7379 = vadd.f32 %v7123, %v7251
        %v7380 = vadd.f32 %v7124, %v7252
        %v7381 = vadd.f32 %v7125, %v7253
        %v7382 = vadd.f32 %v7126, %v7254
        %v7383 = vadd.f32 %v7127, %v7255
        %v7384 = vadd.f32 %v7128, %v7256
        %v7385 = vadd.f32 %v7129, %v7257
        %v7386 = vadd.f32 %v7130, %v7258
        %v7387 = vadd.f32 %v7131, %v7259
        %v7388 = vadd.f32 %v7132, %v7260
        %v7389 = vadd.f32 %v7133, %v7261
        %v7390 = vadd.f32 %v7134, %v7262
        %v7391 = vadd.f32 %v7135, %v7263
        %v7392 = vadd.f32 %v7136, %v7264
        %v7393 = vadd.f32 %v7137, %v7265
        %v7394 = vadd.f32 %v7138, %v7266
        %v7395 = vadd.f32 %v7139, %v7267
        %v7396 = vadd.f32 %v7140, %v7268
        %v7397 = vadd.f32 %v7141, %v7269
        %v7398 = vadd.f32 %v7142, %v7270
        %v7399 = vadd.f32 %v7143, %v7271
        %v7400 = vadd.f32 %v7144, %v7272
        %v7401 = vadd.f32 %v7145, %v7273
        %v7402 = vadd.f32 %v7146, %v7274
        %v7403 = vadd.f32 %v7147, %v7275
        %v7404 = vadd.f32 %v7148, %v7276
        %v7405 = vadd.f32 %v7149, %v7277
        %v7406 = vadd.f32 %v7150, %v7278
        %v7407 = vadd.f32 %v7151, %v7279
        %v7408 = vadd.f32 %v7152, %v7280
        %v7409 = vadd.f32 %v7153, %v7281
        %v7410 = vadd.f32 %v7154, %v7282
        %v7411 = vadd.f32 %v7155, %v7283
        %v7412 = vadd.f32 %v7156, %v7284
        %v7413 = vadd.f32 %v7157, %v7285
        %v7414 = vadd.f32 %v7158, %v7286
        %v7415 = vadd.f32 %v7159, %v7287
        %v7416 = vadd.f32 %v7160, %v7288
        %v7417 = vadd.f32 %v7161, %v7289
        %v7418 = vadd.f32 %v7162, %v7290
        %v7419 = vadd.f32 %v7163, %v7291
        %v7420 = vadd.f32 %v7164, %v7292
        %v7421 = vadd.f32 %v7165, %v7293
        %v7422 = vadd.f32 %v7166, %v7294
        %v7423 = vadd.f32 %v7167, %v7295
        %v7424 = vadd.f32 %v7168, %v7296
        %v7425 = vadd.f32 %v7169, %v7297
        %v7426 = vadd.f32 %v7170, %v7298
        %v7427 = vadd.f32 %v7171, %v7299
        %v7428 = vadd.f32 %v7172, %v7300
        %v7429 = vadd.f32 %v7173, %v7301
        %v7430 = vadd.f32 %v7174, %v7302
        %v7431 = vadd.f32 %v7175, %v7303
        %v7432 = vadd.f32 %v7176, %v7304
        %v7433 = vadd.f32 %v7177, %v7305
        %v7434 = vadd.f32 %v7178, %v7306
        %v7435 = vadd.f32 %v7179, %v7307
        %v7436 = vadd.f32 %v7180, %v7308
        %v7437 = vadd.f32 %v7181, %v7309
        %v7438 = vadd.f32 %v7182, %v7310
        %v7439 = vadd.f32 %v7183, %v7311
        %v7440 = vadd.f32 %v7184, %v7312
        %v7441 = vadd.f32 %v7185, %v7313
        %v7442 = vadd.f32 %v7186, %v7314
        %v7443 = vadd.f32 %v7187, %v7315
        %v7444 = vadd.f32 %v7188, %v7316
        %v7445 = vadd.f32 %v7189, %v7317
        %v7446 = vadd.f32 %v7190, %v7318
        %v7447 = vadd.f32 %v7191, %v7319
        %v7448 = vadd.f32 %v7192, %v7320
        %v7449 = vadd.f32 %v7193, %v7321
        %v7450 = vadd.f32 %v7194, %v7322
        %v7451 = vadd.f32 %v7195, %v7323
        %v7452 = vadd.f32 %v7196, %v7324
        %v7453 = vadd.f32 %v7197, %v7325
        %v7454 = vadd.f32 %v7198, %v7326
        %v7455 = vadd.f32 %v7199, %v7327
        %v7456 = vadd.f32 %v7200, %v7328
        %v7457 = vadd.f32 %v7201, %v7329
        %v7458 = vadd.f32 %v7202, %v7330
        %v7459 = vadd.f32 %v7203, %v7331
        %v7460 = vadd.f32 %v7204, %v7332
        %v7461 = vadd.f32 %v7205, %v7333
        %v7462 = vadd.f32 %v7206, %v7334
        %v7463 = vadd.f32 %v7207, %v7335
        %v7464 = vadd.f32 %v7208, %v7336
        %v7465 = vadd.f32 %v7209, %v7337
        %v7466 = vadd.f32 %v7210, %v7338
        %v7467 = vadd.f32 %v7211, %v7339
        %v7468 = vadd.f32 %v7212, %v7340
        %v7469 = vadd.f32 %v7213, %v7341
        %v7470 = vadd.f32 %v7214, %v7342
        %v7471 = vadd.f32 %v7215, %v7343
        %v7472 = vadd.f32 %v7216, %v7344
        %v7473 = vadd.f32 %v7217, %v7345
        %v7474 = vadd.f32 %v7218, %v7346
        %v7475 = vadd.f32 %v7219, %v7347
        %v7476 = vadd.f32 %v7220, %v7348
        %v7477 = vadd.f32 %v7221, %v7349
        %v7478 = vadd.f32 %v7222, %v7350
        %v7479 = vadd.f32 %v7223, %v7351
        %v7480 = vadd.f32 %v7224, %v7352
        %v7481 = vadd.f32 %v7225, %v7353
        %v7482 = vadd.f32 %v7226, %v7354
        %v7483 = vadd.f32 %v7227, %v7355
        %v7484 = vpack.c.bf16 %v7360, %v7356
        %v7485 = vpack.c.bf16 %v7361, %v7357
        %v7486 = vpack.c.bf16 %v7362, %v7358
        %v7487 = vpack.c.bf16 %v7363, %v7359
        %v7488 = vpack.c.bf16 %v7368, %v7364
        %v7489 = vpack.c.bf16 %v7369, %v7365
        %v7490 = vpack.c.bf16 %v7370, %v7366
        %v7491 = vpack.c.bf16 %v7371, %v7367
        %v7492 = vpack.c.bf16 %v7376, %v7372
        %v7493 = vpack.c.bf16 %v7377, %v7373
        %v7494 = vpack.c.bf16 %v7378, %v7374
        %v7495 = vpack.c.bf16 %v7379, %v7375
        %v7496 = vpack.c.bf16 %v7384, %v7380
        %v7497 = vpack.c.bf16 %v7385, %v7381
        %v7498 = vpack.c.bf16 %v7386, %v7382
        %v7499 = vpack.c.bf16 %v7387, %v7383
        %v7500 = vpack.c.bf16 %v7392, %v7388
        %v7501 = vpack.c.bf16 %v7393, %v7389
        %v7502 = vpack.c.bf16 %v7394, %v7390
        %v7503 = vpack.c.bf16 %v7395, %v7391
        %v7504 = vpack.c.bf16 %v7400, %v7396
        %v7505 = vpack.c.bf16 %v7401, %v7397
        %v7506 = vpack.c.bf16 %v7402, %v7398
        %v7507 = vpack.c.bf16 %v7403, %v7399
        %v7508 = vpack.c.bf16 %v7408, %v7404
        %v7509 = vpack.c.bf16 %v7409, %v7405
        %v7510 = vpack.c.bf16 %v7410, %v7406
        %v7511 = vpack.c.bf16 %v7411, %v7407
        %v7512 = vpack.c.bf16 %v7416, %v7412
        %v7513 = vpack.c.bf16 %v7417, %v7413
        %v7514 = vpack.c.bf16 %v7418, %v7414
        %v7515 = vpack.c.bf16 %v7419, %v7415
        %v7516 = vpack.c.bf16 %v7424, %v7420
        %v7517 = vpack.c.bf16 %v7425, %v7421
        %v7518 = vpack.c.bf16 %v7426, %v7422
        %v7519 = vpack.c.bf16 %v7427, %v7423
        %v7520 = vpack.c.bf16 %v7432, %v7428
        %v7521 = vpack.c.bf16 %v7433, %v7429
        %v7522 = vpack.c.bf16 %v7434, %v7430
        %v7523 = vpack.c.bf16 %v7435, %v7431
        %v7524 = vpack.c.bf16 %v7440, %v7436
        %v7525 = vpack.c.bf16 %v7441, %v7437
        %v7526 = vpack.c.bf16 %v7442, %v7438
        %v7527 = vpack.c.bf16 %v7443, %v7439
        %v7528 = vpack.c.bf16 %v7448, %v7444
        %v7529 = vpack.c.bf16 %v7449, %v7445
        %v7530 = vpack.c.bf16 %v7450, %v7446
        %v7531 = vpack.c.bf16 %v7451, %v7447
        %v7532 = vpack.c.bf16 %v7456, %v7452
        %v7533 = vpack.c.bf16 %v7457, %v7453
        %v7534 = vpack.c.bf16 %v7458, %v7454
        %v7535 = vpack.c.bf16 %v7459, %v7455
        %v7536 = vpack.c.bf16 %v7464, %v7460
        %v7537 = vpack.c.bf16 %v7465, %v7461
        %v7538 = vpack.c.bf16 %v7466, %v7462
        %v7539 = vpack.c.bf16 %v7467, %v7463
        %v7540 = vpack.c.bf16 %v7472, %v7468
        %v7541 = vpack.c.bf16 %v7473, %v7469
        %v7542 = vpack.c.bf16 %v7474, %v7470
        %v7543 = vpack.c.bf16 %v7475, %v7471
        %v7544 = vpack.c.bf16 %v7480, %v7476
        %v7545 = vpack.c.bf16 %v7481, %v7477
        %v7546 = vpack.c.bf16 %v7482, %v7478
        %v7547 = vpack.c.bf16 %v7483, %v7479
        %v7548 = vld [vmem:[%s2] sm:$0xf]
        %v7549 = vld [vmem:[%s2 + $0x4] sm:$0xf]
        %v7550 = vld [vmem:[%s2 + $0x8] sm:$0xf]
        %v7551 = vld [vmem:[%s2 + $0xc] sm:$0xf]
        %v7552 = vld [vmem:[%s2 + $0x10] sm:$0xf]
        %v7553 = vld [vmem:[%s2 + $0x14] sm:$0xf]
        %v7554 = vld [vmem:[%s2 + $0x18] sm:$0xf]
        %v7555 = vld [vmem:[%s2 + $0x1c] sm:$0xf]
        %v7556 = vld [vmem:[%s2 + $0x20] sm:$0xf]
        %v7557 = vld [vmem:[%s2 + $0x24] sm:$0xf]
        %v7558 = vld [vmem:[%s2 + $0x28] sm:$0xf]
        %v7559 = vld [vmem:[%s2 + $0x2c] sm:$0xf]
        %v7560 = vld [vmem:[%s2 + $0x30] sm:$0xf]
        %v7561 = vld [vmem:[%s2 + $0x34] sm:$0xf]
        %v7562 = vld [vmem:[%s2 + $0x38] sm:$0xf]
        %v7563 = vld [vmem:[%s2 + $0x3c] sm:$0xf]
        %v7564 = vld [vmem:[%s2 + $0x40] sm:$0xf]
        %v7565 = vld [vmem:[%s2 + $0x44] sm:$0xf]
        %v7566 = vld [vmem:[%s2 + $0x48] sm:$0xf]
        %v7567 = vld [vmem:[%s2 + $0x4c] sm:$0xf]
        %v7568 = vld [vmem:[%s2 + $0x50] sm:$0xf]
        %v7569 = vld [vmem:[%s2 + $0x54] sm:$0xf]
        %v7570 = vld [vmem:[%s2 + $0x58] sm:$0xf]
        %v7571 = vld [vmem:[%s2 + $0x5c] sm:$0xf]
        %v7572 = vld [vmem:[%s2 + $0x60] sm:$0xf]
        %v7573 = vld [vmem:[%s2 + $0x64] sm:$0xf]
        %v7574 = vld [vmem:[%s2 + $0x68] sm:$0xf]
        %v7575 = vld [vmem:[%s2 + $0x6c] sm:$0xf]
        %v7576 = vld [vmem:[%s2 + $0x70] sm:$0xf]
        %v7577 = vld [vmem:[%s2 + $0x74] sm:$0xf]
        %v7578 = vld [vmem:[%s2 + $0x78] sm:$0xf]
        %v7579 = vld [vmem:[%s2 + $0x7c] sm:$0xf]
        %v7580 = vld [vmem:[%s2 + $0x80] sm:$0xf]
        %v7581 = vld [vmem:[%s2 + $0x84] sm:$0xf]
        %v7582 = vld [vmem:[%s2 + $0x88] sm:$0xf]
        %v7583 = vld [vmem:[%s2 + $0x8c] sm:$0xf]
        %v7584 = vld [vmem:[%s2 + $0x90] sm:$0xf]
        %v7585 = vld [vmem:[%s2 + $0x94] sm:$0xf]
        %v7586 = vld [vmem:[%s2 + $0x98] sm:$0xf]
        %v7587 = vld [vmem:[%s2 + $0x9c] sm:$0xf]
        %v7588 = vld [vmem:[%s2 + $0xa0] sm:$0xf]
        %v7589 = vld [vmem:[%s2 + $0xa4] sm:$0xf]
        %v7590 = vld [vmem:[%s2 + $0xa8] sm:$0xf]
        %v7591 = vld [vmem:[%s2 + $0xac] sm:$0xf]
        %v7592 = vld [vmem:[%s2 + $0xb0] sm:$0xf]
        %v7593 = vld [vmem:[%s2 + $0xb4] sm:$0xf]
        %v7594 = vld [vmem:[%s2 + $0xb8] sm:$0xf]
        %v7595 = vld [vmem:[%s2 + $0xbc] sm:$0xf]
        %v7596 = vld [vmem:[%s2 + $0xc0] sm:$0xf]
        %v7597 = vld [vmem:[%s2 + $0xc4] sm:$0xf]
        %v7598 = vld [vmem:[%s2 + $0xc8] sm:$0xf]
        %v7599 = vld [vmem:[%s2 + $0xcc] sm:$0xf]
        %v7600 = vld [vmem:[%s2 + $0xd0] sm:$0xf]
        %v7601 = vld [vmem:[%s2 + $0xd4] sm:$0xf]
        %v7602 = vld [vmem:[%s2 + $0xd8] sm:$0xf]
        %v7603 = vld [vmem:[%s2 + $0xdc] sm:$0xf]
        %v7604 = vld [vmem:[%s2 + $0xe0] sm:$0xf]
        %v7605 = vld [vmem:[%s2 + $0xe4] sm:$0xf]
        %v7606 = vld [vmem:[%s2 + $0xe8] sm:$0xf]
        %v7607 = vld [vmem:[%s2 + $0xec] sm:$0xf]
        %v7608 = vld [vmem:[%s2 + $0xf0] sm:$0xf]
        %v7609 = vld [vmem:[%s2 + $0xf4] sm:$0xf]
        %v7610 = vld [vmem:[%s2 + $0xf8] sm:$0xf]
        %v7611 = vld [vmem:[%s2 + $0xfc] sm:$0xf]
        %v7676 = vunpack.c.l.b16 %v7548
        %v7677 = vunpack.c.l.b16 %v7549
        %v7678 = vunpack.c.l.b16 %v7550
        %v7679 = vunpack.c.l.b16 %v7551
        %v7680 = vunpack.c.l.b16 %v7552
        %v7681 = vunpack.c.l.b16 %v7553
        %v7682 = vunpack.c.l.b16 %v7554
        %v7683 = vunpack.c.l.b16 %v7555
        %v7684 = vunpack.c.l.b16 %v7556
        %v7685 = vunpack.c.l.b16 %v7557
        %v7686 = vunpack.c.l.b16 %v7558
        %v7687 = vunpack.c.l.b16 %v7559
        %v7688 = vunpack.c.l.b16 %v7560
        %v7689 = vunpack.c.l.b16 %v7561
        %v7690 = vunpack.c.l.b16 %v7562
        %v7691 = vunpack.c.l.b16 %v7563
        %v7692 = vunpack.c.l.b16 %v7564
        %v7693 = vunpack.c.l.b16 %v7565
        %v7694 = vunpack.c.l.b16 %v7566
        %v7695 = vunpack.c.l.b16 %v7567
        %v7696 = vunpack.c.l.b16 %v7568
        %v7697 = vunpack.c.l.b16 %v7569
        %v7698 = vunpack.c.l.b16 %v7570
        %v7699 = vunpack.c.l.b16 %v7571
        %v7700 = vunpack.c.l.b16 %v7572
        %v7701 = vunpack.c.l.b16 %v7573
        %v7702 = vunpack.c.l.b16 %v7574
        %v7703 = vunpack.c.l.b16 %v7575
        %v7704 = vunpack.c.l.b16 %v7576
        %v7705 = vunpack.c.l.b16 %v7577
        %v7706 = vunpack.c.l.b16 %v7578
        %v7707 = vunpack.c.l.b16 %v7579
        %v7708 = vunpack.c.l.b16 %v7580
        %v7709 = vunpack.c.l.b16 %v7581
        %v7710 = vunpack.c.l.b16 %v7582
        %v7711 = vunpack.c.l.b16 %v7583
        %v7712 = vunpack.c.l.b16 %v7584
        %v7713 = vunpack.c.l.b16 %v7585
        %v7714 = vunpack.c.l.b16 %v7586
        %v7715 = vunpack.c.l.b16 %v7587
        %v7716 = vunpack.c.l.b16 %v7588
        %v7717 = vunpack.c.l.b16 %v7589
        %v7718 = vunpack.c.l.b16 %v7590
        %v7719 = vunpack.c.l.b16 %v7591
        %v7720 = vunpack.c.l.b16 %v7592
        %v7721 = vunpack.c.l.b16 %v7593
        %v7722 = vunpack.c.l.b16 %v7594
        %v7723 = vunpack.c.l.b16 %v7595
        %v7724 = vunpack.c.l.b16 %v7596
        %v7725 = vunpack.c.l.b16 %v7597
        %v7726 = vunpack.c.l.b16 %v7598
        %v7727 = vunpack.c.l.b16 %v7599
        %v7728 = vunpack.c.l.b16 %v7600
        %v7729 = vunpack.c.l.b16 %v7601
        %v7730 = vunpack.c.l.b16 %v7602
        %v7731 = vunpack.c.l.b16 %v7603
        %v7732 = vunpack.c.l.b16 %v7604
        %v7733 = vunpack.c.l.b16 %v7605
        %v7734 = vunpack.c.l.b16 %v7606
        %v7735 = vunpack.c.l.b16 %v7607
        %v7736 = vunpack.c.l.b16 %v7608
        %v7737 = vunpack.c.l.b16 %v7609
        %v7738 = vunpack.c.l.b16 %v7610
        %v7739 = vunpack.c.l.b16 %v7611
        %v7740 = vpack.c.b16 %v7677, %v7676
        %v7741 = vpack.c.b16 %v7679, %v7678
        %v7742 = vpack.c.b16 %v7681, %v7680
        %v7743 = vpack.c.b16 %v7683, %v7682
        %v7744 = vpack.c.b16 %v7685, %v7684
        %v7745 = vpack.c.b16 %v7687, %v7686
        %v7746 = vpack.c.b16 %v7689, %v7688
        %v7747 = vpack.c.b16 %v7691, %v7690
        %v7748 = vpack.c.b16 %v7693, %v7692
        %v7749 = vpack.c.b16 %v7695, %v7694
        %v7750 = vpack.c.b16 %v7697, %v7696
        %v7751 = vpack.c.b16 %v7699, %v7698
        %v7752 = vpack.c.b16 %v7701, %v7700
        %v7753 = vpack.c.b16 %v7703, %v7702
        %v7754 = vpack.c.b16 %v7705, %v7704
        %v7755 = vpack.c.b16 %v7707, %v7706
        %v7756 = vpack.c.b16 %v7709, %v7708
        %v7757 = vpack.c.b16 %v7711, %v7710
        %v7758 = vpack.c.b16 %v7713, %v7712
        %v7759 = vpack.c.b16 %v7715, %v7714
        %v7760 = vpack.c.b16 %v7717, %v7716
        %v7761 = vpack.c.b16 %v7719, %v7718
        %v7762 = vpack.c.b16 %v7721, %v7720
        %v7763 = vpack.c.b16 %v7723, %v7722
        %v7764 = vpack.c.b16 %v7725, %v7724
        %v7765 = vpack.c.b16 %v7727, %v7726
        %v7766 = vpack.c.b16 %v7729, %v7728
        %v7767 = vpack.c.b16 %v7731, %v7730
        %v7768 = vpack.c.b16 %v7733, %v7732
        %v7769 = vpack.c.b16 %v7735, %v7734
        %v7770 = vpack.c.b16 %v7737, %v7736
        %v7771 = vpack.c.b16 %v7739, %v7738
        %7804 = vmatprep.subr.bf16.mxu0 0
        %7805 = vmatpush1.bf16.msra.mxu0 %v7747
        %7806 = vmatprep.subr.bf16.mxu0 0
        %7807 = vmatpush1.bf16.msra.mxu0 %v7746
        %7808 = vmatprep.subr.bf16.mxu0 0
        %7809 = vmatpush1.bf16.msra.mxu0 %v7745
        %7810 = vmatprep.subr.bf16.mxu0 0
        %7811 = vmatpush1.bf16.msra.mxu0 %v7744
        %7812 = vmatprep.subr.bf16.mxu0 0
        %7813 = vmatpush1.bf16.msra.mxu0 %v7743
        %7814 = vmatprep.subr.bf16.mxu0 0
        %7815 = vmatpush1.bf16.msra.mxu0 %v7742
        %7816 = vmatprep.subr.bf16.mxu0 0
        %7817 = vmatpush1.bf16.msra.mxu0 %v7741
        %7818 = vmatprep.subr.bf16.mxu0 0
        %7819 = vmatpush1.bf16.msra.mxu0 %v7740
        %7820 = vmatprep.subr.bf16.mxu0 0
        %7821 = vmatpush2.bf16.msra.mxu0 %v7755
        %7822 = vmatprep.subr.bf16.mxu0 0
        %7823 = vmatpush2.bf16.msra.mxu0 %v7754
        %7824 = vmatprep.subr.bf16.mxu0 0
        %7825 = vmatpush2.bf16.msra.mxu0 %v7753
        %7826 = vmatprep.subr.bf16.mxu0 0
        %7827 = vmatpush2.bf16.msra.mxu0 %v7752
        %7828 = vmatprep.subr.bf16.mxu0 0
        %7829 = vmatpush2.bf16.msra.mxu0 %v7751
        %7830 = vmatprep.subr.bf16.mxu0 0
        %7831 = vmatpush2.bf16.msra.mxu0 %v7750
        %7832 = vmatprep.subr.bf16.mxu0 0
        %7833 = vmatpush2.bf16.msra.mxu0 %v7749
        %7834 = vmatprep.subr.bf16.mxu0 0
        %7835 = vmatpush2.bf16.msra.mxu0 %v7748
        %7836 = vmatprep.mubr.bf16.mxu0 %v7485
        %7837 = vmatmul.mubr.bf16.gmra.mxu0 %v7484
        %v7838 = vpop.f32.mrf.mxu0
        %v7839 = vadd.f32 1e-05, %v7838
        %v7840 = vpop.f32.mrf.mxu0
        %v7841 = vpop.f32.mrf.mxu0
        %v7842 = vadd.f32 1e-05, %v7841
        %v7843 = vpop.f32.mrf.mxu0
        %7844 = vmatprep.mubr.bf16.mxu0 %v7489
        %7845 = vmatmul.mubr.bf16.gmra.mxu0 %v7488
        %v7846 = vpop.f32.mrf.mxu0
        %v7847 = vadd.f32 1e-05, %v7846
        %v7848 = vpop.f32.mrf.mxu0
        %v7849 = vpop.f32.mrf.mxu0
        %v7850 = vadd.f32 1e-05, %v7849
        %v7851 = vpop.f32.mrf.mxu0
        %7852 = vmatprep.mubr.bf16.mxu0 %v7493
        %7853 = vmatmul.mubr.bf16.gmra.mxu0 %v7492
        %v7854 = vpop.f32.mrf.mxu0
        %v7855 = vadd.f32 1e-05, %v7854
        %v7856 = vpop.f32.mrf.mxu0
        %v7857 = vpop.f32.mrf.mxu0
        %v7858 = vadd.f32 1e-05, %v7857
        %v7859 = vpop.f32.mrf.mxu0
        %7860 = vmatprep.mubr.bf16.mxu0 %v7497
        %7861 = vmatmul.mubr.bf16.gmra.mxu0 %v7496
        %v7862 = vpop.f32.mrf.mxu0
        %v7863 = vadd.f32 1e-05, %v7862
        %v7864 = vpop.f32.mrf.mxu0
        %v7865 = vpop.f32.mrf.mxu0
        %v7866 = vadd.f32 1e-05, %v7865
        %v7867 = vpop.f32.mrf.mxu0
        %7868 = vmatprep.mubr.bf16.mxu0 %v7501
        %7869 = vmatmul.mubr.bf16.gmra.mxu0 %v7500
        %v7870 = vpop.f32.mrf.mxu0
        %v7871 = vadd.f32 1e-05, %v7870
        %v7872 = vpop.f32.mrf.mxu0
        %v7873 = vpop.f32.mrf.mxu0
        %v7874 = vadd.f32 1e-05, %v7873
        %v7875 = vpop.f32.mrf.mxu0
        %7876 = vmatprep.mubr.bf16.mxu0 %v7505
        %7877 = vmatmul.mubr.bf16.gmra.mxu0 %v7504
        %v7878 = vpop.f32.mrf.mxu0
        %v7879 = vadd.f32 1e-05, %v7878
        %v7880 = vpop.f32.mrf.mxu0
        %v7881 = vpop.f32.mrf.mxu0
        %v7882 = vadd.f32 1e-05, %v7881
        %v7883 = vpop.f32.mrf.mxu0
        %7884 = vmatprep.mubr.bf16.mxu0 %v7509
        %7885 = vmatmul.mubr.bf16.gmra.mxu0 %v7508
        %v7886 = vpop.f32.mrf.mxu0
        %v7887 = vadd.f32 1e-05, %v7886
        %v7888 = vpop.f32.mrf.mxu0
        %v7889 = vpop.f32.mrf.mxu0
        %v7890 = vadd.f32 1e-05, %v7889
        %v7891 = vpop.f32.mrf.mxu0
        %7892 = vmatprep.mubr.bf16.mxu0 %v7513
        %7893 = vmatmul.mubr.bf16.gmra.mxu0 %v7512
        %v7894 = vpop.f32.mrf.mxu0
        %v7895 = vadd.f32 1e-05, %v7894
        %v7896 = vpop.f32.mrf.mxu0
        %v7897 = vpop.f32.mrf.mxu0
        %v7898 = vadd.f32 1e-05, %v7897
        %v7899 = vpop.f32.mrf.mxu0
        %7900 = vmatprep.mubr.bf16.mxu0 %v7517
        %7901 = vmatmul.mubr.bf16.gmra.mxu0 %v7516
        %v7902 = vpop.f32.mrf.mxu0
        %v7903 = vadd.f32 1e-05, %v7902
        %v7904 = vpop.f32.mrf.mxu0
        %v7905 = vpop.f32.mrf.mxu0
        %v7906 = vadd.f32 1e-05, %v7905
        %v7907 = vpop.f32.mrf.mxu0
        %7908 = vmatprep.mubr.bf16.mxu0 %v7521
        %7909 = vmatmul.mubr.bf16.gmra.mxu0 %v7520
        %v7910 = vpop.f32.mrf.mxu0
        %v7911 = vadd.f32 1e-05, %v7910
        %v7912 = vpop.f32.mrf.mxu0
        %v7913 = vpop.f32.mrf.mxu0
        %v7914 = vadd.f32 1e-05, %v7913
        %v7915 = vpop.f32.mrf.mxu0
        %7916 = vmatprep.mubr.bf16.mxu0 %v7525
        %7917 = vmatmul.mubr.bf16.gmra.mxu0 %v7524
        %v7918 = vpop.f32.mrf.mxu0
        %v7919 = vadd.f32 1e-05, %v7918
        %v7920 = vpop.f32.mrf.mxu0
        %v7921 = vpop.f32.mrf.mxu0
        %v7922 = vadd.f32 1e-05, %v7921
        %v7923 = vpop.f32.mrf.mxu0
        %7924 = vmatprep.mubr.bf16.mxu0 %v7529
        %7925 = vmatmul.mubr.bf16.gmra.mxu0 %v7528
        %v7926 = vpop.f32.mrf.mxu0
        %v7927 = vadd.f32 1e-05, %v7926
        %v7928 = vpop.f32.mrf.mxu0
        %v7929 = vpop.f32.mrf.mxu0
        %v7930 = vadd.f32 1e-05, %v7929
        %v7931 = vpop.f32.mrf.mxu0
        %7932 = vmatprep.mubr.bf16.mxu0 %v7533
        %7933 = vmatmul.mubr.bf16.gmra.mxu0 %v7532
        %v7934 = vpop.f32.mrf.mxu0
        %v7935 = vadd.f32 1e-05, %v7934
        %v7936 = vpop.f32.mrf.mxu0
        %v7937 = vpop.f32.mrf.mxu0
        %v7938 = vadd.f32 1e-05, %v7937
        %v7939 = vpop.f32.mrf.mxu0
        %7940 = vmatprep.mubr.bf16.mxu0 %v7537
        %7941 = vmatmul.mubr.bf16.gmra.mxu0 %v7536
        %v7942 = vpop.f32.mrf.mxu0
        %v7943 = vadd.f32 1e-05, %v7942
        %v7944 = vpop.f32.mrf.mxu0
        %v7945 = vpop.f32.mrf.mxu0
        %v7946 = vadd.f32 1e-05, %v7945
        %v7947 = vpop.f32.mrf.mxu0
        %7948 = vmatprep.mubr.bf16.mxu0 %v7541
        %7949 = vmatmul.mubr.bf16.gmra.mxu0 %v7540
        %v7950 = vpop.f32.mrf.mxu0
        %v7951 = vadd.f32 1e-05, %v7950
        %v7952 = vpop.f32.mrf.mxu0
        %v7953 = vpop.f32.mrf.mxu0
        %v7954 = vadd.f32 1e-05, %v7953
        %v7955 = vpop.f32.mrf.mxu0
        %7956 = vmatprep.mubr.bf16.mxu0 %v7545
        %7957 = vmatmul.mubr.bf16.gmra.mxu0 %v7544
        %v7958 = vpop.f32.mrf.mxu0
        %v7959 = vadd.f32 1e-05, %v7958
        %v7960 = vpop.f32.mrf.mxu0
        %v7961 = vpop.f32.mrf.mxu0
        %v7962 = vadd.f32 1e-05, %v7961
        %v7963 = vpop.f32.mrf.mxu0
        %7964 = vdwg.mxu0
        %7965 = vmatprep.subr.bf16.mxu0 0
        %7966 = vmatpush1.bf16.msra.mxu0 %v7763
        %7967 = vmatprep.subr.bf16.mxu0 0
        %7968 = vmatpush1.bf16.msra.mxu0 %v7762
        %7969 = vmatprep.subr.bf16.mxu0 0
        %7970 = vmatpush1.bf16.msra.mxu0 %v7761
        %7971 = vmatprep.subr.bf16.mxu0 0
        %7972 = vmatpush1.bf16.msra.mxu0 %v7760
        %7973 = vmatprep.subr.bf16.mxu0 0
        %7974 = vmatpush1.bf16.msra.mxu0 %v7759
        %7975 = vmatprep.subr.bf16.mxu0 0
        %7976 = vmatpush1.bf16.msra.mxu0 %v7758
        %7977 = vmatprep.subr.bf16.mxu0 0
        %7978 = vmatpush1.bf16.msra.mxu0 %v7757
        %7979 = vmatprep.subr.bf16.mxu0 0
        %7980 = vmatpush1.bf16.msra.mxu0 %v7756
        %7981 = vmatprep.subr.bf16.mxu0 0
        %7982 = vmatpush2.bf16.msra.mxu0 %v7771
        %7983 = vmatprep.subr.bf16.mxu0 0
        %7984 = vmatpush2.bf16.msra.mxu0 %v7770
        %7985 = vmatprep.subr.bf16.mxu0 0
        %7986 = vmatpush2.bf16.msra.mxu0 %v7769
        %7987 = vmatprep.subr.bf16.mxu0 0
        %7988 = vmatpush2.bf16.msra.mxu0 %v7768
        %7989 = vmatprep.subr.bf16.mxu0 0
        %7990 = vmatpush2.bf16.msra.mxu0 %v7767
        %7991 = vmatprep.subr.bf16.mxu0 0
        %7992 = vmatpush2.bf16.msra.mxu0 %v7766
        %7993 = vmatprep.subr.bf16.mxu0 0
        %7994 = vmatpush2.bf16.msra.mxu0 %v7765
        %7995 = vmatprep.subr.bf16.mxu0 0
        %7996 = vmatpush2.bf16.msra.mxu0 %v7764
        %7997 = vmatprep.mubr.bf16.mxu0 %v7487
        %7998 = vmatmul.mubr.bf16.gmra.mxu0 %v7486
        %v7999 = vpop.f32.mrf.mxu0
        %v8000 = vadd.f32 %v7839, %v7999
        %v8001 = vpop.f32.mrf.mxu0
        %v8002 = vpop.f32.mrf.mxu0
        %v8003 = vadd.f32 %v7842, %v8002
        %v8004 = vpop.f32.mrf.mxu0
        %8005 = vmatprep.mubr.bf16.mxu0 %v7491
        %8006 = vmatmul.mubr.bf16.gmra.mxu0 %v7490
        %v8007 = vpop.f32.mrf.mxu0
        %v8008 = vadd.f32 %v7847, %v8007
        %v8009 = vpop.f32.mrf.mxu0
        %v8010 = vpop.f32.mrf.mxu0
        %v8011 = vadd.f32 %v7850, %v8010
        %v8012 = vpop.f32.mrf.mxu0
        %8013 = vmatprep.mubr.bf16.mxu0 %v7495
        %8014 = vmatmul.mubr.bf16.gmra.mxu0 %v7494
        %v8015 = vpop.f32.mrf.mxu0
        %v8016 = vadd.f32 %v7855, %v8015
        %v8017 = vpop.f32.mrf.mxu0
        %v8018 = vpop.f32.mrf.mxu0
        %v8019 = vadd.f32 %v7858, %v8018
        %v8020 = vpop.f32.mrf.mxu0
        %8021 = vmatprep.mubr.bf16.mxu0 %v7499
        %8022 = vmatmul.mubr.bf16.gmra.mxu0 %v7498
        %v8023 = vpop.f32.mrf.mxu0
        %v8024 = vadd.f32 %v7863, %v8023
        %v8025 = vpop.f32.mrf.mxu0
        %v8026 = vpop.f32.mrf.mxu0
        %v8027 = vadd.f32 %v7866, %v8026
        %v8028 = vpop.f32.mrf.mxu0
        %8029 = vmatprep.mubr.bf16.mxu0 %v7503
        %8030 = vmatmul.mubr.bf16.gmra.mxu0 %v7502
        %v8031 = vpop.f32.mrf.mxu0
        %v8032 = vadd.f32 %v7871, %v8031
        %v8033 = vpop.f32.mrf.mxu0
        %v8034 = vpop.f32.mrf.mxu0
        %v8035 = vadd.f32 %v7874, %v8034
        %v8036 = vpop.f32.mrf.mxu0
        %8037 = vmatprep.mubr.bf16.mxu0 %v7507
        %8038 = vmatmul.mubr.bf16.gmra.mxu0 %v7506
        %v8039 = vpop.f32.mrf.mxu0
        %v8040 = vadd.f32 %v7879, %v8039
        %v8041 = vpop.f32.mrf.mxu0
        %v8042 = vpop.f32.mrf.mxu0
        %v8043 = vadd.f32 %v7882, %v8042
        %v8044 = vpop.f32.mrf.mxu0
        %8045 = vmatprep.mubr.bf16.mxu0 %v7511
        %8046 = vmatmul.mubr.bf16.gmra.mxu0 %v7510
        %v8047 = vpop.f32.mrf.mxu0
        %v8048 = vadd.f32 %v7887, %v8047
        %v8049 = vpop.f32.mrf.mxu0
        %v8050 = vpop.f32.mrf.mxu0
        %v8051 = vadd.f32 %v7890, %v8050
        %v8052 = vpop.f32.mrf.mxu0
        %8053 = vmatprep.mubr.bf16.mxu0 %v7515
        %8054 = vmatmul.mubr.bf16.gmra.mxu0 %v7514
        %v8055 = vpop.f32.mrf.mxu0
        %v8056 = vadd.f32 %v7895, %v8055
        %v8057 = vpop.f32.mrf.mxu0
        %v8058 = vpop.f32.mrf.mxu0
        %v8059 = vadd.f32 %v7898, %v8058
        %v8060 = vpop.f32.mrf.mxu0
        %8061 = vmatprep.mubr.bf16.mxu0 %v7519
        %8062 = vmatmul.mubr.bf16.gmra.mxu0 %v7518
        %v8063 = vpop.f32.mrf.mxu0
        %v8064 = vadd.f32 %v7903, %v8063
        %v8065 = vpop.f32.mrf.mxu0
        %v8066 = vpop.f32.mrf.mxu0
        %v8067 = vadd.f32 %v7906, %v8066
        %v8068 = vpop.f32.mrf.mxu0
        %8069 = vmatprep.mubr.bf16.mxu0 %v7523
        %8070 = vmatmul.mubr.bf16.gmra.mxu0 %v7522
        %v8071 = vpop.f32.mrf.mxu0
        %v8072 = vadd.f32 %v7911, %v8071
        %v8073 = vpop.f32.mrf.mxu0
        %v8074 = vpop.f32.mrf.mxu0
        %v8075 = vadd.f32 %v7914, %v8074
        %v8076 = vpop.f32.mrf.mxu0
        %8077 = vmatprep.mubr.bf16.mxu0 %v7527
        %8078 = vmatmul.mubr.bf16.gmra.mxu0 %v7526
        %v8079 = vpop.f32.mrf.mxu0
        %v8080 = vadd.f32 %v7919, %v8079
        %v8081 = vpop.f32.mrf.mxu0
        %v8082 = vpop.f32.mrf.mxu0
        %v8083 = vadd.f32 %v7922, %v8082
        %v8084 = vpop.f32.mrf.mxu0
        %8085 = vmatprep.mubr.bf16.mxu0 %v7531
        %8086 = vmatmul.mubr.bf16.gmra.mxu0 %v7530
        %v8087 = vpop.f32.mrf.mxu0
        %v8088 = vadd.f32 %v7927, %v8087
        %v8089 = vpop.f32.mrf.mxu0
        %v8090 = vpop.f32.mrf.mxu0
        %v8091 = vadd.f32 %v7930, %v8090
        %v8092 = vpop.f32.mrf.mxu0
        %8093 = vmatprep.mubr.bf16.mxu0 %v7535
        %8094 = vmatmul.mubr.bf16.gmra.mxu0 %v7534
        %v8095 = vpop.f32.mrf.mxu0
        %v8096 = vadd.f32 %v7935, %v8095
        %v8097 = vpop.f32.mrf.mxu0
        %v8098 = vpop.f32.mrf.mxu0
        %v8099 = vadd.f32 %v7938, %v8098
        %v8100 = vpop.f32.mrf.mxu0
        %8101 = vmatprep.mubr.bf16.mxu0 %v7539
        %8102 = vmatmul.mubr.bf16.gmra.mxu0 %v7538
        %v8103 = vpop.f32.mrf.mxu0
        %v8104 = vadd.f32 %v7943, %v8103
        %v8105 = vpop.f32.mrf.mxu0
        %v8106 = vpop.f32.mrf.mxu0
        %v8107 = vadd.f32 %v7946, %v8106
        %v8108 = vpop.f32.mrf.mxu0
        %8109 = vmatprep.mubr.bf16.mxu0 %v7543
        %8110 = vmatmul.mubr.bf16.gmra.mxu0 %v7542
        %v8111 = vpop.f32.mrf.mxu0
        %v8112 = vadd.f32 %v7951, %v8111
        %v8113 = vpop.f32.mrf.mxu0
        %v8114 = vpop.f32.mrf.mxu0
        %v8115 = vadd.f32 %v7954, %v8114
        %v8116 = vpop.f32.mrf.mxu0
        %8117 = vmatprep.mubr.bf16.mxu0 %v7547
        %8118 = vmatmul.mubr.bf16.gmra.mxu0 %v7546
        %v8119 = vpop.f32.mrf.mxu0
        %v8120 = vadd.f32 %v7959, %v8119
        %v8121 = vpop.f32.mrf.mxu0
        %v8122 = vpop.f32.mrf.mxu0
        %v8123 = vadd.f32 %v7962, %v8122
        %v8124 = vpop.f32.mrf.mxu0
        %8125 = vdwg.mxu0
        %v8126 = vlog2.pop %v8000
        %v8127 = vmul.f32 %v8126, 0.6931472
        %v8128 = vlog2.pop %v8003
        %v8129 = vmul.f32 %v8128, 0.6931472
        %v8130 = vlog2.pop %v8008
        %v8131 = vmul.f32 %v8130, 0.6931472
        %v8132 = vlog2.pop %v8011
        %v8133 = vmul.f32 %v8132, 0.6931472
        %v8134 = vlog2.pop %v8016
        %v8135 = vmul.f32 %v8134, 0.6931472
        %v8136 = vlog2.pop %v8019
        %v8137 = vmul.f32 %v8136, 0.6931472
        %v8138 = vlog2.pop %v8024
        %v8139 = vmul.f32 %v8138, 0.6931472
        %v8140 = vlog2.pop %v8027
        %v8141 = vmul.f32 %v8140, 0.6931472
        %v8142 = vlog2.pop %v8032
        %v8143 = vmul.f32 %v8142, 0.6931472
        %v8144 = vlog2.pop %v8035
        %v8145 = vmul.f32 %v8144, 0.6931472
        %v8146 = vlog2.pop %v8040
        %v8147 = vmul.f32 %v8146, 0.6931472
        %v8148 = vlog2.pop %v8043
        %v8149 = vmul.f32 %v8148, 0.6931472
        %v8150 = vlog2.pop %v8048
        %v8151 = vmul.f32 %v8150, 0.6931472
        %v8152 = vlog2.pop %v8051
        %v8153 = vmul.f32 %v8152, 0.6931472
        %v8154 = vlog2.pop %v8056
        %v8155 = vmul.f32 %v8154, 0.6931472
        %v8156 = vlog2.pop %v8059
        %v8157 = vmul.f32 %v8156, 0.6931472
        %v8158 = vlog2.pop %v8064
        %v8159 = vmul.f32 %v8158, 0.6931472
        %v8160 = vlog2.pop %v8067
        %v8161 = vmul.f32 %v8160, 0.6931472
        %v8162 = vlog2.pop %v8072
        %v8163 = vmul.f32 %v8162, 0.6931472
        %v8164 = vlog2.pop %v8075
        %v8165 = vmul.f32 %v8164, 0.6931472
        %v8166 = vlog2.pop %v8080
        %v8167 = vmul.f32 %v8166, 0.6931472
        %v8168 = vlog2.pop %v8083
        %v8169 = vmul.f32 %v8168, 0.6931472
        %v8170 = vlog2.pop %v8088
        %v8171 = vmul.f32 %v8170, 0.6931472
        %v8172 = vlog2.pop %v8091
        %v8173 = vmul.f32 %v8172, 0.6931472
        %v8174 = vlog2.pop %v8096
        %v8175 = vmul.f32 %v8174, 0.6931472
        %v8176 = vlog2.pop %v8099
        %v8177 = vmul.f32 %v8176, 0.6931472
        %v8178 = vlog2.pop %v8104
        %v8179 = vmul.f32 %v8178, 0.6931472
        %v8180 = vlog2.pop %v8107
        %v8181 = vmul.f32 %v8180, 0.6931472
        %v8182 = vlog2.pop %v8112
        %v8183 = vmul.f32 %v8182, 0.6931472
        %v8184 = vlog2.pop %v8115
        %v8185 = vmul.f32 %v8184, 0.6931472
        %v8186 = vlog2.pop %v8120
        %v8187 = vmul.f32 %v8186, 0.6931472
        %v8188 = vlog2.pop %v8123
        %v8189 = vmul.f32 %v8188, 0.6931472
        %v8190 = vadd.f32 %v8127, 4.5
        %v8191 = vadd.f32 %v8129, 4.5
        %v8192 = vadd.f32 %v8131, 4.5
        %v8193 = vadd.f32 %v8133, 4.5
        %v8194 = vadd.f32 %v8135, 4.5
        %v8195 = vadd.f32 %v8137, 4.5
        %v8196 = vadd.f32 %v8139, 4.5
        %v8197 = vadd.f32 %v8141, 4.5
        %v8198 = vadd.f32 %v8143, 4.5
        %v8199 = vadd.f32 %v8145, 4.5
        %v8200 = vadd.f32 %v8147, 4.5
        %v8201 = vadd.f32 %v8149, 4.5
        %v8202 = vadd.f32 %v8151, 4.5
        %v8203 = vadd.f32 %v8153, 4.5
        %v8204 = vadd.f32 %v8155, 4.5
        %v8205 = vadd.f32 %v8157, 4.5
        %v8206 = vadd.f32 %v8159, 4.5
        %v8207 = vadd.f32 %v8161, 4.5
        %v8208 = vadd.f32 %v8163, 4.5
        %v8209 = vadd.f32 %v8165, 4.5
        %v8210 = vadd.f32 %v8167, 4.5
        %v8211 = vadd.f32 %v8169, 4.5
        %v8212 = vadd.f32 %v8171, 4.5
        %v8213 = vadd.f32 %v8173, 4.5
        %v8214 = vadd.f32 %v8175, 4.5
        %v8215 = vadd.f32 %v8177, 4.5
        %v8216 = vadd.f32 %v8179, 4.5
        %v8217 = vadd.f32 %v8181, 4.5
        %v8218 = vadd.f32 %v8183, 4.5
        %v8219 = vadd.f32 %v8185, 4.5
        %v8220 = vadd.f32 %v8187, 4.5
        %v8221 = vadd.f32 %v8189, 4.5
        %v8222 = vmul.f32 %v8190, 0.2
        %v8223 = vmul.f32 %v8191, 0.2
        %v8224 = vmul.f32 %v8192, 0.2
        %v8225 = vmul.f32 %v8193, 0.2
        %v8226 = vmul.f32 %v8194, 0.2
        %v8227 = vmul.f32 %v8195, 0.2
        %v8228 = vmul.f32 %v8196, 0.2
        %v8229 = vmul.f32 %v8197, 0.2
        %v8230 = vmul.f32 %v8198, 0.2
        %v8231 = vmul.f32 %v8199, 0.2
        %v8232 = vmul.f32 %v8200, 0.2
        %v8233 = vmul.f32 %v8201, 0.2
        %v8234 = vmul.f32 %v8202, 0.2
        %v8235 = vmul.f32 %v8203, 0.2
        %v8236 = vmul.f32 %v8204, 0.2
        %v8237 = vmul.f32 %v8205, 0.2
        %v8238 = vmul.f32 %v8206, 0.2
        %v8239 = vmul.f32 %v8207, 0.2
        %v8240 = vmul.f32 %v8208, 0.2
        %v8241 = vmul.f32 %v8209, 0.2
        %v8242 = vmul.f32 %v8210, 0.2
        %v8243 = vmul.f32 %v8211, 0.2
        %v8244 = vmul.f32 %v8212, 0.2
        %v8245 = vmul.f32 %v8213, 0.2
        %v8246 = vmul.f32 %v8214, 0.2
        %v8247 = vmul.f32 %v8215, 0.2
        %v8248 = vmul.f32 %v8216, 0.2
        %v8249 = vmul.f32 %v8217, 0.2
        %v8250 = vmul.f32 %v8218, 0.2
        %v8251 = vmul.f32 %v8219, 0.2
        %v8252 = vmul.f32 %v8220, 0.2
        %v8253 = vmul.f32 %v8221, 0.2
        %8254 = vxpose.xlu0.b32.start [1/16] %v8222, 128
        %8255 = vxpose.xlu0.b32.cont [2/16] %v8223, 128
        %8256 = vxpose.xlu0.b32.cont [3/16] %v8224, 128
        %8257 = vxpose.xlu0.b32.cont [4/16] %v8225, 128
        %8258 = vxpose.xlu0.b32.cont [5/16] %v8226, 128
        %8259 = vxpose.xlu0.b32.cont [6/16] %v8227, 128
        %8260 = vxpose.xlu0.b32.cont [7/16] %v8228, 128
        %8261 = vxpose.xlu0.b32.cont [8/16] %v8229, 128
        %8262 = vxpose.xlu0.b32.cont [9/16] %v8230, 128
        %8263 = vxpose.xlu0.b32.cont [10/16] %v8231, 128
        %8264 = vxpose.xlu0.b32.cont [11/16] %v8232, 128
        %8265 = vxpose.xlu0.b32.cont [12/16] %v8233, 128
        %8266 = vxpose.xlu0.b32.cont [13/16] %v8234, 128
        %8267 = vxpose.xlu0.b32.cont [14/16] %v8235, 128
        %8268 = vxpose.xlu0.b32.cont [15/16] %v8236, 128
        %8269 = vxpose.xlu0.b32.end [16/16] %v8237, 128
        %v8270 = vpop.trf.xlu0
        %v8271 = vpop.trf.xlu0
        %v8272 = vpop.trf.xlu0
        %v8273 = vpop.trf.xlu0
        %v8274 = vpop.trf.xlu0
        %v8275 = vpop.trf.xlu0
        %v8276 = vpop.trf.xlu0
        %v8277 = vpop.trf.xlu0
        %v8278 = vpop.trf.xlu0
        %v8279 = vpop.trf.xlu0
        %v8280 = vpop.trf.xlu0
        %v8281 = vpop.trf.xlu0
        %v8282 = vpop.trf.xlu0
        %v8283 = vpop.trf.xlu0
        %v8284 = vpop.trf.xlu0
        %v8285 = vpop.trf.xlu0
        %8286 = vxpose.xlu0.b32.start [1/16] %v8238, 128
        %8287 = vxpose.xlu0.b32.cont [2/16] %v8239, 128
        %8288 = vxpose.xlu0.b32.cont [3/16] %v8240, 128
        %8289 = vxpose.xlu0.b32.cont [4/16] %v8241, 128
        %8290 = vxpose.xlu0.b32.cont [5/16] %v8242, 128
        %8291 = vxpose.xlu0.b32.cont [6/16] %v8243, 128
        %8292 = vxpose.xlu0.b32.cont [7/16] %v8244, 128
        %8293 = vxpose.xlu0.b32.cont [8/16] %v8245, 128
        %8294 = vxpose.xlu0.b32.cont [9/16] %v8246, 128
        %8295 = vxpose.xlu0.b32.cont [10/16] %v8247, 128
        %8296 = vxpose.xlu0.b32.cont [11/16] %v8248, 128
        %8297 = vxpose.xlu0.b32.cont [12/16] %v8249, 128
        %8298 = vxpose.xlu0.b32.cont [13/16] %v8250, 128
        %8299 = vxpose.xlu0.b32.cont [14/16] %v8251, 128
        %8300 = vxpose.xlu0.b32.cont [15/16] %v8252, 128
        %8301 = vxpose.xlu0.b32.end [16/16] %v8253, 128
        %v8302 = vpop.trf.xlu0
        %v8303 = vpop.trf.xlu0
        %v8304 = vpop.trf.xlu0
        %v8305 = vpop.trf.xlu0
        %v8306 = vpop.trf.xlu0
        %v8307 = vpop.trf.xlu0
        %v8308 = vpop.trf.xlu0
        %v8309 = vpop.trf.xlu0
        %v8310 = vpop.trf.xlu0
        %v8311 = vpop.trf.xlu0
        %v8312 = vpop.trf.xlu0
        %v8313 = vpop.trf.xlu0
        %v8314 = vpop.trf.xlu0
        %v8315 = vpop.trf.xlu0
        %v8316 = vpop.trf.xlu0
        %v8317 = vpop.trf.xlu0
        %8318 = vst [vmem:[%s162] sm:$0xff] %v8270
        %8319 = vst [vmem:[%s162 + $0x8] sm:$0xff] %v8302
        %8320 = vst [vmem:[%s162 + $0x10] sm:$0xff] %v8271
        %8321 = vst [vmem:[%s162 + $0x18] sm:$0xff] %v8303
        %8322 = vst [vmem:[%s162 + $0x20] sm:$0xff] %v8272
        %8323 = vst [vmem:[%s162 + $0x28] sm:$0xff] %v8304
        %8324 = vst [vmem:[%s162 + $0x30] sm:$0xff] %v8273
        %8325 = vst [vmem:[%s162 + $0x38] sm:$0xff] %v8305
        %8326 = vst [vmem:[%s162 + $0x40] sm:$0xff] %v8274
        %8327 = vst [vmem:[%s162 + $0x48] sm:$0xff] %v8306
        %8328 = vst [vmem:[%s162 + $0x50] sm:$0xff] %v8275
        %8329 = vst [vmem:[%s162 + $0x58] sm:$0xff] %v8307
        %8330 = vst [vmem:[%s162 + $0x60] sm:$0xff] %v8276
        %8331 = vst [vmem:[%s162 + $0x68] sm:$0xff] %v8308
        %8332 = vst [vmem:[%s162 + $0x70] sm:$0xff] %v8277
        %8333 = vst [vmem:[%s162 + $0x78] sm:$0xff] %v8309
        %8334 = vst [vmem:[%s162 + $0x80] sm:$0xff] %v8278
        %8335 = vst [vmem:[%s162 + $0x88] sm:$0xff] %v8310
        %8336 = vst [vmem:[%s162 + $0x90] sm:$0xff] %v8279
        %8337 = vst [vmem:[%s162 + $0x98] sm:$0xff] %v8311
        %8338 = vst [vmem:[%s162 + $0xa0] sm:$0xff] %v8280
        %8339 = vst [vmem:[%s162 + $0xa8] sm:$0xff] %v8312
        %8340 = vst [vmem:[%s162 + $0xb0] sm:$0xff] %v8281
        %8341 = vst [vmem:[%s162 + $0xb8] sm:$0xff] %v8313
        %8342 = vst [vmem:[%s162 + $0xc0] sm:$0xff] %v8282
        %8343 = vst [vmem:[%s162 + $0xc8] sm:$0xff] %v8314
        %8344 = vst [vmem:[%s162 + $0xd0] sm:$0xff] %v8283
        %8345 = vst [vmem:[%s162 + $0xd8] sm:$0xff] %v8315
        %8346 = vst [vmem:[%s162 + $0xe0] sm:$0xff] %v8284
        %8347 = vst [vmem:[%s162 + $0xe8] sm:$0xff] %v8316
        %8348 = vst [vmem:[%s162 + $0xf0] sm:$0xff] %v8285
        %8349 = vst [vmem:[%s162 + $0xf8] sm:$0xff] %v8317
        %s8350 = sand.u32 %s90, 1
        %s8351 = sand.u32 %s90, 1
        %s8352 = smul.addr %s8351, 256
        %s8353 = scalar_lea.vmem [#allocation2], %s8352
        // Predicated region
        $region33: #{augment_mel_stft.1} parent=31 // pred_check
          %p8354 = pneg %p100
        $region34: #{augment_mel_stft.1} parent=31 // pred_check_branch
          %8356 = sbr.rel (%p8354) target = $region36
        $region35: #{augment_mel_stft.1} parent=31 // pred_region
          %s8357 = smul.u32 2, %s14
          %s8358 = smul.addr %s8357, 8
          %s8359 = scalar_lea.vmem %s3, %s8358
          // Predicated region
          $region37: #{augment_mel_stft.1} parent=35 // pred_check
            _
          $region38: #{augment_mel_stft.1} parent=35 // pred_check_branch
            %8361 = sbr.rel (0) target = $region40
          $region39: #{augment_mel_stft.1} parent=35 // pred_region
            // Predicated region
            $region41: #{augment_mel_stft.1} parent=39 // pred_check
              _
            $region42: #{augment_mel_stft.1} parent=39 // pred_check_branch
              %8363 = sbr.rel (0) target = $region44
            $region43: #{augment_mel_stft.1} parent=39 // pred_region
              loop: start=0, step=1, limit=1
              $region45: #{augment_mel_stft.1} parent=43 // loop_pre_header
                _
              $region46: #{augment_mel_stft.1} parent=43 // loop_header
                %s8365 = sphi 0, %s8369
                %p8366 = scmp.ge.s32.totalorder %s8365, 1
                %s8370 = sphi %s8353, %s8353
                %s8371 = sphi %s8359, %s8359
              $region47: #{augment_mel_stft.1} parent=43 // loop_header_branch
                %8368 = sbr.rel (%p8366) target = $region51
              $region48: #{augment_mel_stft.1} parent=43 // loop_body
                %v8372 = vld [vmem:[%s8370] sm:$0xff]
                %8373 = vst [vmem:[%s8371] sm:$0xff] %v8372
                %v8374 = vld [vmem:[%s8370 + $0x8] sm:$0xff]
                %8375 = vst [vmem:[%s8371 + $0x8] sm:$0xff] %v8374
                %v8376 = vld [vmem:[%s8370 + $0x10] sm:$0xff]
                %8377 = vst [vmem:[%s8371 + $0x20] sm:$0xff] %v8376
                %v8378 = vld [vmem:[%s8370 + $0x18] sm:$0xff]
                %8379 = vst [vmem:[%s8371 + $0x28] sm:$0xff] %v8378
                %v8380 = vld [vmem:[%s8370 + $0x20] sm:$0xff]
                %8381 = vst [vmem:[%s8371 + $0x40] sm:$0xff] %v8380
                %v8382 = vld [vmem:[%s8370 + $0x28] sm:$0xff]
                %8383 = vst [vmem:[%s8371 + $0x48] sm:$0xff] %v8382
                %v8384 = vld [vmem:[%s8370 + $0x30] sm:$0xff]
                %8385 = vst [vmem:[%s8371 + $0x60] sm:$0xff] %v8384
                %v8386 = vld [vmem:[%s8370 + $0x38] sm:$0xff]
                %8387 = vst [vmem:[%s8371 + $0x68] sm:$0xff] %v8386
                %v8388 = vld [vmem:[%s8370 + $0x40] sm:$0xff]
                %8389 = vst [vmem:[%s8371 + $0x80] sm:$0xff] %v8388
                %v8390 = vld [vmem:[%s8370 + $0x48] sm:$0xff]
                %8391 = vst [vmem:[%s8371 + $0x88] sm:$0xff] %v8390
                %v8392 = vld [vmem:[%s8370 + $0x50] sm:$0xff]
                %8393 = vst [vmem:[%s8371 + $0xa0] sm:$0xff] %v8392
                %v8394 = vld [vmem:[%s8370 + $0x58] sm:$0xff]
                %8395 = vst [vmem:[%s8371 + $0xa8] sm:$0xff] %v8394
                %v8396 = vld [vmem:[%s8370 + $0x60] sm:$0xff]
                %8397 = vst [vmem:[%s8371 + $0xc0] sm:$0xff] %v8396
                %v8398 = vld [vmem:[%s8370 + $0x68] sm:$0xff]
                %8399 = vst [vmem:[%s8371 + $0xc8] sm:$0xff] %v8398
                %v8400 = vld [vmem:[%s8370 + $0x70] sm:$0xff]
                %8401 = vst [vmem:[%s8371 + $0xe0] sm:$0xff] %v8400
                %v8402 = vld [vmem:[%s8370 + $0x78] sm:$0xff]
                %8403 = vst [vmem:[%s8371 + $0xe8] sm:$0xff] %v8402
                %v8404 = vld [vmem:[%s8370 + $0x80] sm:$0xff]
                %8405 = vst [vmem:[%s8371 + $0x100] sm:$0xff] %v8404
                %v8406 = vld [vmem:[%s8370 + $0x88] sm:$0xff]
                %8407 = vst [vmem:[%s8371 + $0x108] sm:$0xff] %v8406
                %v8408 = vld [vmem:[%s8370 + $0x90] sm:$0xff]
                %8409 = vst [vmem:[%s8371 + $0x120] sm:$0xff] %v8408
                %v8410 = vld [vmem:[%s8370 + $0x98] sm:$0xff]
                %8411 = vst [vmem:[%s8371 + $0x128] sm:$0xff] %v8410
                %v8412 = vld [vmem:[%s8370 + $0xa0] sm:$0xff]
                %8413 = vst [vmem:[%s8371 + $0x140] sm:$0xff] %v8412
                %v8414 = vld [vmem:[%s8370 + $0xa8] sm:$0xff]
                %8415 = vst [vmem:[%s8371 + $0x148] sm:$0xff] %v8414
                %v8416 = vld [vmem:[%s8370 + $0xb0] sm:$0xff]
                %8417 = vst [vmem:[%s8371 + $0x160] sm:$0xff] %v8416
                %v8418 = vld [vmem:[%s8370 + $0xb8] sm:$0xff]
                %8419 = vst [vmem:[%s8371 + $0x168] sm:$0xff] %v8418
                %v8420 = vld [vmem:[%s8370 + $0xc0] sm:$0xff]
                %8421 = vst [vmem:[%s8371 + $0x180] sm:$0xff] %v8420
                %v8422 = vld [vmem:[%s8370 + $0xc8] sm:$0xff]
                %8423 = vst [vmem:[%s8371 + $0x188] sm:$0xff] %v8422
                %v8424 = vld [vmem:[%s8370 + $0xd0] sm:$0xff]
                %8425 = vst [vmem:[%s8371 + $0x1a0] sm:$0xff] %v8424
                %v8426 = vld [vmem:[%s8370 + $0xd8] sm:$0xff]
                %8427 = vst [vmem:[%s8371 + $0x1a8] sm:$0xff] %v8426
                %v8428 = vld [vmem:[%s8370 + $0xe0] sm:$0xff]
                %8429 = vst [vmem:[%s8371 + $0x1c0] sm:$0xff] %v8428
                %v8430 = vld [vmem:[%s8370 + $0xe8] sm:$0xff]
                %8431 = vst [vmem:[%s8371 + $0x1c8] sm:$0xff] %v8430
                %v8432 = vld [vmem:[%s8370 + $0xf0] sm:$0xff]
                %8433 = vst [vmem:[%s8371 + $0x1e0] sm:$0xff] %v8432
                %v8434 = vld [vmem:[%s8370 + $0xf8] sm:$0xff]
                %8435 = vst [vmem:[%s8371 + $0x1e8] sm:$0xff] %v8434
              $region49: #{augment_mel_stft.1} parent=43 // loop_footer
                %s8369 = sadd.s32 1, %s8365
              $region50: #{augment_mel_stft.1} parent=43 // loop_footer_branch
                %8364 = sbr.rel target = $region46
              $region51: #{augment_mel_stft.1} parent=43 // loop_exit
                _
            $region44: #{augment_mel_stft.1} parent=39 // pred_fallthru
              _
            // Predicated region
            $region52: #{augment_mel_stft.1} parent=39 // pred_check
              _
            $region53: #{augment_mel_stft.1} parent=39 // pred_check_branch
              %8437 = sbr.rel target = $region55
            $region54: #{augment_mel_stft.1} parent=39 // pred_region
              _
            $region55: #{augment_mel_stft.1} parent=39 // pred_fallthru
              _
          $region40: #{augment_mel_stft.1} parent=35 // pred_fallthru
            _
          %8438 = vnop
        $region36: #{augment_mel_stft.1} parent=31 // pred_fallthru
          _
      $region32: #{augment_mel_stft.1} parent=5 // pred_fallthru
        _
      %p8439 = scmp.le.s32.totalorder 2, %s9
      // Predicated region
      $region56: #{augment_mel_stft.1} parent=5 // pred_check
        %p8440 = pneg %p8439
      $region57: #{augment_mel_stft.1} parent=5 // pred_check_branch
        %8442 = sbr.rel (%p8440) target = $region59
      $region58: #{augment_mel_stft.1} parent=5 // pred_region
        %s8443 = ssub.s32 %s9, 2
        // Predicated region
        $region60: #{augment_mel_stft.1} parent=58 // pred_check
          %p8444 = pneg %p106
        $region61: #{augment_mel_stft.1} parent=58 // pred_check_branch
          %8446 = sbr.rel (%p8444) target = $region63
        $region62: #{augment_mel_stft.1} parent=58 // pred_region
          %s8447 = sand.u32 %s91, 1
          %s8448 = sand.u32 %s91, 1
          %s8449 = smul.addr %s8448, 256
          %s8450 = scalar_lea.vmem [#allocation2], %s8449
        $region63: #{augment_mel_stft.1} parent=58 // pred_fallthru
          _
      $region59: #{augment_mel_stft.1} parent=5 // pred_fallthru
        _
    $region6: #{augment_mel_stft.1} parent=1 // loop_footer
      %s13 = sadd.s32 1, %s9
    $region7: #{augment_mel_stft.1} parent=1 // loop_footer_branch
      %8 = sbr.rel target = $region3
    $region8: #{augment_mel_stft.1} parent=1 // loop_exit
      _

</llo_original>
